<compile_context>
chip_gen: v7x
topology: tpu7x:2x2x1
jax: 0.10.0
libtpu: 0.0.40
codegen_flags: <defaults>
</compile_context>

<pallas_src>
import functools

import numpy as np

import jax
import jax.numpy as jnp
from jax.experimental import pallas as pl
from jax.experimental.pallas import tpu as pltpu


B_TILE = 16  # images per grid step (multiple of 8; conv1 GEMM M = 28*B_TILE = 448)


# ----------------------------------------------------------------------------
# The fused Pallas kernel (processes B_TILE images per grid step)
# ----------------------------------------------------------------------------
def _lenet_kernel(x_ref, rhs1_ref, b1_ref, pr1_ref, pc1_ref,
                  rhs2_ref, b2_ref, pr2_ref, pc2_ref,
                  wf1_ref, bf1_ref, wf2_ref, bf2_ref, wf3_ref, bf3_ref,
                  out_ref, *, b_tile):
    bf16 = jnp.bfloat16
    dot = functools.partial(jnp.dot, preferred_element_type=jnp.float32)

    # Packed input block: rows = h*b_tile + b (h in [0,32), H zero-padded by 2),
    # lanes = ic*28 + x.  Already bf16 from the host packer.
    xb = x_ref[...]                                             # (32*b_tile, c_in*28)

    # ---- conv1 (5x5, pad=2): per-dy accumulation, aligned sublane slices ----
    acc = dot(xb[0:28 * b_tile, :], rhs1_ref[0])
    for dy in range(1, 5):
        acc += dot(xb[dy * b_tile:(dy + 28) * b_tile, :], rhs1_ref[dy])
    c1 = jnp.maximum(acc + b1_ref[...], 0.0)                    # (28*b_tile, 6*28) f32

    # ---- avgpool1 (2x2): lane column-pair matmul + block-diag row-pair matmul ----
    p1 = dot(pr1_ref[...], dot(c1.astype(bf16), pc1_ref[...]).astype(bf16))
    p1b = p1.astype(bf16)                                       # (14*b_tile, 6*14)

    # ---- conv2 (5x5, no pad): per-dy accumulation ----
    acc = dot(p1b[0:10 * b_tile, :], rhs2_ref[0])
    for dy in range(1, 5):
        acc += dot(p1b[dy * b_tile:(dy + 10) * b_tile, :], rhs2_ref[dy])
    c2 = jnp.maximum(acc + b2_ref[...], 0.0)                    # (10*b_tile, 16*10) f32

    # ---- avgpool2 (2x2) ----
    p2 = dot(pr2_ref[...], dot(c2.astype(bf16), pc2_ref[...]).astype(bf16))
    p2b = p2.astype(bf16)                                       # (5*b_tile, 16*5)

    # ---- fc1 with flatten folded in: sum over the 5 qh row-blocks ----
    acc = dot(p2b[0:b_tile, :], wf1_ref[0])
    for qh in range(1, 5):
        acc += dot(p2b[qh * b_tile:(qh + 1) * b_tile, :], wf1_ref[qh])
    h = jnp.maximum(acc + bf1_ref[...], 0.0)                    # (b_tile, 120) f32

    # ---- fc2 -> fc3 ----
    h = jnp.maximum(dot(h.astype(bf16), wf2_ref[...]) + bf2_ref[...], 0.0)   # (b_tile, 84)
    out_ref[...] = dot(h.astype(bf16), wf3_ref[...]) + bf3_ref[...]          # (b_tile, out_ch)


# ----------------------------------------------------------------------------
# One-time host-side weight packing (pure numpy)
# ----------------------------------------------------------------------------
def _conv_rhs_per_dy(w, w_in, w_out, pad):
    """Per-dy banded RHS: rhs[dy, ic*w_in + x, oc*w_out + ow] = w[oc, ic, dy, x-ow+pad]."""
    oc, c_in, k, _ = w.shape
    rhs = np.zeros((k, c_in, w_in, oc, w_out), np.float32)
    for dy in range(k):
        for dx in range(k):
            for ow in range(w_out):
                x = ow + dx - pad
                if 0 <= x < w_in:
                    rhs[dy, :, x, :, ow] = w[:, :, dy, dx].T   # (c_in, oc)
    return rhs.reshape(k, c_in * w_in, oc * w_out)


def _pool_cols(oc, ow):
    """Lane column-pair averaging matrix: (oc*ow, oc*(ow//2))."""
    m = np.zeros((oc * ow, oc * (ow // 2)), np.float32)
    for c in range(oc):
        for pw in range(ow // 2):
            m[c * ow + 2 * pw, c * (ow // 2) + pw] = 0.5
            m[c * ow + 2 * pw + 1, c * (ow // 2) + pw] = 0.5
    return m


def _pool_rows_bd(n_rows, b_tile):
    """Block-diagonal row-pair averaging for batched (oh-major, b-minor) rows."""
    m = np.zeros((n_rows // 2, b_tile, n_rows, b_tile), np.float32)
    for ph in range(n_rows // 2):
        for b in range(b_tile):
            m[ph, b, 2 * ph, b] = 0.5
            m[ph, b, 2 * ph + 1, b] = 0.5
    return m.reshape(n_rows // 2 * b_tile, n_rows * b_tile)


def prepare_params(params, b_tile=B_TILE):
    """Pack PyTorch-layout params into kernel-ready bf16 matrices (one-time)."""
    c1_w = np.asarray(params["c1_w"], np.float32)
    c1_b = np.asarray(params["c1_b"], np.float32)
    c2_w = np.asarray(params["c2_w"], np.float32)
    c2_b = np.asarray(params["c2_b"], np.float32)
    f1_w = np.asarray(params["f1_w"], np.float32)
    f1_b = np.asarray(params["f1_b"], np.float32)
    f2_w = np.asarray(params["f2_w"], np.float32)
    f2_b = np.asarray(params["f2_b"], np.float32)
    f3_w = np.asarray(params["f3_w"], np.float32)
    f3_b = np.asarray(params["f3_b"], np.float32)

    # fc1 rows reordered from PyTorch flatten index oc*25 + qh*5 + qw to per-qh
    # blocks with lane order oc*5 + qw (matches the p2 layout in the kernel).
    wf1 = f1_w.reshape(120, 16, 5, 5).transpose(2, 1, 3, 0).reshape(5, 80, 120)

    bf = lambda a: jnp.asarray(a, jnp.bfloat16)
    f32 = lambda a: jnp.asarray(a, jnp.float32)
    return {
        "rhs1": bf(_conv_rhs_per_dy(c1_w, 28, 28, 2)),      # (5, c_in*28, 168)
        "b1":   f32(np.repeat(c1_b, 28)[None, :]),          # (1, 168)
        "pr1":  bf(_pool_rows_bd(28, b_tile)),              # (14*bt, 28*bt)
        "pc1":  bf(_pool_cols(6, 28)),                      # (168, 84)
        "rhs2": bf(_conv_rhs_per_dy(c2_w, 14, 10, 0)),      # (5, 84, 160)
        "b2":   f32(np.repeat(c2_b, 10)[None, :]),          # (1, 160)
        "pr2":  bf(_pool_rows_bd(10, b_tile)),              # (5*bt, 10*bt)
        "pc2":  bf(_pool_cols(16, 10)),                     # (160, 80)
        "wf1":  bf(wf1),                                    # (5, 80, 120)
        "bf1":  f32(f1_b[None, :]),
        "wf2":  bf(f2_w.T), "bf2": f32(f2_b[None, :]),
        "wf3":  bf(f3_w.T), "bf3": f32(f3_b[None, :]),
    }


_WEIGHT_KEYS = ("rhs1", "b1", "pr1", "pc1", "rhs2", "b2", "pr2", "pc2",
                "wf1", "bf1", "wf2", "bf2", "wf3", "bf3")


# ----------------------------------------------------------------------------
# Forward: ONE pallas_call for the whole network, B_TILE images per grid step
# ----------------------------------------------------------------------------
def _const_spec(w):
    zeros = (0,) * w.ndim
    return pl.BlockSpec(w.shape, lambda t, _z=zeros: _z)


def lenet_forward(prep, x, b_tile=B_TILE):
    x = jnp.asarray(x, jnp.float32)
    B, c_in, H, W = x.shape
    assert (H, W) == (28, 28), "LeNet's 16*5*5 flatten requires 28x28 inputs"

    nt = (B + b_tile - 1) // b_tile
    B_pad = nt * b_tile

    # Host-side input packing: H zero-pad to 32, rows = (tile, h, b), lanes = (ic, x).
    xh = jnp.pad(x, ((0, B_pad - B), (0, 0), (2, 2), (0, 0)))          # (B_pad, c_in, 32, 28)
    xp = xh.reshape(nt, b_tile, c_in, 32, 28).transpose(0, 3, 1, 2, 4)
    xp = xp.reshape(nt * 32 * b_tile, c_in * 28).astype(jnp.bfloat16)

    weights = [prep[k] for k in _WEIGHT_KEYS]
    out_ch = prep["bf3"].shape[1]

    in_specs = [pl.BlockSpec((32 * b_tile, c_in * 28), lambda t: (t, 0))]
    in_specs += [_const_spec(w) for w in weights]

    out = pl.pallas_call(
        functools.partial(_lenet_kernel, b_tile=b_tile),
        grid=(nt,),
        in_specs=in_specs,
        out_specs=pl.BlockSpec((b_tile, out_ch), lambda t: (t, 0)),
        out_shape=jax.ShapeDtypeStruct((B_pad, out_ch), jnp.float32),
        compiler_params=pltpu.CompilerParams(dimension_semantics=("parallel",)),
    )(xp, *weights)
    return out[:B]


# ----------------------------------------------------------------------------
# Parameters & pure-JAX reference (for the self-check)
# ----------------------------------------------------------------------------
def init_params(key, input_channel=1, output_channel=2):
    ks = jax.random.split(key, 10)
    n = lambda k, s, sc: sc * jax.random.normal(k, s, jnp.float32)
    return {
        "c1_w": n(ks[0], (6, input_channel, 5, 5), 0.1), "c1_b": n(ks[1], (6,), 0.1),
        "c2_w": n(ks[2], (16, 6, 5, 5), 0.1),            "c2_b": n(ks[3], (16,), 0.1),
        "f1_w": n(ks[4], (120, 16 * 5 * 5), 0.05),       "f1_b": n(ks[5], (120,), 0.05),
        "f2_w": n(ks[6], (84, 120), 0.05),               "f2_b": n(ks[7], (84,), 0.05),
        "f3_w": n(ks[8], (output_channel, 84), 0.05),    "f3_b": n(ks[9], (output_channel,), 0.05),
    }


def lenet_reference(params, x):
    with jax.default_matmul_precision("highest"):
        def conv(x, w, b, pad):
            y = jax.lax.conv_general_dilated(
                x, w, window_strides=(1, 1), padding=[(pad, pad), (pad, pad)],
                dimension_numbers=("NCHW", "OIHW", "NCHW"))
            return jnp.maximum(y + b[None, :, None, None], 0.0)

        def pool(x):
            B, C, H, W = x.shape
            return x.reshape(B, C, H // 2, 2, W // 2, 2).mean(axis=(3, 5))

        h = pool(conv(x, params["c1_w"], params["c1_b"], 2))
        h = pool(conv(h, params["c2_w"], params["c2_b"], 0))
        h = h.reshape(h.shape[0], -1)
        h = jnp.maximum(h @ params["f1_w"].T + params["f1_b"], 0.0)
        h = jnp.maximum(h @ params["f2_w"].T + params["f2_b"], 0.0)
        return h @ params["f3_w"].T + params["f3_b"]


if __name__ == "__main__":
    key = jax.random.PRNGKey(0)
    k_param, k_x = jax.random.split(key)
    params = init_params(k_param, input_channel=1, output_channel=2)
    x = jax.random.normal(k_x, (32, 1, 28, 28), jnp.float32)   # B=32 -> grid of 2 tiles

    prep = prepare_params(params, b_tile=B_TILE)   # one-time host-side weight packing
    fwd = jax.jit(lenet_forward)
    out = jax.block_until_ready(fwd(prep, x))

    ref = jax.block_until_ready(lenet_reference(params, x))
    assert out.shape == (32, 2), out.shape
    assert jnp.allclose(out, ref, atol=3e-2, rtol=3e-2), float(jnp.abs(out - ref).max())

    print("KERNEL_OK")
</pallas_src>

<mosaic_0001>
module attributes {stable_mosaic.version = 11 : i64} {
  func.func @_lenet_kernel(%arg0: i32, %arg1: memref<512x28xbf16, #tpu.memory_space<vmem>>, %arg2: memref<5x28x168xbf16, #tpu.memory_space<vmem>>, %arg3: memref<1x168xf32, #tpu.memory_space<vmem>>, %arg4: memref<224x448xbf16, #tpu.memory_space<vmem>>, %arg5: memref<168x84xbf16, #tpu.memory_space<vmem>>, %arg6: memref<5x84x160xbf16, #tpu.memory_space<vmem>>, %arg7: memref<1x160xf32, #tpu.memory_space<vmem>>, %arg8: memref<80x160xbf16, #tpu.memory_space<vmem>>, %arg9: memref<160x80xbf16, #tpu.memory_space<vmem>>, %arg10: memref<5x80x120xbf16, #tpu.memory_space<vmem>>, %arg11: memref<1x120xf32, #tpu.memory_space<vmem>>, %arg12: memref<120x84xbf16, #tpu.memory_space<vmem>>, %arg13: memref<1x84xf32, #tpu.memory_space<vmem>>, %arg14: memref<84x2xbf16, #tpu.memory_space<vmem>>, %arg15: memref<1x2xf32, #tpu.memory_space<vmem>>, %arg16: memref<16x2xf32, #tpu.memory_space<vmem>>) attributes {dimension_semantics = [#tpu.dimension_semantics<parallel>], iteration_bounds = array<i64: 2>, scalar_prefetch = 0 : i64, scratch_operands = 0 : i64, tpu.core_type = #tpu.core_type<tc>, window_params = [{transform_indices = @transform_0, window_bounds = array<i64: 512, 28>}, {pipeline_mode = #tpu.pipeline_mode<synchronous>, transform_indices = @transform_1, window_bounds = array<i64: 5, 28, 168>}, {pipeline_mode = #tpu.pipeline_mode<synchronous>, transform_indices = @transform_2, window_bounds = array<i64: 1, 168>}, {pipeline_mode = #tpu.pipeline_mode<synchronous>, transform_indices = @transform_3, window_bounds = array<i64: 224, 448>}, {pipeline_mode = #tpu.pipeline_mode<synchronous>, transform_indices = @transform_4, window_bounds = array<i64: 168, 84>}, {pipeline_mode = #tpu.pipeline_mode<synchronous>, transform_indices = @transform_5, window_bounds = array<i64: 5, 84, 160>}, {pipeline_mode = #tpu.pipeline_mode<synchronous>, transform_indices = @transform_6, window_bounds = array<i64: 1, 160>}, {pipeline_mode = #tpu.pipeline_mode<synchronous>, transform_indices = @transform_7, window_bounds = array<i64: 80, 160>}, {pipeline_mode = #tpu.pipeline_mode<synchronous>, transform_indices = @transform_8, window_bounds = array<i64: 160, 80>}, {pipeline_mode = #tpu.pipeline_mode<synchronous>, transform_indices = @transform_9, window_bounds = array<i64: 5, 80, 120>}, {pipeline_mode = #tpu.pipeline_mode<synchronous>, transform_indices = @transform_10, window_bounds = array<i64: 1, 120>}, {pipeline_mode = #tpu.pipeline_mode<synchronous>, transform_indices = @transform_11, window_bounds = array<i64: 120, 84>}, {pipeline_mode = #tpu.pipeline_mode<synchronous>, transform_indices = @transform_12, window_bounds = array<i64: 1, 84>}, {pipeline_mode = #tpu.pipeline_mode<synchronous>, transform_indices = @transform_13, window_bounds = array<i64: 84, 2>}, {pipeline_mode = #tpu.pipeline_mode<synchronous>, transform_indices = @transform_14, window_bounds = array<i64: 1, 2>}, {transform_indices = @transform_15, window_bounds = array<i64: 16, 2>}]} {
    %c0 = arith.constant 0 : index
    %c0_0 = arith.constant 0 : index
    %0 = vector.load %arg1[%c0, %c0_0] : memref<512x28xbf16, #tpu.memory_space<vmem>>, vector<512x28xbf16>
    %1 = vector.extract_strided_slice %0 {offsets = [0, 0], sizes = [448, 28], strides = [1, 1]} : vector<512x28xbf16> to vector<448x28xbf16>
    %c0_1 = arith.constant 0 : index
    %c0_2 = arith.constant 0 : index
    %c0_3 = arith.constant 0 : index
    %2 = vector.load %arg2[%c0_1, %c0_2, %c0_3] : memref<5x28x168xbf16, #tpu.memory_space<vmem>>, vector<1x28x168xbf16>
    %3 = vector.shape_cast %2 : vector<1x28x168xbf16> to vector<28x168xbf16>
    %cst = arith.constant dense<0.000000e+00> : vector<448x168xf32>
    %4 = tpu.matmul %1, %3, %cst {dimension_numbers = #tpu.dot_dimension_numbers<[1], [0], [0], [1], [0, 0, 1, 1], [], []>} : vector<448x28xbf16>, vector<28x168xbf16>, vector<448x168xf32> -> vector<448x168xf32>
    %5 = vector.extract_strided_slice %0 {offsets = [16, 0], sizes = [448, 28], strides = [1, 1]} : vector<512x28xbf16> to vector<448x28xbf16>
    %c1 = arith.constant 1 : index
    %c0_4 = arith.constant 0 : index
    %c0_5 = arith.constant 0 : index
    %6 = vector.load %arg2[%c1, %c0_4, %c0_5] : memref<5x28x168xbf16, #tpu.memory_space<vmem>>, vector<1x28x168xbf16>
    %7 = vector.shape_cast %6 : vector<1x28x168xbf16> to vector<28x168xbf16>
    %cst_6 = arith.constant dense<0.000000e+00> : vector<448x168xf32>
    %8 = tpu.matmul %5, %7, %cst_6 {dimension_numbers = #tpu.dot_dimension_numbers<[1], [0], [0], [1], [0, 0, 1, 1], [], []>} : vector<448x28xbf16>, vector<28x168xbf16>, vector<448x168xf32> -> vector<448x168xf32>
    %9 = arith.addf %4, %8 : vector<448x168xf32>
    %10 = vector.extract_strided_slice %0 {offsets = [32, 0], sizes = [448, 28], strides = [1, 1]} : vector<512x28xbf16> to vector<448x28xbf16>
    %c2 = arith.constant 2 : index
    %c0_7 = arith.constant 0 : index
    %c0_8 = arith.constant 0 : index
    %11 = vector.load %arg2[%c2, %c0_7, %c0_8] : memref<5x28x168xbf16, #tpu.memory_space<vmem>>, vector<1x28x168xbf16>
    %12 = vector.shape_cast %11 : vector<1x28x168xbf16> to vector<28x168xbf16>
    %cst_9 = arith.constant dense<0.000000e+00> : vector<448x168xf32>
    %13 = tpu.matmul %10, %12, %cst_9 {dimension_numbers = #tpu.dot_dimension_numbers<[1], [0], [0], [1], [0, 0, 1, 1], [], []>} : vector<448x28xbf16>, vector<28x168xbf16>, vector<448x168xf32> -> vector<448x168xf32>
    %14 = arith.addf %9, %13 : vector<448x168xf32>
    %15 = vector.extract_strided_slice %0 {offsets = [48, 0], sizes = [448, 28], strides = [1, 1]} : vector<512x28xbf16> to vector<448x28xbf16>
    %c3 = arith.constant 3 : index
    %c0_10 = arith.constant 0 : index
    %c0_11 = arith.constant 0 : index
    %16 = vector.load %arg2[%c3, %c0_10, %c0_11] : memref<5x28x168xbf16, #tpu.memory_space<vmem>>, vector<1x28x168xbf16>
    %17 = vector.shape_cast %16 : vector<1x28x168xbf16> to vector<28x168xbf16>
    %cst_12 = arith.constant dense<0.000000e+00> : vector<448x168xf32>
    %18 = tpu.matmul %15, %17, %cst_12 {dimension_numbers = #tpu.dot_dimension_numbers<[1], [0], [0], [1], [0, 0, 1, 1], [], []>} : vector<448x28xbf16>, vector<28x168xbf16>, vector<448x168xf32> -> vector<448x168xf32>
    %19 = arith.addf %14, %18 : vector<448x168xf32>
    %20 = vector.extract_strided_slice %0 {offsets = [64, 0], sizes = [448, 28], strides = [1, 1]} : vector<512x28xbf16> to vector<448x28xbf16>
    %c4 = arith.constant 4 : index
    %c0_13 = arith.constant 0 : index
    %c0_14 = arith.constant 0 : index
    %21 = vector.load %arg2[%c4, %c0_13, %c0_14] : memref<5x28x168xbf16, #tpu.memory_space<vmem>>, vector<1x28x168xbf16>
    %22 = vector.shape_cast %21 : vector<1x28x168xbf16> to vector<28x168xbf16>
    %cst_15 = arith.constant dense<0.000000e+00> : vector<448x168xf32>
    %23 = tpu.matmul %20, %22, %cst_15 {dimension_numbers = #tpu.dot_dimension_numbers<[1], [0], [0], [1], [0, 0, 1, 1], [], []>} : vector<448x28xbf16>, vector<28x168xbf16>, vector<448x168xf32> -> vector<448x168xf32>
    %24 = arith.addf %19, %23 : vector<448x168xf32>
    %c0_16 = arith.constant 0 : index
    %c0_17 = arith.constant 0 : index
    %25 = vector.load %arg3[%c0_16, %c0_17] : memref<1x168xf32, #tpu.memory_space<vmem>>, vector<1x168xf32>
    %26 = vector.broadcast %25 : vector<1x168xf32> to vector<448x168xf32>
    %27 = arith.addf %24, %26 : vector<448x168xf32>
    %cst_18 = arith.constant 0.000000e+00 : f32
    %28 = vector.broadcast %cst_18 : f32 to vector<448x168xf32>
    %29 = arith.maximumf %27, %28 : vector<448x168xf32>
    %c0_19 = arith.constant 0 : index
    %c0_20 = arith.constant 0 : index
    %30 = vector.load %arg4[%c0_19, %c0_20] : memref<224x448xbf16, #tpu.memory_space<vmem>>, vector<224x448xbf16>
    %31 = arith.truncf %29 : vector<448x168xf32> to vector<448x168xbf16>
    %c0_21 = arith.constant 0 : index
    %c0_22 = arith.constant 0 : index
    %32 = vector.load %arg5[%c0_21, %c0_22] : memref<168x84xbf16, #tpu.memory_space<vmem>>, vector<168x84xbf16>
    %cst_23 = arith.constant dense<0.000000e+00> : vector<448x84xf32>
    %33 = tpu.matmul %31, %32, %cst_23 {dimension_numbers = #tpu.dot_dimension_numbers<[1], [0], [0], [1], [0, 0, 1, 1], [], []>} : vector<448x168xbf16>, vector<168x84xbf16>, vector<448x84xf32> -> vector<448x84xf32>
    %34 = arith.truncf %33 : vector<448x84xf32> to vector<448x84xbf16>
    %cst_24 = arith.constant dense<0.000000e+00> : vector<224x84xf32>
    %35 = tpu.matmul %30, %34, %cst_24 {dimension_numbers = #tpu.dot_dimension_numbers<[1], [0], [0], [1], [0, 0, 1, 1], [], []>} : vector<224x448xbf16>, vector<448x84xbf16>, vector<224x84xf32> -> vector<224x84xf32>
    %36 = arith.truncf %35 : vector<224x84xf32> to vector<224x84xbf16>
    %37 = vector.extract_strided_slice %36 {offsets = [0, 0], sizes = [160, 84], strides = [1, 1]} : vector<224x84xbf16> to vector<160x84xbf16>
    %c0_25 = arith.constant 0 : index
    %c0_26 = arith.constant 0 : index
    %c0_27 = arith.constant 0 : index
    %38 = vector.load %arg6[%c0_25, %c0_26, %c0_27] : memref<5x84x160xbf16, #tpu.memory_space<vmem>>, vector<1x84x160xbf16>
    %39 = vector.shape_cast %38 : vector<1x84x160xbf16> to vector<84x160xbf16>
    %cst_28 = arith.constant dense<0.000000e+00> : vector<160x160xf32>
    %40 = tpu.matmul %37, %39, %cst_28 {dimension_numbers = #tpu.dot_dimension_numbers<[1], [0], [0], [1], [0, 0, 1, 1], [], []>} : vector<160x84xbf16>, vector<84x160xbf16>, vector<160x160xf32> -> vector<160x160xf32>
    %41 = vector.extract_strided_slice %36 {offsets = [16, 0], sizes = [160, 84], strides = [1, 1]} : vector<224x84xbf16> to vector<160x84xbf16>
    %c1_29 = arith.constant 1 : index
    %c0_30 = arith.constant 0 : index
    %c0_31 = arith.constant 0 : index
    %42 = vector.load %arg6[%c1_29, %c0_30, %c0_31] : memref<5x84x160xbf16, #tpu.memory_space<vmem>>, vector<1x84x160xbf16>
    %43 = vector.shape_cast %42 : vector<1x84x160xbf16> to vector<84x160xbf16>
    %cst_32 = arith.constant dense<0.000000e+00> : vector<160x160xf32>
    %44 = tpu.matmul %41, %43, %cst_32 {dimension_numbers = #tpu.dot_dimension_numbers<[1], [0], [0], [1], [0, 0, 1, 1], [], []>} : vector<160x84xbf16>, vector<84x160xbf16>, vector<160x160xf32> -> vector<160x160xf32>
    %45 = arith.addf %40, %44 : vector<160x160xf32>
    %46 = vector.extract_strided_slice %36 {offsets = [32, 0], sizes = [160, 84], strides = [1, 1]} : vector<224x84xbf16> to vector<160x84xbf16>
    %c2_33 = arith.constant 2 : index
    %c0_34 = arith.constant 0 : index
    %c0_35 = arith.constant 0 : index
    %47 = vector.load %arg6[%c2_33, %c0_34, %c0_35] : memref<5x84x160xbf16, #tpu.memory_space<vmem>>, vector<1x84x160xbf16>
    %48 = vector.shape_cast %47 : vector<1x84x160xbf16> to vector<84x160xbf16>
    %cst_36 = arith.constant dense<0.000000e+00> : vector<160x160xf32>
    %49 = tpu.matmul %46, %48, %cst_36 {dimension_numbers = #tpu.dot_dimension_numbers<[1], [0], [0], [1], [0, 0, 1, 1], [], []>} : vector<160x84xbf16>, vector<84x160xbf16>, vector<160x160xf32> -> vector<160x160xf32>
    %50 = arith.addf %45, %49 : vector<160x160xf32>
    %51 = vector.extract_strided_slice %36 {offsets = [48, 0], sizes = [160, 84], strides = [1, 1]} : vector<224x84xbf16> to vector<160x84xbf16>
    %c3_37 = arith.constant 3 : index
    %c0_38 = arith.constant 0 : index
    %c0_39 = arith.constant 0 : index
    %52 = vector.load %arg6[%c3_37, %c0_38, %c0_39] : memref<5x84x160xbf16, #tpu.memory_space<vmem>>, vector<1x84x160xbf16>
    %53 = vector.shape_cast %52 : vector<1x84x160xbf16> to vector<84x160xbf16>
    %cst_40 = arith.constant dense<0.000000e+00> : vector<160x160xf32>
    %54 = tpu.matmul %51, %53, %cst_40 {dimension_numbers = #tpu.dot_dimension_numbers<[1], [0], [0], [1], [0, 0, 1, 1], [], []>} : vector<160x84xbf16>, vector<84x160xbf16>, vector<160x160xf32> -> vector<160x160xf32>
    %55 = arith.addf %50, %54 : vector<160x160xf32>
    %56 = vector.extract_strided_slice %36 {offsets = [64, 0], sizes = [160, 84], strides = [1, 1]} : vector<224x84xbf16> to vector<160x84xbf16>
    %c4_41 = arith.constant 4 : index
    %c0_42 = arith.constant 0 : index
    %c0_43 = arith.constant 0 : index
    %57 = vector.load %arg6[%c4_41, %c0_42, %c0_43] : memref<5x84x160xbf16, #tpu.memory_space<vmem>>, vector<1x84x160xbf16>
    %58 = vector.shape_cast %57 : vector<1x84x160xbf16> to vector<84x160xbf16>
    %cst_44 = arith.constant dense<0.000000e+00> : vector<160x160xf32>
    %59 = tpu.matmul %56, %58, %cst_44 {dimension_numbers = #tpu.dot_dimension_numbers<[1], [0], [0], [1], [0, 0, 1, 1], [], []>} : vector<160x84xbf16>, vector<84x160xbf16>, vector<160x160xf32> -> vector<160x160xf32>
    %60 = arith.addf %55, %59 : vector<160x160xf32>
    %c0_45 = arith.constant 0 : index
    %c0_46 = arith.constant 0 : index
    %61 = vector.load %arg7[%c0_45, %c0_46] : memref<1x160xf32, #tpu.memory_space<vmem>>, vector<1x160xf32>
    %62 = vector.broadcast %61 : vector<1x160xf32> to vector<160x160xf32>
    %63 = arith.addf %60, %62 : vector<160x160xf32>
    %cst_47 = arith.constant 0.000000e+00 : f32
    %64 = vector.broadcast %cst_47 : f32 to vector<160x160xf32>
    %65 = arith.maximumf %63, %64 : vector<160x160xf32>
    %c0_48 = arith.constant 0 : index
    %c0_49 = arith.constant 0 : index
    %66 = vector.load %arg8[%c0_48, %c0_49] : memref<80x160xbf16, #tpu.memory_space<vmem>>, vector<80x160xbf16>
    %67 = arith.truncf %65 : vector<160x160xf32> to vector<160x160xbf16>
    %c0_50 = arith.constant 0 : index
    %c0_51 = arith.constant 0 : index
    %68 = vector.load %arg9[%c0_50, %c0_51] : memref<160x80xbf16, #tpu.memory_space<vmem>>, vector<160x80xbf16>
    %cst_52 = arith.constant dense<0.000000e+00> : vector<160x80xf32>
    %69 = tpu.matmul %67, %68, %cst_52 {dimension_numbers = #tpu.dot_dimension_numbers<[1], [0], [0], [1], [0, 0, 1, 1], [], []>} : vector<160x160xbf16>, vector<160x80xbf16>, vector<160x80xf32> -> vector<160x80xf32>
    %70 = arith.truncf %69 : vector<160x80xf32> to vector<160x80xbf16>
    %cst_53 = arith.constant dense<0.000000e+00> : vector<80x80xf32>
    %71 = tpu.matmul %66, %70, %cst_53 {dimension_numbers = #tpu.dot_dimension_numbers<[1], [0], [0], [1], [0, 0, 1, 1], [], []>} : vector<80x160xbf16>, vector<160x80xbf16>, vector<80x80xf32> -> vector<80x80xf32>
    %72 = arith.truncf %71 : vector<80x80xf32> to vector<80x80xbf16>
    %73 = vector.extract_strided_slice %72 {offsets = [0, 0], sizes = [16, 80], strides = [1, 1]} : vector<80x80xbf16> to vector<16x80xbf16>
    %c0_54 = arith.constant 0 : index
    %c0_55 = arith.constant 0 : index
    %c0_56 = arith.constant 0 : index
    %74 = vector.load %arg10[%c0_54, %c0_55, %c0_56] : memref<5x80x120xbf16, #tpu.memory_space<vmem>>, vector<1x80x120xbf16>
    %75 = vector.shape_cast %74 : vector<1x80x120xbf16> to vector<80x120xbf16>
    %cst_57 = arith.constant dense<0.000000e+00> : vector<16x120xf32>
    %76 = tpu.matmul %73, %75, %cst_57 {dimension_numbers = #tpu.dot_dimension_numbers<[1], [0], [0], [1], [0, 0, 1, 1], [], []>} : vector<16x80xbf16>, vector<80x120xbf16>, vector<16x120xf32> -> vector<16x120xf32>
    %77 = vector.extract_strided_slice %72 {offsets = [16, 0], sizes = [16, 80], strides = [1, 1]} : vector<80x80xbf16> to vector<16x80xbf16>
    %c1_58 = arith.constant 1 : index
    %c0_59 = arith.constant 0 : index
    %c0_60 = arith.constant 0 : index
    %78 = vector.load %arg10[%c1_58, %c0_59, %c0_60] : memref<5x80x120xbf16, #tpu.memory_space<vmem>>, vector<1x80x120xbf16>
    %79 = vector.shape_cast %78 : vector<1x80x120xbf16> to vector<80x120xbf16>
    %cst_61 = arith.constant dense<0.000000e+00> : vector<16x120xf32>
    %80 = tpu.matmul %77, %79, %cst_61 {dimension_numbers = #tpu.dot_dimension_numbers<[1], [0], [0], [1], [0, 0, 1, 1], [], []>} : vector<16x80xbf16>, vector<80x120xbf16>, vector<16x120xf32> -> vector<16x120xf32>
    %81 = arith.addf %76, %80 : vector<16x120xf32>
    %82 = vector.extract_strided_slice %72 {offsets = [32, 0], sizes = [16, 80], strides = [1, 1]} : vector<80x80xbf16> to vector<16x80xbf16>
    %c2_62 = arith.constant 2 : index
    %c0_63 = arith.constant 0 : index
    %c0_64 = arith.constant 0 : index
    %83 = vector.load %arg10[%c2_62, %c0_63, %c0_64] : memref<5x80x120xbf16, #tpu.memory_space<vmem>>, vector<1x80x120xbf16>
    %84 = vector.shape_cast %83 : vector<1x80x120xbf16> to vector<80x120xbf16>
    %cst_65 = arith.constant dense<0.000000e+00> : vector<16x120xf32>
    %85 = tpu.matmul %82, %84, %cst_65 {dimension_numbers = #tpu.dot_dimension_numbers<[1], [0], [0], [1], [0, 0, 1, 1], [], []>} : vector<16x80xbf16>, vector<80x120xbf16>, vector<16x120xf32> -> vector<16x120xf32>
    %86 = arith.addf %81, %85 : vector<16x120xf32>
    %87 = vector.extract_strided_slice %72 {offsets = [48, 0], sizes = [16, 80], strides = [1, 1]} : vector<80x80xbf16> to vector<16x80xbf16>
    %c3_66 = arith.constant 3 : index
    %c0_67 = arith.constant 0 : index
    %c0_68 = arith.constant 0 : index
    %88 = vector.load %arg10[%c3_66, %c0_67, %c0_68] : memref<5x80x120xbf16, #tpu.memory_space<vmem>>, vector<1x80x120xbf16>
    %89 = vector.shape_cast %88 : vector<1x80x120xbf16> to vector<80x120xbf16>
    %cst_69 = arith.constant dense<0.000000e+00> : vector<16x120xf32>
    %90 = tpu.matmul %87, %89, %cst_69 {dimension_numbers = #tpu.dot_dimension_numbers<[1], [0], [0], [1], [0, 0, 1, 1], [], []>} : vector<16x80xbf16>, vector<80x120xbf16>, vector<16x120xf32> -> vector<16x120xf32>
    %91 = arith.addf %86, %90 : vector<16x120xf32>
    %92 = vector.extract_strided_slice %72 {offsets = [64, 0], sizes = [16, 80], strides = [1, 1]} : vector<80x80xbf16> to vector<16x80xbf16>
    %c4_70 = arith.constant 4 : index
    %c0_71 = arith.constant 0 : index
    %c0_72 = arith.constant 0 : index
    %93 = vector.load %arg10[%c4_70, %c0_71, %c0_72] : memref<5x80x120xbf16, #tpu.memory_space<vmem>>, vector<1x80x120xbf16>
    %94 = vector.shape_cast %93 : vector<1x80x120xbf16> to vector<80x120xbf16>
    %cst_73 = arith.constant dense<0.000000e+00> : vector<16x120xf32>
    %95 = tpu.matmul %92, %94, %cst_73 {dimension_numbers = #tpu.dot_dimension_numbers<[1], [0], [0], [1], [0, 0, 1, 1], [], []>} : vector<16x80xbf16>, vector<80x120xbf16>, vector<16x120xf32> -> vector<16x120xf32>
    %96 = arith.addf %91, %95 : vector<16x120xf32>
    %c0_74 = arith.constant 0 : index
    %c0_75 = arith.constant 0 : index
    %97 = vector.load %arg11[%c0_74, %c0_75] : memref<1x120xf32, #tpu.memory_space<vmem>>, vector<1x120xf32>
    %98 = vector.broadcast %97 : vector<1x120xf32> to vector<16x120xf32>
    %99 = arith.addf %96, %98 : vector<16x120xf32>
    %cst_76 = arith.constant 0.000000e+00 : f32
    %100 = vector.broadcast %cst_76 : f32 to vector<16x120xf32>
    %101 = arith.maximumf %99, %100 : vector<16x120xf32>
    %102 = arith.truncf %101 : vector<16x120xf32> to vector<16x120xbf16>
    %c0_77 = arith.constant 0 : index
    %c0_78 = arith.constant 0 : index
    %103 = vector.load %arg12[%c0_77, %c0_78] : memref<120x84xbf16, #tpu.memory_space<vmem>>, vector<120x84xbf16>
    %cst_79 = arith.constant dense<0.000000e+00> : vector<16x84xf32>
    %104 = tpu.matmul %102, %103, %cst_79 {dimension_numbers = #tpu.dot_dimension_numbers<[1], [0], [0], [1], [0, 0, 1, 1], [], []>} : vector<16x120xbf16>, vector<120x84xbf16>, vector<16x84xf32> -> vector<16x84xf32>
    %c0_80 = arith.constant 0 : index
    %c0_81 = arith.constant 0 : index
    %105 = vector.load %arg13[%c0_80, %c0_81] : memref<1x84xf32, #tpu.memory_space<vmem>>, vector<1x84xf32>
    %106 = vector.broadcast %105 : vector<1x84xf32> to vector<16x84xf32>
    %107 = arith.addf %104, %106 : vector<16x84xf32>
    %cst_82 = arith.constant 0.000000e+00 : f32
    %108 = vector.broadcast %cst_82 : f32 to vector<16x84xf32>
    %109 = arith.maximumf %107, %108 : vector<16x84xf32>
    %110 = arith.truncf %109 : vector<16x84xf32> to vector<16x84xbf16>
    %c0_83 = arith.constant 0 : index
    %c0_84 = arith.constant 0 : index
    %111 = vector.load %arg14[%c0_83, %c0_84] : memref<84x2xbf16, #tpu.memory_space<vmem>>, vector<84x2xbf16>
    %cst_85 = arith.constant dense<0.000000e+00> : vector<16x2xf32>
    %112 = tpu.matmul %110, %111, %cst_85 {dimension_numbers = #tpu.dot_dimension_numbers<[1], [0], [0], [1], [0, 0, 1, 1], [], []>} : vector<16x84xbf16>, vector<84x2xbf16>, vector<16x2xf32> -> vector<16x2xf32>
    %c0_86 = arith.constant 0 : index
    %c0_87 = arith.constant 0 : index
    %113 = vector.load %arg15[%c0_86, %c0_87] : memref<1x2xf32, #tpu.memory_space<vmem>>, vector<1x2xf32>
    %114 = vector.broadcast %113 : vector<1x2xf32> to vector<16x2xf32>
    %115 = arith.addf %112, %114 : vector<16x2xf32>
    %c0_88 = arith.constant 0 : index
    %c0_89 = arith.constant 0 : index
    %116 = vector.load %arg16[%c0_88, %c0_89] : memref<16x2xf32, #tpu.memory_space<vmem>>, vector<16x2xf32>
    tpu.vector_store %arg16[%c0_88, %c0_89], %115 {strides = array<i32>} : memref<16x2xf32, #tpu.memory_space<vmem>>, vector<16x2xf32>,
    return
  }
  func.func @transform_0(%arg0: i32) -> (i32, i32) {
    %c0_i32 = arith.constant 0 : i32
    %c0_i32_0 = arith.constant 0 : i32
    return %arg0, %c0_i32 : i32, i32
  }
  func.func @transform_1(%arg0: i32) -> (i32, i32, i32) {
    %c0_i32 = arith.constant 0 : i32
    %c0_i32_0 = arith.constant 0 : i32
    %c0_i32_1 = arith.constant 0 : i32
    %c0_i32_2 = arith.constant 0 : i32
    return %c0_i32, %c0_i32_0, %c0_i32_1 : i32, i32, i32
  }
  func.func @transform_2(%arg0: i32) -> (i32, i32) {
    %c0_i32 = arith.constant 0 : i32
    %c0_i32_0 = arith.constant 0 : i32
    %c0_i32_1 = arith.constant 0 : i32
    return %c0_i32, %c0_i32_0 : i32, i32
  }
  func.func @transform_3(%arg0: i32) -> (i32, i32) {
    %c0_i32 = arith.constant 0 : i32
    %c0_i32_0 = arith.constant 0 : i32
    %c0_i32_1 = arith.constant 0 : i32
    return %c0_i32, %c0_i32_0 : i32, i32
  }
  func.func @transform_4(%arg0: i32) -> (i32, i32) {
    %c0_i32 = arith.constant 0 : i32
    %c0_i32_0 = arith.constant 0 : i32
    %c0_i32_1 = arith.constant 0 : i32
    return %c0_i32, %c0_i32_0 : i32, i32
  }
  func.func @transform_5(%arg0: i32) -> (i32, i32, i32) {
    %c0_i32 = arith.constant 0 : i32
    %c0_i32_0 = arith.constant 0 : i32
    %c0_i32_1 = arith.constant 0 : i32
    %c0_i32_2 = arith.constant 0 : i32
    return %c0_i32, %c0_i32_0, %c0_i32_1 : i32, i32, i32
  }
  func.func @transform_6(%arg0: i32) -> (i32, i32) {
    %c0_i32 = arith.constant 0 : i32
    %c0_i32_0 = arith.constant 0 : i32
    %c0_i32_1 = arith.constant 0 : i32
    return %c0_i32, %c0_i32_0 : i32, i32
  }
  func.func @transform_7(%arg0: i32) -> (i32, i32) {
    %c0_i32 = arith.constant 0 : i32
    %c0_i32_0 = arith.constant 0 : i32
    %c0_i32_1 = arith.constant 0 : i32
    return %c0_i32, %c0_i32_0 : i32, i32
  }
  func.func @transform_8(%arg0: i32) -> (i32, i32) {
    %c0_i32 = arith.constant 0 : i32
    %c0_i32_0 = arith.constant 0 : i32
    %c0_i32_1 = arith.constant 0 : i32
    return %c0_i32, %c0_i32_0 : i32, i32
  }
  func.func @transform_9(%arg0: i32) -> (i32, i32, i32) {
    %c0_i32 = arith.constant 0 : i32
    %c0_i32_0 = arith.constant 0 : i32
    %c0_i32_1 = arith.constant 0 : i32
    %c0_i32_2 = arith.constant 0 : i32
    return %c0_i32, %c0_i32_0, %c0_i32_1 : i32, i32, i32
  }
  func.func @transform_10(%arg0: i32) -> (i32, i32) {
    %c0_i32 = arith.constant 0 : i32
    %c0_i32_0 = arith.constant 0 : i32
    %c0_i32_1 = arith.constant 0 : i32
    return %c0_i32, %c0_i32_0 : i32, i32
  }
  func.func @transform_11(%arg0: i32) -> (i32, i32) {
    %c0_i32 = arith.constant 0 : i32
    %c0_i32_0 = arith.constant 0 : i32
    %c0_i32_1 = arith.constant 0 : i32
    return %c0_i32, %c0_i32_0 : i32, i32
  }
  func.func @transform_12(%arg0: i32) -> (i32, i32) {
    %c0_i32 = arith.constant 0 : i32
    %c0_i32_0 = arith.constant 0 : i32
    %c0_i32_1 = arith.constant 0 : i32
    return %c0_i32, %c0_i32_0 : i32, i32
  }
  func.func @transform_13(%arg0: i32) -> (i32, i32) {
    %c0_i32 = arith.constant 0 : i32
    %c0_i32_0 = arith.constant 0 : i32
    %c0_i32_1 = arith.constant 0 : i32
    return %c0_i32, %c0_i32_0 : i32, i32
  }
  func.func @transform_14(%arg0: i32) -> (i32, i32) {
    %c0_i32 = arith.constant 0 : i32
    %c0_i32_0 = arith.constant 0 : i32
    %c0_i32_1 = arith.constant 0 : i32
    return %c0_i32, %c0_i32_0 : i32, i32
  }
  func.func @transform_15(%arg0: i32) -> (i32, i32) {
    %c0_i32 = arith.constant 0 : i32
    %c0_i32_0 = arith.constant 0 : i32
    return %arg0, %c0_i32 : i32, i32
  }
}

</mosaic_0001>

<llo_original>
// kernel: lenet_forward.1
$region0: #{lenet_forward.1}
  #allocation0 [shape = 'u32[]', space=smem, size = 0x4, offset = 0x4, fixed_abs, tag = 'smem constant byte address 0x4 - core index']
  #allocation1 [shape = 'u32[144,128]{1,0:T(1,128)}', space=vmem, size = 0x12000, scoped, tag = 'internal scratch']
  %s0 = inlined_call_operand.vmem [shape: bf16[1024,28], index: 0, kind: input, shape index: {}]
  %s1 = inlined_call_operand.vmem [shape: bf16[5,28,168], index: 1, kind: input, shape index: {}]
  %s2 = inlined_call_operand.vmem [shape: f32[1,168], index: 2, kind: input, shape index: {}]
  %s3 = inlined_call_operand.vmem [shape: bf16[224,448], index: 3, kind: input, shape index: {}]
  %s4 = inlined_call_operand.vmem [shape: bf16[168,84], index: 4, kind: input, shape index: {}]
  %s5 = inlined_call_operand.vmem [shape: bf16[5,84,160], index: 5, kind: input, shape index: {}]
  %s6 = inlined_call_operand.vmem [shape: f32[1,160], index: 6, kind: input, shape index: {}]
  %s7 = inlined_call_operand.vmem [shape: bf16[80,160], index: 7, kind: input, shape index: {}]
  %s8 = inlined_call_operand.vmem [shape: bf16[160,80], index: 8, kind: input, shape index: {}]
  %s9 = inlined_call_operand.vmem [shape: bf16[5,80,120], index: 9, kind: input, shape index: {}]
  %s10 = inlined_call_operand.vmem [shape: f32[1,120], index: 10, kind: input, shape index: {}]
  %s11 = inlined_call_operand.vmem [shape: bf16[120,84], index: 11, kind: input, shape index: {}]
  %s12 = inlined_call_operand.vmem [shape: f32[1,84], index: 12, kind: input, shape index: {}]
  %s13 = inlined_call_operand.vmem [shape: bf16[84,2], index: 13, kind: input, shape index: {}]
  %s14 = inlined_call_operand.vmem [shape: f32[1,2], index: 14, kind: input, shape index: {}]
  %s15 = inlined_call_operand.vmem [shape: f32[32,2], index: 15, kind: output, shape index: {}]
  %s16 = sld [smem:[#allocation0]]
  $region93: #{lenet_forward.1} parent=0
    _
  %s18 = ssub.s32 1, %s16
  %s19 = scalar_select 0, %s18, %s16
  loop: start=0, step=1, limit=4
  $region2: #{lenet_forward.1} parent=0 // loop_pre_header
    _
  $region3: #{lenet_forward.1} parent=0 // loop_header
    %s21 = sphi 0, %s25
    %p22 = scmp.ge.s32.totalorder %s21, 4
    %s31 = sphi 0, %s33
    %s34 = sphi 0, %s31
    %s35 = sphi 0, %s34
    %s51 = sphi 0, %s35
    %s55 = sphi 0, %s55
    %s57 = sphi 0, %s55
    %s58 = sphi 0, %s57
    %s72 = sphi 0, %s58
    %s76 = sphi 0, %s76
    %s78 = sphi 0, %s76
    %s79 = sphi 0, %s78
    %s93 = sphi 0, %s79
    %s97 = sphi 0, %s97
    %s99 = sphi 0, %s97
    %s100 = sphi 0, %s99
    %s114 = sphi 0, %s100
    %s118 = sphi 0, %s118
    %s120 = sphi 0, %s118
    %s121 = sphi 0, %s120
    %s135 = sphi 0, %s121
    %s139 = sphi 0, %s139
    %s141 = sphi 0, %s139
    %s142 = sphi 0, %s141
    %s156 = sphi 0, %s142
    %s160 = sphi 0, %s160
    %s162 = sphi 0, %s160
    %s163 = sphi 0, %s162
    %s177 = sphi 0, %s163
    %s181 = sphi 0, %s181
    %s183 = sphi 0, %s181
    %s184 = sphi 0, %s183
    %s198 = sphi 0, %s184
    %s202 = sphi 0, %s202
    %s204 = sphi 0, %s202
    %s205 = sphi 0, %s204
    %s219 = sphi 0, %s205
    %s223 = sphi 0, %s223
    %s225 = sphi 0, %s223
    %s226 = sphi 0, %s225
    %s240 = sphi 0, %s226
    %s244 = sphi 0, %s244
    %s246 = sphi 0, %s244
    %s247 = sphi 0, %s246
    %s261 = sphi 0, %s247
    %s265 = sphi 0, %s265
    %s267 = sphi 0, %s265
    %s268 = sphi 0, %s267
    %s282 = sphi 0, %s268
    %s286 = sphi 0, %s286
    %s288 = sphi 0, %s286
    %s289 = sphi 0, %s288
    %s303 = sphi 0, %s289
    %s307 = sphi 0, %s307
    %s309 = sphi 0, %s307
    %s310 = sphi 0, %s309
    %s324 = sphi 0, %s310
    %s328 = sphi 0, %s328
    %s330 = sphi 0, %s328
    %s331 = sphi 0, %s330
    %s345 = sphi 0, %s331
    %s351 = sphi 0, %s353
    %s354 = sphi 0, %s351
    %s355 = sphi 0, %s354
    %s371 = sphi 0, %s355
  $region4: #{lenet_forward.1} parent=0 // loop_header_branch
    %24 = sbr.rel (%p22) target = $region8
  $region5: #{lenet_forward.1} parent=0 // loop_body
    %s26 = ssub.s32 %s21, 1
    %s27 = ssub.s32 %s21, 2
    %s28 = sadd.s32 %s21, 1
    %s29 = ssub.s32 %s21, %s28
    %p30 = scmp.eq.s32.totalorder %s29, 0
    %s32 = sadd.s32 %s31, 1
    %s33 = scalar_select %p30, %s31, %s32
    %p36 = pneg %p30
    %p37 = scmp.eq.s32.totalorder %s21, 1
    %p38 = por %p36, %p37
    %p39 = scmp.ne.s32.totalorder %s31, %s34
    %p40 = scmp.eq.s32.totalorder %s21, 0
    %p41 = por %p39, %p40
    %p42 = scmp.ne.s32.totalorder %s31, %s34
    %p43 = scmp.eq.s32.totalorder %s26, 1
    %p44 = por %p42, %p43
    %p45 = scmp.ne.s32.totalorder %s34, %s35
    %p46 = scmp.eq.s32.totalorder %s26, 0
    %p47 = por %p45, %p46
    %p48 = scmp.ne.s32.totalorder %s34, %s35
    %p49 = scmp.eq.s32.totalorder %s27, 1
    %p50 = por %p48, %p49
    %p52 = scmp.ne.s32.totalorder %s35, %s51
    %p53 = scmp.eq.s32.totalorder %s27, 0
    %p54 = por %p52, %p53
    %s56 = sadd.s32 %s55, 1
    %p59 = scmp.eq.s32.totalorder %s21, 1
    %p60 = scmp.ne.s32.totalorder %s55, %s57
    %p61 = scmp.eq.s32.totalorder %s21, 0
    %p62 = por %p60, %p61
    %p63 = scmp.ne.s32.totalorder %s55, %s57
    %p64 = scmp.eq.s32.totalorder %s26, 1
    %p65 = por %p63, %p64
    %p66 = scmp.ne.s32.totalorder %s57, %s58
    %p67 = scmp.eq.s32.totalorder %s26, 0
    %p68 = por %p66, %p67
    %p69 = scmp.ne.s32.totalorder %s57, %s58
    %p70 = scmp.eq.s32.totalorder %s27, 1
    %p71 = por %p69, %p70
    %p73 = scmp.ne.s32.totalorder %s58, %s72
    %p74 = scmp.eq.s32.totalorder %s27, 0
    %p75 = por %p73, %p74
    %s77 = sadd.s32 %s76, 1
    %p80 = scmp.eq.s32.totalorder %s21, 1
    %p81 = scmp.ne.s32.totalorder %s76, %s78
    %p82 = scmp.eq.s32.totalorder %s21, 0
    %p83 = por %p81, %p82
    %p84 = scmp.ne.s32.totalorder %s76, %s78
    %p85 = scmp.eq.s32.totalorder %s26, 1
    %p86 = por %p84, %p85
    %p87 = scmp.ne.s32.totalorder %s78, %s79
    %p88 = scmp.eq.s32.totalorder %s26, 0
    %p89 = por %p87, %p88
    %p90 = scmp.ne.s32.totalorder %s78, %s79
    %p91 = scmp.eq.s32.totalorder %s27, 1
    %p92 = por %p90, %p91
    %p94 = scmp.ne.s32.totalorder %s79, %s93
    %p95 = scmp.eq.s32.totalorder %s27, 0
    %p96 = por %p94, %p95
    %s98 = sadd.s32 %s97, 1
    %p101 = scmp.eq.s32.totalorder %s21, 1
    %p102 = scmp.ne.s32.totalorder %s97, %s99
    %p103 = scmp.eq.s32.totalorder %s21, 0
    %p104 = por %p102, %p103
    %p105 = scmp.ne.s32.totalorder %s97, %s99
    %p106 = scmp.eq.s32.totalorder %s26, 1
    %p107 = por %p105, %p106
    %p108 = scmp.ne.s32.totalorder %s99, %s100
    %p109 = scmp.eq.s32.totalorder %s26, 0
    %p110 = por %p108, %p109
    %p111 = scmp.ne.s32.totalorder %s99, %s100
    %p112 = scmp.eq.s32.totalorder %s27, 1
    %p113 = por %p111, %p112
    %p115 = scmp.ne.s32.totalorder %s100, %s114
    %p116 = scmp.eq.s32.totalorder %s27, 0
    %p117 = por %p115, %p116
    %s119 = sadd.s32 %s118, 1
    %p122 = scmp.eq.s32.totalorder %s21, 1
    %p123 = scmp.ne.s32.totalorder %s118, %s120
    %p124 = scmp.eq.s32.totalorder %s21, 0
    %p125 = por %p123, %p124
    %p126 = scmp.ne.s32.totalorder %s118, %s120
    %p127 = scmp.eq.s32.totalorder %s26, 1
    %p128 = por %p126, %p127
    %p129 = scmp.ne.s32.totalorder %s120, %s121
    %p130 = scmp.eq.s32.totalorder %s26, 0
    %p131 = por %p129, %p130
    %p132 = scmp.ne.s32.totalorder %s120, %s121
    %p133 = scmp.eq.s32.totalorder %s27, 1
    %p134 = por %p132, %p133
    %p136 = scmp.ne.s32.totalorder %s121, %s135
    %p137 = scmp.eq.s32.totalorder %s27, 0
    %p138 = por %p136, %p137
    %s140 = sadd.s32 %s139, 1
    %p143 = scmp.eq.s32.totalorder %s21, 1
    %p144 = scmp.ne.s32.totalorder %s139, %s141
    %p145 = scmp.eq.s32.totalorder %s21, 0
    %p146 = por %p144, %p145
    %p147 = scmp.ne.s32.totalorder %s139, %s141
    %p148 = scmp.eq.s32.totalorder %s26, 1
    %p149 = por %p147, %p148
    %p150 = scmp.ne.s32.totalorder %s141, %s142
    %p151 = scmp.eq.s32.totalorder %s26, 0
    %p152 = por %p150, %p151
    %p153 = scmp.ne.s32.totalorder %s141, %s142
    %p154 = scmp.eq.s32.totalorder %s27, 1
    %p155 = por %p153, %p154
    %p157 = scmp.ne.s32.totalorder %s142, %s156
    %p158 = scmp.eq.s32.totalorder %s27, 0
    %p159 = por %p157, %p158
    %s161 = sadd.s32 %s160, 1
    %p164 = scmp.eq.s32.totalorder %s21, 1
    %p165 = scmp.ne.s32.totalorder %s160, %s162
    %p166 = scmp.eq.s32.totalorder %s21, 0
    %p167 = por %p165, %p166
    %p168 = scmp.ne.s32.totalorder %s160, %s162
    %p169 = scmp.eq.s32.totalorder %s26, 1
    %p170 = por %p168, %p169
    %p171 = scmp.ne.s32.totalorder %s162, %s163
    %p172 = scmp.eq.s32.totalorder %s26, 0
    %p173 = por %p171, %p172
    %p174 = scmp.ne.s32.totalorder %s162, %s163
    %p175 = scmp.eq.s32.totalorder %s27, 1
    %p176 = por %p174, %p175
    %p178 = scmp.ne.s32.totalorder %s163, %s177
    %p179 = scmp.eq.s32.totalorder %s27, 0
    %p180 = por %p178, %p179
    %s182 = sadd.s32 %s181, 1
    %p185 = scmp.eq.s32.totalorder %s21, 1
    %p186 = scmp.ne.s32.totalorder %s181, %s183
    %p187 = scmp.eq.s32.totalorder %s21, 0
    %p188 = por %p186, %p187
    %p189 = scmp.ne.s32.totalorder %s181, %s183
    %p190 = scmp.eq.s32.totalorder %s26, 1
    %p191 = por %p189, %p190
    %p192 = scmp.ne.s32.totalorder %s183, %s184
    %p193 = scmp.eq.s32.totalorder %s26, 0
    %p194 = por %p192, %p193
    %p195 = scmp.ne.s32.totalorder %s183, %s184
    %p196 = scmp.eq.s32.totalorder %s27, 1
    %p197 = por %p195, %p196
    %p199 = scmp.ne.s32.totalorder %s184, %s198
    %p200 = scmp.eq.s32.totalorder %s27, 0
    %p201 = por %p199, %p200
    %s203 = sadd.s32 %s202, 1
    %p206 = scmp.eq.s32.totalorder %s21, 1
    %p207 = scmp.ne.s32.totalorder %s202, %s204
    %p208 = scmp.eq.s32.totalorder %s21, 0
    %p209 = por %p207, %p208
    %p210 = scmp.ne.s32.totalorder %s202, %s204
    %p211 = scmp.eq.s32.totalorder %s26, 1
    %p212 = por %p210, %p211
    %p213 = scmp.ne.s32.totalorder %s204, %s205
    %p214 = scmp.eq.s32.totalorder %s26, 0
    %p215 = por %p213, %p214
    %p216 = scmp.ne.s32.totalorder %s204, %s205
    %p217 = scmp.eq.s32.totalorder %s27, 1
    %p218 = por %p216, %p217
    %p220 = scmp.ne.s32.totalorder %s205, %s219
    %p221 = scmp.eq.s32.totalorder %s27, 0
    %p222 = por %p220, %p221
    %s224 = sadd.s32 %s223, 1
    %p227 = scmp.eq.s32.totalorder %s21, 1
    %p228 = scmp.ne.s32.totalorder %s223, %s225
    %p229 = scmp.eq.s32.totalorder %s21, 0
    %p230 = por %p228, %p229
    %p231 = scmp.ne.s32.totalorder %s223, %s225
    %p232 = scmp.eq.s32.totalorder %s26, 1
    %p233 = por %p231, %p232
    %p234 = scmp.ne.s32.totalorder %s225, %s226
    %p235 = scmp.eq.s32.totalorder %s26, 0
    %p236 = por %p234, %p235
    %p237 = scmp.ne.s32.totalorder %s225, %s226
    %p238 = scmp.eq.s32.totalorder %s27, 1
    %p239 = por %p237, %p238
    %p241 = scmp.ne.s32.totalorder %s226, %s240
    %p242 = scmp.eq.s32.totalorder %s27, 0
    %p243 = por %p241, %p242
    %s245 = sadd.s32 %s244, 1
    %p248 = scmp.eq.s32.totalorder %s21, 1
    %p249 = scmp.ne.s32.totalorder %s244, %s246
    %p250 = scmp.eq.s32.totalorder %s21, 0
    %p251 = por %p249, %p250
    %p252 = scmp.ne.s32.totalorder %s244, %s246
    %p253 = scmp.eq.s32.totalorder %s26, 1
    %p254 = por %p252, %p253
    %p255 = scmp.ne.s32.totalorder %s246, %s247
    %p256 = scmp.eq.s32.totalorder %s26, 0
    %p257 = por %p255, %p256
    %p258 = scmp.ne.s32.totalorder %s246, %s247
    %p259 = scmp.eq.s32.totalorder %s27, 1
    %p260 = por %p258, %p259
    %p262 = scmp.ne.s32.totalorder %s247, %s261
    %p263 = scmp.eq.s32.totalorder %s27, 0
    %p264 = por %p262, %p263
    %s266 = sadd.s32 %s265, 1
    %p269 = scmp.eq.s32.totalorder %s21, 1
    %p270 = scmp.ne.s32.totalorder %s265, %s267
    %p271 = scmp.eq.s32.totalorder %s21, 0
    %p272 = por %p270, %p271
    %p273 = scmp.ne.s32.totalorder %s265, %s267
    %p274 = scmp.eq.s32.totalorder %s26, 1
    %p275 = por %p273, %p274
    %p276 = scmp.ne.s32.totalorder %s267, %s268
    %p277 = scmp.eq.s32.totalorder %s26, 0
    %p278 = por %p276, %p277
    %p279 = scmp.ne.s32.totalorder %s267, %s268
    %p280 = scmp.eq.s32.totalorder %s27, 1
    %p281 = por %p279, %p280
    %p283 = scmp.ne.s32.totalorder %s268, %s282
    %p284 = scmp.eq.s32.totalorder %s27, 0
    %p285 = por %p283, %p284
    %s287 = sadd.s32 %s286, 1
    %p290 = scmp.eq.s32.totalorder %s21, 1
    %p291 = scmp.ne.s32.totalorder %s286, %s288
    %p292 = scmp.eq.s32.totalorder %s21, 0
    %p293 = por %p291, %p292
    %p294 = scmp.ne.s32.totalorder %s286, %s288
    %p295 = scmp.eq.s32.totalorder %s26, 1
    %p296 = por %p294, %p295
    %p297 = scmp.ne.s32.totalorder %s288, %s289
    %p298 = scmp.eq.s32.totalorder %s26, 0
    %p299 = por %p297, %p298
    %p300 = scmp.ne.s32.totalorder %s288, %s289
    %p301 = scmp.eq.s32.totalorder %s27, 1
    %p302 = por %p300, %p301
    %p304 = scmp.ne.s32.totalorder %s289, %s303
    %p305 = scmp.eq.s32.totalorder %s27, 0
    %p306 = por %p304, %p305
    %s308 = sadd.s32 %s307, 1
    %p311 = scmp.eq.s32.totalorder %s21, 1
    %p312 = scmp.ne.s32.totalorder %s307, %s309
    %p313 = scmp.eq.s32.totalorder %s21, 0
    %p314 = por %p312, %p313
    %p315 = scmp.ne.s32.totalorder %s307, %s309
    %p316 = scmp.eq.s32.totalorder %s26, 1
    %p317 = por %p315, %p316
    %p318 = scmp.ne.s32.totalorder %s309, %s310
    %p319 = scmp.eq.s32.totalorder %s26, 0
    %p320 = por %p318, %p319
    %p321 = scmp.ne.s32.totalorder %s309, %s310
    %p322 = scmp.eq.s32.totalorder %s27, 1
    %p323 = por %p321, %p322
    %p325 = scmp.ne.s32.totalorder %s310, %s324
    %p326 = scmp.eq.s32.totalorder %s27, 0
    %p327 = por %p325, %p326
    %s329 = sadd.s32 %s328, 1
    %p332 = scmp.eq.s32.totalorder %s21, 1
    %p333 = scmp.ne.s32.totalorder %s328, %s330
    %p334 = scmp.eq.s32.totalorder %s21, 0
    %p335 = por %p333, %p334
    %p336 = scmp.ne.s32.totalorder %s328, %s330
    %p337 = scmp.eq.s32.totalorder %s26, 1
    %p338 = por %p336, %p337
    %p339 = scmp.ne.s32.totalorder %s330, %s331
    %p340 = scmp.eq.s32.totalorder %s26, 0
    %p341 = por %p339, %p340
    %p342 = scmp.ne.s32.totalorder %s330, %s331
    %p343 = scmp.eq.s32.totalorder %s27, 1
    %p344 = por %p342, %p343
    %p346 = scmp.ne.s32.totalorder %s331, %s345
    %p347 = scmp.eq.s32.totalorder %s27, 0
    %p348 = por %p346, %p347
    %s349 = ssub.s32 %s21, %s28
    %p350 = scmp.eq.s32.totalorder %s349, 0
    %s352 = sadd.s32 %s351, 1
    %s353 = scalar_select %p350, %s351, %s352
    %p356 = pneg %p350
    %p357 = scmp.eq.s32.totalorder %s21, 1
    %p358 = por %p356, %p357
    %p359 = scmp.ne.s32.totalorder %s351, %s354
    %p360 = scmp.eq.s32.totalorder %s21, 0
    %p361 = por %p359, %p360
    %p362 = scmp.ne.s32.totalorder %s351, %s354
    %p363 = scmp.eq.s32.totalorder %s26, 1
    %p364 = por %p362, %p363
    %p365 = scmp.ne.s32.totalorder %s354, %s355
    %p366 = scmp.eq.s32.totalorder %s26, 0
    %p367 = por %p365, %p366
    %p368 = scmp.ne.s32.totalorder %s354, %s355
    %p369 = scmp.eq.s32.totalorder %s27, 1
    %p370 = por %p368, %p369
    %p372 = scmp.ne.s32.totalorder %s355, %s371
    %p373 = scmp.eq.s32.totalorder %s27, 0
    %p374 = por %p372, %p373
    %p375 = scmp.le.s32.totalorder 1, %s21
    %p376 = scmp.lt.s32.totalorder %s21, 3
    %p377 = pnand %p375, %p376
    %p378 = pneg %p377
    // Predicated region
    $region9: #{lenet_forward.1} parent=5 // pred_check
      _
    $region10: #{lenet_forward.1} parent=5 // pred_check_branch
      %380 = sbr.rel (%p377) target = $region12
    $region11: #{lenet_forward.1} parent=5 // pred_region
      %s381 = ssub.s32 %s21, 1
      // Predicated region
      $region13: #{lenet_forward.1} parent=11 // pred_check
        %p382 = pneg %p68
      $region14: #{lenet_forward.1} parent=11 // pred_check_branch
        %384 = sbr.rel (%p382) target = $region16
      $region15: #{lenet_forward.1} parent=11 // pred_region
        _
      $region16: #{lenet_forward.1} parent=11 // pred_fallthru
        _
      // Predicated region
      $region17: #{lenet_forward.1} parent=11 // pred_check
        %p385 = pneg %p89
      $region18: #{lenet_forward.1} parent=11 // pred_check_branch
        %387 = sbr.rel (%p385) target = $region20
      $region19: #{lenet_forward.1} parent=11 // pred_region
        _
      $region20: #{lenet_forward.1} parent=11 // pred_fallthru
        _
      // Predicated region
      $region21: #{lenet_forward.1} parent=11 // pred_check
        %p388 = pneg %p110
      $region22: #{lenet_forward.1} parent=11 // pred_check_branch
        %390 = sbr.rel (%p388) target = $region24
      $region23: #{lenet_forward.1} parent=11 // pred_region
        _
      $region24: #{lenet_forward.1} parent=11 // pred_fallthru
        _
      // Predicated region
      $region25: #{lenet_forward.1} parent=11 // pred_check
        %p391 = pneg %p131
      $region26: #{lenet_forward.1} parent=11 // pred_check_branch
        %393 = sbr.rel (%p391) target = $region28
      $region27: #{lenet_forward.1} parent=11 // pred_region
        _
      $region28: #{lenet_forward.1} parent=11 // pred_fallthru
        _
      // Predicated region
      $region29: #{lenet_forward.1} parent=11 // pred_check
        %p394 = pneg %p152
      $region30: #{lenet_forward.1} parent=11 // pred_check_branch
        %396 = sbr.rel (%p394) target = $region32
      $region31: #{lenet_forward.1} parent=11 // pred_region
        _
      $region32: #{lenet_forward.1} parent=11 // pred_fallthru
        _
      // Predicated region
      $region33: #{lenet_forward.1} parent=11 // pred_check
        %p397 = pneg %p173
      $region34: #{lenet_forward.1} parent=11 // pred_check_branch
        %399 = sbr.rel (%p397) target = $region36
      $region35: #{lenet_forward.1} parent=11 // pred_region
        _
      $region36: #{lenet_forward.1} parent=11 // pred_fallthru
        _
      // Predicated region
      $region37: #{lenet_forward.1} parent=11 // pred_check
        %p400 = pneg %p194
      $region38: #{lenet_forward.1} parent=11 // pred_check_branch
        %402 = sbr.rel (%p400) target = $region40
      $region39: #{lenet_forward.1} parent=11 // pred_region
        _
      $region40: #{lenet_forward.1} parent=11 // pred_fallthru
        _
      // Predicated region
      $region41: #{lenet_forward.1} parent=11 // pred_check
        %p403 = pneg %p215
      $region42: #{lenet_forward.1} parent=11 // pred_check_branch
        %405 = sbr.rel (%p403) target = $region44
      $region43: #{lenet_forward.1} parent=11 // pred_region
        _
      $region44: #{lenet_forward.1} parent=11 // pred_fallthru
        _
      // Predicated region
      $region45: #{lenet_forward.1} parent=11 // pred_check
        %p406 = pneg %p236
      $region46: #{lenet_forward.1} parent=11 // pred_check_branch
        %408 = sbr.rel (%p406) target = $region48
      $region47: #{lenet_forward.1} parent=11 // pred_region
        _
      $region48: #{lenet_forward.1} parent=11 // pred_fallthru
        _
      // Predicated region
      $region49: #{lenet_forward.1} parent=11 // pred_check
        %p409 = pneg %p257
      $region50: #{lenet_forward.1} parent=11 // pred_check_branch
        %411 = sbr.rel (%p409) target = $region52
      $region51: #{lenet_forward.1} parent=11 // pred_region
        _
      $region52: #{lenet_forward.1} parent=11 // pred_fallthru
        _
      // Predicated region
      $region53: #{lenet_forward.1} parent=11 // pred_check
        %p412 = pneg %p278
      $region54: #{lenet_forward.1} parent=11 // pred_check_branch
        %414 = sbr.rel (%p412) target = $region56
      $region55: #{lenet_forward.1} parent=11 // pred_region
        _
      $region56: #{lenet_forward.1} parent=11 // pred_fallthru
        _
      // Predicated region
      $region57: #{lenet_forward.1} parent=11 // pred_check
        %p415 = pneg %p299
      $region58: #{lenet_forward.1} parent=11 // pred_check_branch
        %417 = sbr.rel (%p415) target = $region60
      $region59: #{lenet_forward.1} parent=11 // pred_region
        _
      $region60: #{lenet_forward.1} parent=11 // pred_fallthru
        _
      // Predicated region
      $region61: #{lenet_forward.1} parent=11 // pred_check
        %p418 = pneg %p320
      $region62: #{lenet_forward.1} parent=11 // pred_check_branch
        %420 = sbr.rel (%p418) target = $region64
      $region63: #{lenet_forward.1} parent=11 // pred_region
        _
      $region64: #{lenet_forward.1} parent=11 // pred_fallthru
        _
      // Predicated region
      $region65: #{lenet_forward.1} parent=11 // pred_check
        %p421 = pneg %p341
      $region66: #{lenet_forward.1} parent=11 // pred_check_branch
        %423 = sbr.rel (%p421) target = $region68
      $region67: #{lenet_forward.1} parent=11 // pred_region
        _
      $region68: #{lenet_forward.1} parent=11 // pred_fallthru
        _
    $region12: #{lenet_forward.1} parent=5 // pred_fallthru
      _
    %p424 = scmp.lt.s32.totalorder %s21, 2
    // Predicated region
    $region69: #{lenet_forward.1} parent=5 // pred_check
      %p425 = pneg %p424
    $region70: #{lenet_forward.1} parent=5 // pred_check_branch
      %427 = sbr.rel (%p425) target = $region72
    $region71: #{lenet_forward.1} parent=5 // pred_region
      // Predicated region
      $region73: #{lenet_forward.1} parent=71 // pred_check
        %p428 = pneg %p41
      $region74: #{lenet_forward.1} parent=71 // pred_check_branch
        %430 = sbr.rel (%p428) target = $region76
      $region75: #{lenet_forward.1} parent=71 // pred_region
        %s431 = smul.u32 64, %s21
        %p432 = scmp.lt.s32.totalorder %s431, 127
        %s433 = scalar_select %p432, %s431, 127
        %s434 = smul.addr %s433, 4
        %s435 = scalar_lea.vmem %s0, %s434
        %s436 = smul.u32 64, %s21
      $region76: #{lenet_forward.1} parent=71 // pred_fallthru
        _
    $region72: #{lenet_forward.1} parent=5 // pred_fallthru
      _
    %p437 = scmp.le.s32.totalorder 1, %s21
    %p438 = scmp.lt.s32.totalorder %s21, 3
    %p439 = pnand %p437, %p438
    %p440 = pneg %p439
    // Predicated region
    $region77: #{lenet_forward.1} parent=5 // pred_check
      _
    $region78: #{lenet_forward.1} parent=5 // pred_check_branch
      %442 = sbr.rel (%p439) target = $region80
    $region79: #{lenet_forward.1} parent=5 // pred_region
      %s443 = ssub.s32 %s21, 1
      %s444 = smul.u32 64, %s26
      %p445 = scmp.lt.s32.totalorder %s444, 127
      %s446 = scalar_select %p445, %s444, 127
      %s447 = smul.addr %s446, 4
      %s448 = scalar_lea.vmem %s0, %s447
      %p449 = pneg %p47
      %p450 = pneg %p44
      %p451 = pneg %p68
      %p452 = pneg %p65
      %p453 = pneg %p89
      %p454 = pneg %p86
      %p455 = pneg %p110
      %p456 = pneg %p107
      %p457 = pneg %p131
      %p458 = pneg %p128
      %p459 = pneg %p152
      %p460 = pneg %p149
      %p461 = pneg %p173
      %p462 = pneg %p170
      %p463 = pneg %p194
      %p464 = pneg %p191
      %p465 = pneg %p215
      %p466 = pneg %p212
      %p467 = pneg %p236
      %p468 = pneg %p233
      %p469 = pneg %p257
      %p470 = pneg %p254
      %p471 = pneg %p278
      %p472 = pneg %p275
      %p473 = pneg %p299
      %p474 = pneg %p296
      %p475 = pneg %p320
      %p476 = pneg %p317
      %p477 = pneg %p341
      %p478 = pneg %p338
      %p479 = pneg %p367
      %p480 = pneg %p364
      %s481 = smul.u32 2, %s26
      %p482 = scmp.lt.s32.totalorder %s481, 3
      %s483 = scalar_select %p482, %s481, 3
      %s484 = smul.addr %s483, 8
      %s485 = scalar_lea.vmem %s15, %s484
      %s486 = smul.u32 64, %s26
      %p487 = scmp.lt.s32.totalorder %s486, 127
      %s488 = scalar_select %p487, %s486, 127
      %s489 = smul.addr %s488, 4
      %s490 = scalar_lea.vmem %s0, %s489
      %s491 = smul.u32 64, %s26
      %s492 = smul.u32 2, %s26
      %p493 = scmp.lt.s32.totalorder %s492, 3
      %s494 = scalar_select %p493, %s492, 3
      %s495 = smul.addr %s494, 8
      %s496 = scalar_lea.vmem %s15, %s495
      %s497 = smul.u32 2, %s26
      %v499 = vld [vmem:[%s490] sm:$0xf]
      %v500 = vld [vmem:[%s490 + $0x4] sm:$0xf]
      %v501 = vld [vmem:[%s490 + $0x8] sm:$0xf]
      %v502 = vld [vmem:[%s490 + $0xc] sm:$0xf]
      %v503 = vld [vmem:[%s490 + $0x10] sm:$0xf]
      %v504 = vld [vmem:[%s490 + $0x14] sm:$0xf]
      %v505 = vld [vmem:[%s490 + $0x18] sm:$0xf]
      %v506 = vld [vmem:[%s490 + $0x1c] sm:$0xf]
      %v507 = vld [vmem:[%s490 + $0x20] sm:$0xf]
      %v508 = vld [vmem:[%s490 + $0x24] sm:$0xf]
      %v509 = vld [vmem:[%s490 + $0x28] sm:$0xf]
      %v510 = vld [vmem:[%s490 + $0x2c] sm:$0xf]
      %v511 = vld [vmem:[%s490 + $0x30] sm:$0xf]
      %v512 = vld [vmem:[%s490 + $0x34] sm:$0xf]
      %v513 = vld [vmem:[%s490 + $0x38] sm:$0xf]
      %v514 = vld [vmem:[%s490 + $0x3c] sm:$0xf]
      %v515 = vld [vmem:[%s490 + $0x40] sm:$0xf]
      %v516 = vld [vmem:[%s490 + $0x44] sm:$0xf]
      %v517 = vld [vmem:[%s490 + $0x48] sm:$0xf]
      %v518 = vld [vmem:[%s490 + $0x4c] sm:$0xf]
      %v519 = vld [vmem:[%s490 + $0x50] sm:$0xf]
      %v520 = vld [vmem:[%s490 + $0x54] sm:$0xf]
      %v521 = vld [vmem:[%s490 + $0x58] sm:$0xf]
      %v522 = vld [vmem:[%s490 + $0x5c] sm:$0xf]
      %v523 = vld [vmem:[%s490 + $0x60] sm:$0xf]
      %v524 = vld [vmem:[%s490 + $0x64] sm:$0xf]
      %v525 = vld [vmem:[%s490 + $0x68] sm:$0xf]
      %v526 = vld [vmem:[%s490 + $0x6c] sm:$0xf]
      %v527 = vld [vmem:[%s490 + $0x70] sm:$0xf]
      %v528 = vld [vmem:[%s490 + $0x74] sm:$0xf]
      %v529 = vld [vmem:[%s490 + $0x78] sm:$0xf]
      %v530 = vld [vmem:[%s490 + $0x7c] sm:$0xf]
      %v531 = vld [vmem:[%s490 + $0x80] sm:$0xf]
      %v532 = vld [vmem:[%s490 + $0x84] sm:$0xf]
      %v533 = vld [vmem:[%s490 + $0x88] sm:$0xf]
      %v534 = vld [vmem:[%s490 + $0x8c] sm:$0xf]
      %v535 = vld [vmem:[%s490 + $0x90] sm:$0xf]
      %v536 = vld [vmem:[%s490 + $0x94] sm:$0xf]
      %v537 = vld [vmem:[%s490 + $0x98] sm:$0xf]
      %v538 = vld [vmem:[%s490 + $0x9c] sm:$0xf]
      %v539 = vld [vmem:[%s490 + $0xa0] sm:$0xf]
      %v540 = vld [vmem:[%s490 + $0xa4] sm:$0xf]
      %v541 = vld [vmem:[%s490 + $0xa8] sm:$0xf]
      %v542 = vld [vmem:[%s490 + $0xac] sm:$0xf]
      %v543 = vld [vmem:[%s490 + $0xb0] sm:$0xf]
      %v544 = vld [vmem:[%s490 + $0xb4] sm:$0xf]
      %v545 = vld [vmem:[%s490 + $0xb8] sm:$0xf]
      %v546 = vld [vmem:[%s490 + $0xbc] sm:$0xf]
      %v547 = vld [vmem:[%s490 + $0xc0] sm:$0xf]
      %v548 = vld [vmem:[%s490 + $0xc4] sm:$0xf]
      %v549 = vld [vmem:[%s490 + $0xc8] sm:$0xf]
      %v550 = vld [vmem:[%s490 + $0xcc] sm:$0xf]
      %v551 = vld [vmem:[%s490 + $0xd0] sm:$0xf]
      %v552 = vld [vmem:[%s490 + $0xd4] sm:$0xf]
      %v553 = vld [vmem:[%s490 + $0xd8] sm:$0xf]
      %v554 = vld [vmem:[%s490 + $0xdc] sm:$0xf]
      %v555 = vld [vmem:[%s490 + $0xe0] sm:$0xf]
      %v556 = vld [vmem:[%s490 + $0xe4] sm:$0xf]
      %v557 = vld [vmem:[%s490 + $0xe8] sm:$0xf]
      %v558 = vld [vmem:[%s490 + $0xec] sm:$0xf]
      %v559 = vld [vmem:[%s490 + $0xf0] sm:$0xf]
      %v560 = vld [vmem:[%s490 + $0xf4] sm:$0xf]
      %v561 = vld [vmem:[%s490 + $0xf8] sm:$0xf]
      %v562 = vld [vmem:[%s490 + $0xfc] sm:$0xf]
      %v563 = vld [vmem:[%s1] sm:$0xff]
      %v564 = vld [vmem:[%s1 + $0x8] sm:$0xff]
      %v565 = vld [vmem:[%s1 + $0x10] sm:$0xff]
      %v566 = vld [vmem:[%s1 + $0x18] sm:$0x33]
      %s567 = scalar_lea.vmem %s1, 32
      %v568 = vld [vmem:[%s567] sm:$0xff]
      %v569 = vld [vmem:[%s567 + $0x8] sm:$0xff]
      %v570 = vld [vmem:[%s567 + $0x10] sm:$0xff]
      %v571 = vld [vmem:[%s567 + $0x18] sm:$0x33]
      %v628 = vunpack.c.l.b16 %v501
      %v629 = vunpack.c.l.b16 %v502
      %v630 = vunpack.c.l.b16 %v503
      %v631 = vunpack.c.l.b16 %v504
      %v632 = vunpack.c.l.b16 %v505
      %v633 = vunpack.c.l.b16 %v506
      %v634 = vunpack.c.l.b16 %v507
      %v635 = vunpack.c.l.b16 %v508
      %v636 = vunpack.c.l.b16 %v509
      %v637 = vunpack.c.l.b16 %v510
      %v638 = vunpack.c.l.b16 %v511
      %v639 = vunpack.c.l.b16 %v512
      %v640 = vunpack.c.l.b16 %v513
      %v641 = vunpack.c.l.b16 %v514
      %v642 = vunpack.c.l.b16 %v515
      %v643 = vunpack.c.l.b16 %v516
      %v644 = vunpack.c.l.b16 %v517
      %v645 = vunpack.c.l.b16 %v518
      %v646 = vunpack.c.l.b16 %v519
      %v647 = vunpack.c.l.b16 %v520
      %v648 = vunpack.c.l.b16 %v521
      %v649 = vunpack.c.l.b16 %v522
      %v650 = vunpack.c.l.b16 %v523
      %v651 = vunpack.c.l.b16 %v524
      %v652 = vunpack.c.l.b16 %v525
      %v653 = vunpack.c.l.b16 %v526
      %v654 = vunpack.c.l.b16 %v527
      %v655 = vunpack.c.l.b16 %v528
      %v656 = vunpack.c.l.b16 %v529
      %v657 = vunpack.c.l.b16 %v530
      %v658 = vunpack.c.l.b16 %v531
      %v659 = vunpack.c.l.b16 %v532
      %v660 = vunpack.c.l.b16 %v533
      %v661 = vunpack.c.l.b16 %v534
      %v662 = vunpack.c.l.b16 %v535
      %v663 = vunpack.c.l.b16 %v536
      %v664 = vunpack.c.l.b16 %v537
      %v665 = vunpack.c.l.b16 %v538
      %v666 = vunpack.c.l.b16 %v539
      %v667 = vunpack.c.l.b16 %v540
      %v668 = vunpack.c.l.b16 %v541
      %v669 = vunpack.c.l.b16 %v542
      %v670 = vunpack.c.l.b16 %v543
      %v671 = vunpack.c.l.b16 %v544
      %v672 = vunpack.c.l.b16 %v545
      %v673 = vunpack.c.l.b16 %v546
      %v674 = vunpack.c.l.b16 %v547
      %v675 = vunpack.c.l.b16 %v548
      %v676 = vunpack.c.l.b16 %v549
      %v677 = vunpack.c.l.b16 %v550
      %v678 = vunpack.c.l.b16 %v551
      %v679 = vunpack.c.l.b16 %v552
      %v680 = vunpack.c.l.b16 %v553
      %v681 = vunpack.c.l.b16 %v554
      %v682 = vunpack.c.l.b16 %v555
      %v683 = vunpack.c.l.b16 %v556
      %v684 = vpack.c.b16 %v629, %v628
      %v685 = vpack.c.b16 %v631, %v630
      %v686 = vpack.c.b16 %v633, %v632
      %v687 = vpack.c.b16 %v635, %v634
      %v688 = vpack.c.b16 %v637, %v636
      %v689 = vpack.c.b16 %v639, %v638
      %v690 = vpack.c.b16 %v641, %v640
      %v691 = vpack.c.b16 %v643, %v642
      %v692 = vpack.c.b16 %v645, %v644
      %v693 = vpack.c.b16 %v647, %v646
      %v694 = vpack.c.b16 %v649, %v648
      %v695 = vpack.c.b16 %v651, %v650
      %v696 = vpack.c.b16 %v653, %v652
      %v697 = vpack.c.b16 %v655, %v654
      %v698 = vpack.c.b16 %v657, %v656
      %v699 = vpack.c.b16 %v659, %v658
      %v700 = vpack.c.b16 %v661, %v660
      %v701 = vpack.c.b16 %v663, %v662
      %v702 = vpack.c.b16 %v665, %v664
      %v703 = vpack.c.b16 %v667, %v666
      %v704 = vpack.c.b16 %v669, %v668
      %v705 = vpack.c.b16 %v671, %v670
      %v706 = vpack.c.b16 %v673, %v672
      %v707 = vpack.c.b16 %v675, %v674
      %v708 = vpack.c.b16 %v677, %v676
      %v709 = vpack.c.b16 %v679, %v678
      %v710 = vpack.c.b16 %v681, %v680
      %v711 = vpack.c.b16 %v683, %v682
      %v716 = vunpack.c.l.b16 %v568
      %v717 = vunpack.c.h.b16 %v568
      %v718 = vunpack.c.l.b16 %v569
      %v719 = vunpack.c.h.b16 %v569
      %v720 = vunpack.c.l.b16 %v570
      %v721 = vunpack.c.h.b16 %v570
      %v722 = vunpack.c.l.b16 %v571
      %v723 = vunpack.c.h.b16 %v571
      %v724 = vpack.c.b16 %v718, %v716
      %v725 = vpack.c.b16 %v719, %v717
      %v726 = vpack.c.b16 %v722, %v720
      %v727 = vpack.c.b16 %v723, %v721
      %vm730 = vcmask 228352
      %v732 = vsel %vm730, %v684, 0
      %v735 = vsel %vm730, %v685, 0
      %v738 = vsel %vm730, %v686, 0
      %v741 = vsel %vm730, %v687, 0
      %v744 = vsel %vm730, %v688, 0
      %v747 = vsel %vm730, %v689, 0
      %v750 = vsel %vm730, %v690, 0
      %v753 = vsel %vm730, %v691, 0
      %v756 = vsel %vm730, %v692, 0
      %v759 = vsel %vm730, %v693, 0
      %v762 = vsel %vm730, %v694, 0
      %v765 = vsel %vm730, %v695, 0
      %v768 = vsel %vm730, %v696, 0
      %v771 = vsel %vm730, %v697, 0
      %v774 = vsel %vm730, %v698, 0
      %v777 = vsel %vm730, %v699, 0
      %v780 = vsel %vm730, %v700, 0
      %v783 = vsel %vm730, %v701, 0
      %v786 = vsel %vm730, %v702, 0
      %v789 = vsel %vm730, %v703, 0
      %v792 = vsel %vm730, %v704, 0
      %v795 = vsel %vm730, %v705, 0
      %v798 = vsel %vm730, %v706, 0
      %v801 = vsel %vm730, %v707, 0
      %v804 = vsel %vm730, %v708, 0
      %v807 = vsel %vm730, %v709, 0
      %v810 = vsel %vm730, %v710, 0
      %v813 = vsel %vm730, %v711, 0
      %vm815 = vcmask 1045504
      %v817 = vsel %vm815, %v726, 0
      %v820 = vsel %vm815, %v727, 0
      %822 = vmatprep.subr.bf16.mxu0 %v725
      %823 = vmatpush1.bf16.msra.mxu0 %v724
      %824 = vmatprep.subr.bf16.mxu0 %v820
      %825 = vmatpush1.bf16.msra.mxu0 %v817
      %826 = vmatprep.subr.bf16.mxu0 0
      %827 = vmatpush1.bf16.msra.mxu0 0
      %828 = vmatprep.subr.bf16.mxu0 0
      %829 = vmatpush1.bf16.msra.mxu0 0
      %830 = vmatprep.subr.bf16.mxu0 0
      %831 = vmatpush1.bf16.msra.mxu0 0
      %832 = vmatprep.subr.bf16.mxu0 0
      %833 = vmatpush1.bf16.msra.mxu0 0
      %834 = vmatprep.subr.bf16.mxu0 0
      %835 = vmatpush1.bf16.msra.mxu0 0
      %836 = vmatprep.subr.bf16.mxu0 0
      %837 = vmatpush1.bf16.msra.mxu0 0
      %838 = vmatprep.subr.bf16.mxu0 0
      %839 = vmatpush1.bf16.msra.mxu0 0
      %840 = vmatprep.subr.bf16.mxu0 0
      %841 = vmatpush1.bf16.msra.mxu0 0
      %842 = vmatprep.subr.bf16.mxu0 0
      %843 = vmatpush1.bf16.msra.mxu0 0
      %844 = vmatprep.subr.bf16.mxu0 0
      %845 = vmatpush1.bf16.msra.mxu0 0
      %846 = vmatprep.subr.bf16.mxu0 0
      %847 = vmatpush1.bf16.msra.mxu0 0
      %848 = vmatprep.subr.bf16.mxu0 0
      %849 = vmatpush1.bf16.msra.mxu0 0
      %850 = vmatprep.subr.bf16.mxu0 0
      %851 = vmatpush1.bf16.msra.mxu0 0
      %852 = vmatprep.subr.bf16.mxu0 0
      %853 = vmatpush1.bf16.msra.mxu0 0
      %854 = vmatprep.mubr.bf16.mxu0 0
      %855 = vmatmul.mubr.bf16.gmra.mrb[0].mxu0 %v732
      %v856 = vpop.f32.mrb[0].mxu0
      %v857 = vadd.f32 0.0, %v856
      %v858 = vpop.f32.mrb[0].mxu0
      %v859 = vadd.f32 0.0, %v858
      %v860 = vpop.f32.mrb[0].mxu0
      %v861 = vadd.f32 0.0, %v860
      %v862 = vpop.f32.mrb[0].mxu0
      %v863 = vadd.f32 0.0, %v862
      %864 = vmatprep.mubr.bf16.mxu0 0
      %865 = vmatmul.mubr.bf16.gmra.mrb[0].mxu0 %v735
      %v866 = vpop.f32.mrb[0].mxu0
      %v867 = vadd.f32 0.0, %v866
      %v868 = vpop.f32.mrb[0].mxu0
      %v869 = vadd.f32 0.0, %v868
      %v870 = vpop.f32.mrb[0].mxu0
      %v871 = vadd.f32 0.0, %v870
      %v872 = vpop.f32.mrb[0].mxu0
      %v873 = vadd.f32 0.0, %v872
      %874 = vmatprep.mubr.bf16.mxu0 0
      %875 = vmatmul.mubr.bf16.gmra.mrb[0].mxu0 %v738
      %v876 = vpop.f32.mrb[0].mxu0
      %v877 = vadd.f32 0.0, %v876
      %v878 = vpop.f32.mrb[0].mxu0
      %v879 = vadd.f32 0.0, %v878
      %v880 = vpop.f32.mrb[0].mxu0
      %v881 = vadd.f32 0.0, %v880
      %v882 = vpop.f32.mrb[0].mxu0
      %v883 = vadd.f32 0.0, %v882
      %884 = vmatprep.mubr.bf16.mxu0 0
      %885 = vmatmul.mubr.bf16.gmra.mrb[0].mxu0 %v741
      %v886 = vpop.f32.mrb[0].mxu0
      %v887 = vadd.f32 0.0, %v886
      %v888 = vpop.f32.mrb[0].mxu0
      %v889 = vadd.f32 0.0, %v888
      %v890 = vpop.f32.mrb[0].mxu0
      %v891 = vadd.f32 0.0, %v890
      %v892 = vpop.f32.mrb[0].mxu0
      %v893 = vadd.f32 0.0, %v892
      %894 = vmatprep.mubr.bf16.mxu0 0
      %895 = vmatmul.mubr.bf16.gmra.mrb[0].mxu0 %v744
      %v896 = vpop.f32.mrb[0].mxu0
      %v897 = vadd.f32 0.0, %v896
      %v898 = vpop.f32.mrb[0].mxu0
      %v899 = vadd.f32 0.0, %v898
      %v900 = vpop.f32.mrb[0].mxu0
      %v901 = vadd.f32 0.0, %v900
      %v902 = vpop.f32.mrb[0].mxu0
      %v903 = vadd.f32 0.0, %v902
      %904 = vmatprep.mubr.bf16.mxu0 0
      %905 = vmatmul.mubr.bf16.gmra.mrb[0].mxu0 %v747
      %v906 = vpop.f32.mrb[0].mxu0
      %v907 = vadd.f32 0.0, %v906
      %v908 = vpop.f32.mrb[0].mxu0
      %v909 = vadd.f32 0.0, %v908
      %v910 = vpop.f32.mrb[0].mxu0
      %v911 = vadd.f32 0.0, %v910
      %v912 = vpop.f32.mrb[0].mxu0
      %v913 = vadd.f32 0.0, %v912
      %914 = vmatprep.mubr.bf16.mxu0 0
      %915 = vmatmul.mubr.bf16.gmra.mrb[0].mxu0 %v750
      %v916 = vpop.f32.mrb[0].mxu0
      %v917 = vadd.f32 0.0, %v916
      %v918 = vpop.f32.mrb[0].mxu0
      %v919 = vadd.f32 0.0, %v918
      %v920 = vpop.f32.mrb[0].mxu0
      %v921 = vadd.f32 0.0, %v920
      %v922 = vpop.f32.mrb[0].mxu0
      %v923 = vadd.f32 0.0, %v922
      %924 = vmatprep.mubr.bf16.mxu0 0
      %925 = vmatmul.mubr.bf16.gmra.mrb[0].mxu0 %v753
      %v926 = vpop.f32.mrb[0].mxu0
      %v927 = vadd.f32 0.0, %v926
      %v928 = vpop.f32.mrb[0].mxu0
      %v929 = vadd.f32 0.0, %v928
      %v930 = vpop.f32.mrb[0].mxu0
      %v931 = vadd.f32 0.0, %v930
      %v932 = vpop.f32.mrb[0].mxu0
      %v933 = vadd.f32 0.0, %v932
      %934 = vmatprep.mubr.bf16.mxu0 0
      %935 = vmatmul.mubr.bf16.gmra.mrb[0].mxu0 %v756
      %v936 = vpop.f32.mrb[0].mxu0
      %v937 = vadd.f32 0.0, %v936
      %v938 = vpop.f32.mrb[0].mxu0
      %v939 = vadd.f32 0.0, %v938
      %v940 = vpop.f32.mrb[0].mxu0
      %v941 = vadd.f32 0.0, %v940
      %v942 = vpop.f32.mrb[0].mxu0
      %v943 = vadd.f32 0.0, %v942
      %944 = vmatprep.mubr.bf16.mxu0 0
      %945 = vmatmul.mubr.bf16.gmra.mrb[0].mxu0 %v759
      %v946 = vpop.f32.mrb[0].mxu0
      %v947 = vadd.f32 0.0, %v946
      %v948 = vpop.f32.mrb[0].mxu0
      %v949 = vadd.f32 0.0, %v948
      %v950 = vpop.f32.mrb[0].mxu0
      %v951 = vadd.f32 0.0, %v950
      %v952 = vpop.f32.mrb[0].mxu0
      %v953 = vadd.f32 0.0, %v952
      %954 = vmatprep.mubr.bf16.mxu0 0
      %955 = vmatmul.mubr.bf16.gmra.mrb[0].mxu0 %v762
      %v956 = vpop.f32.mrb[0].mxu0
      %v957 = vadd.f32 0.0, %v956
      %v958 = vpop.f32.mrb[0].mxu0
      %v959 = vadd.f32 0.0, %v958
      %v960 = vpop.f32.mrb[0].mxu0
      %v961 = vadd.f32 0.0, %v960
      %v962 = vpop.f32.mrb[0].mxu0
      %v963 = vadd.f32 0.0, %v962
      %964 = vmatprep.mubr.bf16.mxu0 0
      %965 = vmatmul.mubr.bf16.gmra.mrb[0].mxu0 %v765
      %v966 = vpop.f32.mrb[0].mxu0
      %v967 = vadd.f32 0.0, %v966
      %v968 = vpop.f32.mrb[0].mxu0
      %v969 = vadd.f32 0.0, %v968
      %v970 = vpop.f32.mrb[0].mxu0
      %v971 = vadd.f32 0.0, %v970
      %v972 = vpop.f32.mrb[0].mxu0
      %v973 = vadd.f32 0.0, %v972
      %974 = vmatprep.mubr.bf16.mxu0 0
      %975 = vmatmul.mubr.bf16.gmra.mrb[0].mxu0 %v768
      %v976 = vpop.f32.mrb[0].mxu0
      %v977 = vadd.f32 0.0, %v976
      %v978 = vpop.f32.mrb[0].mxu0
      %v979 = vadd.f32 0.0, %v978
      %v980 = vpop.f32.mrb[0].mxu0
      %v981 = vadd.f32 0.0, %v980
      %v982 = vpop.f32.mrb[0].mxu0
      %v983 = vadd.f32 0.0, %v982
      %984 = vmatprep.mubr.bf16.mxu0 0
      %985 = vmatmul.mubr.bf16.gmra.mrb[0].mxu0 %v771
      %v986 = vpop.f32.mrb[0].mxu0
      %v987 = vadd.f32 0.0, %v986
      %v988 = vpop.f32.mrb[0].mxu0
      %v989 = vadd.f32 0.0, %v988
      %v990 = vpop.f32.mrb[0].mxu0
      %v991 = vadd.f32 0.0, %v990
      %v992 = vpop.f32.mrb[0].mxu0
      %v993 = vadd.f32 0.0, %v992
      %994 = vmatprep.mubr.bf16.mxu0 0
      %995 = vmatmul.mubr.bf16.gmra.mrb[0].mxu0 %v774
      %v996 = vpop.f32.mrb[0].mxu0
      %v997 = vadd.f32 0.0, %v996
      %v998 = vpop.f32.mrb[0].mxu0
      %v999 = vadd.f32 0.0, %v998
      %v1000 = vpop.f32.mrb[0].mxu0
      %v1001 = vadd.f32 0.0, %v1000
      %v1002 = vpop.f32.mrb[0].mxu0
      %v1003 = vadd.f32 0.0, %v1002
      %1004 = vmatprep.mubr.bf16.mxu0 0
      %1005 = vmatmul.mubr.bf16.gmra.mrb[0].mxu0 %v777
      %v1006 = vpop.f32.mrb[0].mxu0
      %v1007 = vadd.f32 0.0, %v1006
      %v1008 = vpop.f32.mrb[0].mxu0
      %v1009 = vadd.f32 0.0, %v1008
      %v1010 = vpop.f32.mrb[0].mxu0
      %v1011 = vadd.f32 0.0, %v1010
      %v1012 = vpop.f32.mrb[0].mxu0
      %v1013 = vadd.f32 0.0, %v1012
      %1014 = vmatprep.mubr.bf16.mxu0 0
      %1015 = vmatmul.mubr.bf16.gmra.mrb[0].mxu0 %v780
      %v1016 = vpop.f32.mrb[0].mxu0
      %v1017 = vadd.f32 0.0, %v1016
      %v1018 = vpop.f32.mrb[0].mxu0
      %v1019 = vadd.f32 0.0, %v1018
      %v1020 = vpop.f32.mrb[0].mxu0
      %v1021 = vadd.f32 0.0, %v1020
      %v1022 = vpop.f32.mrb[0].mxu0
      %v1023 = vadd.f32 0.0, %v1022
      %1024 = vmatprep.mubr.bf16.mxu0 0
      %1025 = vmatmul.mubr.bf16.gmra.mrb[0].mxu0 %v783
      %v1026 = vpop.f32.mrb[0].mxu0
      %v1027 = vadd.f32 0.0, %v1026
      %v1028 = vpop.f32.mrb[0].mxu0
      %v1029 = vadd.f32 0.0, %v1028
      %v1030 = vpop.f32.mrb[0].mxu0
      %v1031 = vadd.f32 0.0, %v1030
      %v1032 = vpop.f32.mrb[0].mxu0
      %v1033 = vadd.f32 0.0, %v1032
      %1034 = vmatprep.mubr.bf16.mxu0 0
      %1035 = vmatmul.mubr.bf16.gmra.mrb[0].mxu0 %v786
      %v1036 = vpop.f32.mrb[0].mxu0
      %v1037 = vadd.f32 0.0, %v1036
      %v1038 = vpop.f32.mrb[0].mxu0
      %v1039 = vadd.f32 0.0, %v1038
      %v1040 = vpop.f32.mrb[0].mxu0
      %v1041 = vadd.f32 0.0, %v1040
      %v1042 = vpop.f32.mrb[0].mxu0
      %v1043 = vadd.f32 0.0, %v1042
      %1044 = vmatprep.mubr.bf16.mxu0 0
      %1045 = vmatmul.mubr.bf16.gmra.mrb[0].mxu0 %v789
      %v1046 = vpop.f32.mrb[0].mxu0
      %v1047 = vadd.f32 0.0, %v1046
      %v1048 = vpop.f32.mrb[0].mxu0
      %v1049 = vadd.f32 0.0, %v1048
      %v1050 = vpop.f32.mrb[0].mxu0
      %v1051 = vadd.f32 0.0, %v1050
      %v1052 = vpop.f32.mrb[0].mxu0
      %v1053 = vadd.f32 0.0, %v1052
      %1054 = vmatprep.mubr.bf16.mxu0 0
      %1055 = vmatmul.mubr.bf16.gmra.mrb[0].mxu0 %v792
      %v1056 = vpop.f32.mrb[0].mxu0
      %v1057 = vadd.f32 0.0, %v1056
      %v1058 = vpop.f32.mrb[0].mxu0
      %v1059 = vadd.f32 0.0, %v1058
      %v1060 = vpop.f32.mrb[0].mxu0
      %v1061 = vadd.f32 0.0, %v1060
      %v1062 = vpop.f32.mrb[0].mxu0
      %v1063 = vadd.f32 0.0, %v1062
      %1064 = vmatprep.mubr.bf16.mxu0 0
      %1065 = vmatmul.mubr.bf16.gmra.mrb[0].mxu0 %v795
      %v1066 = vpop.f32.mrb[0].mxu0
      %v1067 = vadd.f32 0.0, %v1066
      %v1068 = vpop.f32.mrb[0].mxu0
      %v1069 = vadd.f32 0.0, %v1068
      %v1070 = vpop.f32.mrb[0].mxu0
      %v1071 = vadd.f32 0.0, %v1070
      %v1072 = vpop.f32.mrb[0].mxu0
      %v1073 = vadd.f32 0.0, %v1072
      %1074 = vmatprep.mubr.bf16.mxu0 0
      %1075 = vmatmul.mubr.bf16.gmra.mrb[0].mxu0 %v798
      %v1076 = vpop.f32.mrb[0].mxu0
      %v1077 = vadd.f32 0.0, %v1076
      %v1078 = vpop.f32.mrb[0].mxu0
      %v1079 = vadd.f32 0.0, %v1078
      %v1080 = vpop.f32.mrb[0].mxu0
      %v1081 = vadd.f32 0.0, %v1080
      %v1082 = vpop.f32.mrb[0].mxu0
      %v1083 = vadd.f32 0.0, %v1082
      %1084 = vmatprep.mubr.bf16.mxu0 0
      %1085 = vmatmul.mubr.bf16.gmra.mrb[0].mxu0 %v801
      %v1086 = vpop.f32.mrb[0].mxu0
      %v1087 = vadd.f32 0.0, %v1086
      %v1088 = vpop.f32.mrb[0].mxu0
      %v1089 = vadd.f32 0.0, %v1088
      %v1090 = vpop.f32.mrb[0].mxu0
      %v1091 = vadd.f32 0.0, %v1090
      %v1092 = vpop.f32.mrb[0].mxu0
      %v1093 = vadd.f32 0.0, %v1092
      %1094 = vmatprep.mubr.bf16.mxu0 0
      %1095 = vmatmul.mubr.bf16.gmra.mrb[0].mxu0 %v804
      %v1096 = vpop.f32.mrb[0].mxu0
      %v1097 = vadd.f32 0.0, %v1096
      %v1098 = vpop.f32.mrb[0].mxu0
      %v1099 = vadd.f32 0.0, %v1098
      %v1100 = vpop.f32.mrb[0].mxu0
      %v1101 = vadd.f32 0.0, %v1100
      %v1102 = vpop.f32.mrb[0].mxu0
      %v1103 = vadd.f32 0.0, %v1102
      %1104 = vmatprep.mubr.bf16.mxu0 0
      %1105 = vmatmul.mubr.bf16.gmra.mrb[0].mxu0 %v807
      %v1106 = vpop.f32.mrb[0].mxu0
      %v1107 = vadd.f32 0.0, %v1106
      %v1108 = vpop.f32.mrb[0].mxu0
      %v1109 = vadd.f32 0.0, %v1108
      %v1110 = vpop.f32.mrb[0].mxu0
      %v1111 = vadd.f32 0.0, %v1110
      %v1112 = vpop.f32.mrb[0].mxu0
      %v1113 = vadd.f32 0.0, %v1112
      %1114 = vmatprep.mubr.bf16.mxu0 0
      %1115 = vmatmul.mubr.bf16.gmra.mrb[0].mxu0 %v810
      %v1116 = vpop.f32.mrb[0].mxu0
      %v1117 = vadd.f32 0.0, %v1116
      %v1118 = vpop.f32.mrb[0].mxu0
      %v1119 = vadd.f32 0.0, %v1118
      %v1120 = vpop.f32.mrb[0].mxu0
      %v1121 = vadd.f32 0.0, %v1120
      %v1122 = vpop.f32.mrb[0].mxu0
      %v1123 = vadd.f32 0.0, %v1122
      %1124 = vmatprep.mubr.bf16.mxu0 0
      %1125 = vmatmul.mubr.bf16.gmra.mrb[0].mxu0 %v813
      %v1126 = vpop.f32.mrb[0].mxu0
      %v1127 = vadd.f32 0.0, %v1126
      %v1128 = vpop.f32.mrb[0].mxu0
      %v1129 = vadd.f32 0.0, %v1128
      %v1130 = vpop.f32.mrb[0].mxu0
      %v1131 = vadd.f32 0.0, %v1130
      %v1132 = vpop.f32.mrb[0].mxu0
      %v1133 = vadd.f32 0.0, %v1132
      %1134 = vdwg.mxu0
      %v1137 = vunpack.c.l.b16 %v499
      %v1138 = vunpack.c.l.b16 %v500
      %v1139 = vpack.c.b16 %v1138, %v1137
      %v1144 = vunpack.c.l.b16 %v563
      %v1145 = vunpack.c.h.b16 %v563
      %v1146 = vunpack.c.l.b16 %v564
      %v1147 = vunpack.c.h.b16 %v564
      %v1148 = vunpack.c.l.b16 %v565
      %v1149 = vunpack.c.h.b16 %v565
      %v1150 = vunpack.c.l.b16 %v566
      %v1151 = vunpack.c.h.b16 %v566
      %v1152 = vpack.c.b16 %v1146, %v1144
      %v1153 = vpack.c.b16 %v1147, %v1145
      %v1154 = vpack.c.b16 %v1150, %v1148
      %v1155 = vpack.c.b16 %v1151, %v1149
      %v1159 = vsel %vm730, %v1139, 0
      %v1162 = vsel %vm815, %v1154, 0
      %v1165 = vsel %vm815, %v1155, 0
      %1167 = vmatprep.subr.bf16.mxu0 %v1153
      %1168 = vmatpush1.bf16.msra.mxu0 %v1152
      %1169 = vmatprep.subr.bf16.mxu0 %v1165
      %1170 = vmatpush1.bf16.msra.mxu0 %v1162
      %1171 = vmatprep.subr.bf16.mxu0 0
      %1172 = vmatpush1.bf16.msra.mxu0 0
      %1173 = vmatprep.subr.bf16.mxu0 0
      %1174 = vmatpush1.bf16.msra.mxu0 0
      %1175 = vmatprep.subr.bf16.mxu0 0
      %1176 = vmatpush1.bf16.msra.mxu0 0
      %1177 = vmatprep.subr.bf16.mxu0 0
      %1178 = vmatpush1.bf16.msra.mxu0 0
      %1179 = vmatprep.subr.bf16.mxu0 0
      %1180 = vmatpush1.bf16.msra.mxu0 0
      %1181 = vmatprep.subr.bf16.mxu0 0
      %1182 = vmatpush1.bf16.msra.mxu0 0
      %1183 = vmatprep.subr.bf16.mxu0 0
      %1184 = vmatpush1.bf16.msra.mxu0 0
      %1185 = vmatprep.subr.bf16.mxu0 0
      %1186 = vmatpush1.bf16.msra.mxu0 0
      %1187 = vmatprep.subr.bf16.mxu0 0
      %1188 = vmatpush1.bf16.msra.mxu0 0
      %1189 = vmatprep.subr.bf16.mxu0 0
      %1190 = vmatpush1.bf16.msra.mxu0 0
      %1191 = vmatprep.subr.bf16.mxu0 0
      %1192 = vmatpush1.bf16.msra.mxu0 0
      %1193 = vmatprep.subr.bf16.mxu0 0
      %1194 = vmatpush1.bf16.msra.mxu0 0
      %1195 = vmatprep.subr.bf16.mxu0 0
      %1196 = vmatpush1.bf16.msra.mxu0 0
      %1197 = vmatprep.subr.bf16.mxu0 0
      %1198 = vmatpush1.bf16.msra.mxu0 0
      %1199 = vmatprep.mubr.bf16.mxu0 0
      %1200 = vmatmul.mubr.bf16.gmra.mrb[0].mxu0 %v1159
      %v1201 = vpop.f32.mrb[0].mxu0
      %v1202 = vadd.f32 %v857, %v1201
      %v1203 = vpop.f32.mrb[0].mxu0
      %v1204 = vadd.f32 %v859, %v1203
      %v1205 = vpop.f32.mrb[0].mxu0
      %v1206 = vadd.f32 %v861, %v1205
      %v1207 = vpop.f32.mrb[0].mxu0
      %v1208 = vadd.f32 %v863, %v1207
      %1209 = vmatprep.mubr.bf16.mxu0 0
      %1210 = vmatmul.mubr.bf16.gmra.mrb[0].mxu0 %v732
      %v1211 = vpop.f32.mrb[0].mxu0
      %v1212 = vadd.f32 %v867, %v1211
      %v1213 = vpop.f32.mrb[0].mxu0
      %v1214 = vadd.f32 %v869, %v1213
      %v1215 = vpop.f32.mrb[0].mxu0
      %v1216 = vadd.f32 %v871, %v1215
      %v1217 = vpop.f32.mrb[0].mxu0
      %v1218 = vadd.f32 %v873, %v1217
      %1219 = vmatprep.mubr.bf16.mxu0 0
      %1220 = vmatmul.mubr.bf16.gmra.mrb[0].mxu0 %v735
      %v1221 = vpop.f32.mrb[0].mxu0
      %v1222 = vadd.f32 %v877, %v1221
      %v1223 = vpop.f32.mrb[0].mxu0
      %v1224 = vadd.f32 %v879, %v1223
      %v1225 = vpop.f32.mrb[0].mxu0
      %v1226 = vadd.f32 %v881, %v1225
      %v1227 = vpop.f32.mrb[0].mxu0
      %v1228 = vadd.f32 %v883, %v1227
      %1229 = vmatprep.mubr.bf16.mxu0 0
      %1230 = vmatmul.mubr.bf16.gmra.mrb[0].mxu0 %v738
      %v1231 = vpop.f32.mrb[0].mxu0
      %v1232 = vadd.f32 %v887, %v1231
      %v1233 = vpop.f32.mrb[0].mxu0
      %v1234 = vadd.f32 %v889, %v1233
      %v1235 = vpop.f32.mrb[0].mxu0
      %v1236 = vadd.f32 %v891, %v1235
      %v1237 = vpop.f32.mrb[0].mxu0
      %v1238 = vadd.f32 %v893, %v1237
      %1239 = vmatprep.mubr.bf16.mxu0 0
      %1240 = vmatmul.mubr.bf16.gmra.mrb[0].mxu0 %v741
      %v1241 = vpop.f32.mrb[0].mxu0
      %v1242 = vadd.f32 %v897, %v1241
      %v1243 = vpop.f32.mrb[0].mxu0
      %v1244 = vadd.f32 %v899, %v1243
      %v1245 = vpop.f32.mrb[0].mxu0
      %v1246 = vadd.f32 %v901, %v1245
      %v1247 = vpop.f32.mrb[0].mxu0
      %v1248 = vadd.f32 %v903, %v1247
      %1249 = vmatprep.mubr.bf16.mxu0 0
      %1250 = vmatmul.mubr.bf16.gmra.mrb[0].mxu0 %v744
      %v1251 = vpop.f32.mrb[0].mxu0
      %v1252 = vadd.f32 %v907, %v1251
      %v1253 = vpop.f32.mrb[0].mxu0
      %v1254 = vadd.f32 %v909, %v1253
      %v1255 = vpop.f32.mrb[0].mxu0
      %v1256 = vadd.f32 %v911, %v1255
      %v1257 = vpop.f32.mrb[0].mxu0
      %v1258 = vadd.f32 %v913, %v1257
      %1259 = vmatprep.mubr.bf16.mxu0 0
      %1260 = vmatmul.mubr.bf16.gmra.mrb[0].mxu0 %v747
      %v1261 = vpop.f32.mrb[0].mxu0
      %v1262 = vadd.f32 %v917, %v1261
      %v1263 = vpop.f32.mrb[0].mxu0
      %v1264 = vadd.f32 %v919, %v1263
      %v1265 = vpop.f32.mrb[0].mxu0
      %v1266 = vadd.f32 %v921, %v1265
      %v1267 = vpop.f32.mrb[0].mxu0
      %v1268 = vadd.f32 %v923, %v1267
      %1269 = vmatprep.mubr.bf16.mxu0 0
      %1270 = vmatmul.mubr.bf16.gmra.mrb[0].mxu0 %v750
      %v1271 = vpop.f32.mrb[0].mxu0
      %v1272 = vadd.f32 %v927, %v1271
      %v1273 = vpop.f32.mrb[0].mxu0
      %v1274 = vadd.f32 %v929, %v1273
      %v1275 = vpop.f32.mrb[0].mxu0
      %v1276 = vadd.f32 %v931, %v1275
      %v1277 = vpop.f32.mrb[0].mxu0
      %v1278 = vadd.f32 %v933, %v1277
      %1279 = vmatprep.mubr.bf16.mxu0 0
      %1280 = vmatmul.mubr.bf16.gmra.mrb[0].mxu0 %v753
      %v1281 = vpop.f32.mrb[0].mxu0
      %v1282 = vadd.f32 %v937, %v1281
      %v1283 = vpop.f32.mrb[0].mxu0
      %v1284 = vadd.f32 %v939, %v1283
      %v1285 = vpop.f32.mrb[0].mxu0
      %v1286 = vadd.f32 %v941, %v1285
      %v1287 = vpop.f32.mrb[0].mxu0
      %v1288 = vadd.f32 %v943, %v1287
      %1289 = vmatprep.mubr.bf16.mxu0 0
      %1290 = vmatmul.mubr.bf16.gmra.mrb[0].mxu0 %v756
      %v1291 = vpop.f32.mrb[0].mxu0
      %v1292 = vadd.f32 %v947, %v1291
      %v1293 = vpop.f32.mrb[0].mxu0
      %v1294 = vadd.f32 %v949, %v1293
      %v1295 = vpop.f32.mrb[0].mxu0
      %v1296 = vadd.f32 %v951, %v1295
      %v1297 = vpop.f32.mrb[0].mxu0
      %v1298 = vadd.f32 %v953, %v1297
      %1299 = vmatprep.mubr.bf16.mxu0 0
      %1300 = vmatmul.mubr.bf16.gmra.mrb[0].mxu0 %v759
      %v1301 = vpop.f32.mrb[0].mxu0
      %v1302 = vadd.f32 %v957, %v1301
      %v1303 = vpop.f32.mrb[0].mxu0
      %v1304 = vadd.f32 %v959, %v1303
      %v1305 = vpop.f32.mrb[0].mxu0
      %v1306 = vadd.f32 %v961, %v1305
      %v1307 = vpop.f32.mrb[0].mxu0
      %v1308 = vadd.f32 %v963, %v1307
      %1309 = vmatprep.mubr.bf16.mxu0 0
      %1310 = vmatmul.mubr.bf16.gmra.mrb[0].mxu0 %v762
      %v1311 = vpop.f32.mrb[0].mxu0
      %v1312 = vadd.f32 %v967, %v1311
      %v1313 = vpop.f32.mrb[0].mxu0
      %v1314 = vadd.f32 %v969, %v1313
      %v1315 = vpop.f32.mrb[0].mxu0
      %v1316 = vadd.f32 %v971, %v1315
      %v1317 = vpop.f32.mrb[0].mxu0
      %v1318 = vadd.f32 %v973, %v1317
      %1319 = vmatprep.mubr.bf16.mxu0 0
      %1320 = vmatmul.mubr.bf16.gmra.mrb[0].mxu0 %v765
      %v1321 = vpop.f32.mrb[0].mxu0
      %v1322 = vadd.f32 %v977, %v1321
      %v1323 = vpop.f32.mrb[0].mxu0
      %v1324 = vadd.f32 %v979, %v1323
      %v1325 = vpop.f32.mrb[0].mxu0
      %v1326 = vadd.f32 %v981, %v1325
      %v1327 = vpop.f32.mrb[0].mxu0
      %v1328 = vadd.f32 %v983, %v1327
      %1329 = vmatprep.mubr.bf16.mxu0 0
      %1330 = vmatmul.mubr.bf16.gmra.mrb[0].mxu0 %v768
      %v1331 = vpop.f32.mrb[0].mxu0
      %v1332 = vadd.f32 %v987, %v1331
      %v1333 = vpop.f32.mrb[0].mxu0
      %v1334 = vadd.f32 %v989, %v1333
      %v1335 = vpop.f32.mrb[0].mxu0
      %v1336 = vadd.f32 %v991, %v1335
      %v1337 = vpop.f32.mrb[0].mxu0
      %v1338 = vadd.f32 %v993, %v1337
      %1339 = vmatprep.mubr.bf16.mxu0 0
      %1340 = vmatmul.mubr.bf16.gmra.mrb[0].mxu0 %v771
      %v1341 = vpop.f32.mrb[0].mxu0
      %v1342 = vadd.f32 %v997, %v1341
      %v1343 = vpop.f32.mrb[0].mxu0
      %v1344 = vadd.f32 %v999, %v1343
      %v1345 = vpop.f32.mrb[0].mxu0
      %v1346 = vadd.f32 %v1001, %v1345
      %v1347 = vpop.f32.mrb[0].mxu0
      %v1348 = vadd.f32 %v1003, %v1347
      %1349 = vmatprep.mubr.bf16.mxu0 0
      %1350 = vmatmul.mubr.bf16.gmra.mrb[0].mxu0 %v774
      %v1351 = vpop.f32.mrb[0].mxu0
      %v1352 = vadd.f32 %v1007, %v1351
      %v1353 = vpop.f32.mrb[0].mxu0
      %v1354 = vadd.f32 %v1009, %v1353
      %v1355 = vpop.f32.mrb[0].mxu0
      %v1356 = vadd.f32 %v1011, %v1355
      %v1357 = vpop.f32.mrb[0].mxu0
      %v1358 = vadd.f32 %v1013, %v1357
      %1359 = vmatprep.mubr.bf16.mxu0 0
      %1360 = vmatmul.mubr.bf16.gmra.mrb[0].mxu0 %v777
      %v1361 = vpop.f32.mrb[0].mxu0
      %v1362 = vadd.f32 %v1017, %v1361
      %v1363 = vpop.f32.mrb[0].mxu0
      %v1364 = vadd.f32 %v1019, %v1363
      %v1365 = vpop.f32.mrb[0].mxu0
      %v1366 = vadd.f32 %v1021, %v1365
      %v1367 = vpop.f32.mrb[0].mxu0
      %v1368 = vadd.f32 %v1023, %v1367
      %1369 = vmatprep.mubr.bf16.mxu0 0
      %1370 = vmatmul.mubr.bf16.gmra.mrb[0].mxu0 %v780
      %v1371 = vpop.f32.mrb[0].mxu0
      %v1372 = vadd.f32 %v1027, %v1371
      %v1373 = vpop.f32.mrb[0].mxu0
      %v1374 = vadd.f32 %v1029, %v1373
      %v1375 = vpop.f32.mrb[0].mxu0
      %v1376 = vadd.f32 %v1031, %v1375
      %v1377 = vpop.f32.mrb[0].mxu0
      %v1378 = vadd.f32 %v1033, %v1377
      %1379 = vmatprep.mubr.bf16.mxu0 0
      %1380 = vmatmul.mubr.bf16.gmra.mrb[0].mxu0 %v783
      %v1381 = vpop.f32.mrb[0].mxu0
      %v1382 = vadd.f32 %v1037, %v1381
      %v1383 = vpop.f32.mrb[0].mxu0
      %v1384 = vadd.f32 %v1039, %v1383
      %v1385 = vpop.f32.mrb[0].mxu0
      %v1386 = vadd.f32 %v1041, %v1385
      %v1387 = vpop.f32.mrb[0].mxu0
      %v1388 = vadd.f32 %v1043, %v1387
      %1389 = vmatprep.mubr.bf16.mxu0 0
      %1390 = vmatmul.mubr.bf16.gmra.mrb[0].mxu0 %v786
      %v1391 = vpop.f32.mrb[0].mxu0
      %v1392 = vadd.f32 %v1047, %v1391
      %v1393 = vpop.f32.mrb[0].mxu0
      %v1394 = vadd.f32 %v1049, %v1393
      %v1395 = vpop.f32.mrb[0].mxu0
      %v1396 = vadd.f32 %v1051, %v1395
      %v1397 = vpop.f32.mrb[0].mxu0
      %v1398 = vadd.f32 %v1053, %v1397
      %1399 = vmatprep.mubr.bf16.mxu0 0
      %1400 = vmatmul.mubr.bf16.gmra.mrb[0].mxu0 %v789
      %v1401 = vpop.f32.mrb[0].mxu0
      %v1402 = vadd.f32 %v1057, %v1401
      %v1403 = vpop.f32.mrb[0].mxu0
      %v1404 = vadd.f32 %v1059, %v1403
      %v1405 = vpop.f32.mrb[0].mxu0
      %v1406 = vadd.f32 %v1061, %v1405
      %v1407 = vpop.f32.mrb[0].mxu0
      %v1408 = vadd.f32 %v1063, %v1407
      %1409 = vmatprep.mubr.bf16.mxu0 0
      %1410 = vmatmul.mubr.bf16.gmra.mrb[0].mxu0 %v792
      %v1411 = vpop.f32.mrb[0].mxu0
      %v1412 = vadd.f32 %v1067, %v1411
      %v1413 = vpop.f32.mrb[0].mxu0
      %v1414 = vadd.f32 %v1069, %v1413
      %v1415 = vpop.f32.mrb[0].mxu0
      %v1416 = vadd.f32 %v1071, %v1415
      %v1417 = vpop.f32.mrb[0].mxu0
      %v1418 = vadd.f32 %v1073, %v1417
      %1419 = vmatprep.mubr.bf16.mxu0 0
      %1420 = vmatmul.mubr.bf16.gmra.mrb[0].mxu0 %v795
      %v1421 = vpop.f32.mrb[0].mxu0
      %v1422 = vadd.f32 %v1077, %v1421
      %v1423 = vpop.f32.mrb[0].mxu0
      %v1424 = vadd.f32 %v1079, %v1423
      %v1425 = vpop.f32.mrb[0].mxu0
      %v1426 = vadd.f32 %v1081, %v1425
      %v1427 = vpop.f32.mrb[0].mxu0
      %v1428 = vadd.f32 %v1083, %v1427
      %1429 = vmatprep.mubr.bf16.mxu0 0
      %1430 = vmatmul.mubr.bf16.gmra.mrb[0].mxu0 %v798
      %v1431 = vpop.f32.mrb[0].mxu0
      %v1432 = vadd.f32 %v1087, %v1431
      %v1433 = vpop.f32.mrb[0].mxu0
      %v1434 = vadd.f32 %v1089, %v1433
      %v1435 = vpop.f32.mrb[0].mxu0
      %v1436 = vadd.f32 %v1091, %v1435
      %v1437 = vpop.f32.mrb[0].mxu0
      %v1438 = vadd.f32 %v1093, %v1437
      %1439 = vmatprep.mubr.bf16.mxu0 0
      %1440 = vmatmul.mubr.bf16.gmra.mrb[0].mxu0 %v801
      %v1441 = vpop.f32.mrb[0].mxu0
      %v1442 = vadd.f32 %v1097, %v1441
      %v1443 = vpop.f32.mrb[0].mxu0
      %v1444 = vadd.f32 %v1099, %v1443
      %v1445 = vpop.f32.mrb[0].mxu0
      %v1446 = vadd.f32 %v1101, %v1445
      %v1447 = vpop.f32.mrb[0].mxu0
      %v1448 = vadd.f32 %v1103, %v1447
      %1449 = vmatprep.mubr.bf16.mxu0 0
      %1450 = vmatmul.mubr.bf16.gmra.mrb[0].mxu0 %v804
      %v1451 = vpop.f32.mrb[0].mxu0
      %v1452 = vadd.f32 %v1107, %v1451
      %v1453 = vpop.f32.mrb[0].mxu0
      %v1454 = vadd.f32 %v1109, %v1453
      %v1455 = vpop.f32.mrb[0].mxu0
      %v1456 = vadd.f32 %v1111, %v1455
      %v1457 = vpop.f32.mrb[0].mxu0
      %v1458 = vadd.f32 %v1113, %v1457
      %1459 = vmatprep.mubr.bf16.mxu0 0
      %1460 = vmatmul.mubr.bf16.gmra.mrb[0].mxu0 %v807
      %v1461 = vpop.f32.mrb[0].mxu0
      %v1462 = vadd.f32 %v1117, %v1461
      %v1463 = vpop.f32.mrb[0].mxu0
      %v1464 = vadd.f32 %v1119, %v1463
      %v1465 = vpop.f32.mrb[0].mxu0
      %v1466 = vadd.f32 %v1121, %v1465
      %v1467 = vpop.f32.mrb[0].mxu0
      %v1468 = vadd.f32 %v1123, %v1467
      %1469 = vmatprep.mubr.bf16.mxu0 0
      %1470 = vmatmul.mubr.bf16.gmra.mrb[0].mxu0 %v810
      %v1471 = vpop.f32.mrb[0].mxu0
      %v1472 = vadd.f32 %v1127, %v1471
      %v1473 = vpop.f32.mrb[0].mxu0
      %v1474 = vadd.f32 %v1129, %v1473
      %v1475 = vpop.f32.mrb[0].mxu0
      %v1476 = vadd.f32 %v1131, %v1475
      %v1477 = vpop.f32.mrb[0].mxu0
      %v1478 = vadd.f32 %v1133, %v1477
      %1479 = vdwg.mxu0
      %s1480 = scalar_lea.vmem %s1, 64
      %v1481 = vld [vmem:[%s1480] sm:$0xff]
      %v1482 = vld [vmem:[%s1480 + $0x8] sm:$0xff]
      %v1483 = vld [vmem:[%s1480 + $0x10] sm:$0xff]
      %v1484 = vld [vmem:[%s1480 + $0x18] sm:$0x33]
      %v1487 = vunpack.c.l.b16 %v557
      %v1488 = vunpack.c.l.b16 %v558
      %v1489 = vpack.c.b16 %v1488, %v1487
      %v1494 = vunpack.c.l.b16 %v1481
      %v1495 = vunpack.c.h.b16 %v1481
      %v1496 = vunpack.c.l.b16 %v1482
      %v1497 = vunpack.c.h.b16 %v1482
      %v1498 = vunpack.c.l.b16 %v1483
      %v1499 = vunpack.c.h.b16 %v1483
      %v1500 = vunpack.c.l.b16 %v1484
      %v1501 = vunpack.c.h.b16 %v1484
      %v1502 = vpack.c.b16 %v1496, %v1494
      %v1503 = vpack.c.b16 %v1497, %v1495
      %v1504 = vpack.c.b16 %v1500, %v1498
      %v1505 = vpack.c.b16 %v1501, %v1499
      %v1509 = vsel %vm730, %v1489, 0
      %v1512 = vsel %vm815, %v1504, 0
      %v1515 = vsel %vm815, %v1505, 0
      %1517 = vmatprep.subr.bf16.mxu0 %v1503
      %1518 = vmatpush1.bf16.msra.mxu0 %v1502
      %1519 = vmatprep.subr.bf16.mxu0 %v1515
      %1520 = vmatpush1.bf16.msra.mxu0 %v1512
      %1521 = vmatprep.subr.bf16.mxu0 0
      %1522 = vmatpush1.bf16.msra.mxu0 0
      %1523 = vmatprep.subr.bf16.mxu0 0
      %1524 = vmatpush1.bf16.msra.mxu0 0
      %1525 = vmatprep.subr.bf16.mxu0 0
      %1526 = vmatpush1.bf16.msra.mxu0 0
      %1527 = vmatprep.subr.bf16.mxu0 0
      %1528 = vmatpush1.bf16.msra.mxu0 0
      %1529 = vmatprep.subr.bf16.mxu0 0
      %1530 = vmatpush1.bf16.msra.mxu0 0
      %1531 = vmatprep.subr.bf16.mxu0 0
      %1532 = vmatpush1.bf16.msra.mxu0 0
      %1533 = vmatprep.subr.bf16.mxu0 0
      %1534 = vmatpush1.bf16.msra.mxu0 0
      %1535 = vmatprep.subr.bf16.mxu0 0
      %1536 = vmatpush1.bf16.msra.mxu0 0
      %1537 = vmatprep.subr.bf16.mxu0 0
      %1538 = vmatpush1.bf16.msra.mxu0 0
      %1539 = vmatprep.subr.bf16.mxu0 0
      %1540 = vmatpush1.bf16.msra.mxu0 0
      %1541 = vmatprep.subr.bf16.mxu0 0
      %1542 = vmatpush1.bf16.msra.mxu0 0
      %1543 = vmatprep.subr.bf16.mxu0 0
      %1544 = vmatpush1.bf16.msra.mxu0 0
      %1545 = vmatprep.subr.bf16.mxu0 0
      %1546 = vmatpush1.bf16.msra.mxu0 0
      %1547 = vmatprep.subr.bf16.mxu0 0
      %1548 = vmatpush1.bf16.msra.mxu0 0
      %1549 = vmatprep.mubr.bf16.mxu0 0
      %1550 = vmatmul.mubr.bf16.gmra.mrb[0].mxu0 %v735
      %v1551 = vpop.f32.mrb[0].mxu0
      %v1552 = vadd.f32 0.0, %v1551
      %v1553 = vpop.f32.mrb[0].mxu0
      %v1554 = vadd.f32 0.0, %v1553
      %v1555 = vpop.f32.mrb[0].mxu0
      %v1556 = vadd.f32 0.0, %v1555
      %v1557 = vpop.f32.mrb[0].mxu0
      %v1558 = vadd.f32 0.0, %v1557
      %1559 = vmatprep.mubr.bf16.mxu0 0
      %1560 = vmatmul.mubr.bf16.gmra.mrb[0].mxu0 %v738
      %v1561 = vpop.f32.mrb[0].mxu0
      %v1562 = vadd.f32 0.0, %v1561
      %v1563 = vpop.f32.mrb[0].mxu0
      %v1564 = vadd.f32 0.0, %v1563
      %v1565 = vpop.f32.mrb[0].mxu0
      %v1566 = vadd.f32 0.0, %v1565
      %v1567 = vpop.f32.mrb[0].mxu0
      %v1568 = vadd.f32 0.0, %v1567
      %1569 = vmatprep.mubr.bf16.mxu0 0
      %1570 = vmatmul.mubr.bf16.gmra.mrb[0].mxu0 %v741
      %v1571 = vpop.f32.mrb[0].mxu0
      %v1572 = vadd.f32 0.0, %v1571
      %v1573 = vpop.f32.mrb[0].mxu0
      %v1574 = vadd.f32 0.0, %v1573
      %v1575 = vpop.f32.mrb[0].mxu0
      %v1576 = vadd.f32 0.0, %v1575
      %v1577 = vpop.f32.mrb[0].mxu0
      %v1578 = vadd.f32 0.0, %v1577
      %1579 = vmatprep.mubr.bf16.mxu0 0
      %1580 = vmatmul.mubr.bf16.gmra.mrb[0].mxu0 %v744
      %v1581 = vpop.f32.mrb[0].mxu0
      %v1582 = vadd.f32 0.0, %v1581
      %v1583 = vpop.f32.mrb[0].mxu0
      %v1584 = vadd.f32 0.0, %v1583
      %v1585 = vpop.f32.mrb[0].mxu0
      %v1586 = vadd.f32 0.0, %v1585
      %v1587 = vpop.f32.mrb[0].mxu0
      %v1588 = vadd.f32 0.0, %v1587
      %1589 = vmatprep.mubr.bf16.mxu0 0
      %1590 = vmatmul.mubr.bf16.gmra.mrb[0].mxu0 %v747
      %v1591 = vpop.f32.mrb[0].mxu0
      %v1592 = vadd.f32 0.0, %v1591
      %v1593 = vpop.f32.mrb[0].mxu0
      %v1594 = vadd.f32 0.0, %v1593
      %v1595 = vpop.f32.mrb[0].mxu0
      %v1596 = vadd.f32 0.0, %v1595
      %v1597 = vpop.f32.mrb[0].mxu0
      %v1598 = vadd.f32 0.0, %v1597
      %1599 = vmatprep.mubr.bf16.mxu0 0
      %1600 = vmatmul.mubr.bf16.gmra.mrb[0].mxu0 %v750
      %v1601 = vpop.f32.mrb[0].mxu0
      %v1602 = vadd.f32 0.0, %v1601
      %v1603 = vpop.f32.mrb[0].mxu0
      %v1604 = vadd.f32 0.0, %v1603
      %v1605 = vpop.f32.mrb[0].mxu0
      %v1606 = vadd.f32 0.0, %v1605
      %v1607 = vpop.f32.mrb[0].mxu0
      %v1608 = vadd.f32 0.0, %v1607
      %1609 = vmatprep.mubr.bf16.mxu0 0
      %1610 = vmatmul.mubr.bf16.gmra.mrb[0].mxu0 %v753
      %v1611 = vpop.f32.mrb[0].mxu0
      %v1612 = vadd.f32 0.0, %v1611
      %v1613 = vpop.f32.mrb[0].mxu0
      %v1614 = vadd.f32 0.0, %v1613
      %v1615 = vpop.f32.mrb[0].mxu0
      %v1616 = vadd.f32 0.0, %v1615
      %v1617 = vpop.f32.mrb[0].mxu0
      %v1618 = vadd.f32 0.0, %v1617
      %1619 = vmatprep.mubr.bf16.mxu0 0
      %1620 = vmatmul.mubr.bf16.gmra.mrb[0].mxu0 %v756
      %v1621 = vpop.f32.mrb[0].mxu0
      %v1622 = vadd.f32 0.0, %v1621
      %v1623 = vpop.f32.mrb[0].mxu0
      %v1624 = vadd.f32 0.0, %v1623
      %v1625 = vpop.f32.mrb[0].mxu0
      %v1626 = vadd.f32 0.0, %v1625
      %v1627 = vpop.f32.mrb[0].mxu0
      %v1628 = vadd.f32 0.0, %v1627
      %1629 = vmatprep.mubr.bf16.mxu0 0
      %1630 = vmatmul.mubr.bf16.gmra.mrb[0].mxu0 %v759
      %v1631 = vpop.f32.mrb[0].mxu0
      %v1632 = vadd.f32 0.0, %v1631
      %v1633 = vpop.f32.mrb[0].mxu0
      %v1634 = vadd.f32 0.0, %v1633
      %v1635 = vpop.f32.mrb[0].mxu0
      %v1636 = vadd.f32 0.0, %v1635
      %v1637 = vpop.f32.mrb[0].mxu0
      %v1638 = vadd.f32 0.0, %v1637
      %1639 = vmatprep.mubr.bf16.mxu0 0
      %1640 = vmatmul.mubr.bf16.gmra.mrb[0].mxu0 %v762
      %v1641 = vpop.f32.mrb[0].mxu0
      %v1642 = vadd.f32 0.0, %v1641
      %v1643 = vpop.f32.mrb[0].mxu0
      %v1644 = vadd.f32 0.0, %v1643
      %v1645 = vpop.f32.mrb[0].mxu0
      %v1646 = vadd.f32 0.0, %v1645
      %v1647 = vpop.f32.mrb[0].mxu0
      %v1648 = vadd.f32 0.0, %v1647
      %1649 = vmatprep.mubr.bf16.mxu0 0
      %1650 = vmatmul.mubr.bf16.gmra.mrb[0].mxu0 %v765
      %v1651 = vpop.f32.mrb[0].mxu0
      %v1652 = vadd.f32 0.0, %v1651
      %v1653 = vpop.f32.mrb[0].mxu0
      %v1654 = vadd.f32 0.0, %v1653
      %v1655 = vpop.f32.mrb[0].mxu0
      %v1656 = vadd.f32 0.0, %v1655
      %v1657 = vpop.f32.mrb[0].mxu0
      %v1658 = vadd.f32 0.0, %v1657
      %1659 = vmatprep.mubr.bf16.mxu0 0
      %1660 = vmatmul.mubr.bf16.gmra.mrb[0].mxu0 %v768
      %v1661 = vpop.f32.mrb[0].mxu0
      %v1662 = vadd.f32 0.0, %v1661
      %v1663 = vpop.f32.mrb[0].mxu0
      %v1664 = vadd.f32 0.0, %v1663
      %v1665 = vpop.f32.mrb[0].mxu0
      %v1666 = vadd.f32 0.0, %v1665
      %v1667 = vpop.f32.mrb[0].mxu0
      %v1668 = vadd.f32 0.0, %v1667
      %1669 = vmatprep.mubr.bf16.mxu0 0
      %1670 = vmatmul.mubr.bf16.gmra.mrb[0].mxu0 %v771
      %v1671 = vpop.f32.mrb[0].mxu0
      %v1672 = vadd.f32 0.0, %v1671
      %v1673 = vpop.f32.mrb[0].mxu0
      %v1674 = vadd.f32 0.0, %v1673
      %v1675 = vpop.f32.mrb[0].mxu0
      %v1676 = vadd.f32 0.0, %v1675
      %v1677 = vpop.f32.mrb[0].mxu0
      %v1678 = vadd.f32 0.0, %v1677
      %1679 = vmatprep.mubr.bf16.mxu0 0
      %1680 = vmatmul.mubr.bf16.gmra.mrb[0].mxu0 %v774
      %v1681 = vpop.f32.mrb[0].mxu0
      %v1682 = vadd.f32 0.0, %v1681
      %v1683 = vpop.f32.mrb[0].mxu0
      %v1684 = vadd.f32 0.0, %v1683
      %v1685 = vpop.f32.mrb[0].mxu0
      %v1686 = vadd.f32 0.0, %v1685
      %v1687 = vpop.f32.mrb[0].mxu0
      %v1688 = vadd.f32 0.0, %v1687
      %1689 = vmatprep.mubr.bf16.mxu0 0
      %1690 = vmatmul.mubr.bf16.gmra.mrb[0].mxu0 %v777
      %v1691 = vpop.f32.mrb[0].mxu0
      %v1692 = vadd.f32 0.0, %v1691
      %v1693 = vpop.f32.mrb[0].mxu0
      %v1694 = vadd.f32 0.0, %v1693
      %v1695 = vpop.f32.mrb[0].mxu0
      %v1696 = vadd.f32 0.0, %v1695
      %v1697 = vpop.f32.mrb[0].mxu0
      %v1698 = vadd.f32 0.0, %v1697
      %1699 = vmatprep.mubr.bf16.mxu0 0
      %1700 = vmatmul.mubr.bf16.gmra.mrb[0].mxu0 %v780
      %v1701 = vpop.f32.mrb[0].mxu0
      %v1702 = vadd.f32 0.0, %v1701
      %v1703 = vpop.f32.mrb[0].mxu0
      %v1704 = vadd.f32 0.0, %v1703
      %v1705 = vpop.f32.mrb[0].mxu0
      %v1706 = vadd.f32 0.0, %v1705
      %v1707 = vpop.f32.mrb[0].mxu0
      %v1708 = vadd.f32 0.0, %v1707
      %1709 = vmatprep.mubr.bf16.mxu0 0
      %1710 = vmatmul.mubr.bf16.gmra.mrb[0].mxu0 %v783
      %v1711 = vpop.f32.mrb[0].mxu0
      %v1712 = vadd.f32 0.0, %v1711
      %v1713 = vpop.f32.mrb[0].mxu0
      %v1714 = vadd.f32 0.0, %v1713
      %v1715 = vpop.f32.mrb[0].mxu0
      %v1716 = vadd.f32 0.0, %v1715
      %v1717 = vpop.f32.mrb[0].mxu0
      %v1718 = vadd.f32 0.0, %v1717
      %1719 = vmatprep.mubr.bf16.mxu0 0
      %1720 = vmatmul.mubr.bf16.gmra.mrb[0].mxu0 %v786
      %v1721 = vpop.f32.mrb[0].mxu0
      %v1722 = vadd.f32 0.0, %v1721
      %v1723 = vpop.f32.mrb[0].mxu0
      %v1724 = vadd.f32 0.0, %v1723
      %v1725 = vpop.f32.mrb[0].mxu0
      %v1726 = vadd.f32 0.0, %v1725
      %v1727 = vpop.f32.mrb[0].mxu0
      %v1728 = vadd.f32 0.0, %v1727
      %1729 = vmatprep.mubr.bf16.mxu0 0
      %1730 = vmatmul.mubr.bf16.gmra.mrb[0].mxu0 %v789
      %v1731 = vpop.f32.mrb[0].mxu0
      %v1732 = vadd.f32 0.0, %v1731
      %v1733 = vpop.f32.mrb[0].mxu0
      %v1734 = vadd.f32 0.0, %v1733
      %v1735 = vpop.f32.mrb[0].mxu0
      %v1736 = vadd.f32 0.0, %v1735
      %v1737 = vpop.f32.mrb[0].mxu0
      %v1738 = vadd.f32 0.0, %v1737
      %1739 = vmatprep.mubr.bf16.mxu0 0
      %1740 = vmatmul.mubr.bf16.gmra.mrb[0].mxu0 %v792
      %v1741 = vpop.f32.mrb[0].mxu0
      %v1742 = vadd.f32 0.0, %v1741
      %v1743 = vpop.f32.mrb[0].mxu0
      %v1744 = vadd.f32 0.0, %v1743
      %v1745 = vpop.f32.mrb[0].mxu0
      %v1746 = vadd.f32 0.0, %v1745
      %v1747 = vpop.f32.mrb[0].mxu0
      %v1748 = vadd.f32 0.0, %v1747
      %1749 = vmatprep.mubr.bf16.mxu0 0
      %1750 = vmatmul.mubr.bf16.gmra.mrb[0].mxu0 %v795
      %v1751 = vpop.f32.mrb[0].mxu0
      %v1752 = vadd.f32 0.0, %v1751
      %v1753 = vpop.f32.mrb[0].mxu0
      %v1754 = vadd.f32 0.0, %v1753
      %v1755 = vpop.f32.mrb[0].mxu0
      %v1756 = vadd.f32 0.0, %v1755
      %v1757 = vpop.f32.mrb[0].mxu0
      %v1758 = vadd.f32 0.0, %v1757
      %1759 = vmatprep.mubr.bf16.mxu0 0
      %1760 = vmatmul.mubr.bf16.gmra.mrb[0].mxu0 %v798
      %v1761 = vpop.f32.mrb[0].mxu0
      %v1762 = vadd.f32 0.0, %v1761
      %v1763 = vpop.f32.mrb[0].mxu0
      %v1764 = vadd.f32 0.0, %v1763
      %v1765 = vpop.f32.mrb[0].mxu0
      %v1766 = vadd.f32 0.0, %v1765
      %v1767 = vpop.f32.mrb[0].mxu0
      %v1768 = vadd.f32 0.0, %v1767
      %1769 = vmatprep.mubr.bf16.mxu0 0
      %1770 = vmatmul.mubr.bf16.gmra.mrb[0].mxu0 %v801
      %v1771 = vpop.f32.mrb[0].mxu0
      %v1772 = vadd.f32 0.0, %v1771
      %v1773 = vpop.f32.mrb[0].mxu0
      %v1774 = vadd.f32 0.0, %v1773
      %v1775 = vpop.f32.mrb[0].mxu0
      %v1776 = vadd.f32 0.0, %v1775
      %v1777 = vpop.f32.mrb[0].mxu0
      %v1778 = vadd.f32 0.0, %v1777
      %1779 = vmatprep.mubr.bf16.mxu0 0
      %1780 = vmatmul.mubr.bf16.gmra.mrb[0].mxu0 %v804
      %v1781 = vpop.f32.mrb[0].mxu0
      %v1782 = vadd.f32 0.0, %v1781
      %v1783 = vpop.f32.mrb[0].mxu0
      %v1784 = vadd.f32 0.0, %v1783
      %v1785 = vpop.f32.mrb[0].mxu0
      %v1786 = vadd.f32 0.0, %v1785
      %v1787 = vpop.f32.mrb[0].mxu0
      %v1788 = vadd.f32 0.0, %v1787
      %1789 = vmatprep.mubr.bf16.mxu0 0
      %1790 = vmatmul.mubr.bf16.gmra.mrb[0].mxu0 %v807
      %v1791 = vpop.f32.mrb[0].mxu0
      %v1792 = vadd.f32 0.0, %v1791
      %v1793 = vpop.f32.mrb[0].mxu0
      %v1794 = vadd.f32 0.0, %v1793
      %v1795 = vpop.f32.mrb[0].mxu0
      %v1796 = vadd.f32 0.0, %v1795
      %v1797 = vpop.f32.mrb[0].mxu0
      %v1798 = vadd.f32 0.0, %v1797
      %1799 = vmatprep.mubr.bf16.mxu0 0
      %1800 = vmatmul.mubr.bf16.gmra.mrb[0].mxu0 %v810
      %v1801 = vpop.f32.mrb[0].mxu0
      %v1802 = vadd.f32 0.0, %v1801
      %v1803 = vpop.f32.mrb[0].mxu0
      %v1804 = vadd.f32 0.0, %v1803
      %v1805 = vpop.f32.mrb[0].mxu0
      %v1806 = vadd.f32 0.0, %v1805
      %v1807 = vpop.f32.mrb[0].mxu0
      %v1808 = vadd.f32 0.0, %v1807
      %1809 = vmatprep.mubr.bf16.mxu0 0
      %1810 = vmatmul.mubr.bf16.gmra.mrb[0].mxu0 %v813
      %v1811 = vpop.f32.mrb[0].mxu0
      %v1812 = vadd.f32 0.0, %v1811
      %v1813 = vpop.f32.mrb[0].mxu0
      %v1814 = vadd.f32 0.0, %v1813
      %v1815 = vpop.f32.mrb[0].mxu0
      %v1816 = vadd.f32 0.0, %v1815
      %v1817 = vpop.f32.mrb[0].mxu0
      %v1818 = vadd.f32 0.0, %v1817
      %1819 = vmatprep.mubr.bf16.mxu0 0
      %1820 = vmatmul.mubr.bf16.gmra.mrb[0].mxu0 %v1509
      %v1821 = vpop.f32.mrb[0].mxu0
      %v1822 = vadd.f32 0.0, %v1821
      %v1823 = vpop.f32.mrb[0].mxu0
      %v1824 = vadd.f32 0.0, %v1823
      %v1825 = vpop.f32.mrb[0].mxu0
      %v1826 = vadd.f32 0.0, %v1825
      %v1827 = vpop.f32.mrb[0].mxu0
      %v1828 = vadd.f32 0.0, %v1827
      %1829 = vdwg.mxu0
      %v1830 = vadd.f32 %v1202, %v1552
      %v1831 = vadd.f32 %v1204, %v1554
      %v1832 = vadd.f32 %v1206, %v1556
      %v1833 = vadd.f32 %v1208, %v1558
      %v1834 = vadd.f32 %v1212, %v1562
      %v1835 = vadd.f32 %v1214, %v1564
      %v1836 = vadd.f32 %v1216, %v1566
      %v1837 = vadd.f32 %v1218, %v1568
      %v1838 = vadd.f32 %v1222, %v1572
      %v1839 = vadd.f32 %v1224, %v1574
      %v1840 = vadd.f32 %v1226, %v1576
      %v1841 = vadd.f32 %v1228, %v1578
      %v1842 = vadd.f32 %v1232, %v1582
      %v1843 = vadd.f32 %v1234, %v1584
      %v1844 = vadd.f32 %v1236, %v1586
      %v1845 = vadd.f32 %v1238, %v1588
      %v1846 = vadd.f32 %v1242, %v1592
      %v1847 = vadd.f32 %v1244, %v1594
      %v1848 = vadd.f32 %v1246, %v1596
      %v1849 = vadd.f32 %v1248, %v1598
      %v1850 = vadd.f32 %v1252, %v1602
      %v1851 = vadd.f32 %v1254, %v1604
      %v1852 = vadd.f32 %v1256, %v1606
      %v1853 = vadd.f32 %v1258, %v1608
      %v1854 = vadd.f32 %v1262, %v1612
      %v1855 = vadd.f32 %v1264, %v1614
      %v1856 = vadd.f32 %v1266, %v1616
      %v1857 = vadd.f32 %v1268, %v1618
      %v1858 = vadd.f32 %v1272, %v1622
      %v1859 = vadd.f32 %v1274, %v1624
      %v1860 = vadd.f32 %v1276, %v1626
      %v1861 = vadd.f32 %v1278, %v1628
      %v1862 = vadd.f32 %v1282, %v1632
      %v1863 = vadd.f32 %v1284, %v1634
      %v1864 = vadd.f32 %v1286, %v1636
      %v1865 = vadd.f32 %v1288, %v1638
      %v1866 = vadd.f32 %v1292, %v1642
      %v1867 = vadd.f32 %v1294, %v1644
      %v1868 = vadd.f32 %v1296, %v1646
      %v1869 = vadd.f32 %v1298, %v1648
      %v1870 = vadd.f32 %v1302, %v1652
      %v1871 = vadd.f32 %v1304, %v1654
      %v1872 = vadd.f32 %v1306, %v1656
      %v1873 = vadd.f32 %v1308, %v1658
      %v1874 = vadd.f32 %v1312, %v1662
      %v1875 = vadd.f32 %v1314, %v1664
      %v1876 = vadd.f32 %v1316, %v1666
      %v1877 = vadd.f32 %v1318, %v1668
      %v1878 = vadd.f32 %v1322, %v1672
      %v1879 = vadd.f32 %v1324, %v1674
      %v1880 = vadd.f32 %v1326, %v1676
      %v1881 = vadd.f32 %v1328, %v1678
      %v1882 = vadd.f32 %v1332, %v1682
      %v1883 = vadd.f32 %v1334, %v1684
      %v1884 = vadd.f32 %v1336, %v1686
      %v1885 = vadd.f32 %v1338, %v1688
      %v1886 = vadd.f32 %v1342, %v1692
      %v1887 = vadd.f32 %v1344, %v1694
      %v1888 = vadd.f32 %v1346, %v1696
      %v1889 = vadd.f32 %v1348, %v1698
      %v1890 = vadd.f32 %v1352, %v1702
      %v1891 = vadd.f32 %v1354, %v1704
      %v1892 = vadd.f32 %v1356, %v1706
      %v1893 = vadd.f32 %v1358, %v1708
      %v1894 = vadd.f32 %v1362, %v1712
      %v1895 = vadd.f32 %v1364, %v1714
      %v1896 = vadd.f32 %v1366, %v1716
      %v1897 = vadd.f32 %v1368, %v1718
      %v1898 = vadd.f32 %v1372, %v1722
      %v1899 = vadd.f32 %v1374, %v1724
      %v1900 = vadd.f32 %v1376, %v1726
      %v1901 = vadd.f32 %v1378, %v1728
      %v1902 = vadd.f32 %v1382, %v1732
      %v1903 = vadd.f32 %v1384, %v1734
      %v1904 = vadd.f32 %v1386, %v1736
      %v1905 = vadd.f32 %v1388, %v1738
      %v1906 = vadd.f32 %v1392, %v1742
      %v1907 = vadd.f32 %v1394, %v1744
      %v1908 = vadd.f32 %v1396, %v1746
      %v1909 = vadd.f32 %v1398, %v1748
      %v1910 = vadd.f32 %v1402, %v1752
      %v1911 = vadd.f32 %v1404, %v1754
      %v1912 = vadd.f32 %v1406, %v1756
      %v1913 = vadd.f32 %v1408, %v1758
      %v1914 = vadd.f32 %v1412, %v1762
      %v1915 = vadd.f32 %v1414, %v1764
      %v1916 = vadd.f32 %v1416, %v1766
      %v1917 = vadd.f32 %v1418, %v1768
      %v1918 = vadd.f32 %v1422, %v1772
      %v1919 = vadd.f32 %v1424, %v1774
      %v1920 = vadd.f32 %v1426, %v1776
      %v1921 = vadd.f32 %v1428, %v1778
      %v1922 = vadd.f32 %v1432, %v1782
      %v1923 = vadd.f32 %v1434, %v1784
      %v1924 = vadd.f32 %v1436, %v1786
      %v1925 = vadd.f32 %v1438, %v1788
      %v1926 = vadd.f32 %v1442, %v1792
      %v1927 = vadd.f32 %v1444, %v1794
      %v1928 = vadd.f32 %v1446, %v1796
      %v1929 = vadd.f32 %v1448, %v1798
      %v1930 = vadd.f32 %v1452, %v1802
      %v1931 = vadd.f32 %v1454, %v1804
      %v1932 = vadd.f32 %v1456, %v1806
      %v1933 = vadd.f32 %v1458, %v1808
      %v1934 = vadd.f32 %v1462, %v1812
      %v1935 = vadd.f32 %v1464, %v1814
      %v1936 = vadd.f32 %v1466, %v1816
      %v1937 = vadd.f32 %v1468, %v1818
      %v1938 = vadd.f32 %v1472, %v1822
      %v1939 = vadd.f32 %v1474, %v1824
      %v1940 = vadd.f32 %v1476, %v1826
      %v1941 = vadd.f32 %v1478, %v1828
      %s1942 = scalar_lea.vmem %s1, 96
      %v1943 = vld [vmem:[%s1942] sm:$0xff]
      %v1944 = vld [vmem:[%s1942 + $0x8] sm:$0xff]
      %v1945 = vld [vmem:[%s1942 + $0x10] sm:$0xff]
      %v1946 = vld [vmem:[%s1942 + $0x18] sm:$0x33]
      %v1949 = vunpack.c.l.b16 %v559
      %v1950 = vunpack.c.l.b16 %v560
      %v1951 = vpack.c.b16 %v1950, %v1949
      %v1956 = vunpack.c.l.b16 %v1943
      %v1957 = vunpack.c.h.b16 %v1943
      %v1958 = vunpack.c.l.b16 %v1944
      %v1959 = vunpack.c.h.b16 %v1944
      %v1960 = vunpack.c.l.b16 %v1945
      %v1961 = vunpack.c.h.b16 %v1945
      %v1962 = vunpack.c.l.b16 %v1946
      %v1963 = vunpack.c.h.b16 %v1946
      %v1964 = vpack.c.b16 %v1958, %v1956
      %v1965 = vpack.c.b16 %v1959, %v1957
      %v1966 = vpack.c.b16 %v1962, %v1960
      %v1967 = vpack.c.b16 %v1963, %v1961
      %v1971 = vsel %vm730, %v1951, 0
      %v1974 = vsel %vm815, %v1966, 0
      %v1977 = vsel %vm815, %v1967, 0
      %1979 = vmatprep.subr.bf16.mxu0 %v1965
      %1980 = vmatpush1.bf16.msra.mxu0 %v1964
      %1981 = vmatprep.subr.bf16.mxu0 %v1977
      %1982 = vmatpush1.bf16.msra.mxu0 %v1974
      %1983 = vmatprep.subr.bf16.mxu0 0
      %1984 = vmatpush1.bf16.msra.mxu0 0
      %1985 = vmatprep.subr.bf16.mxu0 0
      %1986 = vmatpush1.bf16.msra.mxu0 0
      %1987 = vmatprep.subr.bf16.mxu0 0
      %1988 = vmatpush1.bf16.msra.mxu0 0
      %1989 = vmatprep.subr.bf16.mxu0 0
      %1990 = vmatpush1.bf16.msra.mxu0 0
      %1991 = vmatprep.subr.bf16.mxu0 0
      %1992 = vmatpush1.bf16.msra.mxu0 0
      %1993 = vmatprep.subr.bf16.mxu0 0
      %1994 = vmatpush1.bf16.msra.mxu0 0
      %1995 = vmatprep.subr.bf16.mxu0 0
      %1996 = vmatpush1.bf16.msra.mxu0 0
      %1997 = vmatprep.subr.bf16.mxu0 0
      %1998 = vmatpush1.bf16.msra.mxu0 0
      %1999 = vmatprep.subr.bf16.mxu0 0
      %2000 = vmatpush1.bf16.msra.mxu0 0
      %2001 = vmatprep.subr.bf16.mxu0 0
      %2002 = vmatpush1.bf16.msra.mxu0 0
      %2003 = vmatprep.subr.bf16.mxu0 0
      %2004 = vmatpush1.bf16.msra.mxu0 0
      %2005 = vmatprep.subr.bf16.mxu0 0
      %2006 = vmatpush1.bf16.msra.mxu0 0
      %2007 = vmatprep.subr.bf16.mxu0 0
      %2008 = vmatpush1.bf16.msra.mxu0 0
      %2009 = vmatprep.subr.bf16.mxu0 0
      %2010 = vmatpush1.bf16.msra.mxu0 0
      %2011 = vmatprep.mubr.bf16.mxu0 0
      %2012 = vmatmul.mubr.bf16.gmra.mrb[0].mxu0 %v738
      %v2013 = vpop.f32.mrb[0].mxu0
      %v2014 = vadd.f32 0.0, %v2013
      %v2015 = vpop.f32.mrb[0].mxu0
      %v2016 = vadd.f32 0.0, %v2015
      %v2017 = vpop.f32.mrb[0].mxu0
      %v2018 = vadd.f32 0.0, %v2017
      %v2019 = vpop.f32.mrb[0].mxu0
      %v2020 = vadd.f32 0.0, %v2019
      %2021 = vmatprep.mubr.bf16.mxu0 0
      %2022 = vmatmul.mubr.bf16.gmra.mrb[0].mxu0 %v741
      %v2023 = vpop.f32.mrb[0].mxu0
      %v2024 = vadd.f32 0.0, %v2023
      %v2025 = vpop.f32.mrb[0].mxu0
      %v2026 = vadd.f32 0.0, %v2025
      %v2027 = vpop.f32.mrb[0].mxu0
      %v2028 = vadd.f32 0.0, %v2027
      %v2029 = vpop.f32.mrb[0].mxu0
      %v2030 = vadd.f32 0.0, %v2029
      %2031 = vmatprep.mubr.bf16.mxu0 0
      %2032 = vmatmul.mubr.bf16.gmra.mrb[0].mxu0 %v744
      %v2033 = vpop.f32.mrb[0].mxu0
      %v2034 = vadd.f32 0.0, %v2033
      %v2035 = vpop.f32.mrb[0].mxu0
      %v2036 = vadd.f32 0.0, %v2035
      %v2037 = vpop.f32.mrb[0].mxu0
      %v2038 = vadd.f32 0.0, %v2037
      %v2039 = vpop.f32.mrb[0].mxu0
      %v2040 = vadd.f32 0.0, %v2039
      %2041 = vmatprep.mubr.bf16.mxu0 0
      %2042 = vmatmul.mubr.bf16.gmra.mrb[0].mxu0 %v747
      %v2043 = vpop.f32.mrb[0].mxu0
      %v2044 = vadd.f32 0.0, %v2043
      %v2045 = vpop.f32.mrb[0].mxu0
      %v2046 = vadd.f32 0.0, %v2045
      %v2047 = vpop.f32.mrb[0].mxu0
      %v2048 = vadd.f32 0.0, %v2047
      %v2049 = vpop.f32.mrb[0].mxu0
      %v2050 = vadd.f32 0.0, %v2049
      %2051 = vmatprep.mubr.bf16.mxu0 0
      %2052 = vmatmul.mubr.bf16.gmra.mrb[0].mxu0 %v750
      %v2053 = vpop.f32.mrb[0].mxu0
      %v2054 = vadd.f32 0.0, %v2053
      %v2055 = vpop.f32.mrb[0].mxu0
      %v2056 = vadd.f32 0.0, %v2055
      %v2057 = vpop.f32.mrb[0].mxu0
      %v2058 = vadd.f32 0.0, %v2057
      %v2059 = vpop.f32.mrb[0].mxu0
      %v2060 = vadd.f32 0.0, %v2059
      %2061 = vmatprep.mubr.bf16.mxu0 0
      %2062 = vmatmul.mubr.bf16.gmra.mrb[0].mxu0 %v753
      %v2063 = vpop.f32.mrb[0].mxu0
      %v2064 = vadd.f32 0.0, %v2063
      %v2065 = vpop.f32.mrb[0].mxu0
      %v2066 = vadd.f32 0.0, %v2065
      %v2067 = vpop.f32.mrb[0].mxu0
      %v2068 = vadd.f32 0.0, %v2067
      %v2069 = vpop.f32.mrb[0].mxu0
      %v2070 = vadd.f32 0.0, %v2069
      %2071 = vmatprep.mubr.bf16.mxu0 0
      %2072 = vmatmul.mubr.bf16.gmra.mrb[0].mxu0 %v756
      %v2073 = vpop.f32.mrb[0].mxu0
      %v2074 = vadd.f32 0.0, %v2073
      %v2075 = vpop.f32.mrb[0].mxu0
      %v2076 = vadd.f32 0.0, %v2075
      %v2077 = vpop.f32.mrb[0].mxu0
      %v2078 = vadd.f32 0.0, %v2077
      %v2079 = vpop.f32.mrb[0].mxu0
      %v2080 = vadd.f32 0.0, %v2079
      %2081 = vmatprep.mubr.bf16.mxu0 0
      %2082 = vmatmul.mubr.bf16.gmra.mrb[0].mxu0 %v759
      %v2083 = vpop.f32.mrb[0].mxu0
      %v2084 = vadd.f32 0.0, %v2083
      %v2085 = vpop.f32.mrb[0].mxu0
      %v2086 = vadd.f32 0.0, %v2085
      %v2087 = vpop.f32.mrb[0].mxu0
      %v2088 = vadd.f32 0.0, %v2087
      %v2089 = vpop.f32.mrb[0].mxu0
      %v2090 = vadd.f32 0.0, %v2089
      %2091 = vmatprep.mubr.bf16.mxu0 0
      %2092 = vmatmul.mubr.bf16.gmra.mrb[0].mxu0 %v762
      %v2093 = vpop.f32.mrb[0].mxu0
      %v2094 = vadd.f32 0.0, %v2093
      %v2095 = vpop.f32.mrb[0].mxu0
      %v2096 = vadd.f32 0.0, %v2095
      %v2097 = vpop.f32.mrb[0].mxu0
      %v2098 = vadd.f32 0.0, %v2097
      %v2099 = vpop.f32.mrb[0].mxu0
      %v2100 = vadd.f32 0.0, %v2099
      %2101 = vmatprep.mubr.bf16.mxu0 0
      %2102 = vmatmul.mubr.bf16.gmra.mrb[0].mxu0 %v765
      %v2103 = vpop.f32.mrb[0].mxu0
      %v2104 = vadd.f32 0.0, %v2103
      %v2105 = vpop.f32.mrb[0].mxu0
      %v2106 = vadd.f32 0.0, %v2105
      %v2107 = vpop.f32.mrb[0].mxu0
      %v2108 = vadd.f32 0.0, %v2107
      %v2109 = vpop.f32.mrb[0].mxu0
      %v2110 = vadd.f32 0.0, %v2109
      %2111 = vmatprep.mubr.bf16.mxu0 0
      %2112 = vmatmul.mubr.bf16.gmra.mrb[0].mxu0 %v768
      %v2113 = vpop.f32.mrb[0].mxu0
      %v2114 = vadd.f32 0.0, %v2113
      %v2115 = vpop.f32.mrb[0].mxu0
      %v2116 = vadd.f32 0.0, %v2115
      %v2117 = vpop.f32.mrb[0].mxu0
      %v2118 = vadd.f32 0.0, %v2117
      %v2119 = vpop.f32.mrb[0].mxu0
      %v2120 = vadd.f32 0.0, %v2119
      %2121 = vmatprep.mubr.bf16.mxu0 0
      %2122 = vmatmul.mubr.bf16.gmra.mrb[0].mxu0 %v771
      %v2123 = vpop.f32.mrb[0].mxu0
      %v2124 = vadd.f32 0.0, %v2123
      %v2125 = vpop.f32.mrb[0].mxu0
      %v2126 = vadd.f32 0.0, %v2125
      %v2127 = vpop.f32.mrb[0].mxu0
      %v2128 = vadd.f32 0.0, %v2127
      %v2129 = vpop.f32.mrb[0].mxu0
      %v2130 = vadd.f32 0.0, %v2129
      %2131 = vmatprep.mubr.bf16.mxu0 0
      %2132 = vmatmul.mubr.bf16.gmra.mrb[0].mxu0 %v774
      %v2133 = vpop.f32.mrb[0].mxu0
      %v2134 = vadd.f32 0.0, %v2133
      %v2135 = vpop.f32.mrb[0].mxu0
      %v2136 = vadd.f32 0.0, %v2135
      %v2137 = vpop.f32.mrb[0].mxu0
      %v2138 = vadd.f32 0.0, %v2137
      %v2139 = vpop.f32.mrb[0].mxu0
      %v2140 = vadd.f32 0.0, %v2139
      %2141 = vmatprep.mubr.bf16.mxu0 0
      %2142 = vmatmul.mubr.bf16.gmra.mrb[0].mxu0 %v777
      %v2143 = vpop.f32.mrb[0].mxu0
      %v2144 = vadd.f32 0.0, %v2143
      %v2145 = vpop.f32.mrb[0].mxu0
      %v2146 = vadd.f32 0.0, %v2145
      %v2147 = vpop.f32.mrb[0].mxu0
      %v2148 = vadd.f32 0.0, %v2147
      %v2149 = vpop.f32.mrb[0].mxu0
      %v2150 = vadd.f32 0.0, %v2149
      %2151 = vmatprep.mubr.bf16.mxu0 0
      %2152 = vmatmul.mubr.bf16.gmra.mrb[0].mxu0 %v780
      %v2153 = vpop.f32.mrb[0].mxu0
      %v2154 = vadd.f32 0.0, %v2153
      %v2155 = vpop.f32.mrb[0].mxu0
      %v2156 = vadd.f32 0.0, %v2155
      %v2157 = vpop.f32.mrb[0].mxu0
      %v2158 = vadd.f32 0.0, %v2157
      %v2159 = vpop.f32.mrb[0].mxu0
      %v2160 = vadd.f32 0.0, %v2159
      %2161 = vmatprep.mubr.bf16.mxu0 0
      %2162 = vmatmul.mubr.bf16.gmra.mrb[0].mxu0 %v783
      %v2163 = vpop.f32.mrb[0].mxu0
      %v2164 = vadd.f32 0.0, %v2163
      %v2165 = vpop.f32.mrb[0].mxu0
      %v2166 = vadd.f32 0.0, %v2165
      %v2167 = vpop.f32.mrb[0].mxu0
      %v2168 = vadd.f32 0.0, %v2167
      %v2169 = vpop.f32.mrb[0].mxu0
      %v2170 = vadd.f32 0.0, %v2169
      %2171 = vmatprep.mubr.bf16.mxu0 0
      %2172 = vmatmul.mubr.bf16.gmra.mrb[0].mxu0 %v786
      %v2173 = vpop.f32.mrb[0].mxu0
      %v2174 = vadd.f32 0.0, %v2173
      %v2175 = vpop.f32.mrb[0].mxu0
      %v2176 = vadd.f32 0.0, %v2175
      %v2177 = vpop.f32.mrb[0].mxu0
      %v2178 = vadd.f32 0.0, %v2177
      %v2179 = vpop.f32.mrb[0].mxu0
      %v2180 = vadd.f32 0.0, %v2179
      %2181 = vmatprep.mubr.bf16.mxu0 0
      %2182 = vmatmul.mubr.bf16.gmra.mrb[0].mxu0 %v789
      %v2183 = vpop.f32.mrb[0].mxu0
      %v2184 = vadd.f32 0.0, %v2183
      %v2185 = vpop.f32.mrb[0].mxu0
      %v2186 = vadd.f32 0.0, %v2185
      %v2187 = vpop.f32.mrb[0].mxu0
      %v2188 = vadd.f32 0.0, %v2187
      %v2189 = vpop.f32.mrb[0].mxu0
      %v2190 = vadd.f32 0.0, %v2189
      %2191 = vmatprep.mubr.bf16.mxu0 0
      %2192 = vmatmul.mubr.bf16.gmra.mrb[0].mxu0 %v792
      %v2193 = vpop.f32.mrb[0].mxu0
      %v2194 = vadd.f32 0.0, %v2193
      %v2195 = vpop.f32.mrb[0].mxu0
      %v2196 = vadd.f32 0.0, %v2195
      %v2197 = vpop.f32.mrb[0].mxu0
      %v2198 = vadd.f32 0.0, %v2197
      %v2199 = vpop.f32.mrb[0].mxu0
      %v2200 = vadd.f32 0.0, %v2199
      %2201 = vmatprep.mubr.bf16.mxu0 0
      %2202 = vmatmul.mubr.bf16.gmra.mrb[0].mxu0 %v795
      %v2203 = vpop.f32.mrb[0].mxu0
      %v2204 = vadd.f32 0.0, %v2203
      %v2205 = vpop.f32.mrb[0].mxu0
      %v2206 = vadd.f32 0.0, %v2205
      %v2207 = vpop.f32.mrb[0].mxu0
      %v2208 = vadd.f32 0.0, %v2207
      %v2209 = vpop.f32.mrb[0].mxu0
      %v2210 = vadd.f32 0.0, %v2209
      %2211 = vmatprep.mubr.bf16.mxu0 0
      %2212 = vmatmul.mubr.bf16.gmra.mrb[0].mxu0 %v798
      %v2213 = vpop.f32.mrb[0].mxu0
      %v2214 = vadd.f32 0.0, %v2213
      %v2215 = vpop.f32.mrb[0].mxu0
      %v2216 = vadd.f32 0.0, %v2215
      %v2217 = vpop.f32.mrb[0].mxu0
      %v2218 = vadd.f32 0.0, %v2217
      %v2219 = vpop.f32.mrb[0].mxu0
      %v2220 = vadd.f32 0.0, %v2219
      %2221 = vmatprep.mubr.bf16.mxu0 0
      %2222 = vmatmul.mubr.bf16.gmra.mrb[0].mxu0 %v801
      %v2223 = vpop.f32.mrb[0].mxu0
      %v2224 = vadd.f32 0.0, %v2223
      %v2225 = vpop.f32.mrb[0].mxu0
      %v2226 = vadd.f32 0.0, %v2225
      %v2227 = vpop.f32.mrb[0].mxu0
      %v2228 = vadd.f32 0.0, %v2227
      %v2229 = vpop.f32.mrb[0].mxu0
      %v2230 = vadd.f32 0.0, %v2229
      %2231 = vmatprep.mubr.bf16.mxu0 0
      %2232 = vmatmul.mubr.bf16.gmra.mrb[0].mxu0 %v804
      %v2233 = vpop.f32.mrb[0].mxu0
      %v2234 = vadd.f32 0.0, %v2233
      %v2235 = vpop.f32.mrb[0].mxu0
      %v2236 = vadd.f32 0.0, %v2235
      %v2237 = vpop.f32.mrb[0].mxu0
      %v2238 = vadd.f32 0.0, %v2237
      %v2239 = vpop.f32.mrb[0].mxu0
      %v2240 = vadd.f32 0.0, %v2239
      %2241 = vmatprep.mubr.bf16.mxu0 0
      %2242 = vmatmul.mubr.bf16.gmra.mrb[0].mxu0 %v807
      %v2243 = vpop.f32.mrb[0].mxu0
      %v2244 = vadd.f32 0.0, %v2243
      %v2245 = vpop.f32.mrb[0].mxu0
      %v2246 = vadd.f32 0.0, %v2245
      %v2247 = vpop.f32.mrb[0].mxu0
      %v2248 = vadd.f32 0.0, %v2247
      %v2249 = vpop.f32.mrb[0].mxu0
      %v2250 = vadd.f32 0.0, %v2249
      %2251 = vmatprep.mubr.bf16.mxu0 0
      %2252 = vmatmul.mubr.bf16.gmra.mrb[0].mxu0 %v810
      %v2253 = vpop.f32.mrb[0].mxu0
      %v2254 = vadd.f32 0.0, %v2253
      %v2255 = vpop.f32.mrb[0].mxu0
      %v2256 = vadd.f32 0.0, %v2255
      %v2257 = vpop.f32.mrb[0].mxu0
      %v2258 = vadd.f32 0.0, %v2257
      %v2259 = vpop.f32.mrb[0].mxu0
      %v2260 = vadd.f32 0.0, %v2259
      %2261 = vmatprep.mubr.bf16.mxu0 0
      %2262 = vmatmul.mubr.bf16.gmra.mrb[0].mxu0 %v813
      %v2263 = vpop.f32.mrb[0].mxu0
      %v2264 = vadd.f32 0.0, %v2263
      %v2265 = vpop.f32.mrb[0].mxu0
      %v2266 = vadd.f32 0.0, %v2265
      %v2267 = vpop.f32.mrb[0].mxu0
      %v2268 = vadd.f32 0.0, %v2267
      %v2269 = vpop.f32.mrb[0].mxu0
      %v2270 = vadd.f32 0.0, %v2269
      %2271 = vmatprep.mubr.bf16.mxu0 0
      %2272 = vmatmul.mubr.bf16.gmra.mrb[0].mxu0 %v1509
      %v2273 = vpop.f32.mrb[0].mxu0
      %v2274 = vadd.f32 0.0, %v2273
      %v2275 = vpop.f32.mrb[0].mxu0
      %v2276 = vadd.f32 0.0, %v2275
      %v2277 = vpop.f32.mrb[0].mxu0
      %v2278 = vadd.f32 0.0, %v2277
      %v2279 = vpop.f32.mrb[0].mxu0
      %v2280 = vadd.f32 0.0, %v2279
      %2281 = vmatprep.mubr.bf16.mxu0 0
      %2282 = vmatmul.mubr.bf16.gmra.mrb[0].mxu0 %v1971
      %v2283 = vpop.f32.mrb[0].mxu0
      %v2284 = vadd.f32 0.0, %v2283
      %v2285 = vpop.f32.mrb[0].mxu0
      %v2286 = vadd.f32 0.0, %v2285
      %v2287 = vpop.f32.mrb[0].mxu0
      %v2288 = vadd.f32 0.0, %v2287
      %v2289 = vpop.f32.mrb[0].mxu0
      %v2290 = vadd.f32 0.0, %v2289
      %2291 = vdwg.mxu0
      %v2292 = vadd.f32 %v1830, %v2014
      %v2293 = vadd.f32 %v1831, %v2016
      %v2294 = vadd.f32 %v1832, %v2018
      %v2295 = vadd.f32 %v1833, %v2020
      %v2296 = vadd.f32 %v1834, %v2024
      %v2297 = vadd.f32 %v1835, %v2026
      %v2298 = vadd.f32 %v1836, %v2028
      %v2299 = vadd.f32 %v1837, %v2030
      %v2300 = vadd.f32 %v1838, %v2034
      %v2301 = vadd.f32 %v1839, %v2036
      %v2302 = vadd.f32 %v1840, %v2038
      %v2303 = vadd.f32 %v1841, %v2040
      %v2304 = vadd.f32 %v1842, %v2044
      %v2305 = vadd.f32 %v1843, %v2046
      %v2306 = vadd.f32 %v1844, %v2048
      %v2307 = vadd.f32 %v1845, %v2050
      %v2308 = vadd.f32 %v1846, %v2054
      %v2309 = vadd.f32 %v1847, %v2056
      %v2310 = vadd.f32 %v1848, %v2058
      %v2311 = vadd.f32 %v1849, %v2060
      %v2312 = vadd.f32 %v1850, %v2064
      %v2313 = vadd.f32 %v1851, %v2066
      %v2314 = vadd.f32 %v1852, %v2068
      %v2315 = vadd.f32 %v1853, %v2070
      %v2316 = vadd.f32 %v1854, %v2074
      %v2317 = vadd.f32 %v1855, %v2076
      %v2318 = vadd.f32 %v1856, %v2078
      %v2319 = vadd.f32 %v1857, %v2080
      %v2320 = vadd.f32 %v1858, %v2084
      %v2321 = vadd.f32 %v1859, %v2086
      %v2322 = vadd.f32 %v1860, %v2088
      %v2323 = vadd.f32 %v1861, %v2090
      %v2324 = vadd.f32 %v1862, %v2094
      %v2325 = vadd.f32 %v1863, %v2096
      %v2326 = vadd.f32 %v1864, %v2098
      %v2327 = vadd.f32 %v1865, %v2100
      %v2328 = vadd.f32 %v1866, %v2104
      %v2329 = vadd.f32 %v1867, %v2106
      %v2330 = vadd.f32 %v1868, %v2108
      %v2331 = vadd.f32 %v1869, %v2110
      %v2332 = vadd.f32 %v1870, %v2114
      %v2333 = vadd.f32 %v1871, %v2116
      %v2334 = vadd.f32 %v1872, %v2118
      %v2335 = vadd.f32 %v1873, %v2120
      %v2336 = vadd.f32 %v1874, %v2124
      %v2337 = vadd.f32 %v1875, %v2126
      %v2338 = vadd.f32 %v1876, %v2128
      %v2339 = vadd.f32 %v1877, %v2130
      %v2340 = vadd.f32 %v1878, %v2134
      %v2341 = vadd.f32 %v1879, %v2136
      %v2342 = vadd.f32 %v1880, %v2138
      %v2343 = vadd.f32 %v1881, %v2140
      %v2344 = vadd.f32 %v1882, %v2144
      %v2345 = vadd.f32 %v1883, %v2146
      %v2346 = vadd.f32 %v1884, %v2148
      %v2347 = vadd.f32 %v1885, %v2150
      %v2348 = vadd.f32 %v1886, %v2154
      %v2349 = vadd.f32 %v1887, %v2156
      %v2350 = vadd.f32 %v1888, %v2158
      %v2351 = vadd.f32 %v1889, %v2160
      %v2352 = vadd.f32 %v1890, %v2164
      %v2353 = vadd.f32 %v1891, %v2166
      %v2354 = vadd.f32 %v1892, %v2168
      %v2355 = vadd.f32 %v1893, %v2170
      %v2356 = vadd.f32 %v1894, %v2174
      %v2357 = vadd.f32 %v1895, %v2176
      %v2358 = vadd.f32 %v1896, %v2178
      %v2359 = vadd.f32 %v1897, %v2180
      %v2360 = vadd.f32 %v1898, %v2184
      %v2361 = vadd.f32 %v1899, %v2186
      %v2362 = vadd.f32 %v1900, %v2188
      %v2363 = vadd.f32 %v1901, %v2190
      %v2364 = vadd.f32 %v1902, %v2194
      %v2365 = vadd.f32 %v1903, %v2196
      %v2366 = vadd.f32 %v1904, %v2198
      %v2367 = vadd.f32 %v1905, %v2200
      %v2368 = vadd.f32 %v1906, %v2204
      %v2369 = vadd.f32 %v1907, %v2206
      %v2370 = vadd.f32 %v1908, %v2208
      %v2371 = vadd.f32 %v1909, %v2210
      %v2372 = vadd.f32 %v1910, %v2214
      %v2373 = vadd.f32 %v1911, %v2216
      %v2374 = vadd.f32 %v1912, %v2218
      %v2375 = vadd.f32 %v1913, %v2220
      %v2376 = vadd.f32 %v1914, %v2224
      %v2377 = vadd.f32 %v1915, %v2226
      %v2378 = vadd.f32 %v1916, %v2228
      %v2379 = vadd.f32 %v1917, %v2230
      %v2380 = vadd.f32 %v1918, %v2234
      %v2381 = vadd.f32 %v1919, %v2236
      %v2382 = vadd.f32 %v1920, %v2238
      %v2383 = vadd.f32 %v1921, %v2240
      %v2384 = vadd.f32 %v1922, %v2244
      %v2385 = vadd.f32 %v1923, %v2246
      %v2386 = vadd.f32 %v1924, %v2248
      %v2387 = vadd.f32 %v1925, %v2250
      %v2388 = vadd.f32 %v1926, %v2254
      %v2389 = vadd.f32 %v1927, %v2256
      %v2390 = vadd.f32 %v1928, %v2258
      %v2391 = vadd.f32 %v1929, %v2260
      %v2392 = vadd.f32 %v1930, %v2264
      %v2393 = vadd.f32 %v1931, %v2266
      %v2394 = vadd.f32 %v1932, %v2268
      %v2395 = vadd.f32 %v1933, %v2270
      %v2396 = vadd.f32 %v1934, %v2274
      %v2397 = vadd.f32 %v1935, %v2276
      %v2398 = vadd.f32 %v1936, %v2278
      %v2399 = vadd.f32 %v1937, %v2280
      %v2400 = vadd.f32 %v1938, %v2284
      %v2401 = vadd.f32 %v1939, %v2286
      %v2402 = vadd.f32 %v1940, %v2288
      %v2403 = vadd.f32 %v1941, %v2290
      %s2404 = scalar_lea.vmem %s1, 128
      %v2405 = vld [vmem:[%s2404] sm:$0xff]
      %v2406 = vld [vmem:[%s2404 + $0x8] sm:$0xff]
      %v2407 = vld [vmem:[%s2404 + $0x10] sm:$0xff]
      %v2408 = vld [vmem:[%s2404 + $0x18] sm:$0x33]
      %v2411 = vunpack.c.l.b16 %v561
      %v2412 = vunpack.c.l.b16 %v562
      %v2413 = vpack.c.b16 %v2412, %v2411
      %v2418 = vunpack.c.l.b16 %v2405
      %v2419 = vunpack.c.h.b16 %v2405
      %v2420 = vunpack.c.l.b16 %v2406
      %v2421 = vunpack.c.h.b16 %v2406
      %v2422 = vunpack.c.l.b16 %v2407
      %v2423 = vunpack.c.h.b16 %v2407
      %v2424 = vunpack.c.l.b16 %v2408
      %v2425 = vunpack.c.h.b16 %v2408
      %v2426 = vpack.c.b16 %v2420, %v2418
      %v2427 = vpack.c.b16 %v2421, %v2419
      %v2428 = vpack.c.b16 %v2424, %v2422
      %v2429 = vpack.c.b16 %v2425, %v2423
      %v2433 = vsel %vm730, %v2413, 0
      %v2436 = vsel %vm815, %v2428, 0
      %v2439 = vsel %vm815, %v2429, 0
      %2441 = vmatprep.subr.bf16.mxu0 %v2427
      %2442 = vmatpush1.bf16.msra.mxu0 %v2426
      %2443 = vmatprep.subr.bf16.mxu0 %v2439
      %2444 = vmatpush1.bf16.msra.mxu0 %v2436
      %2445 = vmatprep.subr.bf16.mxu0 0
      %2446 = vmatpush1.bf16.msra.mxu0 0
      %2447 = vmatprep.subr.bf16.mxu0 0
      %2448 = vmatpush1.bf16.msra.mxu0 0
      %2449 = vmatprep.subr.bf16.mxu0 0
      %2450 = vmatpush1.bf16.msra.mxu0 0
      %2451 = vmatprep.subr.bf16.mxu0 0
      %2452 = vmatpush1.bf16.msra.mxu0 0
      %2453 = vmatprep.subr.bf16.mxu0 0
      %2454 = vmatpush1.bf16.msra.mxu0 0
      %2455 = vmatprep.subr.bf16.mxu0 0
      %2456 = vmatpush1.bf16.msra.mxu0 0
      %2457 = vmatprep.subr.bf16.mxu0 0
      %2458 = vmatpush1.bf16.msra.mxu0 0
      %2459 = vmatprep.subr.bf16.mxu0 0
      %2460 = vmatpush1.bf16.msra.mxu0 0
      %2461 = vmatprep.subr.bf16.mxu0 0
      %2462 = vmatpush1.bf16.msra.mxu0 0
      %2463 = vmatprep.subr.bf16.mxu0 0
      %2464 = vmatpush1.bf16.msra.mxu0 0
      %2465 = vmatprep.subr.bf16.mxu0 0
      %2466 = vmatpush1.bf16.msra.mxu0 0
      %2467 = vmatprep.subr.bf16.mxu0 0
      %2468 = vmatpush1.bf16.msra.mxu0 0
      %2469 = vmatprep.subr.bf16.mxu0 0
      %2470 = vmatpush1.bf16.msra.mxu0 0
      %2471 = vmatprep.subr.bf16.mxu0 0
      %2472 = vmatpush1.bf16.msra.mxu0 0
      %2473 = vmatprep.mubr.bf16.mxu0 0
      %2474 = vmatmul.mubr.bf16.gmra.mrb[0].mxu0 %v741
      %v2475 = vpop.f32.mrb[0].mxu0
      %v2476 = vadd.f32 0.0, %v2475
      %v2477 = vpop.f32.mrb[0].mxu0
      %v2478 = vadd.f32 0.0, %v2477
      %v2479 = vpop.f32.mrb[0].mxu0
      %v2480 = vadd.f32 0.0, %v2479
      %v2481 = vpop.f32.mrb[0].mxu0
      %v2482 = vadd.f32 0.0, %v2481
      %2483 = vmatprep.mubr.bf16.mxu0 0
      %2484 = vmatmul.mubr.bf16.gmra.mrb[0].mxu0 %v744
      %v2485 = vpop.f32.mrb[0].mxu0
      %v2486 = vadd.f32 0.0, %v2485
      %v2487 = vpop.f32.mrb[0].mxu0
      %v2488 = vadd.f32 0.0, %v2487
      %v2489 = vpop.f32.mrb[0].mxu0
      %v2490 = vadd.f32 0.0, %v2489
      %v2491 = vpop.f32.mrb[0].mxu0
      %v2492 = vadd.f32 0.0, %v2491
      %2493 = vmatprep.mubr.bf16.mxu0 0
      %2494 = vmatmul.mubr.bf16.gmra.mrb[0].mxu0 %v747
      %v2495 = vpop.f32.mrb[0].mxu0
      %v2496 = vadd.f32 0.0, %v2495
      %v2497 = vpop.f32.mrb[0].mxu0
      %v2498 = vadd.f32 0.0, %v2497
      %v2499 = vpop.f32.mrb[0].mxu0
      %v2500 = vadd.f32 0.0, %v2499
      %v2501 = vpop.f32.mrb[0].mxu0
      %v2502 = vadd.f32 0.0, %v2501
      %2503 = vmatprep.mubr.bf16.mxu0 0
      %2504 = vmatmul.mubr.bf16.gmra.mrb[0].mxu0 %v750
      %v2505 = vpop.f32.mrb[0].mxu0
      %v2506 = vadd.f32 0.0, %v2505
      %v2507 = vpop.f32.mrb[0].mxu0
      %v2508 = vadd.f32 0.0, %v2507
      %v2509 = vpop.f32.mrb[0].mxu0
      %v2510 = vadd.f32 0.0, %v2509
      %v2511 = vpop.f32.mrb[0].mxu0
      %v2512 = vadd.f32 0.0, %v2511
      %2513 = vmatprep.mubr.bf16.mxu0 0
      %2514 = vmatmul.mubr.bf16.gmra.mrb[0].mxu0 %v753
      %v2515 = vpop.f32.mrb[0].mxu0
      %v2516 = vadd.f32 0.0, %v2515
      %v2517 = vpop.f32.mrb[0].mxu0
      %v2518 = vadd.f32 0.0, %v2517
      %v2519 = vpop.f32.mrb[0].mxu0
      %v2520 = vadd.f32 0.0, %v2519
      %v2521 = vpop.f32.mrb[0].mxu0
      %v2522 = vadd.f32 0.0, %v2521
      %2523 = vmatprep.mubr.bf16.mxu0 0
      %2524 = vmatmul.mubr.bf16.gmra.mrb[0].mxu0 %v756
      %v2525 = vpop.f32.mrb[0].mxu0
      %v2526 = vadd.f32 0.0, %v2525
      %v2527 = vpop.f32.mrb[0].mxu0
      %v2528 = vadd.f32 0.0, %v2527
      %v2529 = vpop.f32.mrb[0].mxu0
      %v2530 = vadd.f32 0.0, %v2529
      %v2531 = vpop.f32.mrb[0].mxu0
      %v2532 = vadd.f32 0.0, %v2531
      %2533 = vmatprep.mubr.bf16.mxu0 0
      %2534 = vmatmul.mubr.bf16.gmra.mrb[0].mxu0 %v759
      %v2535 = vpop.f32.mrb[0].mxu0
      %v2536 = vadd.f32 0.0, %v2535
      %v2537 = vpop.f32.mrb[0].mxu0
      %v2538 = vadd.f32 0.0, %v2537
      %v2539 = vpop.f32.mrb[0].mxu0
      %v2540 = vadd.f32 0.0, %v2539
      %v2541 = vpop.f32.mrb[0].mxu0
      %v2542 = vadd.f32 0.0, %v2541
      %2543 = vmatprep.mubr.bf16.mxu0 0
      %2544 = vmatmul.mubr.bf16.gmra.mrb[0].mxu0 %v762
      %v2545 = vpop.f32.mrb[0].mxu0
      %v2546 = vadd.f32 0.0, %v2545
      %v2547 = vpop.f32.mrb[0].mxu0
      %v2548 = vadd.f32 0.0, %v2547
      %v2549 = vpop.f32.mrb[0].mxu0
      %v2550 = vadd.f32 0.0, %v2549
      %v2551 = vpop.f32.mrb[0].mxu0
      %v2552 = vadd.f32 0.0, %v2551
      %2553 = vmatprep.mubr.bf16.mxu0 0
      %2554 = vmatmul.mubr.bf16.gmra.mrb[0].mxu0 %v765
      %v2555 = vpop.f32.mrb[0].mxu0
      %v2556 = vadd.f32 0.0, %v2555
      %v2557 = vpop.f32.mrb[0].mxu0
      %v2558 = vadd.f32 0.0, %v2557
      %v2559 = vpop.f32.mrb[0].mxu0
      %v2560 = vadd.f32 0.0, %v2559
      %v2561 = vpop.f32.mrb[0].mxu0
      %v2562 = vadd.f32 0.0, %v2561
      %2563 = vmatprep.mubr.bf16.mxu0 0
      %2564 = vmatmul.mubr.bf16.gmra.mrb[0].mxu0 %v768
      %v2565 = vpop.f32.mrb[0].mxu0
      %v2566 = vadd.f32 0.0, %v2565
      %v2567 = vpop.f32.mrb[0].mxu0
      %v2568 = vadd.f32 0.0, %v2567
      %v2569 = vpop.f32.mrb[0].mxu0
      %v2570 = vadd.f32 0.0, %v2569
      %v2571 = vpop.f32.mrb[0].mxu0
      %v2572 = vadd.f32 0.0, %v2571
      %2573 = vmatprep.mubr.bf16.mxu0 0
      %2574 = vmatmul.mubr.bf16.gmra.mrb[0].mxu0 %v771
      %v2575 = vpop.f32.mrb[0].mxu0
      %v2576 = vadd.f32 0.0, %v2575
      %v2577 = vpop.f32.mrb[0].mxu0
      %v2578 = vadd.f32 0.0, %v2577
      %v2579 = vpop.f32.mrb[0].mxu0
      %v2580 = vadd.f32 0.0, %v2579
      %v2581 = vpop.f32.mrb[0].mxu0
      %v2582 = vadd.f32 0.0, %v2581
      %2583 = vmatprep.mubr.bf16.mxu0 0
      %2584 = vmatmul.mubr.bf16.gmra.mrb[0].mxu0 %v774
      %v2585 = vpop.f32.mrb[0].mxu0
      %v2586 = vadd.f32 0.0, %v2585
      %v2587 = vpop.f32.mrb[0].mxu0
      %v2588 = vadd.f32 0.0, %v2587
      %v2589 = vpop.f32.mrb[0].mxu0
      %v2590 = vadd.f32 0.0, %v2589
      %v2591 = vpop.f32.mrb[0].mxu0
      %v2592 = vadd.f32 0.0, %v2591
      %2593 = vmatprep.mubr.bf16.mxu0 0
      %2594 = vmatmul.mubr.bf16.gmra.mrb[0].mxu0 %v777
      %v2595 = vpop.f32.mrb[0].mxu0
      %v2596 = vadd.f32 0.0, %v2595
      %v2597 = vpop.f32.mrb[0].mxu0
      %v2598 = vadd.f32 0.0, %v2597
      %v2599 = vpop.f32.mrb[0].mxu0
      %v2600 = vadd.f32 0.0, %v2599
      %v2601 = vpop.f32.mrb[0].mxu0
      %v2602 = vadd.f32 0.0, %v2601
      %2603 = vmatprep.mubr.bf16.mxu0 0
      %2604 = vmatmul.mubr.bf16.gmra.mrb[0].mxu0 %v780
      %v2605 = vpop.f32.mrb[0].mxu0
      %v2606 = vadd.f32 0.0, %v2605
      %v2607 = vpop.f32.mrb[0].mxu0
      %v2608 = vadd.f32 0.0, %v2607
      %v2609 = vpop.f32.mrb[0].mxu0
      %v2610 = vadd.f32 0.0, %v2609
      %v2611 = vpop.f32.mrb[0].mxu0
      %v2612 = vadd.f32 0.0, %v2611
      %2613 = vmatprep.mubr.bf16.mxu0 0
      %2614 = vmatmul.mubr.bf16.gmra.mrb[0].mxu0 %v783
      %v2615 = vpop.f32.mrb[0].mxu0
      %v2616 = vadd.f32 0.0, %v2615
      %v2617 = vpop.f32.mrb[0].mxu0
      %v2618 = vadd.f32 0.0, %v2617
      %v2619 = vpop.f32.mrb[0].mxu0
      %v2620 = vadd.f32 0.0, %v2619
      %v2621 = vpop.f32.mrb[0].mxu0
      %v2622 = vadd.f32 0.0, %v2621
      %2623 = vmatprep.mubr.bf16.mxu0 0
      %2624 = vmatmul.mubr.bf16.gmra.mrb[0].mxu0 %v786
      %v2625 = vpop.f32.mrb[0].mxu0
      %v2626 = vadd.f32 0.0, %v2625
      %v2627 = vpop.f32.mrb[0].mxu0
      %v2628 = vadd.f32 0.0, %v2627
      %v2629 = vpop.f32.mrb[0].mxu0
      %v2630 = vadd.f32 0.0, %v2629
      %v2631 = vpop.f32.mrb[0].mxu0
      %v2632 = vadd.f32 0.0, %v2631
      %2633 = vmatprep.mubr.bf16.mxu0 0
      %2634 = vmatmul.mubr.bf16.gmra.mrb[0].mxu0 %v789
      %v2635 = vpop.f32.mrb[0].mxu0
      %v2636 = vadd.f32 0.0, %v2635
      %v2637 = vpop.f32.mrb[0].mxu0
      %v2638 = vadd.f32 0.0, %v2637
      %v2639 = vpop.f32.mrb[0].mxu0
      %v2640 = vadd.f32 0.0, %v2639
      %v2641 = vpop.f32.mrb[0].mxu0
      %v2642 = vadd.f32 0.0, %v2641
      %2643 = vmatprep.mubr.bf16.mxu0 0
      %2644 = vmatmul.mubr.bf16.gmra.mrb[0].mxu0 %v792
      %v2645 = vpop.f32.mrb[0].mxu0
      %v2646 = vadd.f32 0.0, %v2645
      %v2647 = vpop.f32.mrb[0].mxu0
      %v2648 = vadd.f32 0.0, %v2647
      %v2649 = vpop.f32.mrb[0].mxu0
      %v2650 = vadd.f32 0.0, %v2649
      %v2651 = vpop.f32.mrb[0].mxu0
      %v2652 = vadd.f32 0.0, %v2651
      %2653 = vmatprep.mubr.bf16.mxu0 0
      %2654 = vmatmul.mubr.bf16.gmra.mrb[0].mxu0 %v795
      %v2655 = vpop.f32.mrb[0].mxu0
      %v2656 = vadd.f32 0.0, %v2655
      %v2657 = vpop.f32.mrb[0].mxu0
      %v2658 = vadd.f32 0.0, %v2657
      %v2659 = vpop.f32.mrb[0].mxu0
      %v2660 = vadd.f32 0.0, %v2659
      %v2661 = vpop.f32.mrb[0].mxu0
      %v2662 = vadd.f32 0.0, %v2661
      %2663 = vmatprep.mubr.bf16.mxu0 0
      %2664 = vmatmul.mubr.bf16.gmra.mrb[0].mxu0 %v798
      %v2665 = vpop.f32.mrb[0].mxu0
      %v2666 = vadd.f32 0.0, %v2665
      %v2667 = vpop.f32.mrb[0].mxu0
      %v2668 = vadd.f32 0.0, %v2667
      %v2669 = vpop.f32.mrb[0].mxu0
      %v2670 = vadd.f32 0.0, %v2669
      %v2671 = vpop.f32.mrb[0].mxu0
      %v2672 = vadd.f32 0.0, %v2671
      %2673 = vmatprep.mubr.bf16.mxu0 0
      %2674 = vmatmul.mubr.bf16.gmra.mrb[0].mxu0 %v801
      %v2675 = vpop.f32.mrb[0].mxu0
      %v2676 = vadd.f32 0.0, %v2675
      %v2677 = vpop.f32.mrb[0].mxu0
      %v2678 = vadd.f32 0.0, %v2677
      %v2679 = vpop.f32.mrb[0].mxu0
      %v2680 = vadd.f32 0.0, %v2679
      %v2681 = vpop.f32.mrb[0].mxu0
      %v2682 = vadd.f32 0.0, %v2681
      %2683 = vmatprep.mubr.bf16.mxu0 0
      %2684 = vmatmul.mubr.bf16.gmra.mrb[0].mxu0 %v804
      %v2685 = vpop.f32.mrb[0].mxu0
      %v2686 = vadd.f32 0.0, %v2685
      %v2687 = vpop.f32.mrb[0].mxu0
      %v2688 = vadd.f32 0.0, %v2687
      %v2689 = vpop.f32.mrb[0].mxu0
      %v2690 = vadd.f32 0.0, %v2689
      %v2691 = vpop.f32.mrb[0].mxu0
      %v2692 = vadd.f32 0.0, %v2691
      %2693 = vmatprep.mubr.bf16.mxu0 0
      %2694 = vmatmul.mubr.bf16.gmra.mrb[0].mxu0 %v807
      %v2695 = vpop.f32.mrb[0].mxu0
      %v2696 = vadd.f32 0.0, %v2695
      %v2697 = vpop.f32.mrb[0].mxu0
      %v2698 = vadd.f32 0.0, %v2697
      %v2699 = vpop.f32.mrb[0].mxu0
      %v2700 = vadd.f32 0.0, %v2699
      %v2701 = vpop.f32.mrb[0].mxu0
      %v2702 = vadd.f32 0.0, %v2701
      %2703 = vmatprep.mubr.bf16.mxu0 0
      %2704 = vmatmul.mubr.bf16.gmra.mrb[0].mxu0 %v810
      %v2705 = vpop.f32.mrb[0].mxu0
      %v2706 = vadd.f32 0.0, %v2705
      %v2707 = vpop.f32.mrb[0].mxu0
      %v2708 = vadd.f32 0.0, %v2707
      %v2709 = vpop.f32.mrb[0].mxu0
      %v2710 = vadd.f32 0.0, %v2709
      %v2711 = vpop.f32.mrb[0].mxu0
      %v2712 = vadd.f32 0.0, %v2711
      %2713 = vmatprep.mubr.bf16.mxu0 0
      %2714 = vmatmul.mubr.bf16.gmra.mrb[0].mxu0 %v813
      %v2715 = vpop.f32.mrb[0].mxu0
      %v2716 = vadd.f32 0.0, %v2715
      %v2717 = vpop.f32.mrb[0].mxu0
      %v2718 = vadd.f32 0.0, %v2717
      %v2719 = vpop.f32.mrb[0].mxu0
      %v2720 = vadd.f32 0.0, %v2719
      %v2721 = vpop.f32.mrb[0].mxu0
      %v2722 = vadd.f32 0.0, %v2721
      %2723 = vmatprep.mubr.bf16.mxu0 0
      %2724 = vmatmul.mubr.bf16.gmra.mrb[0].mxu0 %v1509
      %v2725 = vpop.f32.mrb[0].mxu0
      %v2726 = vadd.f32 0.0, %v2725
      %v2727 = vpop.f32.mrb[0].mxu0
      %v2728 = vadd.f32 0.0, %v2727
      %v2729 = vpop.f32.mrb[0].mxu0
      %v2730 = vadd.f32 0.0, %v2729
      %v2731 = vpop.f32.mrb[0].mxu0
      %v2732 = vadd.f32 0.0, %v2731
      %2733 = vmatprep.mubr.bf16.mxu0 0
      %2734 = vmatmul.mubr.bf16.gmra.mrb[0].mxu0 %v1971
      %v2735 = vpop.f32.mrb[0].mxu0
      %v2736 = vadd.f32 0.0, %v2735
      %v2737 = vpop.f32.mrb[0].mxu0
      %v2738 = vadd.f32 0.0, %v2737
      %v2739 = vpop.f32.mrb[0].mxu0
      %v2740 = vadd.f32 0.0, %v2739
      %v2741 = vpop.f32.mrb[0].mxu0
      %v2742 = vadd.f32 0.0, %v2741
      %2743 = vmatprep.mubr.bf16.mxu0 0
      %2744 = vmatmul.mubr.bf16.gmra.mrb[0].mxu0 %v2433
      %v2745 = vpop.f32.mrb[0].mxu0
      %v2746 = vadd.f32 0.0, %v2745
      %v2747 = vpop.f32.mrb[0].mxu0
      %v2748 = vadd.f32 0.0, %v2747
      %v2749 = vpop.f32.mrb[0].mxu0
      %v2750 = vadd.f32 0.0, %v2749
      %v2751 = vpop.f32.mrb[0].mxu0
      %v2752 = vadd.f32 0.0, %v2751
      %2753 = vdwg.mxu0
      %v2754 = vadd.f32 %v2292, %v2476
      %v2755 = vadd.f32 %v2293, %v2478
      %v2756 = vadd.f32 %v2294, %v2480
      %v2757 = vadd.f32 %v2295, %v2482
      %v2758 = vadd.f32 %v2296, %v2486
      %v2759 = vadd.f32 %v2297, %v2488
      %v2760 = vadd.f32 %v2298, %v2490
      %v2761 = vadd.f32 %v2299, %v2492
      %v2762 = vadd.f32 %v2300, %v2496
      %v2763 = vadd.f32 %v2301, %v2498
      %v2764 = vadd.f32 %v2302, %v2500
      %v2765 = vadd.f32 %v2303, %v2502
      %v2766 = vadd.f32 %v2304, %v2506
      %v2767 = vadd.f32 %v2305, %v2508
      %v2768 = vadd.f32 %v2306, %v2510
      %v2769 = vadd.f32 %v2307, %v2512
      %v2770 = vadd.f32 %v2308, %v2516
      %v2771 = vadd.f32 %v2309, %v2518
      %v2772 = vadd.f32 %v2310, %v2520
      %v2773 = vadd.f32 %v2311, %v2522
      %v2774 = vadd.f32 %v2312, %v2526
      %v2775 = vadd.f32 %v2313, %v2528
      %v2776 = vadd.f32 %v2314, %v2530
      %v2777 = vadd.f32 %v2315, %v2532
      %v2778 = vadd.f32 %v2316, %v2536
      %v2779 = vadd.f32 %v2317, %v2538
      %v2780 = vadd.f32 %v2318, %v2540
      %v2781 = vadd.f32 %v2319, %v2542
      %v2782 = vadd.f32 %v2320, %v2546
      %v2783 = vadd.f32 %v2321, %v2548
      %v2784 = vadd.f32 %v2322, %v2550
      %v2785 = vadd.f32 %v2323, %v2552
      %v2786 = vadd.f32 %v2324, %v2556
      %v2787 = vadd.f32 %v2325, %v2558
      %v2788 = vadd.f32 %v2326, %v2560
      %v2789 = vadd.f32 %v2327, %v2562
      %v2790 = vadd.f32 %v2328, %v2566
      %v2791 = vadd.f32 %v2329, %v2568
      %v2792 = vadd.f32 %v2330, %v2570
      %v2793 = vadd.f32 %v2331, %v2572
      %v2794 = vadd.f32 %v2332, %v2576
      %v2795 = vadd.f32 %v2333, %v2578
      %v2796 = vadd.f32 %v2334, %v2580
      %v2797 = vadd.f32 %v2335, %v2582
      %v2798 = vadd.f32 %v2336, %v2586
      %v2799 = vadd.f32 %v2337, %v2588
      %v2800 = vadd.f32 %v2338, %v2590
      %v2801 = vadd.f32 %v2339, %v2592
      %v2802 = vadd.f32 %v2340, %v2596
      %v2803 = vadd.f32 %v2341, %v2598
      %v2804 = vadd.f32 %v2342, %v2600
      %v2805 = vadd.f32 %v2343, %v2602
      %v2806 = vadd.f32 %v2344, %v2606
      %v2807 = vadd.f32 %v2345, %v2608
      %v2808 = vadd.f32 %v2346, %v2610
      %v2809 = vadd.f32 %v2347, %v2612
      %v2810 = vadd.f32 %v2348, %v2616
      %v2811 = vadd.f32 %v2349, %v2618
      %v2812 = vadd.f32 %v2350, %v2620
      %v2813 = vadd.f32 %v2351, %v2622
      %v2814 = vadd.f32 %v2352, %v2626
      %v2815 = vadd.f32 %v2353, %v2628
      %v2816 = vadd.f32 %v2354, %v2630
      %v2817 = vadd.f32 %v2355, %v2632
      %v2818 = vadd.f32 %v2356, %v2636
      %v2819 = vadd.f32 %v2357, %v2638
      %v2820 = vadd.f32 %v2358, %v2640
      %v2821 = vadd.f32 %v2359, %v2642
      %v2822 = vadd.f32 %v2360, %v2646
      %v2823 = vadd.f32 %v2361, %v2648
      %v2824 = vadd.f32 %v2362, %v2650
      %v2825 = vadd.f32 %v2363, %v2652
      %v2826 = vadd.f32 %v2364, %v2656
      %v2827 = vadd.f32 %v2365, %v2658
      %v2828 = vadd.f32 %v2366, %v2660
      %v2829 = vadd.f32 %v2367, %v2662
      %v2830 = vadd.f32 %v2368, %v2666
      %v2831 = vadd.f32 %v2369, %v2668
      %v2832 = vadd.f32 %v2370, %v2670
      %v2833 = vadd.f32 %v2371, %v2672
      %v2834 = vadd.f32 %v2372, %v2676
      %v2835 = vadd.f32 %v2373, %v2678
      %v2836 = vadd.f32 %v2374, %v2680
      %v2837 = vadd.f32 %v2375, %v2682
      %v2838 = vadd.f32 %v2376, %v2686
      %v2839 = vadd.f32 %v2377, %v2688
      %v2840 = vadd.f32 %v2378, %v2690
      %v2841 = vadd.f32 %v2379, %v2692
      %v2842 = vadd.f32 %v2380, %v2696
      %v2843 = vadd.f32 %v2381, %v2698
      %v2844 = vadd.f32 %v2382, %v2700
      %v2845 = vadd.f32 %v2383, %v2702
      %v2846 = vadd.f32 %v2384, %v2706
      %v2847 = vadd.f32 %v2385, %v2708
      %v2848 = vadd.f32 %v2386, %v2710
      %v2849 = vadd.f32 %v2387, %v2712
      %v2850 = vadd.f32 %v2388, %v2716
      %v2851 = vadd.f32 %v2389, %v2718
      %v2852 = vadd.f32 %v2390, %v2720
      %v2853 = vadd.f32 %v2391, %v2722
      %v2854 = vadd.f32 %v2392, %v2726
      %v2855 = vadd.f32 %v2393, %v2728
      %v2856 = vadd.f32 %v2394, %v2730
      %v2857 = vadd.f32 %v2395, %v2732
      %v2858 = vadd.f32 %v2396, %v2736
      %v2859 = vadd.f32 %v2397, %v2738
      %v2860 = vadd.f32 %v2398, %v2740
      %v2861 = vadd.f32 %v2399, %v2742
      %v2862 = vadd.f32 %v2400, %v2746
      %v2863 = vadd.f32 %v2401, %v2748
      %v2864 = vadd.f32 %v2402, %v2750
      %v2865 = vadd.f32 %v2403, %v2752
      %v2866 = vld [vmem:[%s2] sm:$0x3]
      %v2868 = vlaneseq
      %v2869 = vshrl.u32 %v2868, 7
      %v2870 = vsub.s32 0, %v2869
      %v2871 = vrot.slane %v2866, %v2870
      %v2872 = vlaneseq
      %v2873 = vshrl.u32 %v2872, 7
      %v2874 = vsub.s32 1, %v2873
      %v2875 = vrot.slane %v2866, %v2874
      %v2878 = vadd.f32 %v2754, %v2871
      %v2879 = vadd.f32 %v2755, %v2875
      %v2880 = vadd.f32 %v2756, %v2871
      %v2881 = vadd.f32 %v2757, %v2875
      %v2882 = vadd.f32 %v2758, %v2871
      %v2883 = vadd.f32 %v2759, %v2875
      %v2884 = vadd.f32 %v2760, %v2871
      %v2885 = vadd.f32 %v2761, %v2875
      %v2886 = vadd.f32 %v2762, %v2871
      %v2887 = vadd.f32 %v2763, %v2875
      %v2888 = vadd.f32 %v2764, %v2871
      %v2889 = vadd.f32 %v2765, %v2875
      %v2890 = vadd.f32 %v2766, %v2871
      %v2891 = vadd.f32 %v2767, %v2875
      %v2892 = vadd.f32 %v2768, %v2871
      %v2893 = vadd.f32 %v2769, %v2875
      %v2894 = vadd.f32 %v2770, %v2871
      %v2895 = vadd.f32 %v2771, %v2875
      %v2896 = vadd.f32 %v2772, %v2871
      %v2897 = vadd.f32 %v2773, %v2875
      %v2898 = vadd.f32 %v2774, %v2871
      %v2899 = vadd.f32 %v2775, %v2875
      %v2900 = vadd.f32 %v2776, %v2871
      %v2901 = vadd.f32 %v2777, %v2875
      %v2902 = vadd.f32 %v2778, %v2871
      %v2903 = vadd.f32 %v2779, %v2875
      %v2904 = vadd.f32 %v2780, %v2871
      %v2905 = vadd.f32 %v2781, %v2875
      %v2906 = vadd.f32 %v2782, %v2871
      %v2907 = vadd.f32 %v2783, %v2875
      %v2908 = vadd.f32 %v2784, %v2871
      %v2909 = vadd.f32 %v2785, %v2875
      %v2910 = vadd.f32 %v2786, %v2871
      %v2911 = vadd.f32 %v2787, %v2875
      %v2912 = vadd.f32 %v2788, %v2871
      %v2913 = vadd.f32 %v2789, %v2875
      %v2914 = vadd.f32 %v2790, %v2871
      %v2915 = vadd.f32 %v2791, %v2875
      %v2916 = vadd.f32 %v2792, %v2871
      %v2917 = vadd.f32 %v2793, %v2875
      %v2918 = vadd.f32 %v2794, %v2871
      %v2919 = vadd.f32 %v2795, %v2875
      %v2920 = vadd.f32 %v2796, %v2871
      %v2921 = vadd.f32 %v2797, %v2875
      %v2922 = vadd.f32 %v2798, %v2871
      %v2923 = vadd.f32 %v2799, %v2875
      %v2924 = vadd.f32 %v2800, %v2871
      %v2925 = vadd.f32 %v2801, %v2875
      %v2926 = vadd.f32 %v2802, %v2871
      %v2927 = vadd.f32 %v2803, %v2875
      %v2928 = vadd.f32 %v2804, %v2871
      %v2929 = vadd.f32 %v2805, %v2875
      %v2930 = vadd.f32 %v2806, %v2871
      %v2931 = vadd.f32 %v2807, %v2875
      %v2932 = vadd.f32 %v2808, %v2871
      %v2933 = vadd.f32 %v2809, %v2875
      %v2934 = vadd.f32 %v2810, %v2871
      %v2935 = vadd.f32 %v2811, %v2875
      %v2936 = vadd.f32 %v2812, %v2871
      %v2937 = vadd.f32 %v2813, %v2875
      %v2938 = vadd.f32 %v2814, %v2871
      %v2939 = vadd.f32 %v2815, %v2875
      %v2940 = vadd.f32 %v2816, %v2871
      %v2941 = vadd.f32 %v2817, %v2875
      %v2942 = vadd.f32 %v2818, %v2871
      %v2943 = vadd.f32 %v2819, %v2875
      %v2944 = vadd.f32 %v2820, %v2871
      %v2945 = vadd.f32 %v2821, %v2875
      %v2946 = vadd.f32 %v2822, %v2871
      %v2947 = vadd.f32 %v2823, %v2875
      %v2948 = vadd.f32 %v2824, %v2871
      %v2949 = vadd.f32 %v2825, %v2875
      %v2950 = vadd.f32 %v2826, %v2871
      %v2951 = vadd.f32 %v2827, %v2875
      %v2952 = vadd.f32 %v2828, %v2871
      %v2953 = vadd.f32 %v2829, %v2875
      %v2954 = vadd.f32 %v2830, %v2871
      %v2955 = vadd.f32 %v2831, %v2875
      %v2956 = vadd.f32 %v2832, %v2871
      %v2957 = vadd.f32 %v2833, %v2875
      %v2958 = vadd.f32 %v2834, %v2871
      %v2959 = vadd.f32 %v2835, %v2875
      %v2960 = vadd.f32 %v2836, %v2871
      %v2961 = vadd.f32 %v2837, %v2875
      %v2962 = vadd.f32 %v2838, %v2871
      %v2963 = vadd.f32 %v2839, %v2875
      %v2964 = vadd.f32 %v2840, %v2871
      %v2965 = vadd.f32 %v2841, %v2875
      %v2966 = vadd.f32 %v2842, %v2871
      %v2967 = vadd.f32 %v2843, %v2875
      %v2968 = vadd.f32 %v2844, %v2871
      %v2969 = vadd.f32 %v2845, %v2875
      %v2970 = vadd.f32 %v2846, %v2871
      %v2971 = vadd.f32 %v2847, %v2875
      %v2972 = vadd.f32 %v2848, %v2871
      %v2973 = vadd.f32 %v2849, %v2875
      %v2974 = vadd.f32 %v2850, %v2871
      %v2975 = vadd.f32 %v2851, %v2875
      %v2976 = vadd.f32 %v2852, %v2871
      %v2977 = vadd.f32 %v2853, %v2875
      %v2978 = vadd.f32 %v2854, %v2871
      %v2979 = vadd.f32 %v2855, %v2875
      %v2980 = vadd.f32 %v2856, %v2871
      %v2981 = vadd.f32 %v2857, %v2875
      %v2982 = vadd.f32 %v2858, %v2871
      %v2983 = vadd.f32 %v2859, %v2875
      %v2984 = vadd.f32 %v2860, %v2871
      %v2985 = vadd.f32 %v2861, %v2875
      %v2986 = vadd.f32 %v2862, %v2871
      %v2987 = vadd.f32 %v2863, %v2875
      %v2988 = vadd.f32 %v2864, %v2871
      %v2989 = vadd.f32 %v2865, %v2875
      %v2990 = vmax.f32 %v2878, 0.0
      %v2991 = vmax.f32 %v2879, 0.0
      %v2992 = vmax.f32 %v2880, 0.0
      %v2993 = vmax.f32 %v2881, 0.0
      %v2994 = vmax.f32 %v2882, 0.0
      %v2995 = vmax.f32 %v2883, 0.0
      %v2996 = vmax.f32 %v2884, 0.0
      %v2997 = vmax.f32 %v2885, 0.0
      %v2998 = vmax.f32 %v2886, 0.0
      %v2999 = vmax.f32 %v2887, 0.0
      %v3000 = vmax.f32 %v2888, 0.0
      %v3001 = vmax.f32 %v2889, 0.0
      %v3002 = vmax.f32 %v2890, 0.0
      %v3003 = vmax.f32 %v2891, 0.0
      %v3004 = vmax.f32 %v2892, 0.0
      %v3005 = vmax.f32 %v2893, 0.0
      %v3006 = vmax.f32 %v2894, 0.0
      %v3007 = vmax.f32 %v2895, 0.0
      %v3008 = vmax.f32 %v2896, 0.0
      %v3009 = vmax.f32 %v2897, 0.0
      %v3010 = vmax.f32 %v2898, 0.0
      %v3011 = vmax.f32 %v2899, 0.0
      %v3012 = vmax.f32 %v2900, 0.0
      %v3013 = vmax.f32 %v2901, 0.0
      %v3014 = vmax.f32 %v2902, 0.0
      %v3015 = vmax.f32 %v2903, 0.0
      %v3016 = vmax.f32 %v2904, 0.0
      %v3017 = vmax.f32 %v2905, 0.0
      %v3018 = vmax.f32 %v2906, 0.0
      %v3019 = vmax.f32 %v2907, 0.0
      %v3020 = vmax.f32 %v2908, 0.0
      %v3021 = vmax.f32 %v2909, 0.0
      %v3022 = vmax.f32 %v2910, 0.0
      %v3023 = vmax.f32 %v2911, 0.0
      %v3024 = vmax.f32 %v2912, 0.0
      %v3025 = vmax.f32 %v2913, 0.0
      %v3026 = vmax.f32 %v2914, 0.0
      %v3027 = vmax.f32 %v2915, 0.0
      %v3028 = vmax.f32 %v2916, 0.0
      %v3029 = vmax.f32 %v2917, 0.0
      %v3030 = vmax.f32 %v2918, 0.0
      %v3031 = vmax.f32 %v2919, 0.0
      %v3032 = vmax.f32 %v2920, 0.0
      %v3033 = vmax.f32 %v2921, 0.0
      %v3034 = vmax.f32 %v2922, 0.0
      %v3035 = vmax.f32 %v2923, 0.0
      %v3036 = vmax.f32 %v2924, 0.0
      %v3037 = vmax.f32 %v2925, 0.0
      %v3038 = vmax.f32 %v2926, 0.0
      %v3039 = vmax.f32 %v2927, 0.0
      %v3040 = vmax.f32 %v2928, 0.0
      %v3041 = vmax.f32 %v2929, 0.0
      %v3042 = vmax.f32 %v2930, 0.0
      %v3043 = vmax.f32 %v2931, 0.0
      %v3044 = vmax.f32 %v2932, 0.0
      %v3045 = vmax.f32 %v2933, 0.0
      %v3046 = vmax.f32 %v2934, 0.0
      %v3047 = vmax.f32 %v2935, 0.0
      %v3048 = vmax.f32 %v2936, 0.0
      %v3049 = vmax.f32 %v2937, 0.0
      %v3050 = vmax.f32 %v2938, 0.0
      %v3051 = vmax.f32 %v2939, 0.0
      %v3052 = vmax.f32 %v2940, 0.0
      %v3053 = vmax.f32 %v2941, 0.0
      %v3054 = vmax.f32 %v2942, 0.0
      %v3055 = vmax.f32 %v2943, 0.0
      %v3056 = vmax.f32 %v2944, 0.0
      %v3057 = vmax.f32 %v2945, 0.0
      %v3058 = vmax.f32 %v2946, 0.0
      %v3059 = vmax.f32 %v2947, 0.0
      %v3060 = vmax.f32 %v2948, 0.0
      %v3061 = vmax.f32 %v2949, 0.0
      %v3062 = vmax.f32 %v2950, 0.0
      %v3063 = vmax.f32 %v2951, 0.0
      %v3064 = vmax.f32 %v2952, 0.0
      %v3065 = vmax.f32 %v2953, 0.0
      %v3066 = vmax.f32 %v2954, 0.0
      %v3067 = vmax.f32 %v2955, 0.0
      %v3068 = vmax.f32 %v2956, 0.0
      %v3069 = vmax.f32 %v2957, 0.0
      %v3070 = vmax.f32 %v2958, 0.0
      %v3071 = vmax.f32 %v2959, 0.0
      %v3072 = vmax.f32 %v2960, 0.0
      %v3073 = vmax.f32 %v2961, 0.0
      %v3074 = vmax.f32 %v2962, 0.0
      %v3075 = vmax.f32 %v2963, 0.0
      %v3076 = vmax.f32 %v2964, 0.0
      %v3077 = vmax.f32 %v2965, 0.0
      %v3078 = vmax.f32 %v2966, 0.0
      %v3079 = vmax.f32 %v2967, 0.0
      %v3080 = vmax.f32 %v2968, 0.0
      %v3081 = vmax.f32 %v2969, 0.0
      %v3082 = vmax.f32 %v2970, 0.0
      %v3083 = vmax.f32 %v2971, 0.0
      %v3084 = vmax.f32 %v2972, 0.0
      %v3085 = vmax.f32 %v2973, 0.0
      %v3086 = vmax.f32 %v2974, 0.0
      %v3087 = vmax.f32 %v2975, 0.0
      %v3088 = vmax.f32 %v2976, 0.0
      %v3089 = vmax.f32 %v2977, 0.0
      %v3090 = vmax.f32 %v2978, 0.0
      %v3091 = vmax.f32 %v2979, 0.0
      %v3092 = vmax.f32 %v2980, 0.0
      %v3093 = vmax.f32 %v2981, 0.0
      %v3094 = vmax.f32 %v2982, 0.0
      %v3095 = vmax.f32 %v2983, 0.0
      %v3096 = vmax.f32 %v2984, 0.0
      %v3097 = vmax.f32 %v2985, 0.0
      %v3098 = vmax.f32 %v2986, 0.0
      %v3099 = vmax.f32 %v2987, 0.0
      %v3100 = vmax.f32 %v2988, 0.0
      %v3101 = vmax.f32 %v2989, 0.0
      %v3102 = vld [vmem:[%s3] sm:$0xff]
      %v3103 = vld [vmem:[%s3 + $0x8] sm:$0xff]
      %v3104 = vld [vmem:[%s3 + $0x10] sm:$0xff]
      %v3105 = vld [vmem:[%s3 + $0x18] sm:$0xff]
      %v3106 = vld [vmem:[%s3 + $0x20] sm:$0xff]
      %v3107 = vld [vmem:[%s3 + $0x28] sm:$0xff]
      %v3108 = vld [vmem:[%s3 + $0x30] sm:$0xff]
      %v3109 = vld [vmem:[%s3 + $0x38] sm:$0xff]
      %v3110 = vld [vmem:[%s3 + $0x40] sm:$0xff]
      %v3111 = vld [vmem:[%s3 + $0x48] sm:$0xff]
      %v3112 = vld [vmem:[%s3 + $0x50] sm:$0xff]
      %v3113 = vld [vmem:[%s3 + $0x58] sm:$0xff]
      %v3114 = vld [vmem:[%s3 + $0x60] sm:$0xff]
      %v3115 = vld [vmem:[%s3 + $0x68] sm:$0xff]
      %v3116 = vld [vmem:[%s3 + $0x70] sm:$0xff]
      %v3117 = vld [vmem:[%s3 + $0x78] sm:$0xff]
      %v3118 = vld [vmem:[%s3 + $0x80] sm:$0xff]
      %v3119 = vld [vmem:[%s3 + $0x88] sm:$0xff]
      %v3120 = vld [vmem:[%s3 + $0x90] sm:$0xff]
      %v3121 = vld [vmem:[%s3 + $0x98] sm:$0xff]
      %v3122 = vld [vmem:[%s3 + $0xa0] sm:$0xff]
      %v3123 = vld [vmem:[%s3 + $0xa8] sm:$0xff]
      %v3124 = vld [vmem:[%s3 + $0xb0] sm:$0xff]
      %v3125 = vld [vmem:[%s3 + $0xb8] sm:$0xff]
      %v3126 = vld [vmem:[%s3 + $0xc0] sm:$0xff]
      %v3127 = vld [vmem:[%s3 + $0xc8] sm:$0xff]
      %v3128 = vld [vmem:[%s3 + $0xd0] sm:$0xff]
      %v3129 = vld [vmem:[%s3 + $0xd8] sm:$0xff]
      %v3130 = vld [vmem:[%s3 + $0xe0] sm:$0xff]
      %v3131 = vld [vmem:[%s3 + $0xe8] sm:$0xff]
      %v3132 = vld [vmem:[%s3 + $0xf0] sm:$0xff]
      %v3133 = vld [vmem:[%s3 + $0xf8] sm:$0xff]
      %v3134 = vld [vmem:[%s3 + $0x100] sm:$0xff]
      %v3135 = vld [vmem:[%s3 + $0x108] sm:$0xff]
      %v3136 = vld [vmem:[%s3 + $0x110] sm:$0xff]
      %v3137 = vld [vmem:[%s3 + $0x118] sm:$0xff]
      %v3138 = vld [vmem:[%s3 + $0x120] sm:$0xff]
      %v3139 = vld [vmem:[%s3 + $0x128] sm:$0xff]
      %v3140 = vld [vmem:[%s3 + $0x130] sm:$0xff]
      %v3141 = vld [vmem:[%s3 + $0x138] sm:$0xff]
      %v3142 = vld [vmem:[%s3 + $0x140] sm:$0xff]
      %v3143 = vld [vmem:[%s3 + $0x148] sm:$0xff]
      %v3144 = vld [vmem:[%s3 + $0x150] sm:$0xff]
      %v3145 = vld [vmem:[%s3 + $0x158] sm:$0xff]
      %v3146 = vld [vmem:[%s3 + $0x160] sm:$0xff]
      %v3147 = vld [vmem:[%s3 + $0x168] sm:$0xff]
      %v3148 = vld [vmem:[%s3 + $0x170] sm:$0xff]
      %v3149 = vld [vmem:[%s3 + $0x178] sm:$0xff]
      %v3150 = vld [vmem:[%s3 + $0x180] sm:$0xff]
      %v3151 = vld [vmem:[%s3 + $0x188] sm:$0xff]
      %v3152 = vld [vmem:[%s3 + $0x190] sm:$0xff]
      %v3153 = vld [vmem:[%s3 + $0x198] sm:$0xff]
      %v3154 = vld [vmem:[%s3 + $0x1a0] sm:$0xff]
      %v3155 = vld [vmem:[%s3 + $0x1a8] sm:$0xff]
      %v3156 = vld [vmem:[%s3 + $0x1b0] sm:$0xff]
      %v3157 = vld [vmem:[%s3 + $0x1b8] sm:$0xff]
      %v3158 = vpack.c.bf16 %v2992, %v2990
      %v3159 = vpack.c.bf16 %v2993, %v2991
      %v3160 = vpack.c.bf16 %v2996, %v2994
      %v3161 = vpack.c.bf16 %v2997, %v2995
      %v3162 = vpack.c.bf16 %v3000, %v2998
      %v3163 = vpack.c.bf16 %v3001, %v2999
      %v3164 = vpack.c.bf16 %v3004, %v3002
      %v3165 = vpack.c.bf16 %v3005, %v3003
      %v3166 = vpack.c.bf16 %v3008, %v3006
      %v3167 = vpack.c.bf16 %v3009, %v3007
      %v3168 = vpack.c.bf16 %v3012, %v3010
      %v3169 = vpack.c.bf16 %v3013, %v3011
      %v3170 = vpack.c.bf16 %v3016, %v3014
      %v3171 = vpack.c.bf16 %v3017, %v3015
      %v3172 = vpack.c.bf16 %v3020, %v3018
      %v3173 = vpack.c.bf16 %v3021, %v3019
      %v3174 = vpack.c.bf16 %v3024, %v3022
      %v3175 = vpack.c.bf16 %v3025, %v3023
      %v3176 = vpack.c.bf16 %v3028, %v3026
      %v3177 = vpack.c.bf16 %v3029, %v3027
      %v3178 = vpack.c.bf16 %v3032, %v3030
      %v3179 = vpack.c.bf16 %v3033, %v3031
      %v3180 = vpack.c.bf16 %v3036, %v3034
      %v3181 = vpack.c.bf16 %v3037, %v3035
      %v3182 = vpack.c.bf16 %v3040, %v3038
      %v3183 = vpack.c.bf16 %v3041, %v3039
      %v3184 = vpack.c.bf16 %v3044, %v3042
      %v3185 = vpack.c.bf16 %v3045, %v3043
      %v3186 = vpack.c.bf16 %v3048, %v3046
      %v3187 = vpack.c.bf16 %v3049, %v3047
      %v3188 = vpack.c.bf16 %v3052, %v3050
      %v3189 = vpack.c.bf16 %v3053, %v3051
      %v3190 = vpack.c.bf16 %v3056, %v3054
      %v3191 = vpack.c.bf16 %v3057, %v3055
      %v3192 = vpack.c.bf16 %v3060, %v3058
      %v3193 = vpack.c.bf16 %v3061, %v3059
      %v3194 = vpack.c.bf16 %v3064, %v3062
      %v3195 = vpack.c.bf16 %v3065, %v3063
      %v3196 = vpack.c.bf16 %v3068, %v3066
      %v3197 = vpack.c.bf16 %v3069, %v3067
      %v3198 = vpack.c.bf16 %v3072, %v3070
      %v3199 = vpack.c.bf16 %v3073, %v3071
      %v3200 = vpack.c.bf16 %v3076, %v3074
      %v3201 = vpack.c.bf16 %v3077, %v3075
      %v3202 = vpack.c.bf16 %v3080, %v3078
      %v3203 = vpack.c.bf16 %v3081, %v3079
      %v3204 = vpack.c.bf16 %v3084, %v3082
      %v3205 = vpack.c.bf16 %v3085, %v3083
      %v3206 = vpack.c.bf16 %v3088, %v3086
      %v3207 = vpack.c.bf16 %v3089, %v3087
      %v3208 = vpack.c.bf16 %v3092, %v3090
      %v3209 = vpack.c.bf16 %v3093, %v3091
      %v3210 = vpack.c.bf16 %v3096, %v3094
      %v3211 = vpack.c.bf16 %v3097, %v3095
      %v3212 = vpack.c.bf16 %v3100, %v3098
      %v3213 = vpack.c.bf16 %v3101, %v3099
      %v3214 = vld [vmem:[%s4] sm:$0xf]
      %v3215 = vld [vmem:[%s4 + $0x4] sm:$0xf]
      %v3216 = vld [vmem:[%s4 + $0x8] sm:$0xf]
      %v3217 = vld [vmem:[%s4 + $0xc] sm:$0xf]
      %v3218 = vld [vmem:[%s4 + $0x10] sm:$0xf]
      %v3219 = vld [vmem:[%s4 + $0x14] sm:$0xf]
      %v3220 = vld [vmem:[%s4 + $0x18] sm:$0xf]
      %v3221 = vld [vmem:[%s4 + $0x1c] sm:$0xf]
      %v3222 = vld [vmem:[%s4 + $0x20] sm:$0xf]
      %v3223 = vld [vmem:[%s4 + $0x24] sm:$0xf]
      %v3224 = vld [vmem:[%s4 + $0x28] sm:$0xf]
      %v3225 = vld [vmem:[%s4 + $0x2c] sm:$0xf]
      %v3226 = vld [vmem:[%s4 + $0x30] sm:$0xf]
      %v3227 = vld [vmem:[%s4 + $0x34] sm:$0xf]
      %v3228 = vld [vmem:[%s4 + $0x38] sm:$0xf]
      %v3229 = vld [vmem:[%s4 + $0x3c] sm:$0xf]
      %v3230 = vld [vmem:[%s4 + $0x40] sm:$0xf]
      %v3231 = vld [vmem:[%s4 + $0x44] sm:$0xf]
      %v3232 = vld [vmem:[%s4 + $0x48] sm:$0xf]
      %v3233 = vld [vmem:[%s4 + $0x4c] sm:$0xf]
      %v3234 = vld [vmem:[%s4 + $0x50] sm:$0xf]
      %v3256 = vunpack.c.l.b16 %v3214
      %v3257 = vunpack.c.l.b16 %v3215
      %v3258 = vunpack.c.l.b16 %v3216
      %v3259 = vunpack.c.l.b16 %v3217
      %v3260 = vunpack.c.l.b16 %v3218
      %v3261 = vunpack.c.l.b16 %v3219
      %v3262 = vunpack.c.l.b16 %v3220
      %v3263 = vunpack.c.l.b16 %v3221
      %v3264 = vunpack.c.l.b16 %v3222
      %v3265 = vunpack.c.l.b16 %v3223
      %v3266 = vunpack.c.l.b16 %v3224
      %v3267 = vunpack.c.l.b16 %v3225
      %v3268 = vunpack.c.l.b16 %v3226
      %v3269 = vunpack.c.l.b16 %v3227
      %v3270 = vunpack.c.l.b16 %v3228
      %v3271 = vunpack.c.l.b16 %v3229
      %v3272 = vunpack.c.l.b16 %v3230
      %v3273 = vunpack.c.l.b16 %v3231
      %v3274 = vunpack.c.l.b16 %v3232
      %v3275 = vunpack.c.l.b16 %v3233
      %v3276 = vunpack.c.l.b16 %v3234
      %v3277 = vpack.c.b16 %v3257, %v3256
      %v3278 = vpack.c.b16 %v3259, %v3258
      %v3279 = vpack.c.b16 %v3261, %v3260
      %v3280 = vpack.c.b16 %v3263, %v3262
      %v3281 = vpack.c.b16 %v3265, %v3264
      %v3282 = vpack.c.b16 %v3267, %v3266
      %v3283 = vpack.c.b16 %v3269, %v3268
      %v3284 = vpack.c.b16 %v3271, %v3270
      %v3285 = vpack.c.b16 %v3273, %v3272
      %v3286 = vpack.c.b16 %v3275, %v3274
      %v3287 = vpack.c.b16 %v3276, %v3276
      %vm3298 = vcmask 326656
      %v3300 = vsel %vm3298, %v3159, 0
      %v3303 = vsel %vm3298, %v3161, 0
      %v3306 = vsel %vm3298, %v3163, 0
      %v3309 = vsel %vm3298, %v3165, 0
      %v3312 = vsel %vm3298, %v3167, 0
      %v3315 = vsel %vm3298, %v3169, 0
      %v3318 = vsel %vm3298, %v3171, 0
      %v3321 = vsel %vm3298, %v3173, 0
      %v3324 = vsel %vm3298, %v3175, 0
      %v3327 = vsel %vm3298, %v3177, 0
      %v3330 = vsel %vm3298, %v3179, 0
      %v3333 = vsel %vm3298, %v3181, 0
      %v3336 = vsel %vm3298, %v3183, 0
      %v3339 = vsel %vm3298, %v3185, 0
      %v3342 = vsel %vm3298, %v3187, 0
      %v3345 = vsel %vm3298, %v3189, 0
      %v3348 = vsel %vm3298, %v3191, 0
      %v3351 = vsel %vm3298, %v3193, 0
      %v3354 = vsel %vm3298, %v3195, 0
      %v3357 = vsel %vm3298, %v3197, 0
      %v3360 = vsel %vm3298, %v3199, 0
      %v3363 = vsel %vm3298, %v3201, 0
      %v3366 = vsel %vm3298, %v3203, 0
      %v3369 = vsel %vm3298, %v3205, 0
      %v3372 = vsel %vm3298, %v3207, 0
      %v3375 = vsel %vm3298, %v3209, 0
      %v3378 = vsel %vm3298, %v3211, 0
      %v3381 = vsel %vm3298, %v3213, 0
      %vm3383 = vcmask 1043456
      %v3385 = vsel %vm3383, %v3287, 0
      %3387 = vmatprep.subr.bf16.mxu0 0
      %3388 = vmatpush1.bf16.msra.mxu0 %v3277
      %3389 = vmatprep.subr.bf16.mxu0 0
      %3390 = vmatpush1.bf16.msra.mxu0 %v3278
      %3391 = vmatprep.subr.bf16.mxu0 0
      %3392 = vmatpush1.bf16.msra.mxu0 %v3279
      %3393 = vmatprep.subr.bf16.mxu0 0
      %3394 = vmatpush1.bf16.msra.mxu0 %v3280
      %3395 = vmatprep.subr.bf16.mxu0 0
      %3396 = vmatpush1.bf16.msra.mxu0 %v3281
      %3397 = vmatprep.subr.bf16.mxu0 0
      %3398 = vmatpush1.bf16.msra.mxu0 %v3282
      %3399 = vmatprep.subr.bf16.mxu0 0
      %3400 = vmatpush1.bf16.msra.mxu0 %v3283
      %3401 = vmatprep.subr.bf16.mxu0 0
      %3402 = vmatpush1.bf16.msra.mxu0 %v3284
      %3403 = vmatprep.subr.bf16.mxu0 0
      %3404 = vmatpush1.bf16.msra.mxu0 %v3285
      %3405 = vmatprep.subr.bf16.mxu0 0
      %3406 = vmatpush1.bf16.msra.mxu0 %v3286
      %3407 = vmatprep.subr.bf16.mxu0 0
      %3408 = vmatpush1.bf16.msra.mxu0 %v3385
      %3409 = vmatprep.subr.bf16.mxu0 0
      %3410 = vmatpush1.bf16.msra.mxu0 0
      %3411 = vmatprep.subr.bf16.mxu0 0
      %3412 = vmatpush1.bf16.msra.mxu0 0
      %3413 = vmatprep.subr.bf16.mxu0 0
      %3414 = vmatpush1.bf16.msra.mxu0 0
      %3415 = vmatprep.subr.bf16.mxu0 0
      %3416 = vmatpush1.bf16.msra.mxu0 0
      %3417 = vmatprep.subr.bf16.mxu0 0
      %3418 = vmatpush1.bf16.msra.mxu0 0
      %3419 = vmatprep.mubr.bf16.mxu0 %v3300
      %3420 = vmatmul.mubr.bf16.gmra.mrb[0].mxu0 %v3158
      %v3421 = vpop.f32.mrb[0].mxu0
      %v3422 = vadd.f32 0.0, %v3421
      %v3423 = vpop.f32.mrb[0].mxu0
      %v3424 = vpop.f32.mrb[0].mxu0
      %v3425 = vadd.f32 0.0, %v3424
      %v3426 = vpop.f32.mrb[0].mxu0
      %3427 = vmatprep.mubr.bf16.mxu0 %v3303
      %3428 = vmatmul.mubr.bf16.gmra.mrb[0].mxu0 %v3160
      %v3429 = vpop.f32.mrb[0].mxu0
      %v3430 = vadd.f32 0.0, %v3429
      %v3431 = vpop.f32.mrb[0].mxu0
      %v3432 = vpop.f32.mrb[0].mxu0
      %v3433 = vadd.f32 0.0, %v3432
      %v3434 = vpop.f32.mrb[0].mxu0
      %3435 = vmatprep.mubr.bf16.mxu0 %v3306
      %3436 = vmatmul.mubr.bf16.gmra.mrb[0].mxu0 %v3162
      %v3437 = vpop.f32.mrb[0].mxu0
      %v3438 = vadd.f32 0.0, %v3437
      %v3439 = vpop.f32.mrb[0].mxu0
      %v3440 = vpop.f32.mrb[0].mxu0
      %v3441 = vadd.f32 0.0, %v3440
      %v3442 = vpop.f32.mrb[0].mxu0
      %3443 = vmatprep.mubr.bf16.mxu0 %v3309
      %3444 = vmatmul.mubr.bf16.gmra.mrb[0].mxu0 %v3164
      %v3445 = vpop.f32.mrb[0].mxu0
      %v3446 = vadd.f32 0.0, %v3445
      %v3447 = vpop.f32.mrb[0].mxu0
      %v3448 = vpop.f32.mrb[0].mxu0
      %v3449 = vadd.f32 0.0, %v3448
      %v3450 = vpop.f32.mrb[0].mxu0
      %3451 = vmatprep.mubr.bf16.mxu0 %v3312
      %3452 = vmatmul.mubr.bf16.gmra.mrb[0].mxu0 %v3166
      %v3453 = vpop.f32.mrb[0].mxu0
      %v3454 = vadd.f32 0.0, %v3453
      %v3455 = vpop.f32.mrb[0].mxu0
      %v3456 = vpop.f32.mrb[0].mxu0
      %v3457 = vadd.f32 0.0, %v3456
      %v3458 = vpop.f32.mrb[0].mxu0
      %3459 = vmatprep.mubr.bf16.mxu0 %v3315
      %3460 = vmatmul.mubr.bf16.gmra.mrb[0].mxu0 %v3168
      %v3461 = vpop.f32.mrb[0].mxu0
      %v3462 = vadd.f32 0.0, %v3461
      %v3463 = vpop.f32.mrb[0].mxu0
      %v3464 = vpop.f32.mrb[0].mxu0
      %v3465 = vadd.f32 0.0, %v3464
      %v3466 = vpop.f32.mrb[0].mxu0
      %3467 = vmatprep.mubr.bf16.mxu0 %v3318
      %3468 = vmatmul.mubr.bf16.gmra.mrb[0].mxu0 %v3170
      %v3469 = vpop.f32.mrb[0].mxu0
      %v3470 = vadd.f32 0.0, %v3469
      %v3471 = vpop.f32.mrb[0].mxu0
      %v3472 = vpop.f32.mrb[0].mxu0
      %v3473 = vadd.f32 0.0, %v3472
      %v3474 = vpop.f32.mrb[0].mxu0
      %3475 = vmatprep.mubr.bf16.mxu0 %v3321
      %3476 = vmatmul.mubr.bf16.gmra.mrb[0].mxu0 %v3172
      %v3477 = vpop.f32.mrb[0].mxu0
      %v3478 = vadd.f32 0.0, %v3477
      %v3479 = vpop.f32.mrb[0].mxu0
      %v3480 = vpop.f32.mrb[0].mxu0
      %v3481 = vadd.f32 0.0, %v3480
      %v3482 = vpop.f32.mrb[0].mxu0
      %3483 = vmatprep.mubr.bf16.mxu0 %v3324
      %3484 = vmatmul.mubr.bf16.gmra.mrb[0].mxu0 %v3174
      %v3485 = vpop.f32.mrb[0].mxu0
      %v3486 = vadd.f32 0.0, %v3485
      %v3487 = vpop.f32.mrb[0].mxu0
      %v3488 = vpop.f32.mrb[0].mxu0
      %v3489 = vadd.f32 0.0, %v3488
      %v3490 = vpop.f32.mrb[0].mxu0
      %3491 = vmatprep.mubr.bf16.mxu0 %v3327
      %3492 = vmatmul.mubr.bf16.gmra.mrb[0].mxu0 %v3176
      %v3493 = vpop.f32.mrb[0].mxu0
      %v3494 = vadd.f32 0.0, %v3493
      %v3495 = vpop.f32.mrb[0].mxu0
      %v3496 = vpop.f32.mrb[0].mxu0
      %v3497 = vadd.f32 0.0, %v3496
      %v3498 = vpop.f32.mrb[0].mxu0
      %3499 = vmatprep.mubr.bf16.mxu0 %v3330
      %3500 = vmatmul.mubr.bf16.gmra.mrb[0].mxu0 %v3178
      %v3501 = vpop.f32.mrb[0].mxu0
      %v3502 = vadd.f32 0.0, %v3501
      %v3503 = vpop.f32.mrb[0].mxu0
      %v3504 = vpop.f32.mrb[0].mxu0
      %v3505 = vadd.f32 0.0, %v3504
      %v3506 = vpop.f32.mrb[0].mxu0
      %3507 = vmatprep.mubr.bf16.mxu0 %v3333
      %3508 = vmatmul.mubr.bf16.gmra.mrb[0].mxu0 %v3180
      %v3509 = vpop.f32.mrb[0].mxu0
      %v3510 = vadd.f32 0.0, %v3509
      %v3511 = vpop.f32.mrb[0].mxu0
      %v3512 = vpop.f32.mrb[0].mxu0
      %v3513 = vadd.f32 0.0, %v3512
      %v3514 = vpop.f32.mrb[0].mxu0
      %3515 = vmatprep.mubr.bf16.mxu0 %v3336
      %3516 = vmatmul.mubr.bf16.gmra.mrb[0].mxu0 %v3182
      %v3517 = vpop.f32.mrb[0].mxu0
      %v3518 = vadd.f32 0.0, %v3517
      %v3519 = vpop.f32.mrb[0].mxu0
      %v3520 = vpop.f32.mrb[0].mxu0
      %v3521 = vadd.f32 0.0, %v3520
      %v3522 = vpop.f32.mrb[0].mxu0
      %3523 = vmatprep.mubr.bf16.mxu0 %v3339
      %3524 = vmatmul.mubr.bf16.gmra.mrb[0].mxu0 %v3184
      %v3525 = vpop.f32.mrb[0].mxu0
      %v3526 = vadd.f32 0.0, %v3525
      %v3527 = vpop.f32.mrb[0].mxu0
      %v3528 = vpop.f32.mrb[0].mxu0
      %v3529 = vadd.f32 0.0, %v3528
      %v3530 = vpop.f32.mrb[0].mxu0
      %3531 = vmatprep.mubr.bf16.mxu0 %v3342
      %3532 = vmatmul.mubr.bf16.gmra.mrb[0].mxu0 %v3186
      %v3533 = vpop.f32.mrb[0].mxu0
      %v3534 = vadd.f32 0.0, %v3533
      %v3535 = vpop.f32.mrb[0].mxu0
      %v3536 = vpop.f32.mrb[0].mxu0
      %v3537 = vadd.f32 0.0, %v3536
      %v3538 = vpop.f32.mrb[0].mxu0
      %3539 = vmatprep.mubr.bf16.mxu0 %v3345
      %3540 = vmatmul.mubr.bf16.gmra.mrb[0].mxu0 %v3188
      %v3541 = vpop.f32.mrb[0].mxu0
      %v3542 = vadd.f32 0.0, %v3541
      %v3543 = vpop.f32.mrb[0].mxu0
      %v3544 = vpop.f32.mrb[0].mxu0
      %v3545 = vadd.f32 0.0, %v3544
      %v3546 = vpop.f32.mrb[0].mxu0
      %3547 = vmatprep.mubr.bf16.mxu0 %v3348
      %3548 = vmatmul.mubr.bf16.gmra.mrb[0].mxu0 %v3190
      %v3549 = vpop.f32.mrb[0].mxu0
      %v3550 = vadd.f32 0.0, %v3549
      %v3551 = vpop.f32.mrb[0].mxu0
      %v3552 = vpop.f32.mrb[0].mxu0
      %v3553 = vadd.f32 0.0, %v3552
      %v3554 = vpop.f32.mrb[0].mxu0
      %3555 = vmatprep.mubr.bf16.mxu0 %v3351
      %3556 = vmatmul.mubr.bf16.gmra.mrb[0].mxu0 %v3192
      %v3557 = vpop.f32.mrb[0].mxu0
      %v3558 = vadd.f32 0.0, %v3557
      %v3559 = vpop.f32.mrb[0].mxu0
      %v3560 = vpop.f32.mrb[0].mxu0
      %v3561 = vadd.f32 0.0, %v3560
      %v3562 = vpop.f32.mrb[0].mxu0
      %3563 = vmatprep.mubr.bf16.mxu0 %v3354
      %3564 = vmatmul.mubr.bf16.gmra.mrb[0].mxu0 %v3194
      %v3565 = vpop.f32.mrb[0].mxu0
      %v3566 = vadd.f32 0.0, %v3565
      %v3567 = vpop.f32.mrb[0].mxu0
      %v3568 = vpop.f32.mrb[0].mxu0
      %v3569 = vadd.f32 0.0, %v3568
      %v3570 = vpop.f32.mrb[0].mxu0
      %3571 = vmatprep.mubr.bf16.mxu0 %v3357
      %3572 = vmatmul.mubr.bf16.gmra.mrb[0].mxu0 %v3196
      %v3573 = vpop.f32.mrb[0].mxu0
      %v3574 = vadd.f32 0.0, %v3573
      %v3575 = vpop.f32.mrb[0].mxu0
      %v3576 = vpop.f32.mrb[0].mxu0
      %v3577 = vadd.f32 0.0, %v3576
      %v3578 = vpop.f32.mrb[0].mxu0
      %3579 = vmatprep.mubr.bf16.mxu0 %v3360
      %3580 = vmatmul.mubr.bf16.gmra.mrb[0].mxu0 %v3198
      %v3581 = vpop.f32.mrb[0].mxu0
      %v3582 = vadd.f32 0.0, %v3581
      %v3583 = vpop.f32.mrb[0].mxu0
      %v3584 = vpop.f32.mrb[0].mxu0
      %v3585 = vadd.f32 0.0, %v3584
      %v3586 = vpop.f32.mrb[0].mxu0
      %3587 = vmatprep.mubr.bf16.mxu0 %v3363
      %3588 = vmatmul.mubr.bf16.gmra.mrb[0].mxu0 %v3200
      %v3589 = vpop.f32.mrb[0].mxu0
      %v3590 = vadd.f32 0.0, %v3589
      %v3591 = vpop.f32.mrb[0].mxu0
      %v3592 = vpop.f32.mrb[0].mxu0
      %v3593 = vadd.f32 0.0, %v3592
      %v3594 = vpop.f32.mrb[0].mxu0
      %3595 = vmatprep.mubr.bf16.mxu0 %v3366
      %3596 = vmatmul.mubr.bf16.gmra.mrb[0].mxu0 %v3202
      %v3597 = vpop.f32.mrb[0].mxu0
      %v3598 = vadd.f32 0.0, %v3597
      %v3599 = vpop.f32.mrb[0].mxu0
      %v3600 = vpop.f32.mrb[0].mxu0
      %v3601 = vadd.f32 0.0, %v3600
      %v3602 = vpop.f32.mrb[0].mxu0
      %3603 = vmatprep.mubr.bf16.mxu0 %v3369
      %3604 = vmatmul.mubr.bf16.gmra.mrb[0].mxu0 %v3204
      %v3605 = vpop.f32.mrb[0].mxu0
      %v3606 = vadd.f32 0.0, %v3605
      %v3607 = vpop.f32.mrb[0].mxu0
      %v3608 = vpop.f32.mrb[0].mxu0
      %v3609 = vadd.f32 0.0, %v3608
      %v3610 = vpop.f32.mrb[0].mxu0
      %3611 = vmatprep.mubr.bf16.mxu0 %v3372
      %3612 = vmatmul.mubr.bf16.gmra.mrb[0].mxu0 %v3206
      %v3613 = vpop.f32.mrb[0].mxu0
      %v3614 = vadd.f32 0.0, %v3613
      %v3615 = vpop.f32.mrb[0].mxu0
      %v3616 = vpop.f32.mrb[0].mxu0
      %v3617 = vadd.f32 0.0, %v3616
      %v3618 = vpop.f32.mrb[0].mxu0
      %3619 = vmatprep.mubr.bf16.mxu0 %v3375
      %3620 = vmatmul.mubr.bf16.gmra.mrb[0].mxu0 %v3208
      %v3621 = vpop.f32.mrb[0].mxu0
      %v3622 = vadd.f32 0.0, %v3621
      %v3623 = vpop.f32.mrb[0].mxu0
      %v3624 = vpop.f32.mrb[0].mxu0
      %v3625 = vadd.f32 0.0, %v3624
      %v3626 = vpop.f32.mrb[0].mxu0
      %3627 = vmatprep.mubr.bf16.mxu0 %v3378
      %3628 = vmatmul.mubr.bf16.gmra.mrb[0].mxu0 %v3210
      %v3629 = vpop.f32.mrb[0].mxu0
      %v3630 = vadd.f32 0.0, %v3629
      %v3631 = vpop.f32.mrb[0].mxu0
      %v3632 = vpop.f32.mrb[0].mxu0
      %v3633 = vadd.f32 0.0, %v3632
      %v3634 = vpop.f32.mrb[0].mxu0
      %3635 = vmatprep.mubr.bf16.mxu0 %v3381
      %3636 = vmatmul.mubr.bf16.gmra.mrb[0].mxu0 %v3212
      %v3637 = vpop.f32.mrb[0].mxu0
      %v3638 = vadd.f32 0.0, %v3637
      %v3639 = vpop.f32.mrb[0].mxu0
      %v3640 = vpop.f32.mrb[0].mxu0
      %v3641 = vadd.f32 0.0, %v3640
      %v3642 = vpop.f32.mrb[0].mxu0
      %3643 = vdwg.mxu0
      %v3644 = vpack.c.bf16 %v3425, %v3422
      %v3645 = vpack.c.bf16 %v3433, %v3430
      %v3646 = vpack.c.bf16 %v3441, %v3438
      %v3647 = vpack.c.bf16 %v3449, %v3446
      %v3648 = vpack.c.bf16 %v3457, %v3454
      %v3649 = vpack.c.bf16 %v3465, %v3462
      %v3650 = vpack.c.bf16 %v3473, %v3470
      %v3651 = vpack.c.bf16 %v3481, %v3478
      %v3652 = vpack.c.bf16 %v3489, %v3486
      %v3653 = vpack.c.bf16 %v3497, %v3494
      %v3654 = vpack.c.bf16 %v3505, %v3502
      %v3655 = vpack.c.bf16 %v3513, %v3510
      %v3656 = vpack.c.bf16 %v3521, %v3518
      %v3657 = vpack.c.bf16 %v3529, %v3526
      %v3658 = vpack.c.bf16 %v3537, %v3534
      %v3659 = vpack.c.bf16 %v3545, %v3542
      %v3660 = vpack.c.bf16 %v3553, %v3550
      %v3661 = vpack.c.bf16 %v3561, %v3558
      %v3662 = vpack.c.bf16 %v3569, %v3566
      %v3663 = vpack.c.bf16 %v3577, %v3574
      %v3664 = vpack.c.bf16 %v3585, %v3582
      %v3665 = vpack.c.bf16 %v3593, %v3590
      %v3666 = vpack.c.bf16 %v3601, %v3598
      %v3667 = vpack.c.bf16 %v3609, %v3606
      %v3668 = vpack.c.bf16 %v3617, %v3614
      %v3669 = vpack.c.bf16 %v3625, %v3622
      %v3670 = vpack.c.bf16 %v3633, %v3630
      %v3671 = vpack.c.bf16 %v3641, %v3638
      %v3728 = vunpack.c.l.b16 %v3102
      %v3729 = vunpack.c.h.b16 %v3102
      %v3730 = vunpack.c.l.b16 %v3103
      %v3731 = vunpack.c.h.b16 %v3103
      %v3732 = vunpack.c.l.b16 %v3104
      %v3733 = vunpack.c.h.b16 %v3104
      %v3734 = vunpack.c.l.b16 %v3105
      %v3735 = vunpack.c.h.b16 %v3105
      %v3736 = vunpack.c.l.b16 %v3106
      %v3737 = vunpack.c.h.b16 %v3106
      %v3738 = vunpack.c.l.b16 %v3107
      %v3739 = vunpack.c.h.b16 %v3107
      %v3740 = vunpack.c.l.b16 %v3108
      %v3741 = vunpack.c.h.b16 %v3108
      %v3742 = vunpack.c.l.b16 %v3109
      %v3743 = vunpack.c.h.b16 %v3109
      %v3744 = vunpack.c.l.b16 %v3110
      %v3745 = vunpack.c.h.b16 %v3110
      %v3746 = vunpack.c.l.b16 %v3111
      %v3747 = vunpack.c.h.b16 %v3111
      %v3748 = vunpack.c.l.b16 %v3112
      %v3749 = vunpack.c.h.b16 %v3112
      %v3750 = vunpack.c.l.b16 %v3113
      %v3751 = vunpack.c.h.b16 %v3113
      %v3752 = vunpack.c.l.b16 %v3114
      %v3753 = vunpack.c.h.b16 %v3114
      %v3754 = vunpack.c.l.b16 %v3115
      %v3755 = vunpack.c.h.b16 %v3115
      %v3756 = vunpack.c.l.b16 %v3116
      %v3757 = vunpack.c.h.b16 %v3116
      %v3758 = vunpack.c.l.b16 %v3117
      %v3759 = vunpack.c.h.b16 %v3117
      %v3760 = vunpack.c.l.b16 %v3118
      %v3761 = vunpack.c.h.b16 %v3118
      %v3762 = vunpack.c.l.b16 %v3119
      %v3763 = vunpack.c.h.b16 %v3119
      %v3764 = vunpack.c.l.b16 %v3120
      %v3765 = vunpack.c.h.b16 %v3120
      %v3766 = vunpack.c.l.b16 %v3121
      %v3767 = vunpack.c.h.b16 %v3121
      %v3768 = vunpack.c.l.b16 %v3122
      %v3769 = vunpack.c.h.b16 %v3122
      %v3770 = vunpack.c.l.b16 %v3123
      %v3771 = vunpack.c.h.b16 %v3123
      %v3772 = vunpack.c.l.b16 %v3124
      %v3773 = vunpack.c.h.b16 %v3124
      %v3774 = vunpack.c.l.b16 %v3125
      %v3775 = vunpack.c.h.b16 %v3125
      %v3776 = vunpack.c.l.b16 %v3126
      %v3777 = vunpack.c.h.b16 %v3126
      %v3778 = vunpack.c.l.b16 %v3127
      %v3779 = vunpack.c.h.b16 %v3127
      %v3780 = vunpack.c.l.b16 %v3128
      %v3781 = vunpack.c.h.b16 %v3128
      %v3782 = vunpack.c.l.b16 %v3129
      %v3783 = vunpack.c.h.b16 %v3129
      %v3784 = vunpack.c.l.b16 %v3130
      %v3785 = vunpack.c.h.b16 %v3130
      %v3786 = vunpack.c.l.b16 %v3131
      %v3787 = vunpack.c.h.b16 %v3131
      %v3788 = vunpack.c.l.b16 %v3132
      %v3789 = vunpack.c.h.b16 %v3132
      %v3790 = vunpack.c.l.b16 %v3133
      %v3791 = vunpack.c.h.b16 %v3133
      %v3792 = vunpack.c.l.b16 %v3134
      %v3793 = vunpack.c.h.b16 %v3134
      %v3794 = vunpack.c.l.b16 %v3135
      %v3795 = vunpack.c.h.b16 %v3135
      %v3796 = vunpack.c.l.b16 %v3136
      %v3797 = vunpack.c.h.b16 %v3136
      %v3798 = vunpack.c.l.b16 %v3137
      %v3799 = vunpack.c.h.b16 %v3137
      %v3800 = vunpack.c.l.b16 %v3138
      %v3801 = vunpack.c.h.b16 %v3138
      %v3802 = vunpack.c.l.b16 %v3139
      %v3803 = vunpack.c.h.b16 %v3139
      %v3804 = vunpack.c.l.b16 %v3140
      %v3805 = vunpack.c.h.b16 %v3140
      %v3806 = vunpack.c.l.b16 %v3141
      %v3807 = vunpack.c.h.b16 %v3141
      %v3808 = vunpack.c.l.b16 %v3142
      %v3809 = vunpack.c.h.b16 %v3142
      %v3810 = vunpack.c.l.b16 %v3143
      %v3811 = vunpack.c.h.b16 %v3143
      %v3812 = vunpack.c.l.b16 %v3144
      %v3813 = vunpack.c.h.b16 %v3144
      %v3814 = vunpack.c.l.b16 %v3145
      %v3815 = vunpack.c.h.b16 %v3145
      %v3816 = vunpack.c.l.b16 %v3146
      %v3817 = vunpack.c.h.b16 %v3146
      %v3818 = vunpack.c.l.b16 %v3147
      %v3819 = vunpack.c.h.b16 %v3147
      %v3820 = vunpack.c.l.b16 %v3148
      %v3821 = vunpack.c.h.b16 %v3148
      %v3822 = vunpack.c.l.b16 %v3149
      %v3823 = vunpack.c.h.b16 %v3149
      %v3824 = vunpack.c.l.b16 %v3150
      %v3825 = vunpack.c.h.b16 %v3150
      %v3826 = vunpack.c.l.b16 %v3151
      %v3827 = vunpack.c.h.b16 %v3151
      %v3828 = vunpack.c.l.b16 %v3152
      %v3829 = vunpack.c.h.b16 %v3152
      %v3830 = vunpack.c.l.b16 %v3153
      %v3831 = vunpack.c.h.b16 %v3153
      %v3832 = vunpack.c.l.b16 %v3154
      %v3833 = vunpack.c.h.b16 %v3154
      %v3834 = vunpack.c.l.b16 %v3155
      %v3835 = vunpack.c.h.b16 %v3155
      %v3836 = vunpack.c.l.b16 %v3156
      %v3837 = vunpack.c.h.b16 %v3156
      %v3838 = vunpack.c.l.b16 %v3157
      %v3839 = vunpack.c.h.b16 %v3157
      %v3840 = vpack.c.b16 %v3732, %v3728
      %v3841 = vpack.c.b16 %v3733, %v3729
      %v3842 = vpack.c.b16 %v3734, %v3730
      %v3843 = vpack.c.b16 %v3735, %v3731
      %v3844 = vpack.c.b16 %v3740, %v3736
      %v3845 = vpack.c.b16 %v3741, %v3737
      %v3846 = vpack.c.b16 %v3742, %v3738
      %v3847 = vpack.c.b16 %v3743, %v3739
      %v3848 = vpack.c.b16 %v3748, %v3744
      %v3849 = vpack.c.b16 %v3749, %v3745
      %v3850 = vpack.c.b16 %v3750, %v3746
      %v3851 = vpack.c.b16 %v3751, %v3747
      %v3852 = vpack.c.b16 %v3756, %v3752
      %v3853 = vpack.c.b16 %v3757, %v3753
      %v3854 = vpack.c.b16 %v3758, %v3754
      %v3855 = vpack.c.b16 %v3759, %v3755
      %v3856 = vpack.c.b16 %v3764, %v3760
      %v3857 = vpack.c.b16 %v3765, %v3761
      %v3858 = vpack.c.b16 %v3766, %v3762
      %v3859 = vpack.c.b16 %v3767, %v3763
      %v3860 = vpack.c.b16 %v3772, %v3768
      %v3861 = vpack.c.b16 %v3773, %v3769
      %v3862 = vpack.c.b16 %v3774, %v3770
      %v3863 = vpack.c.b16 %v3775, %v3771
      %v3864 = vpack.c.b16 %v3780, %v3776
      %v3865 = vpack.c.b16 %v3781, %v3777
      %v3866 = vpack.c.b16 %v3782, %v3778
      %v3867 = vpack.c.b16 %v3783, %v3779
      %v3868 = vpack.c.b16 %v3788, %v3784
      %v3869 = vpack.c.b16 %v3789, %v3785
      %v3870 = vpack.c.b16 %v3790, %v3786
      %v3871 = vpack.c.b16 %v3791, %v3787
      %v3872 = vpack.c.b16 %v3796, %v3792
      %v3873 = vpack.c.b16 %v3797, %v3793
      %v3874 = vpack.c.b16 %v3798, %v3794
      %v3875 = vpack.c.b16 %v3799, %v3795
      %v3876 = vpack.c.b16 %v3804, %v3800
      %v3877 = vpack.c.b16 %v3805, %v3801
      %v3878 = vpack.c.b16 %v3806, %v3802
      %v3879 = vpack.c.b16 %v3807, %v3803
      %v3880 = vpack.c.b16 %v3812, %v3808
      %v3881 = vpack.c.b16 %v3813, %v3809
      %v3882 = vpack.c.b16 %v3814, %v3810
      %v3883 = vpack.c.b16 %v3815, %v3811
      %v3884 = vpack.c.b16 %v3820, %v3816
      %v3885 = vpack.c.b16 %v3821, %v3817
      %v3886 = vpack.c.b16 %v3822, %v3818
      %v3887 = vpack.c.b16 %v3823, %v3819
      %v3888 = vpack.c.b16 %v3828, %v3824
      %v3889 = vpack.c.b16 %v3829, %v3825
      %v3890 = vpack.c.b16 %v3830, %v3826
      %v3891 = vpack.c.b16 %v3831, %v3827
      %v3892 = vpack.c.b16 %v3836, %v3832
      %v3893 = vpack.c.b16 %v3837, %v3833
      %v3894 = vpack.c.b16 %v3838, %v3834
      %v3895 = vpack.c.b16 %v3839, %v3835
      %vm3938 = vcmask 523264
      %v3940 = vsel %vm3938, %v3843, 0
      %v3943 = vsel %vm3938, %v3847, 0
      %v3946 = vsel %vm3938, %v3851, 0
      %v3949 = vsel %vm3938, %v3855, 0
      %v3952 = vsel %vm3938, %v3859, 0
      %v3955 = vsel %vm3938, %v3863, 0
      %v3958 = vsel %vm3938, %v3867, 0
      %v3961 = vsel %vm3938, %v3871, 0
      %v3964 = vsel %vm3938, %v3875, 0
      %v3967 = vsel %vm3938, %v3879, 0
      %v3970 = vsel %vm3938, %v3883, 0
      %v3973 = vsel %vm3938, %v3887, 0
      %v3976 = vsel %vm3938, %v3891, 0
      %v3979 = vsel %vm3938, %v3895, 0
      %3981 = vmatprep.subr.bf16.mxu0 0
      %3982 = vmatpush1.bf16.msra.mxu0 %v3644
      %3983 = vmatprep.subr.bf16.mxu0 0
      %3984 = vmatpush1.bf16.msra.mxu0 %v3645
      %3985 = vmatprep.subr.bf16.mxu0 0
      %3986 = vmatpush1.bf16.msra.mxu0 %v3646
      %3987 = vmatprep.subr.bf16.mxu0 0
      %3988 = vmatpush1.bf16.msra.mxu0 %v3647
      %3989 = vmatprep.subr.bf16.mxu0 0
      %3990 = vmatpush1.bf16.msra.mxu0 %v3648
      %3991 = vmatprep.subr.bf16.mxu0 0
      %3992 = vmatpush1.bf16.msra.mxu0 %v3649
      %3993 = vmatprep.subr.bf16.mxu0 0
      %3994 = vmatpush1.bf16.msra.mxu0 %v3650
      %3995 = vmatprep.subr.bf16.mxu0 0
      %3996 = vmatpush1.bf16.msra.mxu0 %v3651
      %3997 = vmatprep.subr.bf16.mxu0 0
      %3998 = vmatpush1.bf16.msra.mxu0 %v3652
      %3999 = vmatprep.subr.bf16.mxu0 0
      %4000 = vmatpush1.bf16.msra.mxu0 %v3653
      %4001 = vmatprep.subr.bf16.mxu0 0
      %4002 = vmatpush1.bf16.msra.mxu0 %v3654
      %4003 = vmatprep.subr.bf16.mxu0 0
      %4004 = vmatpush1.bf16.msra.mxu0 %v3655
      %4005 = vmatprep.subr.bf16.mxu0 0
      %4006 = vmatpush1.bf16.msra.mxu0 %v3656
      %4007 = vmatprep.subr.bf16.mxu0 0
      %4008 = vmatpush1.bf16.msra.mxu0 %v3657
      %4009 = vmatprep.subr.bf16.mxu0 0
      %4010 = vmatpush1.bf16.msra.mxu0 %v3658
      %4011 = vmatprep.subr.bf16.mxu0 0
      %4012 = vmatpush1.bf16.msra.mxu0 %v3659
      %4013 = vmatprep.mubr.bf16.mxu0 %v3841
      %4014 = vmatmul.mubr.bf16.gmra.mrb[0].mxu0 %v3840
      %v4015 = vpop.f32.mrb[0].mxu0
      %v4016 = vadd.f32 0.0, %v4015
      %v4017 = vpop.f32.mrb[0].mxu0
      %v4018 = vpop.f32.mrb[0].mxu0
      %v4019 = vadd.f32 0.0, %v4018
      %v4020 = vpop.f32.mrb[0].mxu0
      %4021 = vmatprep.mubr.bf16.mxu0 %v3845
      %4022 = vmatmul.mubr.bf16.gmra.mrb[0].mxu0 %v3844
      %v4023 = vpop.f32.mrb[0].mxu0
      %v4024 = vadd.f32 0.0, %v4023
      %v4025 = vpop.f32.mrb[0].mxu0
      %v4026 = vpop.f32.mrb[0].mxu0
      %v4027 = vadd.f32 0.0, %v4026
      %v4028 = vpop.f32.mrb[0].mxu0
      %4029 = vmatprep.mubr.bf16.mxu0 %v3849
      %4030 = vmatmul.mubr.bf16.gmra.mrb[0].mxu0 %v3848
      %v4031 = vpop.f32.mrb[0].mxu0
      %v4032 = vadd.f32 0.0, %v4031
      %v4033 = vpop.f32.mrb[0].mxu0
      %v4034 = vpop.f32.mrb[0].mxu0
      %v4035 = vadd.f32 0.0, %v4034
      %v4036 = vpop.f32.mrb[0].mxu0
      %4037 = vmatprep.mubr.bf16.mxu0 %v3853
      %4038 = vmatmul.mubr.bf16.gmra.mrb[0].mxu0 %v3852
      %v4039 = vpop.f32.mrb[0].mxu0
      %v4040 = vadd.f32 0.0, %v4039
      %v4041 = vpop.f32.mrb[0].mxu0
      %v4042 = vpop.f32.mrb[0].mxu0
      %v4043 = vadd.f32 0.0, %v4042
      %v4044 = vpop.f32.mrb[0].mxu0
      %4045 = vmatprep.mubr.bf16.mxu0 %v3857
      %4046 = vmatmul.mubr.bf16.gmra.mrb[0].mxu0 %v3856
      %v4047 = vpop.f32.mrb[0].mxu0
      %v4048 = vadd.f32 0.0, %v4047
      %v4049 = vpop.f32.mrb[0].mxu0
      %v4050 = vpop.f32.mrb[0].mxu0
      %v4051 = vadd.f32 0.0, %v4050
      %v4052 = vpop.f32.mrb[0].mxu0
      %4053 = vmatprep.mubr.bf16.mxu0 %v3861
      %4054 = vmatmul.mubr.bf16.gmra.mrb[0].mxu0 %v3860
      %v4055 = vpop.f32.mrb[0].mxu0
      %v4056 = vadd.f32 0.0, %v4055
      %v4057 = vpop.f32.mrb[0].mxu0
      %v4058 = vpop.f32.mrb[0].mxu0
      %v4059 = vadd.f32 0.0, %v4058
      %v4060 = vpop.f32.mrb[0].mxu0
      %4061 = vmatprep.mubr.bf16.mxu0 %v3865
      %4062 = vmatmul.mubr.bf16.gmra.mrb[0].mxu0 %v3864
      %v4063 = vpop.f32.mrb[0].mxu0
      %v4064 = vadd.f32 0.0, %v4063
      %v4065 = vpop.f32.mrb[0].mxu0
      %v4066 = vpop.f32.mrb[0].mxu0
      %v4067 = vadd.f32 0.0, %v4066
      %v4068 = vpop.f32.mrb[0].mxu0
      %4069 = vmatprep.mubr.bf16.mxu0 %v3869
      %4070 = vmatmul.mubr.bf16.gmra.mrb[0].mxu0 %v3868
      %v4071 = vpop.f32.mrb[0].mxu0
      %v4072 = vadd.f32 0.0, %v4071
      %v4073 = vpop.f32.mrb[0].mxu0
      %v4074 = vpop.f32.mrb[0].mxu0
      %v4075 = vadd.f32 0.0, %v4074
      %v4076 = vpop.f32.mrb[0].mxu0
      %4077 = vmatprep.mubr.bf16.mxu0 %v3873
      %4078 = vmatmul.mubr.bf16.gmra.mrb[0].mxu0 %v3872
      %v4079 = vpop.f32.mrb[0].mxu0
      %v4080 = vadd.f32 0.0, %v4079
      %v4081 = vpop.f32.mrb[0].mxu0
      %v4082 = vpop.f32.mrb[0].mxu0
      %v4083 = vadd.f32 0.0, %v4082
      %v4084 = vpop.f32.mrb[0].mxu0
      %4085 = vmatprep.mubr.bf16.mxu0 %v3877
      %4086 = vmatmul.mubr.bf16.gmra.mrb[0].mxu0 %v3876
      %v4087 = vpop.f32.mrb[0].mxu0
      %v4088 = vadd.f32 0.0, %v4087
      %v4089 = vpop.f32.mrb[0].mxu0
      %v4090 = vpop.f32.mrb[0].mxu0
      %v4091 = vadd.f32 0.0, %v4090
      %v4092 = vpop.f32.mrb[0].mxu0
      %4093 = vmatprep.mubr.bf16.mxu0 %v3881
      %4094 = vmatmul.mubr.bf16.gmra.mrb[0].mxu0 %v3880
      %v4095 = vpop.f32.mrb[0].mxu0
      %v4096 = vadd.f32 0.0, %v4095
      %v4097 = vpop.f32.mrb[0].mxu0
      %v4098 = vpop.f32.mrb[0].mxu0
      %v4099 = vadd.f32 0.0, %v4098
      %v4100 = vpop.f32.mrb[0].mxu0
      %4101 = vmatprep.mubr.bf16.mxu0 %v3885
      %4102 = vmatmul.mubr.bf16.gmra.mrb[0].mxu0 %v3884
      %v4103 = vpop.f32.mrb[0].mxu0
      %v4104 = vadd.f32 0.0, %v4103
      %v4105 = vpop.f32.mrb[0].mxu0
      %v4106 = vpop.f32.mrb[0].mxu0
      %v4107 = vadd.f32 0.0, %v4106
      %v4108 = vpop.f32.mrb[0].mxu0
      %4109 = vmatprep.mubr.bf16.mxu0 %v3889
      %4110 = vmatmul.mubr.bf16.gmra.mrb[0].mxu0 %v3888
      %v4111 = vpop.f32.mrb[0].mxu0
      %v4112 = vadd.f32 0.0, %v4111
      %v4113 = vpop.f32.mrb[0].mxu0
      %v4114 = vpop.f32.mrb[0].mxu0
      %v4115 = vadd.f32 0.0, %v4114
      %v4116 = vpop.f32.mrb[0].mxu0
      %4117 = vmatprep.mubr.bf16.mxu0 %v3893
      %4118 = vmatmul.mubr.bf16.gmra.mrb[0].mxu0 %v3892
      %v4119 = vpop.f32.mrb[0].mxu0
      %v4120 = vadd.f32 0.0, %v4119
      %v4121 = vpop.f32.mrb[0].mxu0
      %v4122 = vpop.f32.mrb[0].mxu0
      %v4123 = vadd.f32 0.0, %v4122
      %v4124 = vpop.f32.mrb[0].mxu0
      %4125 = vdwg.mxu0
      %4126 = vmatprep.subr.bf16.mxu0 0
      %4127 = vmatpush1.bf16.msra.mxu0 %v3660
      %4128 = vmatprep.subr.bf16.mxu0 0
      %4129 = vmatpush1.bf16.msra.mxu0 %v3661
      %4130 = vmatprep.subr.bf16.mxu0 0
      %4131 = vmatpush1.bf16.msra.mxu0 %v3662
      %4132 = vmatprep.subr.bf16.mxu0 0
      %4133 = vmatpush1.bf16.msra.mxu0 %v3663
      %4134 = vmatprep.subr.bf16.mxu0 0
      %4135 = vmatpush1.bf16.msra.mxu0 %v3664
      %4136 = vmatprep.subr.bf16.mxu0 0
      %4137 = vmatpush1.bf16.msra.mxu0 %v3665
      %4138 = vmatprep.subr.bf16.mxu0 0
      %4139 = vmatpush1.bf16.msra.mxu0 %v3666
      %4140 = vmatprep.subr.bf16.mxu0 0
      %4141 = vmatpush1.bf16.msra.mxu0 %v3667
      %4142 = vmatprep.subr.bf16.mxu0 0
      %4143 = vmatpush1.bf16.msra.mxu0 %v3668
      %4144 = vmatprep.subr.bf16.mxu0 0
      %4145 = vmatpush1.bf16.msra.mxu0 %v3669
      %4146 = vmatprep.subr.bf16.mxu0 0
      %4147 = vmatpush1.bf16.msra.mxu0 %v3670
      %4148 = vmatprep.subr.bf16.mxu0 0
      %4149 = vmatpush1.bf16.msra.mxu0 %v3671
      %4150 = vmatprep.subr.bf16.mxu0 0
      %4151 = vmatpush1.bf16.msra.mxu0 0
      %4152 = vmatprep.subr.bf16.mxu0 0
      %4153 = vmatpush1.bf16.msra.mxu0 0
      %4154 = vmatprep.subr.bf16.mxu0 0
      %4155 = vmatpush1.bf16.msra.mxu0 0
      %4156 = vmatprep.subr.bf16.mxu0 0
      %4157 = vmatpush1.bf16.msra.mxu0 0
      %4158 = vmatprep.mubr.bf16.mxu0 %v3940
      %4159 = vmatmul.mubr.bf16.gmra.mrb[0].mxu0 %v3842
      %v4160 = vpop.f32.mrb[0].mxu0
      %v4161 = vadd.f32 %v4016, %v4160
      %v4162 = vpop.f32.mrb[0].mxu0
      %v4163 = vpop.f32.mrb[0].mxu0
      %v4164 = vadd.f32 %v4019, %v4163
      %v4165 = vpop.f32.mrb[0].mxu0
      %4166 = vmatprep.mubr.bf16.mxu0 %v3943
      %4167 = vmatmul.mubr.bf16.gmra.mrb[0].mxu0 %v3846
      %v4168 = vpop.f32.mrb[0].mxu0
      %v4169 = vadd.f32 %v4024, %v4168
      %v4170 = vpop.f32.mrb[0].mxu0
      %v4171 = vpop.f32.mrb[0].mxu0
      %v4172 = vadd.f32 %v4027, %v4171
      %v4173 = vpop.f32.mrb[0].mxu0
      %4174 = vmatprep.mubr.bf16.mxu0 %v3946
      %4175 = vmatmul.mubr.bf16.gmra.mrb[0].mxu0 %v3850
      %v4176 = vpop.f32.mrb[0].mxu0
      %v4177 = vadd.f32 %v4032, %v4176
      %v4178 = vpop.f32.mrb[0].mxu0
      %v4179 = vpop.f32.mrb[0].mxu0
      %v4180 = vadd.f32 %v4035, %v4179
      %v4181 = vpop.f32.mrb[0].mxu0
      %4182 = vmatprep.mubr.bf16.mxu0 %v3949
      %4183 = vmatmul.mubr.bf16.gmra.mrb[0].mxu0 %v3854
      %v4184 = vpop.f32.mrb[0].mxu0
      %v4185 = vadd.f32 %v4040, %v4184
      %v4186 = vpop.f32.mrb[0].mxu0
      %v4187 = vpop.f32.mrb[0].mxu0
      %v4188 = vadd.f32 %v4043, %v4187
      %v4189 = vpop.f32.mrb[0].mxu0
      %4190 = vmatprep.mubr.bf16.mxu0 %v3952
      %4191 = vmatmul.mubr.bf16.gmra.mrb[0].mxu0 %v3858
      %v4192 = vpop.f32.mrb[0].mxu0
      %v4193 = vadd.f32 %v4048, %v4192
      %v4194 = vpop.f32.mrb[0].mxu0
      %v4195 = vpop.f32.mrb[0].mxu0
      %v4196 = vadd.f32 %v4051, %v4195
      %v4197 = vpop.f32.mrb[0].mxu0
      %4198 = vmatprep.mubr.bf16.mxu0 %v3955
      %4199 = vmatmul.mubr.bf16.gmra.mrb[0].mxu0 %v3862
      %v4200 = vpop.f32.mrb[0].mxu0
      %v4201 = vadd.f32 %v4056, %v4200
      %v4202 = vpop.f32.mrb[0].mxu0
      %v4203 = vpop.f32.mrb[0].mxu0
      %v4204 = vadd.f32 %v4059, %v4203
      %v4205 = vpop.f32.mrb[0].mxu0
      %4206 = vmatprep.mubr.bf16.mxu0 %v3958
      %4207 = vmatmul.mubr.bf16.gmra.mrb[0].mxu0 %v3866
      %v4208 = vpop.f32.mrb[0].mxu0
      %v4209 = vadd.f32 %v4064, %v4208
      %v4210 = vpop.f32.mrb[0].mxu0
      %v4211 = vpop.f32.mrb[0].mxu0
      %v4212 = vadd.f32 %v4067, %v4211
      %v4213 = vpop.f32.mrb[0].mxu0
      %4214 = vmatprep.mubr.bf16.mxu0 %v3961
      %4215 = vmatmul.mubr.bf16.gmra.mrb[0].mxu0 %v3870
      %v4216 = vpop.f32.mrb[0].mxu0
      %v4217 = vadd.f32 %v4072, %v4216
      %v4218 = vpop.f32.mrb[0].mxu0
      %v4219 = vpop.f32.mrb[0].mxu0
      %v4220 = vadd.f32 %v4075, %v4219
      %v4221 = vpop.f32.mrb[0].mxu0
      %4222 = vmatprep.mubr.bf16.mxu0 %v3964
      %4223 = vmatmul.mubr.bf16.gmra.mrb[0].mxu0 %v3874
      %v4224 = vpop.f32.mrb[0].mxu0
      %v4225 = vadd.f32 %v4080, %v4224
      %v4226 = vpop.f32.mrb[0].mxu0
      %v4227 = vpop.f32.mrb[0].mxu0
      %v4228 = vadd.f32 %v4083, %v4227
      %v4229 = vpop.f32.mrb[0].mxu0
      %4230 = vmatprep.mubr.bf16.mxu0 %v3967
      %4231 = vmatmul.mubr.bf16.gmra.mrb[0].mxu0 %v3878
      %v4232 = vpop.f32.mrb[0].mxu0
      %v4233 = vadd.f32 %v4088, %v4232
      %v4234 = vpop.f32.mrb[0].mxu0
      %v4235 = vpop.f32.mrb[0].mxu0
      %v4236 = vadd.f32 %v4091, %v4235
      %v4237 = vpop.f32.mrb[0].mxu0
      %4238 = vmatprep.mubr.bf16.mxu0 %v3970
      %4239 = vmatmul.mubr.bf16.gmra.mrb[0].mxu0 %v3882
      %v4240 = vpop.f32.mrb[0].mxu0
      %v4241 = vadd.f32 %v4096, %v4240
      %v4242 = vpop.f32.mrb[0].mxu0
      %v4243 = vpop.f32.mrb[0].mxu0
      %v4244 = vadd.f32 %v4099, %v4243
      %v4245 = vpop.f32.mrb[0].mxu0
      %4246 = vmatprep.mubr.bf16.mxu0 %v3973
      %4247 = vmatmul.mubr.bf16.gmra.mrb[0].mxu0 %v3886
      %v4248 = vpop.f32.mrb[0].mxu0
      %v4249 = vadd.f32 %v4104, %v4248
      %v4250 = vpop.f32.mrb[0].mxu0
      %v4251 = vpop.f32.mrb[0].mxu0
      %v4252 = vadd.f32 %v4107, %v4251
      %v4253 = vpop.f32.mrb[0].mxu0
      %4254 = vmatprep.mubr.bf16.mxu0 %v3976
      %4255 = vmatmul.mubr.bf16.gmra.mrb[0].mxu0 %v3890
      %v4256 = vpop.f32.mrb[0].mxu0
      %v4257 = vadd.f32 %v4112, %v4256
      %v4258 = vpop.f32.mrb[0].mxu0
      %v4259 = vpop.f32.mrb[0].mxu0
      %v4260 = vadd.f32 %v4115, %v4259
      %v4261 = vpop.f32.mrb[0].mxu0
      %4262 = vmatprep.mubr.bf16.mxu0 %v3979
      %4263 = vmatmul.mubr.bf16.gmra.mrb[0].mxu0 %v3894
      %v4264 = vpop.f32.mrb[0].mxu0
      %v4265 = vadd.f32 %v4120, %v4264
      %v4266 = vpop.f32.mrb[0].mxu0
      %v4267 = vpop.f32.mrb[0].mxu0
      %v4268 = vadd.f32 %v4123, %v4267
      %v4269 = vpop.f32.mrb[0].mxu0
      %4270 = vdwg.mxu0
      %v4271 = vpack.c.bf16 %v4164, %v4161
      %v4272 = vpack.c.bf16 %v4172, %v4169
      %v4273 = vpack.c.bf16 %v4180, %v4177
      %v4274 = vpack.c.bf16 %v4188, %v4185
      %v4275 = vpack.c.bf16 %v4196, %v4193
      %v4276 = vpack.c.bf16 %v4204, %v4201
      %v4277 = vpack.c.bf16 %v4212, %v4209
      %v4278 = vpack.c.bf16 %v4220, %v4217
      %v4279 = vpack.c.bf16 %v4228, %v4225
      %v4280 = vpack.c.bf16 %v4236, %v4233
      %v4281 = vpack.c.bf16 %v4244, %v4241
      %v4282 = vpack.c.bf16 %v4252, %v4249
      %v4283 = vpack.c.bf16 %v4260, %v4257
      %v4284 = vpack.c.bf16 %v4268, %v4265
      %v4285 = vld [vmem:[%s5] sm:$0xff]
      %v4286 = vld [vmem:[%s5 + $0x8] sm:$0xff]
      %v4287 = vld [vmem:[%s5 + $0x10] sm:$0xff]
      %v4288 = vld [vmem:[%s5 + $0x18] sm:$0xff]
      %v4289 = vld [vmem:[%s5 + $0x20] sm:$0xff]
      %v4290 = vld [vmem:[%s5 + $0x28] sm:$0xff]
      %v4291 = vld [vmem:[%s5 + $0x30] sm:$0xff]
      %v4292 = vld [vmem:[%s5 + $0x38] sm:$0xff]
      %v4293 = vld [vmem:[%s5 + $0x40] sm:$0xff]
      %v4294 = vld [vmem:[%s5 + $0x48] sm:$0xff]
      %v4295 = vld [vmem:[%s5 + $0x50] sm:$0x33]
      %s4296 = scalar_lea.vmem %s5, 88
      %v4297 = vld [vmem:[%s4296] sm:$0xff]
      %v4298 = vld [vmem:[%s4296 + $0x8] sm:$0xff]
      %v4299 = vld [vmem:[%s4296 + $0x10] sm:$0xff]
      %v4300 = vld [vmem:[%s4296 + $0x18] sm:$0xff]
      %v4301 = vld [vmem:[%s4296 + $0x20] sm:$0xff]
      %v4302 = vld [vmem:[%s4296 + $0x28] sm:$0xff]
      %v4303 = vld [vmem:[%s4296 + $0x30] sm:$0xff]
      %v4304 = vld [vmem:[%s4296 + $0x38] sm:$0xff]
      %v4305 = vld [vmem:[%s4296 + $0x40] sm:$0xff]
      %v4306 = vld [vmem:[%s4296 + $0x48] sm:$0xff]
      %v4307 = vld [vmem:[%s4296 + $0x50] sm:$0x33]
      %v4319 = vunpack.c.l.b16 %v4297
      %v4320 = vunpack.c.h.b16 %v4297
      %v4321 = vunpack.c.l.b16 %v4298
      %v4322 = vunpack.c.h.b16 %v4298
      %v4323 = vunpack.c.l.b16 %v4299
      %v4324 = vunpack.c.h.b16 %v4299
      %v4325 = vunpack.c.l.b16 %v4300
      %v4326 = vunpack.c.h.b16 %v4300
      %v4327 = vunpack.c.l.b16 %v4301
      %v4328 = vunpack.c.h.b16 %v4301
      %v4329 = vunpack.c.l.b16 %v4302
      %v4330 = vunpack.c.h.b16 %v4302
      %v4331 = vunpack.c.l.b16 %v4303
      %v4332 = vunpack.c.h.b16 %v4303
      %v4333 = vunpack.c.l.b16 %v4304
      %v4334 = vunpack.c.h.b16 %v4304
      %v4335 = vunpack.c.l.b16 %v4305
      %v4336 = vunpack.c.h.b16 %v4305
      %v4337 = vunpack.c.l.b16 %v4306
      %v4338 = vunpack.c.h.b16 %v4306
      %v4339 = vunpack.c.l.b16 %v4307
      %v4340 = vunpack.c.h.b16 %v4307
      %v4341 = vpack.c.b16 %v4321, %v4319
      %v4342 = vpack.c.b16 %v4322, %v4320
      %v4343 = vpack.c.b16 %v4325, %v4323
      %v4344 = vpack.c.b16 %v4326, %v4324
      %v4345 = vpack.c.b16 %v4329, %v4327
      %v4346 = vpack.c.b16 %v4330, %v4328
      %v4347 = vpack.c.b16 %v4333, %v4331
      %v4348 = vpack.c.b16 %v4334, %v4332
      %v4349 = vpack.c.b16 %v4337, %v4335
      %v4350 = vpack.c.b16 %v4338, %v4336
      %v4351 = vpack.c.b16 %v4339, %v4339
      %v4352 = vpack.c.b16 %v4340, %v4340
      %vm4363 = vcmask 687104
      %v4365 = vsel %vm4363, %v4272, 0
      %v4368 = vsel %vm4363, %v4273, 0
      %v4371 = vsel %vm4363, %v4274, 0
      %v4374 = vsel %vm4363, %v4275, 0
      %v4377 = vsel %vm4363, %v4276, 0
      %v4380 = vsel %vm4363, %v4277, 0
      %v4383 = vsel %vm4363, %v4278, 0
      %v4386 = vsel %vm4363, %v4279, 0
      %v4389 = vsel %vm4363, %v4280, 0
      %v4392 = vsel %vm4363, %v4281, 0
      %vm4394 = vcmask 1041408
      %v4396 = vsel %vm4394, %v4351, 0
      %v4399 = vsel %vm4394, %v4352, 0
      %4401 = vmatprep.subr.bf16.mxu0 %v4342
      %4402 = vmatpush1.bf16.msra.mxu0 %v4341
      %4403 = vmatprep.subr.bf16.mxu0 %v4344
      %4404 = vmatpush1.bf16.msra.mxu0 %v4343
      %4405 = vmatprep.subr.bf16.mxu0 %v4346
      %4406 = vmatpush1.bf16.msra.mxu0 %v4345
      %4407 = vmatprep.subr.bf16.mxu0 %v4348
      %4408 = vmatpush1.bf16.msra.mxu0 %v4347
      %4409 = vmatprep.subr.bf16.mxu0 %v4350
      %4410 = vmatpush1.bf16.msra.mxu0 %v4349
      %4411 = vmatprep.subr.bf16.mxu0 %v4399
      %4412 = vmatpush1.bf16.msra.mxu0 %v4396
      %4413 = vmatprep.subr.bf16.mxu0 0
      %4414 = vmatpush1.bf16.msra.mxu0 0
      %4415 = vmatprep.subr.bf16.mxu0 0
      %4416 = vmatpush1.bf16.msra.mxu0 0
      %4417 = vmatprep.subr.bf16.mxu0 0
      %4418 = vmatpush1.bf16.msra.mxu0 0
      %4419 = vmatprep.subr.bf16.mxu0 0
      %4420 = vmatpush1.bf16.msra.mxu0 0
      %4421 = vmatprep.subr.bf16.mxu0 0
      %4422 = vmatpush1.bf16.msra.mxu0 0
      %4423 = vmatprep.subr.bf16.mxu0 0
      %4424 = vmatpush1.bf16.msra.mxu0 0
      %4425 = vmatprep.subr.bf16.mxu0 0
      %4426 = vmatpush1.bf16.msra.mxu0 0
      %4427 = vmatprep.subr.bf16.mxu0 0
      %4428 = vmatpush1.bf16.msra.mxu0 0
      %4429 = vmatprep.subr.bf16.mxu0 0
      %4430 = vmatpush1.bf16.msra.mxu0 0
      %4431 = vmatprep.subr.bf16.mxu0 0
      %4432 = vmatpush1.bf16.msra.mxu0 0
      %4433 = vmatprep.mubr.bf16.mxu0 0
      %4434 = vmatmul.mubr.bf16.gmra.mrb[0].mxu0 %v4365
      %v4435 = vpop.f32.mrb[0].mxu0
      %v4436 = vadd.f32 0.0, %v4435
      %v4437 = vpop.f32.mrb[0].mxu0
      %v4438 = vadd.f32 0.0, %v4437
      %v4439 = vpop.f32.mrb[0].mxu0
      %v4440 = vadd.f32 0.0, %v4439
      %v4441 = vpop.f32.mrb[0].mxu0
      %v4442 = vadd.f32 0.0, %v4441
      %4443 = vmatprep.mubr.bf16.mxu0 0
      %4444 = vmatmul.mubr.bf16.gmra.mrb[0].mxu0 %v4368
      %v4445 = vpop.f32.mrb[0].mxu0
      %v4446 = vadd.f32 0.0, %v4445
      %v4447 = vpop.f32.mrb[0].mxu0
      %v4448 = vadd.f32 0.0, %v4447
      %v4449 = vpop.f32.mrb[0].mxu0
      %v4450 = vadd.f32 0.0, %v4449
      %v4451 = vpop.f32.mrb[0].mxu0
      %v4452 = vadd.f32 0.0, %v4451
      %4453 = vmatprep.mubr.bf16.mxu0 0
      %4454 = vmatmul.mubr.bf16.gmra.mrb[0].mxu0 %v4371
      %v4455 = vpop.f32.mrb[0].mxu0
      %v4456 = vadd.f32 0.0, %v4455
      %v4457 = vpop.f32.mrb[0].mxu0
      %v4458 = vadd.f32 0.0, %v4457
      %v4459 = vpop.f32.mrb[0].mxu0
      %v4460 = vadd.f32 0.0, %v4459
      %v4461 = vpop.f32.mrb[0].mxu0
      %v4462 = vadd.f32 0.0, %v4461
      %4463 = vmatprep.mubr.bf16.mxu0 0
      %4464 = vmatmul.mubr.bf16.gmra.mrb[0].mxu0 %v4374
      %v4465 = vpop.f32.mrb[0].mxu0
      %v4466 = vadd.f32 0.0, %v4465
      %v4467 = vpop.f32.mrb[0].mxu0
      %v4468 = vadd.f32 0.0, %v4467
      %v4469 = vpop.f32.mrb[0].mxu0
      %v4470 = vadd.f32 0.0, %v4469
      %v4471 = vpop.f32.mrb[0].mxu0
      %v4472 = vadd.f32 0.0, %v4471
      %4473 = vmatprep.mubr.bf16.mxu0 0
      %4474 = vmatmul.mubr.bf16.gmra.mrb[0].mxu0 %v4377
      %v4475 = vpop.f32.mrb[0].mxu0
      %v4476 = vadd.f32 0.0, %v4475
      %v4477 = vpop.f32.mrb[0].mxu0
      %v4478 = vadd.f32 0.0, %v4477
      %v4479 = vpop.f32.mrb[0].mxu0
      %v4480 = vadd.f32 0.0, %v4479
      %v4481 = vpop.f32.mrb[0].mxu0
      %v4482 = vadd.f32 0.0, %v4481
      %4483 = vmatprep.mubr.bf16.mxu0 0
      %4484 = vmatmul.mubr.bf16.gmra.mrb[0].mxu0 %v4380
      %v4485 = vpop.f32.mrb[0].mxu0
      %v4486 = vadd.f32 0.0, %v4485
      %v4487 = vpop.f32.mrb[0].mxu0
      %v4488 = vadd.f32 0.0, %v4487
      %v4489 = vpop.f32.mrb[0].mxu0
      %v4490 = vadd.f32 0.0, %v4489
      %v4491 = vpop.f32.mrb[0].mxu0
      %v4492 = vadd.f32 0.0, %v4491
      %4493 = vmatprep.mubr.bf16.mxu0 0
      %4494 = vmatmul.mubr.bf16.gmra.mrb[0].mxu0 %v4383
      %v4495 = vpop.f32.mrb[0].mxu0
      %v4496 = vadd.f32 0.0, %v4495
      %v4497 = vpop.f32.mrb[0].mxu0
      %v4498 = vadd.f32 0.0, %v4497
      %v4499 = vpop.f32.mrb[0].mxu0
      %v4500 = vadd.f32 0.0, %v4499
      %v4501 = vpop.f32.mrb[0].mxu0
      %v4502 = vadd.f32 0.0, %v4501
      %4503 = vmatprep.mubr.bf16.mxu0 0
      %4504 = vmatmul.mubr.bf16.gmra.mrb[0].mxu0 %v4386
      %v4505 = vpop.f32.mrb[0].mxu0
      %v4506 = vadd.f32 0.0, %v4505
      %v4507 = vpop.f32.mrb[0].mxu0
      %v4508 = vadd.f32 0.0, %v4507
      %v4509 = vpop.f32.mrb[0].mxu0
      %v4510 = vadd.f32 0.0, %v4509
      %v4511 = vpop.f32.mrb[0].mxu0
      %v4512 = vadd.f32 0.0, %v4511
      %4513 = vmatprep.mubr.bf16.mxu0 0
      %4514 = vmatmul.mubr.bf16.gmra.mrb[0].mxu0 %v4389
      %v4515 = vpop.f32.mrb[0].mxu0
      %v4516 = vadd.f32 0.0, %v4515
      %v4517 = vpop.f32.mrb[0].mxu0
      %v4518 = vadd.f32 0.0, %v4517
      %v4519 = vpop.f32.mrb[0].mxu0
      %v4520 = vadd.f32 0.0, %v4519
      %v4521 = vpop.f32.mrb[0].mxu0
      %v4522 = vadd.f32 0.0, %v4521
      %4523 = vmatprep.mubr.bf16.mxu0 0
      %4524 = vmatmul.mubr.bf16.gmra.mrb[0].mxu0 %v4392
      %v4525 = vpop.f32.mrb[0].mxu0
      %v4526 = vadd.f32 0.0, %v4525
      %v4527 = vpop.f32.mrb[0].mxu0
      %v4528 = vadd.f32 0.0, %v4527
      %v4529 = vpop.f32.mrb[0].mxu0
      %v4530 = vadd.f32 0.0, %v4529
      %v4531 = vpop.f32.mrb[0].mxu0
      %v4532 = vadd.f32 0.0, %v4531
      %4533 = vdwg.mxu0
      %v4545 = vunpack.c.l.b16 %v4285
      %v4546 = vunpack.c.h.b16 %v4285
      %v4547 = vunpack.c.l.b16 %v4286
      %v4548 = vunpack.c.h.b16 %v4286
      %v4549 = vunpack.c.l.b16 %v4287
      %v4550 = vunpack.c.h.b16 %v4287
      %v4551 = vunpack.c.l.b16 %v4288
      %v4552 = vunpack.c.h.b16 %v4288
      %v4553 = vunpack.c.l.b16 %v4289
      %v4554 = vunpack.c.h.b16 %v4289
      %v4555 = vunpack.c.l.b16 %v4290
      %v4556 = vunpack.c.h.b16 %v4290
      %v4557 = vunpack.c.l.b16 %v4291
      %v4558 = vunpack.c.h.b16 %v4291
      %v4559 = vunpack.c.l.b16 %v4292
      %v4560 = vunpack.c.h.b16 %v4292
      %v4561 = vunpack.c.l.b16 %v4293
      %v4562 = vunpack.c.h.b16 %v4293
      %v4563 = vunpack.c.l.b16 %v4294
      %v4564 = vunpack.c.h.b16 %v4294
      %v4565 = vunpack.c.l.b16 %v4295
      %v4566 = vunpack.c.h.b16 %v4295
      %v4567 = vpack.c.b16 %v4547, %v4545
      %v4568 = vpack.c.b16 %v4548, %v4546
      %v4569 = vpack.c.b16 %v4551, %v4549
      %v4570 = vpack.c.b16 %v4552, %v4550
      %v4571 = vpack.c.b16 %v4555, %v4553
      %v4572 = vpack.c.b16 %v4556, %v4554
      %v4573 = vpack.c.b16 %v4559, %v4557
      %v4574 = vpack.c.b16 %v4560, %v4558
      %v4575 = vpack.c.b16 %v4563, %v4561
      %v4576 = vpack.c.b16 %v4564, %v4562
      %v4577 = vpack.c.b16 %v4565, %v4565
      %v4578 = vpack.c.b16 %v4566, %v4566
      %v4590 = vsel %vm4363, %v4271, 0
      %v4593 = vsel %vm4394, %v4577, 0
      %v4596 = vsel %vm4394, %v4578, 0
      %4598 = vmatprep.subr.bf16.mxu0 %v4568
      %4599 = vmatpush1.bf16.msra.mxu0 %v4567
      %4600 = vmatprep.subr.bf16.mxu0 %v4570
      %4601 = vmatpush1.bf16.msra.mxu0 %v4569
      %4602 = vmatprep.subr.bf16.mxu0 %v4572
      %4603 = vmatpush1.bf16.msra.mxu0 %v4571
      %4604 = vmatprep.subr.bf16.mxu0 %v4574
      %4605 = vmatpush1.bf16.msra.mxu0 %v4573
      %4606 = vmatprep.subr.bf16.mxu0 %v4576
      %4607 = vmatpush1.bf16.msra.mxu0 %v4575
      %4608 = vmatprep.subr.bf16.mxu0 %v4596
      %4609 = vmatpush1.bf16.msra.mxu0 %v4593
      %4610 = vmatprep.subr.bf16.mxu0 0
      %4611 = vmatpush1.bf16.msra.mxu0 0
      %4612 = vmatprep.subr.bf16.mxu0 0
      %4613 = vmatpush1.bf16.msra.mxu0 0
      %4614 = vmatprep.subr.bf16.mxu0 0
      %4615 = vmatpush1.bf16.msra.mxu0 0
      %4616 = vmatprep.subr.bf16.mxu0 0
      %4617 = vmatpush1.bf16.msra.mxu0 0
      %4618 = vmatprep.subr.bf16.mxu0 0
      %4619 = vmatpush1.bf16.msra.mxu0 0
      %4620 = vmatprep.subr.bf16.mxu0 0
      %4621 = vmatpush1.bf16.msra.mxu0 0
      %4622 = vmatprep.subr.bf16.mxu0 0
      %4623 = vmatpush1.bf16.msra.mxu0 0
      %4624 = vmatprep.subr.bf16.mxu0 0
      %4625 = vmatpush1.bf16.msra.mxu0 0
      %4626 = vmatprep.subr.bf16.mxu0 0
      %4627 = vmatpush1.bf16.msra.mxu0 0
      %4628 = vmatprep.subr.bf16.mxu0 0
      %4629 = vmatpush1.bf16.msra.mxu0 0
      %4630 = vmatprep.mubr.bf16.mxu0 0
      %4631 = vmatmul.mubr.bf16.gmra.mrb[0].mxu0 %v4590
      %v4632 = vpop.f32.mrb[0].mxu0
      %v4633 = vadd.f32 %v4436, %v4632
      %v4634 = vpop.f32.mrb[0].mxu0
      %v4635 = vadd.f32 %v4438, %v4634
      %v4636 = vpop.f32.mrb[0].mxu0
      %v4637 = vadd.f32 %v4440, %v4636
      %v4638 = vpop.f32.mrb[0].mxu0
      %v4639 = vadd.f32 %v4442, %v4638
      %4640 = vmatprep.mubr.bf16.mxu0 0
      %4641 = vmatmul.mubr.bf16.gmra.mrb[0].mxu0 %v4365
      %v4642 = vpop.f32.mrb[0].mxu0
      %v4643 = vadd.f32 %v4446, %v4642
      %v4644 = vpop.f32.mrb[0].mxu0
      %v4645 = vadd.f32 %v4448, %v4644
      %v4646 = vpop.f32.mrb[0].mxu0
      %v4647 = vadd.f32 %v4450, %v4646
      %v4648 = vpop.f32.mrb[0].mxu0
      %v4649 = vadd.f32 %v4452, %v4648
      %4650 = vmatprep.mubr.bf16.mxu0 0
      %4651 = vmatmul.mubr.bf16.gmra.mrb[0].mxu0 %v4368
      %v4652 = vpop.f32.mrb[0].mxu0
      %v4653 = vadd.f32 %v4456, %v4652
      %v4654 = vpop.f32.mrb[0].mxu0
      %v4655 = vadd.f32 %v4458, %v4654
      %v4656 = vpop.f32.mrb[0].mxu0
      %v4657 = vadd.f32 %v4460, %v4656
      %v4658 = vpop.f32.mrb[0].mxu0
      %v4659 = vadd.f32 %v4462, %v4658
      %4660 = vmatprep.mubr.bf16.mxu0 0
      %4661 = vmatmul.mubr.bf16.gmra.mrb[0].mxu0 %v4371
      %v4662 = vpop.f32.mrb[0].mxu0
      %v4663 = vadd.f32 %v4466, %v4662
      %v4664 = vpop.f32.mrb[0].mxu0
      %v4665 = vadd.f32 %v4468, %v4664
      %v4666 = vpop.f32.mrb[0].mxu0
      %v4667 = vadd.f32 %v4470, %v4666
      %v4668 = vpop.f32.mrb[0].mxu0
      %v4669 = vadd.f32 %v4472, %v4668
      %4670 = vmatprep.mubr.bf16.mxu0 0
      %4671 = vmatmul.mubr.bf16.gmra.mrb[0].mxu0 %v4374
      %v4672 = vpop.f32.mrb[0].mxu0
      %v4673 = vadd.f32 %v4476, %v4672
      %v4674 = vpop.f32.mrb[0].mxu0
      %v4675 = vadd.f32 %v4478, %v4674
      %v4676 = vpop.f32.mrb[0].mxu0
      %v4677 = vadd.f32 %v4480, %v4676
      %v4678 = vpop.f32.mrb[0].mxu0
      %v4679 = vadd.f32 %v4482, %v4678
      %4680 = vmatprep.mubr.bf16.mxu0 0
      %4681 = vmatmul.mubr.bf16.gmra.mrb[0].mxu0 %v4377
      %v4682 = vpop.f32.mrb[0].mxu0
      %v4683 = vadd.f32 %v4486, %v4682
      %v4684 = vpop.f32.mrb[0].mxu0
      %v4685 = vadd.f32 %v4488, %v4684
      %v4686 = vpop.f32.mrb[0].mxu0
      %v4687 = vadd.f32 %v4490, %v4686
      %v4688 = vpop.f32.mrb[0].mxu0
      %v4689 = vadd.f32 %v4492, %v4688
      %4690 = vmatprep.mubr.bf16.mxu0 0
      %4691 = vmatmul.mubr.bf16.gmra.mrb[0].mxu0 %v4380
      %v4692 = vpop.f32.mrb[0].mxu0
      %v4693 = vadd.f32 %v4496, %v4692
      %v4694 = vpop.f32.mrb[0].mxu0
      %v4695 = vadd.f32 %v4498, %v4694
      %v4696 = vpop.f32.mrb[0].mxu0
      %v4697 = vadd.f32 %v4500, %v4696
      %v4698 = vpop.f32.mrb[0].mxu0
      %v4699 = vadd.f32 %v4502, %v4698
      %4700 = vmatprep.mubr.bf16.mxu0 0
      %4701 = vmatmul.mubr.bf16.gmra.mrb[0].mxu0 %v4383
      %v4702 = vpop.f32.mrb[0].mxu0
      %v4703 = vadd.f32 %v4506, %v4702
      %v4704 = vpop.f32.mrb[0].mxu0
      %v4705 = vadd.f32 %v4508, %v4704
      %v4706 = vpop.f32.mrb[0].mxu0
      %v4707 = vadd.f32 %v4510, %v4706
      %v4708 = vpop.f32.mrb[0].mxu0
      %v4709 = vadd.f32 %v4512, %v4708
      %4710 = vmatprep.mubr.bf16.mxu0 0
      %4711 = vmatmul.mubr.bf16.gmra.mrb[0].mxu0 %v4386
      %v4712 = vpop.f32.mrb[0].mxu0
      %v4713 = vadd.f32 %v4516, %v4712
      %v4714 = vpop.f32.mrb[0].mxu0
      %v4715 = vadd.f32 %v4518, %v4714
      %v4716 = vpop.f32.mrb[0].mxu0
      %v4717 = vadd.f32 %v4520, %v4716
      %v4718 = vpop.f32.mrb[0].mxu0
      %v4719 = vadd.f32 %v4522, %v4718
      %4720 = vmatprep.mubr.bf16.mxu0 0
      %4721 = vmatmul.mubr.bf16.gmra.mrb[0].mxu0 %v4389
      %v4722 = vpop.f32.mrb[0].mxu0
      %v4723 = vadd.f32 %v4526, %v4722
      %v4724 = vpop.f32.mrb[0].mxu0
      %v4725 = vadd.f32 %v4528, %v4724
      %v4726 = vpop.f32.mrb[0].mxu0
      %v4727 = vadd.f32 %v4530, %v4726
      %v4728 = vpop.f32.mrb[0].mxu0
      %v4729 = vadd.f32 %v4532, %v4728
      %4730 = vdwg.mxu0
      %s4731 = scalar_lea.vmem %s5, 176
      %v4732 = vld [vmem:[%s4731] sm:$0xff]
      %v4733 = vld [vmem:[%s4731 + $0x8] sm:$0xff]
      %v4734 = vld [vmem:[%s4731 + $0x10] sm:$0xff]
      %v4735 = vld [vmem:[%s4731 + $0x18] sm:$0xff]
      %v4736 = vld [vmem:[%s4731 + $0x20] sm:$0xff]
      %v4737 = vld [vmem:[%s4731 + $0x28] sm:$0xff]
      %v4738 = vld [vmem:[%s4731 + $0x30] sm:$0xff]
      %v4739 = vld [vmem:[%s4731 + $0x38] sm:$0xff]
      %v4740 = vld [vmem:[%s4731 + $0x40] sm:$0xff]
      %v4741 = vld [vmem:[%s4731 + $0x48] sm:$0xff]
      %v4742 = vld [vmem:[%s4731 + $0x50] sm:$0x33]
      %v4754 = vunpack.c.l.b16 %v4732
      %v4755 = vunpack.c.h.b16 %v4732
      %v4756 = vunpack.c.l.b16 %v4733
      %v4757 = vunpack.c.h.b16 %v4733
      %v4758 = vunpack.c.l.b16 %v4734
      %v4759 = vunpack.c.h.b16 %v4734
      %v4760 = vunpack.c.l.b16 %v4735
      %v4761 = vunpack.c.h.b16 %v4735
      %v4762 = vunpack.c.l.b16 %v4736
      %v4763 = vunpack.c.h.b16 %v4736
      %v4764 = vunpack.c.l.b16 %v4737
      %v4765 = vunpack.c.h.b16 %v4737
      %v4766 = vunpack.c.l.b16 %v4738
      %v4767 = vunpack.c.h.b16 %v4738
      %v4768 = vunpack.c.l.b16 %v4739
      %v4769 = vunpack.c.h.b16 %v4739
      %v4770 = vunpack.c.l.b16 %v4740
      %v4771 = vunpack.c.h.b16 %v4740
      %v4772 = vunpack.c.l.b16 %v4741
      %v4773 = vunpack.c.h.b16 %v4741
      %v4774 = vunpack.c.l.b16 %v4742
      %v4775 = vunpack.c.h.b16 %v4742
      %v4776 = vpack.c.b16 %v4756, %v4754
      %v4777 = vpack.c.b16 %v4757, %v4755
      %v4778 = vpack.c.b16 %v4760, %v4758
      %v4779 = vpack.c.b16 %v4761, %v4759
      %v4780 = vpack.c.b16 %v4764, %v4762
      %v4781 = vpack.c.b16 %v4765, %v4763
      %v4782 = vpack.c.b16 %v4768, %v4766
      %v4783 = vpack.c.b16 %v4769, %v4767
      %v4784 = vpack.c.b16 %v4772, %v4770
      %v4785 = vpack.c.b16 %v4773, %v4771
      %v4786 = vpack.c.b16 %v4774, %v4774
      %v4787 = vpack.c.b16 %v4775, %v4775
      %v4799 = vsel %vm4363, %v4282, 0
      %v4802 = vsel %vm4394, %v4786, 0
      %v4805 = vsel %vm4394, %v4787, 0
      %4807 = vmatprep.subr.bf16.mxu0 %v4777
      %4808 = vmatpush1.bf16.msra.mxu0 %v4776
      %4809 = vmatprep.subr.bf16.mxu0 %v4779
      %4810 = vmatpush1.bf16.msra.mxu0 %v4778
      %4811 = vmatprep.subr.bf16.mxu0 %v4781
      %4812 = vmatpush1.bf16.msra.mxu0 %v4780
      %4813 = vmatprep.subr.bf16.mxu0 %v4783
      %4814 = vmatpush1.bf16.msra.mxu0 %v4782
      %4815 = vmatprep.subr.bf16.mxu0 %v4785
      %4816 = vmatpush1.bf16.msra.mxu0 %v4784
      %4817 = vmatprep.subr.bf16.mxu0 %v4805
      %4818 = vmatpush1.bf16.msra.mxu0 %v4802
      %4819 = vmatprep.subr.bf16.mxu0 0
      %4820 = vmatpush1.bf16.msra.mxu0 0
      %4821 = vmatprep.subr.bf16.mxu0 0
      %4822 = vmatpush1.bf16.msra.mxu0 0
      %4823 = vmatprep.subr.bf16.mxu0 0
      %4824 = vmatpush1.bf16.msra.mxu0 0
      %4825 = vmatprep.subr.bf16.mxu0 0
      %4826 = vmatpush1.bf16.msra.mxu0 0
      %4827 = vmatprep.subr.bf16.mxu0 0
      %4828 = vmatpush1.bf16.msra.mxu0 0
      %4829 = vmatprep.subr.bf16.mxu0 0
      %4830 = vmatpush1.bf16.msra.mxu0 0
      %4831 = vmatprep.subr.bf16.mxu0 0
      %4832 = vmatpush1.bf16.msra.mxu0 0
      %4833 = vmatprep.subr.bf16.mxu0 0
      %4834 = vmatpush1.bf16.msra.mxu0 0
      %4835 = vmatprep.subr.bf16.mxu0 0
      %4836 = vmatpush1.bf16.msra.mxu0 0
      %4837 = vmatprep.subr.bf16.mxu0 0
      %4838 = vmatpush1.bf16.msra.mxu0 0
      %4839 = vmatprep.mubr.bf16.mxu0 0
      %4840 = vmatmul.mubr.bf16.gmra.mrb[0].mxu0 %v4368
      %v4841 = vpop.f32.mrb[0].mxu0
      %v4842 = vadd.f32 0.0, %v4841
      %v4843 = vpop.f32.mrb[0].mxu0
      %v4844 = vadd.f32 0.0, %v4843
      %v4845 = vpop.f32.mrb[0].mxu0
      %v4846 = vadd.f32 0.0, %v4845
      %v4847 = vpop.f32.mrb[0].mxu0
      %v4848 = vadd.f32 0.0, %v4847
      %4849 = vmatprep.mubr.bf16.mxu0 0
      %4850 = vmatmul.mubr.bf16.gmra.mrb[0].mxu0 %v4371
      %v4851 = vpop.f32.mrb[0].mxu0
      %v4852 = vadd.f32 0.0, %v4851
      %v4853 = vpop.f32.mrb[0].mxu0
      %v4854 = vadd.f32 0.0, %v4853
      %v4855 = vpop.f32.mrb[0].mxu0
      %v4856 = vadd.f32 0.0, %v4855
      %v4857 = vpop.f32.mrb[0].mxu0
      %v4858 = vadd.f32 0.0, %v4857
      %4859 = vmatprep.mubr.bf16.mxu0 0
      %4860 = vmatmul.mubr.bf16.gmra.mrb[0].mxu0 %v4374
      %v4861 = vpop.f32.mrb[0].mxu0
      %v4862 = vadd.f32 0.0, %v4861
      %v4863 = vpop.f32.mrb[0].mxu0
      %v4864 = vadd.f32 0.0, %v4863
      %v4865 = vpop.f32.mrb[0].mxu0
      %v4866 = vadd.f32 0.0, %v4865
      %v4867 = vpop.f32.mrb[0].mxu0
      %v4868 = vadd.f32 0.0, %v4867
      %4869 = vmatprep.mubr.bf16.mxu0 0
      %4870 = vmatmul.mubr.bf16.gmra.mrb[0].mxu0 %v4377
      %v4871 = vpop.f32.mrb[0].mxu0
      %v4872 = vadd.f32 0.0, %v4871
      %v4873 = vpop.f32.mrb[0].mxu0
      %v4874 = vadd.f32 0.0, %v4873
      %v4875 = vpop.f32.mrb[0].mxu0
      %v4876 = vadd.f32 0.0, %v4875
      %v4877 = vpop.f32.mrb[0].mxu0
      %v4878 = vadd.f32 0.0, %v4877
      %4879 = vmatprep.mubr.bf16.mxu0 0
      %4880 = vmatmul.mubr.bf16.gmra.mrb[0].mxu0 %v4380
      %v4881 = vpop.f32.mrb[0].mxu0
      %v4882 = vadd.f32 0.0, %v4881
      %v4883 = vpop.f32.mrb[0].mxu0
      %v4884 = vadd.f32 0.0, %v4883
      %v4885 = vpop.f32.mrb[0].mxu0
      %v4886 = vadd.f32 0.0, %v4885
      %v4887 = vpop.f32.mrb[0].mxu0
      %v4888 = vadd.f32 0.0, %v4887
      %4889 = vmatprep.mubr.bf16.mxu0 0
      %4890 = vmatmul.mubr.bf16.gmra.mrb[0].mxu0 %v4383
      %v4891 = vpop.f32.mrb[0].mxu0
      %v4892 = vadd.f32 0.0, %v4891
      %v4893 = vpop.f32.mrb[0].mxu0
      %v4894 = vadd.f32 0.0, %v4893
      %v4895 = vpop.f32.mrb[0].mxu0
      %v4896 = vadd.f32 0.0, %v4895
      %v4897 = vpop.f32.mrb[0].mxu0
      %v4898 = vadd.f32 0.0, %v4897
      %4899 = vmatprep.mubr.bf16.mxu0 0
      %4900 = vmatmul.mubr.bf16.gmra.mrb[0].mxu0 %v4386
      %v4901 = vpop.f32.mrb[0].mxu0
      %v4902 = vadd.f32 0.0, %v4901
      %v4903 = vpop.f32.mrb[0].mxu0
      %v4904 = vadd.f32 0.0, %v4903
      %v4905 = vpop.f32.mrb[0].mxu0
      %v4906 = vadd.f32 0.0, %v4905
      %v4907 = vpop.f32.mrb[0].mxu0
      %v4908 = vadd.f32 0.0, %v4907
      %4909 = vmatprep.mubr.bf16.mxu0 0
      %4910 = vmatmul.mubr.bf16.gmra.mrb[0].mxu0 %v4389
      %v4911 = vpop.f32.mrb[0].mxu0
      %v4912 = vadd.f32 0.0, %v4911
      %v4913 = vpop.f32.mrb[0].mxu0
      %v4914 = vadd.f32 0.0, %v4913
      %v4915 = vpop.f32.mrb[0].mxu0
      %v4916 = vadd.f32 0.0, %v4915
      %v4917 = vpop.f32.mrb[0].mxu0
      %v4918 = vadd.f32 0.0, %v4917
      %4919 = vmatprep.mubr.bf16.mxu0 0
      %4920 = vmatmul.mubr.bf16.gmra.mrb[0].mxu0 %v4392
      %v4921 = vpop.f32.mrb[0].mxu0
      %v4922 = vadd.f32 0.0, %v4921
      %v4923 = vpop.f32.mrb[0].mxu0
      %v4924 = vadd.f32 0.0, %v4923
      %v4925 = vpop.f32.mrb[0].mxu0
      %v4926 = vadd.f32 0.0, %v4925
      %v4927 = vpop.f32.mrb[0].mxu0
      %v4928 = vadd.f32 0.0, %v4927
      %4929 = vmatprep.mubr.bf16.mxu0 0
      %4930 = vmatmul.mubr.bf16.gmra.mrb[0].mxu0 %v4799
      %v4931 = vpop.f32.mrb[0].mxu0
      %v4932 = vadd.f32 0.0, %v4931
      %v4933 = vpop.f32.mrb[0].mxu0
      %v4934 = vadd.f32 0.0, %v4933
      %v4935 = vpop.f32.mrb[0].mxu0
      %v4936 = vadd.f32 0.0, %v4935
      %v4937 = vpop.f32.mrb[0].mxu0
      %v4938 = vadd.f32 0.0, %v4937
      %4939 = vdwg.mxu0
      %v4940 = vadd.f32 %v4633, %v4842
      %v4941 = vadd.f32 %v4635, %v4844
      %v4942 = vadd.f32 %v4637, %v4846
      %v4943 = vadd.f32 %v4639, %v4848
      %v4944 = vadd.f32 %v4643, %v4852
      %v4945 = vadd.f32 %v4645, %v4854
      %v4946 = vadd.f32 %v4647, %v4856
      %v4947 = vadd.f32 %v4649, %v4858
      %v4948 = vadd.f32 %v4653, %v4862
      %v4949 = vadd.f32 %v4655, %v4864
      %v4950 = vadd.f32 %v4657, %v4866
      %v4951 = vadd.f32 %v4659, %v4868
      %v4952 = vadd.f32 %v4663, %v4872
      %v4953 = vadd.f32 %v4665, %v4874
      %v4954 = vadd.f32 %v4667, %v4876
      %v4955 = vadd.f32 %v4669, %v4878
      %v4956 = vadd.f32 %v4673, %v4882
      %v4957 = vadd.f32 %v4675, %v4884
      %v4958 = vadd.f32 %v4677, %v4886
      %v4959 = vadd.f32 %v4679, %v4888
      %v4960 = vadd.f32 %v4683, %v4892
      %v4961 = vadd.f32 %v4685, %v4894
      %v4962 = vadd.f32 %v4687, %v4896
      %v4963 = vadd.f32 %v4689, %v4898
      %v4964 = vadd.f32 %v4693, %v4902
      %v4965 = vadd.f32 %v4695, %v4904
      %v4966 = vadd.f32 %v4697, %v4906
      %v4967 = vadd.f32 %v4699, %v4908
      %v4968 = vadd.f32 %v4703, %v4912
      %v4969 = vadd.f32 %v4705, %v4914
      %v4970 = vadd.f32 %v4707, %v4916
      %v4971 = vadd.f32 %v4709, %v4918
      %v4972 = vadd.f32 %v4713, %v4922
      %v4973 = vadd.f32 %v4715, %v4924
      %v4974 = vadd.f32 %v4717, %v4926
      %v4975 = vadd.f32 %v4719, %v4928
      %v4976 = vadd.f32 %v4723, %v4932
      %v4977 = vadd.f32 %v4725, %v4934
      %v4978 = vadd.f32 %v4727, %v4936
      %v4979 = vadd.f32 %v4729, %v4938
      %s4980 = scalar_lea.vmem %s5, 264
      %v4981 = vld [vmem:[%s4980] sm:$0xff]
      %v4982 = vld [vmem:[%s4980 + $0x8] sm:$0xff]
      %v4983 = vld [vmem:[%s4980 + $0x10] sm:$0xff]
      %v4984 = vld [vmem:[%s4980 + $0x18] sm:$0xff]
      %v4985 = vld [vmem:[%s4980 + $0x20] sm:$0xff]
      %v4986 = vld [vmem:[%s4980 + $0x28] sm:$0xff]
      %v4987 = vld [vmem:[%s4980 + $0x30] sm:$0xff]
      %v4988 = vld [vmem:[%s4980 + $0x38] sm:$0xff]
      %v4989 = vld [vmem:[%s4980 + $0x40] sm:$0xff]
      %v4990 = vld [vmem:[%s4980 + $0x48] sm:$0xff]
      %v4991 = vld [vmem:[%s4980 + $0x50] sm:$0x33]
      %v5003 = vunpack.c.l.b16 %v4981
      %v5004 = vunpack.c.h.b16 %v4981
      %v5005 = vunpack.c.l.b16 %v4982
      %v5006 = vunpack.c.h.b16 %v4982
      %v5007 = vunpack.c.l.b16 %v4983
      %v5008 = vunpack.c.h.b16 %v4983
      %v5009 = vunpack.c.l.b16 %v4984
      %v5010 = vunpack.c.h.b16 %v4984
      %v5011 = vunpack.c.l.b16 %v4985
      %v5012 = vunpack.c.h.b16 %v4985
      %v5013 = vunpack.c.l.b16 %v4986
      %v5014 = vunpack.c.h.b16 %v4986
      %v5015 = vunpack.c.l.b16 %v4987
      %v5016 = vunpack.c.h.b16 %v4987
      %v5017 = vunpack.c.l.b16 %v4988
      %v5018 = vunpack.c.h.b16 %v4988
      %v5019 = vunpack.c.l.b16 %v4989
      %v5020 = vunpack.c.h.b16 %v4989
      %v5021 = vunpack.c.l.b16 %v4990
      %v5022 = vunpack.c.h.b16 %v4990
      %v5023 = vunpack.c.l.b16 %v4991
      %v5024 = vunpack.c.h.b16 %v4991
      %v5025 = vpack.c.b16 %v5005, %v5003
      %v5026 = vpack.c.b16 %v5006, %v5004
      %v5027 = vpack.c.b16 %v5009, %v5007
      %v5028 = vpack.c.b16 %v5010, %v5008
      %v5029 = vpack.c.b16 %v5013, %v5011
      %v5030 = vpack.c.b16 %v5014, %v5012
      %v5031 = vpack.c.b16 %v5017, %v5015
      %v5032 = vpack.c.b16 %v5018, %v5016
      %v5033 = vpack.c.b16 %v5021, %v5019
      %v5034 = vpack.c.b16 %v5022, %v5020
      %v5035 = vpack.c.b16 %v5023, %v5023
      %v5036 = vpack.c.b16 %v5024, %v5024
      %v5048 = vsel %vm4363, %v4283, 0
      %v5051 = vsel %vm4394, %v5035, 0
      %v5054 = vsel %vm4394, %v5036, 0
      %5056 = vmatprep.subr.bf16.mxu0 %v5026
      %5057 = vmatpush1.bf16.msra.mxu0 %v5025
      %5058 = vmatprep.subr.bf16.mxu0 %v5028
      %5059 = vmatpush1.bf16.msra.mxu0 %v5027
      %5060 = vmatprep.subr.bf16.mxu0 %v5030
      %5061 = vmatpush1.bf16.msra.mxu0 %v5029
      %5062 = vmatprep.subr.bf16.mxu0 %v5032
      %5063 = vmatpush1.bf16.msra.mxu0 %v5031
      %5064 = vmatprep.subr.bf16.mxu0 %v5034
      %5065 = vmatpush1.bf16.msra.mxu0 %v5033
      %5066 = vmatprep.subr.bf16.mxu0 %v5054
      %5067 = vmatpush1.bf16.msra.mxu0 %v5051
      %5068 = vmatprep.subr.bf16.mxu0 0
      %5069 = vmatpush1.bf16.msra.mxu0 0
      %5070 = vmatprep.subr.bf16.mxu0 0
      %5071 = vmatpush1.bf16.msra.mxu0 0
      %5072 = vmatprep.subr.bf16.mxu0 0
      %5073 = vmatpush1.bf16.msra.mxu0 0
      %5074 = vmatprep.subr.bf16.mxu0 0
      %5075 = vmatpush1.bf16.msra.mxu0 0
      %5076 = vmatprep.subr.bf16.mxu0 0
      %5077 = vmatpush1.bf16.msra.mxu0 0
      %5078 = vmatprep.subr.bf16.mxu0 0
      %5079 = vmatpush1.bf16.msra.mxu0 0
      %5080 = vmatprep.subr.bf16.mxu0 0
      %5081 = vmatpush1.bf16.msra.mxu0 0
      %5082 = vmatprep.subr.bf16.mxu0 0
      %5083 = vmatpush1.bf16.msra.mxu0 0
      %5084 = vmatprep.subr.bf16.mxu0 0
      %5085 = vmatpush1.bf16.msra.mxu0 0
      %5086 = vmatprep.subr.bf16.mxu0 0
      %5087 = vmatpush1.bf16.msra.mxu0 0
      %5088 = vmatprep.mubr.bf16.mxu0 0
      %5089 = vmatmul.mubr.bf16.gmra.mrb[0].mxu0 %v4371
      %v5090 = vpop.f32.mrb[0].mxu0
      %v5091 = vadd.f32 0.0, %v5090
      %v5092 = vpop.f32.mrb[0].mxu0
      %v5093 = vadd.f32 0.0, %v5092
      %v5094 = vpop.f32.mrb[0].mxu0
      %v5095 = vadd.f32 0.0, %v5094
      %v5096 = vpop.f32.mrb[0].mxu0
      %v5097 = vadd.f32 0.0, %v5096
      %5098 = vmatprep.mubr.bf16.mxu0 0
      %5099 = vmatmul.mubr.bf16.gmra.mrb[0].mxu0 %v4374
      %v5100 = vpop.f32.mrb[0].mxu0
      %v5101 = vadd.f32 0.0, %v5100
      %v5102 = vpop.f32.mrb[0].mxu0
      %v5103 = vadd.f32 0.0, %v5102
      %v5104 = vpop.f32.mrb[0].mxu0
      %v5105 = vadd.f32 0.0, %v5104
      %v5106 = vpop.f32.mrb[0].mxu0
      %v5107 = vadd.f32 0.0, %v5106
      %5108 = vmatprep.mubr.bf16.mxu0 0
      %5109 = vmatmul.mubr.bf16.gmra.mrb[0].mxu0 %v4377
      %v5110 = vpop.f32.mrb[0].mxu0
      %v5111 = vadd.f32 0.0, %v5110
      %v5112 = vpop.f32.mrb[0].mxu0
      %v5113 = vadd.f32 0.0, %v5112
      %v5114 = vpop.f32.mrb[0].mxu0
      %v5115 = vadd.f32 0.0, %v5114
      %v5116 = vpop.f32.mrb[0].mxu0
      %v5117 = vadd.f32 0.0, %v5116
      %5118 = vmatprep.mubr.bf16.mxu0 0
      %5119 = vmatmul.mubr.bf16.gmra.mrb[0].mxu0 %v4380
      %v5120 = vpop.f32.mrb[0].mxu0
      %v5121 = vadd.f32 0.0, %v5120
      %v5122 = vpop.f32.mrb[0].mxu0
      %v5123 = vadd.f32 0.0, %v5122
      %v5124 = vpop.f32.mrb[0].mxu0
      %v5125 = vadd.f32 0.0, %v5124
      %v5126 = vpop.f32.mrb[0].mxu0
      %v5127 = vadd.f32 0.0, %v5126
      %5128 = vmatprep.mubr.bf16.mxu0 0
      %5129 = vmatmul.mubr.bf16.gmra.mrb[0].mxu0 %v4383
      %v5130 = vpop.f32.mrb[0].mxu0
      %v5131 = vadd.f32 0.0, %v5130
      %v5132 = vpop.f32.mrb[0].mxu0
      %v5133 = vadd.f32 0.0, %v5132
      %v5134 = vpop.f32.mrb[0].mxu0
      %v5135 = vadd.f32 0.0, %v5134
      %v5136 = vpop.f32.mrb[0].mxu0
      %v5137 = vadd.f32 0.0, %v5136
      %5138 = vmatprep.mubr.bf16.mxu0 0
      %5139 = vmatmul.mubr.bf16.gmra.mrb[0].mxu0 %v4386
      %v5140 = vpop.f32.mrb[0].mxu0
      %v5141 = vadd.f32 0.0, %v5140
      %v5142 = vpop.f32.mrb[0].mxu0
      %v5143 = vadd.f32 0.0, %v5142
      %v5144 = vpop.f32.mrb[0].mxu0
      %v5145 = vadd.f32 0.0, %v5144
      %v5146 = vpop.f32.mrb[0].mxu0
      %v5147 = vadd.f32 0.0, %v5146
      %5148 = vmatprep.mubr.bf16.mxu0 0
      %5149 = vmatmul.mubr.bf16.gmra.mrb[0].mxu0 %v4389
      %v5150 = vpop.f32.mrb[0].mxu0
      %v5151 = vadd.f32 0.0, %v5150
      %v5152 = vpop.f32.mrb[0].mxu0
      %v5153 = vadd.f32 0.0, %v5152
      %v5154 = vpop.f32.mrb[0].mxu0
      %v5155 = vadd.f32 0.0, %v5154
      %v5156 = vpop.f32.mrb[0].mxu0
      %v5157 = vadd.f32 0.0, %v5156
      %5158 = vmatprep.mubr.bf16.mxu0 0
      %5159 = vmatmul.mubr.bf16.gmra.mrb[0].mxu0 %v4392
      %v5160 = vpop.f32.mrb[0].mxu0
      %v5161 = vadd.f32 0.0, %v5160
      %v5162 = vpop.f32.mrb[0].mxu0
      %v5163 = vadd.f32 0.0, %v5162
      %v5164 = vpop.f32.mrb[0].mxu0
      %v5165 = vadd.f32 0.0, %v5164
      %v5166 = vpop.f32.mrb[0].mxu0
      %v5167 = vadd.f32 0.0, %v5166
      %5168 = vmatprep.mubr.bf16.mxu0 0
      %5169 = vmatmul.mubr.bf16.gmra.mrb[0].mxu0 %v4799
      %v5170 = vpop.f32.mrb[0].mxu0
      %v5171 = vadd.f32 0.0, %v5170
      %v5172 = vpop.f32.mrb[0].mxu0
      %v5173 = vadd.f32 0.0, %v5172
      %v5174 = vpop.f32.mrb[0].mxu0
      %v5175 = vadd.f32 0.0, %v5174
      %v5176 = vpop.f32.mrb[0].mxu0
      %v5177 = vadd.f32 0.0, %v5176
      %5178 = vmatprep.mubr.bf16.mxu0 0
      %5179 = vmatmul.mubr.bf16.gmra.mrb[0].mxu0 %v5048
      %v5180 = vpop.f32.mrb[0].mxu0
      %v5181 = vadd.f32 0.0, %v5180
      %v5182 = vpop.f32.mrb[0].mxu0
      %v5183 = vadd.f32 0.0, %v5182
      %v5184 = vpop.f32.mrb[0].mxu0
      %v5185 = vadd.f32 0.0, %v5184
      %v5186 = vpop.f32.mrb[0].mxu0
      %v5187 = vadd.f32 0.0, %v5186
      %5188 = vdwg.mxu0
      %v5189 = vadd.f32 %v4940, %v5091
      %v5190 = vadd.f32 %v4941, %v5093
      %v5191 = vadd.f32 %v4942, %v5095
      %v5192 = vadd.f32 %v4943, %v5097
      %v5193 = vadd.f32 %v4944, %v5101
      %v5194 = vadd.f32 %v4945, %v5103
      %v5195 = vadd.f32 %v4946, %v5105
      %v5196 = vadd.f32 %v4947, %v5107
      %v5197 = vadd.f32 %v4948, %v5111
      %v5198 = vadd.f32 %v4949, %v5113
      %v5199 = vadd.f32 %v4950, %v5115
      %v5200 = vadd.f32 %v4951, %v5117
      %v5201 = vadd.f32 %v4952, %v5121
      %v5202 = vadd.f32 %v4953, %v5123
      %v5203 = vadd.f32 %v4954, %v5125
      %v5204 = vadd.f32 %v4955, %v5127
      %v5205 = vadd.f32 %v4956, %v5131
      %v5206 = vadd.f32 %v4957, %v5133
      %v5207 = vadd.f32 %v4958, %v5135
      %v5208 = vadd.f32 %v4959, %v5137
      %v5209 = vadd.f32 %v4960, %v5141
      %v5210 = vadd.f32 %v4961, %v5143
      %v5211 = vadd.f32 %v4962, %v5145
      %v5212 = vadd.f32 %v4963, %v5147
      %v5213 = vadd.f32 %v4964, %v5151
      %v5214 = vadd.f32 %v4965, %v5153
      %v5215 = vadd.f32 %v4966, %v5155
      %v5216 = vadd.f32 %v4967, %v5157
      %v5217 = vadd.f32 %v4968, %v5161
      %v5218 = vadd.f32 %v4969, %v5163
      %v5219 = vadd.f32 %v4970, %v5165
      %v5220 = vadd.f32 %v4971, %v5167
      %v5221 = vadd.f32 %v4972, %v5171
      %v5222 = vadd.f32 %v4973, %v5173
      %v5223 = vadd.f32 %v4974, %v5175
      %v5224 = vadd.f32 %v4975, %v5177
      %v5225 = vadd.f32 %v4976, %v5181
      %v5226 = vadd.f32 %v4977, %v5183
      %v5227 = vadd.f32 %v4978, %v5185
      %v5228 = vadd.f32 %v4979, %v5187
      %s5229 = scalar_lea.vmem %s5, 352
      %v5230 = vld [vmem:[%s5229] sm:$0xff]
      %v5231 = vld [vmem:[%s5229 + $0x8] sm:$0xff]
      %v5232 = vld [vmem:[%s5229 + $0x10] sm:$0xff]
      %v5233 = vld [vmem:[%s5229 + $0x18] sm:$0xff]
      %v5234 = vld [vmem:[%s5229 + $0x20] sm:$0xff]
      %v5235 = vld [vmem:[%s5229 + $0x28] sm:$0xff]
      %v5236 = vld [vmem:[%s5229 + $0x30] sm:$0xff]
      %v5237 = vld [vmem:[%s5229 + $0x38] sm:$0xff]
      %v5238 = vld [vmem:[%s5229 + $0x40] sm:$0xff]
      %v5239 = vld [vmem:[%s5229 + $0x48] sm:$0xff]
      %v5240 = vld [vmem:[%s5229 + $0x50] sm:$0x33]
      %v5252 = vunpack.c.l.b16 %v5230
      %v5253 = vunpack.c.h.b16 %v5230
      %v5254 = vunpack.c.l.b16 %v5231
      %v5255 = vunpack.c.h.b16 %v5231
      %v5256 = vunpack.c.l.b16 %v5232
      %v5257 = vunpack.c.h.b16 %v5232
      %v5258 = vunpack.c.l.b16 %v5233
      %v5259 = vunpack.c.h.b16 %v5233
      %v5260 = vunpack.c.l.b16 %v5234
      %v5261 = vunpack.c.h.b16 %v5234
      %v5262 = vunpack.c.l.b16 %v5235
      %v5263 = vunpack.c.h.b16 %v5235
      %v5264 = vunpack.c.l.b16 %v5236
      %v5265 = vunpack.c.h.b16 %v5236
      %v5266 = vunpack.c.l.b16 %v5237
      %v5267 = vunpack.c.h.b16 %v5237
      %v5268 = vunpack.c.l.b16 %v5238
      %v5269 = vunpack.c.h.b16 %v5238
      %v5270 = vunpack.c.l.b16 %v5239
      %v5271 = vunpack.c.h.b16 %v5239
      %v5272 = vunpack.c.l.b16 %v5240
      %v5273 = vunpack.c.h.b16 %v5240
      %v5274 = vpack.c.b16 %v5254, %v5252
      %v5275 = vpack.c.b16 %v5255, %v5253
      %v5276 = vpack.c.b16 %v5258, %v5256
      %v5277 = vpack.c.b16 %v5259, %v5257
      %v5278 = vpack.c.b16 %v5262, %v5260
      %v5279 = vpack.c.b16 %v5263, %v5261
      %v5280 = vpack.c.b16 %v5266, %v5264
      %v5281 = vpack.c.b16 %v5267, %v5265
      %v5282 = vpack.c.b16 %v5270, %v5268
      %v5283 = vpack.c.b16 %v5271, %v5269
      %v5284 = vpack.c.b16 %v5272, %v5272
      %v5285 = vpack.c.b16 %v5273, %v5273
      %v5297 = vsel %vm4363, %v4284, 0
      %v5300 = vsel %vm4394, %v5284, 0
      %v5303 = vsel %vm4394, %v5285, 0
      %5305 = vmatprep.subr.bf16.mxu0 %v5275
      %5306 = vmatpush1.bf16.msra.mxu0 %v5274
      %5307 = vmatprep.subr.bf16.mxu0 %v5277
      %5308 = vmatpush1.bf16.msra.mxu0 %v5276
      %5309 = vmatprep.subr.bf16.mxu0 %v5279
      %5310 = vmatpush1.bf16.msra.mxu0 %v5278
      %5311 = vmatprep.subr.bf16.mxu0 %v5281
      %5312 = vmatpush1.bf16.msra.mxu0 %v5280
      %5313 = vmatprep.subr.bf16.mxu0 %v5283
      %5314 = vmatpush1.bf16.msra.mxu0 %v5282
      %5315 = vmatprep.subr.bf16.mxu0 %v5303
      %5316 = vmatpush1.bf16.msra.mxu0 %v5300
      %5317 = vmatprep.subr.bf16.mxu0 0
      %5318 = vmatpush1.bf16.msra.mxu0 0
      %5319 = vmatprep.subr.bf16.mxu0 0
      %5320 = vmatpush1.bf16.msra.mxu0 0
      %5321 = vmatprep.subr.bf16.mxu0 0
      %5322 = vmatpush1.bf16.msra.mxu0 0
      %5323 = vmatprep.subr.bf16.mxu0 0
      %5324 = vmatpush1.bf16.msra.mxu0 0
      %5325 = vmatprep.subr.bf16.mxu0 0
      %5326 = vmatpush1.bf16.msra.mxu0 0
      %5327 = vmatprep.subr.bf16.mxu0 0
      %5328 = vmatpush1.bf16.msra.mxu0 0
      %5329 = vmatprep.subr.bf16.mxu0 0
      %5330 = vmatpush1.bf16.msra.mxu0 0
      %5331 = vmatprep.subr.bf16.mxu0 0
      %5332 = vmatpush1.bf16.msra.mxu0 0
      %5333 = vmatprep.subr.bf16.mxu0 0
      %5334 = vmatpush1.bf16.msra.mxu0 0
      %5335 = vmatprep.subr.bf16.mxu0 0
      %5336 = vmatpush1.bf16.msra.mxu0 0
      %5337 = vmatprep.mubr.bf16.mxu0 0
      %5338 = vmatmul.mubr.bf16.gmra.mrb[0].mxu0 %v4374
      %v5339 = vpop.f32.mrb[0].mxu0
      %v5340 = vadd.f32 0.0, %v5339
      %v5341 = vpop.f32.mrb[0].mxu0
      %v5342 = vadd.f32 0.0, %v5341
      %v5343 = vpop.f32.mrb[0].mxu0
      %v5344 = vadd.f32 0.0, %v5343
      %v5345 = vpop.f32.mrb[0].mxu0
      %v5346 = vadd.f32 0.0, %v5345
      %5347 = vmatprep.mubr.bf16.mxu0 0
      %5348 = vmatmul.mubr.bf16.gmra.mrb[0].mxu0 %v4377
      %v5349 = vpop.f32.mrb[0].mxu0
      %v5350 = vadd.f32 0.0, %v5349
      %v5351 = vpop.f32.mrb[0].mxu0
      %v5352 = vadd.f32 0.0, %v5351
      %v5353 = vpop.f32.mrb[0].mxu0
      %v5354 = vadd.f32 0.0, %v5353
      %v5355 = vpop.f32.mrb[0].mxu0
      %v5356 = vadd.f32 0.0, %v5355
      %5357 = vmatprep.mubr.bf16.mxu0 0
      %5358 = vmatmul.mubr.bf16.gmra.mrb[0].mxu0 %v4380
      %v5359 = vpop.f32.mrb[0].mxu0
      %v5360 = vadd.f32 0.0, %v5359
      %v5361 = vpop.f32.mrb[0].mxu0
      %v5362 = vadd.f32 0.0, %v5361
      %v5363 = vpop.f32.mrb[0].mxu0
      %v5364 = vadd.f32 0.0, %v5363
      %v5365 = vpop.f32.mrb[0].mxu0
      %v5366 = vadd.f32 0.0, %v5365
      %5367 = vmatprep.mubr.bf16.mxu0 0
      %5368 = vmatmul.mubr.bf16.gmra.mrb[0].mxu0 %v4383
      %v5369 = vpop.f32.mrb[0].mxu0
      %v5370 = vadd.f32 0.0, %v5369
      %v5371 = vpop.f32.mrb[0].mxu0
      %v5372 = vadd.f32 0.0, %v5371
      %v5373 = vpop.f32.mrb[0].mxu0
      %v5374 = vadd.f32 0.0, %v5373
      %v5375 = vpop.f32.mrb[0].mxu0
      %v5376 = vadd.f32 0.0, %v5375
      %5377 = vmatprep.mubr.bf16.mxu0 0
      %5378 = vmatmul.mubr.bf16.gmra.mrb[0].mxu0 %v4386
      %v5379 = vpop.f32.mrb[0].mxu0
      %v5380 = vadd.f32 0.0, %v5379
      %v5381 = vpop.f32.mrb[0].mxu0
      %v5382 = vadd.f32 0.0, %v5381
      %v5383 = vpop.f32.mrb[0].mxu0
      %v5384 = vadd.f32 0.0, %v5383
      %v5385 = vpop.f32.mrb[0].mxu0
      %v5386 = vadd.f32 0.0, %v5385
      %5387 = vmatprep.mubr.bf16.mxu0 0
      %5388 = vmatmul.mubr.bf16.gmra.mrb[0].mxu0 %v4389
      %v5389 = vpop.f32.mrb[0].mxu0
      %v5390 = vadd.f32 0.0, %v5389
      %v5391 = vpop.f32.mrb[0].mxu0
      %v5392 = vadd.f32 0.0, %v5391
      %v5393 = vpop.f32.mrb[0].mxu0
      %v5394 = vadd.f32 0.0, %v5393
      %v5395 = vpop.f32.mrb[0].mxu0
      %v5396 = vadd.f32 0.0, %v5395
      %5397 = vmatprep.mubr.bf16.mxu0 0
      %5398 = vmatmul.mubr.bf16.gmra.mrb[0].mxu0 %v4392
      %v5399 = vpop.f32.mrb[0].mxu0
      %v5400 = vadd.f32 0.0, %v5399
      %v5401 = vpop.f32.mrb[0].mxu0
      %v5402 = vadd.f32 0.0, %v5401
      %v5403 = vpop.f32.mrb[0].mxu0
      %v5404 = vadd.f32 0.0, %v5403
      %v5405 = vpop.f32.mrb[0].mxu0
      %v5406 = vadd.f32 0.0, %v5405
      %5407 = vmatprep.mubr.bf16.mxu0 0
      %5408 = vmatmul.mubr.bf16.gmra.mrb[0].mxu0 %v4799
      %v5409 = vpop.f32.mrb[0].mxu0
      %v5410 = vadd.f32 0.0, %v5409
      %v5411 = vpop.f32.mrb[0].mxu0
      %v5412 = vadd.f32 0.0, %v5411
      %v5413 = vpop.f32.mrb[0].mxu0
      %v5414 = vadd.f32 0.0, %v5413
      %v5415 = vpop.f32.mrb[0].mxu0
      %v5416 = vadd.f32 0.0, %v5415
      %5417 = vmatprep.mubr.bf16.mxu0 0
      %5418 = vmatmul.mubr.bf16.gmra.mrb[0].mxu0 %v5048
      %v5419 = vpop.f32.mrb[0].mxu0
      %v5420 = vadd.f32 0.0, %v5419
      %v5421 = vpop.f32.mrb[0].mxu0
      %v5422 = vadd.f32 0.0, %v5421
      %v5423 = vpop.f32.mrb[0].mxu0
      %v5424 = vadd.f32 0.0, %v5423
      %v5425 = vpop.f32.mrb[0].mxu0
      %v5426 = vadd.f32 0.0, %v5425
      %5427 = vmatprep.mubr.bf16.mxu0 0
      %5428 = vmatmul.mubr.bf16.gmra.mrb[0].mxu0 %v5297
      %v5429 = vpop.f32.mrb[0].mxu0
      %v5430 = vadd.f32 0.0, %v5429
      %v5431 = vpop.f32.mrb[0].mxu0
      %v5432 = vadd.f32 0.0, %v5431
      %v5433 = vpop.f32.mrb[0].mxu0
      %v5434 = vadd.f32 0.0, %v5433
      %v5435 = vpop.f32.mrb[0].mxu0
      %v5436 = vadd.f32 0.0, %v5435
      %5437 = vdwg.mxu0
      %v5438 = vadd.f32 %v5189, %v5340
      %v5439 = vadd.f32 %v5190, %v5342
      %v5440 = vadd.f32 %v5191, %v5344
      %v5441 = vadd.f32 %v5192, %v5346
      %v5442 = vadd.f32 %v5193, %v5350
      %v5443 = vadd.f32 %v5194, %v5352
      %v5444 = vadd.f32 %v5195, %v5354
      %v5445 = vadd.f32 %v5196, %v5356
      %v5446 = vadd.f32 %v5197, %v5360
      %v5447 = vadd.f32 %v5198, %v5362
      %v5448 = vadd.f32 %v5199, %v5364
      %v5449 = vadd.f32 %v5200, %v5366
      %v5450 = vadd.f32 %v5201, %v5370
      %v5451 = vadd.f32 %v5202, %v5372
      %v5452 = vadd.f32 %v5203, %v5374
      %v5453 = vadd.f32 %v5204, %v5376
      %v5454 = vadd.f32 %v5205, %v5380
      %v5455 = vadd.f32 %v5206, %v5382
      %v5456 = vadd.f32 %v5207, %v5384
      %v5457 = vadd.f32 %v5208, %v5386
      %v5458 = vadd.f32 %v5209, %v5390
      %v5459 = vadd.f32 %v5210, %v5392
      %v5460 = vadd.f32 %v5211, %v5394
      %v5461 = vadd.f32 %v5212, %v5396
      %v5462 = vadd.f32 %v5213, %v5400
      %v5463 = vadd.f32 %v5214, %v5402
      %v5464 = vadd.f32 %v5215, %v5404
      %v5465 = vadd.f32 %v5216, %v5406
      %v5466 = vadd.f32 %v5217, %v5410
      %v5467 = vadd.f32 %v5218, %v5412
      %v5468 = vadd.f32 %v5219, %v5414
      %v5469 = vadd.f32 %v5220, %v5416
      %v5470 = vadd.f32 %v5221, %v5420
      %v5471 = vadd.f32 %v5222, %v5422
      %v5472 = vadd.f32 %v5223, %v5424
      %v5473 = vadd.f32 %v5224, %v5426
      %v5474 = vadd.f32 %v5225, %v5430
      %v5475 = vadd.f32 %v5226, %v5432
      %v5476 = vadd.f32 %v5227, %v5434
      %v5477 = vadd.f32 %v5228, %v5436
      %v5478 = vld [vmem:[%s6] sm:$0x3]
      %v5480 = vlaneseq
      %v5481 = vshrl.u32 %v5480, 7
      %v5482 = vsub.s32 0, %v5481
      %v5483 = vrot.slane %v5478, %v5482
      %v5484 = vlaneseq
      %v5485 = vshrl.u32 %v5484, 7
      %v5486 = vsub.s32 1, %v5485
      %v5487 = vrot.slane %v5478, %v5486
      %v5490 = vadd.f32 %v5438, %v5483
      %v5491 = vadd.f32 %v5439, %v5487
      %v5492 = vadd.f32 %v5440, %v5483
      %v5493 = vadd.f32 %v5441, %v5487
      %v5494 = vadd.f32 %v5442, %v5483
      %v5495 = vadd.f32 %v5443, %v5487
      %v5496 = vadd.f32 %v5444, %v5483
      %v5497 = vadd.f32 %v5445, %v5487
      %v5498 = vadd.f32 %v5446, %v5483
      %v5499 = vadd.f32 %v5447, %v5487
      %v5500 = vadd.f32 %v5448, %v5483
      %v5501 = vadd.f32 %v5449, %v5487
      %v5502 = vadd.f32 %v5450, %v5483
      %v5503 = vadd.f32 %v5451, %v5487
      %v5504 = vadd.f32 %v5452, %v5483
      %v5505 = vadd.f32 %v5453, %v5487
      %v5506 = vadd.f32 %v5454, %v5483
      %v5507 = vadd.f32 %v5455, %v5487
      %v5508 = vadd.f32 %v5456, %v5483
      %v5509 = vadd.f32 %v5457, %v5487
      %v5510 = vadd.f32 %v5458, %v5483
      %v5511 = vadd.f32 %v5459, %v5487
      %v5512 = vadd.f32 %v5460, %v5483
      %v5513 = vadd.f32 %v5461, %v5487
      %v5514 = vadd.f32 %v5462, %v5483
      %v5515 = vadd.f32 %v5463, %v5487
      %v5516 = vadd.f32 %v5464, %v5483
      %v5517 = vadd.f32 %v5465, %v5487
      %v5518 = vadd.f32 %v5466, %v5483
      %v5519 = vadd.f32 %v5467, %v5487
      %v5520 = vadd.f32 %v5468, %v5483
      %v5521 = vadd.f32 %v5469, %v5487
      %v5522 = vadd.f32 %v5470, %v5483
      %v5523 = vadd.f32 %v5471, %v5487
      %v5524 = vadd.f32 %v5472, %v5483
      %v5525 = vadd.f32 %v5473, %v5487
      %v5526 = vadd.f32 %v5474, %v5483
      %v5527 = vadd.f32 %v5475, %v5487
      %v5528 = vadd.f32 %v5476, %v5483
      %v5529 = vadd.f32 %v5477, %v5487
      %v5530 = vmax.f32 %v5490, 0.0
      %v5531 = vmax.f32 %v5491, 0.0
      %v5532 = vmax.f32 %v5492, 0.0
      %v5533 = vmax.f32 %v5493, 0.0
      %v5534 = vmax.f32 %v5494, 0.0
      %v5535 = vmax.f32 %v5495, 0.0
      %v5536 = vmax.f32 %v5496, 0.0
      %v5537 = vmax.f32 %v5497, 0.0
      %v5538 = vmax.f32 %v5498, 0.0
      %v5539 = vmax.f32 %v5499, 0.0
      %v5540 = vmax.f32 %v5500, 0.0
      %v5541 = vmax.f32 %v5501, 0.0
      %v5542 = vmax.f32 %v5502, 0.0
      %v5543 = vmax.f32 %v5503, 0.0
      %v5544 = vmax.f32 %v5504, 0.0
      %v5545 = vmax.f32 %v5505, 0.0
      %v5546 = vmax.f32 %v5506, 0.0
      %v5547 = vmax.f32 %v5507, 0.0
      %v5548 = vmax.f32 %v5508, 0.0
      %v5549 = vmax.f32 %v5509, 0.0
      %v5550 = vmax.f32 %v5510, 0.0
      %v5551 = vmax.f32 %v5511, 0.0
      %v5552 = vmax.f32 %v5512, 0.0
      %v5553 = vmax.f32 %v5513, 0.0
      %v5554 = vmax.f32 %v5514, 0.0
      %v5555 = vmax.f32 %v5515, 0.0
      %v5556 = vmax.f32 %v5516, 0.0
      %v5557 = vmax.f32 %v5517, 0.0
      %v5558 = vmax.f32 %v5518, 0.0
      %v5559 = vmax.f32 %v5519, 0.0
      %v5560 = vmax.f32 %v5520, 0.0
      %v5561 = vmax.f32 %v5521, 0.0
      %v5562 = vmax.f32 %v5522, 0.0
      %v5563 = vmax.f32 %v5523, 0.0
      %v5564 = vmax.f32 %v5524, 0.0
      %v5565 = vmax.f32 %v5525, 0.0
      %v5566 = vmax.f32 %v5526, 0.0
      %v5567 = vmax.f32 %v5527, 0.0
      %v5568 = vmax.f32 %v5528, 0.0
      %v5569 = vmax.f32 %v5529, 0.0
      %v5570 = vld [vmem:[%s7] sm:$0xff]
      %v5571 = vld [vmem:[%s7 + $0x8] sm:$0xff]
      %v5572 = vld [vmem:[%s7 + $0x10] sm:$0xff]
      %v5573 = vld [vmem:[%s7 + $0x18] sm:$0xff]
      %v5574 = vld [vmem:[%s7 + $0x20] sm:$0xff]
      %v5575 = vld [vmem:[%s7 + $0x28] sm:$0xff]
      %v5576 = vld [vmem:[%s7 + $0x30] sm:$0xff]
      %v5577 = vld [vmem:[%s7 + $0x38] sm:$0xff]
      %v5578 = vld [vmem:[%s7 + $0x40] sm:$0xff]
      %v5579 = vld [vmem:[%s7 + $0x48] sm:$0xff]
      %v5580 = vpack.c.bf16 %v5532, %v5530
      %v5581 = vpack.c.bf16 %v5533, %v5531
      %v5582 = vpack.c.bf16 %v5536, %v5534
      %v5583 = vpack.c.bf16 %v5537, %v5535
      %v5584 = vpack.c.bf16 %v5540, %v5538
      %v5585 = vpack.c.bf16 %v5541, %v5539
      %v5586 = vpack.c.bf16 %v5544, %v5542
      %v5587 = vpack.c.bf16 %v5545, %v5543
      %v5588 = vpack.c.bf16 %v5548, %v5546
      %v5589 = vpack.c.bf16 %v5549, %v5547
      %v5590 = vpack.c.bf16 %v5552, %v5550
      %v5591 = vpack.c.bf16 %v5553, %v5551
      %v5592 = vpack.c.bf16 %v5556, %v5554
      %v5593 = vpack.c.bf16 %v5557, %v5555
      %v5594 = vpack.c.bf16 %v5560, %v5558
      %v5595 = vpack.c.bf16 %v5561, %v5559
      %v5596 = vpack.c.bf16 %v5564, %v5562
      %v5597 = vpack.c.bf16 %v5565, %v5563
      %v5598 = vpack.c.bf16 %v5568, %v5566
      %v5599 = vpack.c.bf16 %v5569, %v5567
      %v5600 = vld [vmem:[%s8] sm:$0xf]
      %v5601 = vld [vmem:[%s8 + $0x4] sm:$0xf]
      %v5602 = vld [vmem:[%s8 + $0x8] sm:$0xf]
      %v5603 = vld [vmem:[%s8 + $0xc] sm:$0xf]
      %v5604 = vld [vmem:[%s8 + $0x10] sm:$0xf]
      %v5605 = vld [vmem:[%s8 + $0x14] sm:$0xf]
      %v5606 = vld [vmem:[%s8 + $0x18] sm:$0xf]
      %v5607 = vld [vmem:[%s8 + $0x1c] sm:$0xf]
      %v5608 = vld [vmem:[%s8 + $0x20] sm:$0xf]
      %v5609 = vld [vmem:[%s8 + $0x24] sm:$0xf]
      %v5610 = vld [vmem:[%s8 + $0x28] sm:$0xf]
      %v5611 = vld [vmem:[%s8 + $0x2c] sm:$0xf]
      %v5612 = vld [vmem:[%s8 + $0x30] sm:$0xf]
      %v5613 = vld [vmem:[%s8 + $0x34] sm:$0xf]
      %v5614 = vld [vmem:[%s8 + $0x38] sm:$0xf]
      %v5615 = vld [vmem:[%s8 + $0x3c] sm:$0xf]
      %v5616 = vld [vmem:[%s8 + $0x40] sm:$0xf]
      %v5617 = vld [vmem:[%s8 + $0x44] sm:$0xf]
      %v5618 = vld [vmem:[%s8 + $0x48] sm:$0xf]
      %v5619 = vld [vmem:[%s8 + $0x4c] sm:$0xf]
      %v5640 = vunpack.c.l.b16 %v5600
      %v5641 = vunpack.c.l.b16 %v5601
      %v5642 = vunpack.c.l.b16 %v5602
      %v5643 = vunpack.c.l.b16 %v5603
      %v5644 = vunpack.c.l.b16 %v5604
      %v5645 = vunpack.c.l.b16 %v5605
      %v5646 = vunpack.c.l.b16 %v5606
      %v5647 = vunpack.c.l.b16 %v5607
      %v5648 = vunpack.c.l.b16 %v5608
      %v5649 = vunpack.c.l.b16 %v5609
      %v5650 = vunpack.c.l.b16 %v5610
      %v5651 = vunpack.c.l.b16 %v5611
      %v5652 = vunpack.c.l.b16 %v5612
      %v5653 = vunpack.c.l.b16 %v5613
      %v5654 = vunpack.c.l.b16 %v5614
      %v5655 = vunpack.c.l.b16 %v5615
      %v5656 = vunpack.c.l.b16 %v5616
      %v5657 = vunpack.c.l.b16 %v5617
      %v5658 = vunpack.c.l.b16 %v5618
      %v5659 = vunpack.c.l.b16 %v5619
      %v5660 = vpack.c.b16 %v5641, %v5640
      %v5661 = vpack.c.b16 %v5643, %v5642
      %v5662 = vpack.c.b16 %v5645, %v5644
      %v5663 = vpack.c.b16 %v5647, %v5646
      %v5664 = vpack.c.b16 %v5649, %v5648
      %v5665 = vpack.c.b16 %v5651, %v5650
      %v5666 = vpack.c.b16 %v5653, %v5652
      %v5667 = vpack.c.b16 %v5655, %v5654
      %v5668 = vpack.c.b16 %v5657, %v5656
      %v5669 = vpack.c.b16 %v5659, %v5658
      %vm5680 = vcmask 261120
      %v5682 = vsel %vm5680, %v5581, 0
      %v5685 = vsel %vm5680, %v5583, 0
      %v5688 = vsel %vm5680, %v5585, 0
      %v5691 = vsel %vm5680, %v5587, 0
      %v5694 = vsel %vm5680, %v5589, 0
      %v5697 = vsel %vm5680, %v5591, 0
      %v5700 = vsel %vm5680, %v5593, 0
      %v5703 = vsel %vm5680, %v5595, 0
      %v5706 = vsel %vm5680, %v5597, 0
      %v5709 = vsel %vm5680, %v5599, 0
      %5711 = vmatprep.subr.bf16.mxu0 0
      %5712 = vmatpush1.bf16.msra.mxu0 %v5660
      %5713 = vmatprep.subr.bf16.mxu0 0
      %5714 = vmatpush1.bf16.msra.mxu0 %v5661
      %5715 = vmatprep.subr.bf16.mxu0 0
      %5716 = vmatpush1.bf16.msra.mxu0 %v5662
      %5717 = vmatprep.subr.bf16.mxu0 0
      %5718 = vmatpush1.bf16.msra.mxu0 %v5663
      %5719 = vmatprep.subr.bf16.mxu0 0
      %5720 = vmatpush1.bf16.msra.mxu0 %v5664
      %5721 = vmatprep.subr.bf16.mxu0 0
      %5722 = vmatpush1.bf16.msra.mxu0 %v5665
      %5723 = vmatprep.subr.bf16.mxu0 0
      %5724 = vmatpush1.bf16.msra.mxu0 %v5666
      %5725 = vmatprep.subr.bf16.mxu0 0
      %5726 = vmatpush1.bf16.msra.mxu0 %v5667
      %5727 = vmatprep.subr.bf16.mxu0 0
      %5728 = vmatpush1.bf16.msra.mxu0 %v5668
      %5729 = vmatprep.subr.bf16.mxu0 0
      %5730 = vmatpush1.bf16.msra.mxu0 %v5669
      %5731 = vmatprep.subr.bf16.mxu0 0
      %5732 = vmatpush1.bf16.msra.mxu0 0
      %5733 = vmatprep.subr.bf16.mxu0 0
      %5734 = vmatpush1.bf16.msra.mxu0 0
      %5735 = vmatprep.subr.bf16.mxu0 0
      %5736 = vmatpush1.bf16.msra.mxu0 0
      %5737 = vmatprep.subr.bf16.mxu0 0
      %5738 = vmatpush1.bf16.msra.mxu0 0
      %5739 = vmatprep.subr.bf16.mxu0 0
      %5740 = vmatpush1.bf16.msra.mxu0 0
      %5741 = vmatprep.subr.bf16.mxu0 0
      %5742 = vmatpush1.bf16.msra.mxu0 0
      %5743 = vmatprep.mubr.bf16.mxu0 %v5682
      %5744 = vmatmul.mubr.bf16.gmra.mrb[0].mxu0 %v5580
      %v5745 = vpop.f32.mrb[0].mxu0
      %v5746 = vadd.f32 0.0, %v5745
      %v5747 = vpop.f32.mrb[0].mxu0
      %v5748 = vpop.f32.mrb[0].mxu0
      %v5749 = vadd.f32 0.0, %v5748
      %v5750 = vpop.f32.mrb[0].mxu0
      %5751 = vmatprep.mubr.bf16.mxu0 %v5685
      %5752 = vmatmul.mubr.bf16.gmra.mrb[0].mxu0 %v5582
      %v5753 = vpop.f32.mrb[0].mxu0
      %v5754 = vadd.f32 0.0, %v5753
      %v5755 = vpop.f32.mrb[0].mxu0
      %v5756 = vpop.f32.mrb[0].mxu0
      %v5757 = vadd.f32 0.0, %v5756
      %v5758 = vpop.f32.mrb[0].mxu0
      %5759 = vmatprep.mubr.bf16.mxu0 %v5688
      %5760 = vmatmul.mubr.bf16.gmra.mrb[0].mxu0 %v5584
      %v5761 = vpop.f32.mrb[0].mxu0
      %v5762 = vadd.f32 0.0, %v5761
      %v5763 = vpop.f32.mrb[0].mxu0
      %v5764 = vpop.f32.mrb[0].mxu0
      %v5765 = vadd.f32 0.0, %v5764
      %v5766 = vpop.f32.mrb[0].mxu0
      %5767 = vmatprep.mubr.bf16.mxu0 %v5691
      %5768 = vmatmul.mubr.bf16.gmra.mrb[0].mxu0 %v5586
      %v5769 = vpop.f32.mrb[0].mxu0
      %v5770 = vadd.f32 0.0, %v5769
      %v5771 = vpop.f32.mrb[0].mxu0
      %v5772 = vpop.f32.mrb[0].mxu0
      %v5773 = vadd.f32 0.0, %v5772
      %v5774 = vpop.f32.mrb[0].mxu0
      %5775 = vmatprep.mubr.bf16.mxu0 %v5694
      %5776 = vmatmul.mubr.bf16.gmra.mrb[0].mxu0 %v5588
      %v5777 = vpop.f32.mrb[0].mxu0
      %v5778 = vadd.f32 0.0, %v5777
      %v5779 = vpop.f32.mrb[0].mxu0
      %v5780 = vpop.f32.mrb[0].mxu0
      %v5781 = vadd.f32 0.0, %v5780
      %v5782 = vpop.f32.mrb[0].mxu0
      %5783 = vmatprep.mubr.bf16.mxu0 %v5697
      %5784 = vmatmul.mubr.bf16.gmra.mrb[0].mxu0 %v5590
      %v5785 = vpop.f32.mrb[0].mxu0
      %v5786 = vadd.f32 0.0, %v5785
      %v5787 = vpop.f32.mrb[0].mxu0
      %v5788 = vpop.f32.mrb[0].mxu0
      %v5789 = vadd.f32 0.0, %v5788
      %v5790 = vpop.f32.mrb[0].mxu0
      %5791 = vmatprep.mubr.bf16.mxu0 %v5700
      %5792 = vmatmul.mubr.bf16.gmra.mrb[0].mxu0 %v5592
      %v5793 = vpop.f32.mrb[0].mxu0
      %v5794 = vadd.f32 0.0, %v5793
      %v5795 = vpop.f32.mrb[0].mxu0
      %v5796 = vpop.f32.mrb[0].mxu0
      %v5797 = vadd.f32 0.0, %v5796
      %v5798 = vpop.f32.mrb[0].mxu0
      %5799 = vmatprep.mubr.bf16.mxu0 %v5703
      %5800 = vmatmul.mubr.bf16.gmra.mrb[0].mxu0 %v5594
      %v5801 = vpop.f32.mrb[0].mxu0
      %v5802 = vadd.f32 0.0, %v5801
      %v5803 = vpop.f32.mrb[0].mxu0
      %v5804 = vpop.f32.mrb[0].mxu0
      %v5805 = vadd.f32 0.0, %v5804
      %v5806 = vpop.f32.mrb[0].mxu0
      %5807 = vmatprep.mubr.bf16.mxu0 %v5706
      %5808 = vmatmul.mubr.bf16.gmra.mrb[0].mxu0 %v5596
      %v5809 = vpop.f32.mrb[0].mxu0
      %v5810 = vadd.f32 0.0, %v5809
      %v5811 = vpop.f32.mrb[0].mxu0
      %v5812 = vpop.f32.mrb[0].mxu0
      %v5813 = vadd.f32 0.0, %v5812
      %v5814 = vpop.f32.mrb[0].mxu0
      %5815 = vmatprep.mubr.bf16.mxu0 %v5709
      %5816 = vmatmul.mubr.bf16.gmra.mrb[0].mxu0 %v5598
      %v5817 = vpop.f32.mrb[0].mxu0
      %v5818 = vadd.f32 0.0, %v5817
      %v5819 = vpop.f32.mrb[0].mxu0
      %v5820 = vpop.f32.mrb[0].mxu0
      %v5821 = vadd.f32 0.0, %v5820
      %v5822 = vpop.f32.mrb[0].mxu0
      %5823 = vdwg.mxu0
      %v5824 = vpack.c.bf16 %v5749, %v5746
      %v5825 = vpack.c.bf16 %v5757, %v5754
      %v5826 = vpack.c.bf16 %v5765, %v5762
      %v5827 = vpack.c.bf16 %v5773, %v5770
      %v5828 = vpack.c.bf16 %v5781, %v5778
      %v5829 = vpack.c.bf16 %v5789, %v5786
      %v5830 = vpack.c.bf16 %v5797, %v5794
      %v5831 = vpack.c.bf16 %v5805, %v5802
      %v5832 = vpack.c.bf16 %v5813, %v5810
      %v5833 = vpack.c.bf16 %v5821, %v5818
      %v5844 = vunpack.c.l.b16 %v5570
      %v5845 = vunpack.c.h.b16 %v5570
      %v5846 = vunpack.c.l.b16 %v5571
      %v5847 = vunpack.c.h.b16 %v5571
      %v5848 = vunpack.c.l.b16 %v5572
      %v5849 = vunpack.c.h.b16 %v5572
      %v5850 = vunpack.c.l.b16 %v5573
      %v5851 = vunpack.c.h.b16 %v5573
      %v5852 = vunpack.c.l.b16 %v5574
      %v5853 = vunpack.c.h.b16 %v5574
      %v5854 = vunpack.c.l.b16 %v5575
      %v5855 = vunpack.c.h.b16 %v5575
      %v5856 = vunpack.c.l.b16 %v5576
      %v5857 = vunpack.c.h.b16 %v5576
      %v5858 = vunpack.c.l.b16 %v5577
      %v5859 = vunpack.c.h.b16 %v5577
      %v5860 = vunpack.c.l.b16 %v5578
      %v5861 = vunpack.c.h.b16 %v5578
      %v5862 = vunpack.c.l.b16 %v5579
      %v5863 = vunpack.c.h.b16 %v5579
      %v5864 = vpack.c.b16 %v5846, %v5844
      %v5865 = vpack.c.b16 %v5847, %v5845
      %v5866 = vpack.c.b16 %v5850, %v5848
      %v5867 = vpack.c.b16 %v5851, %v5849
      %v5868 = vpack.c.b16 %v5854, %v5852
      %v5869 = vpack.c.b16 %v5855, %v5853
      %v5870 = vpack.c.b16 %v5858, %v5856
      %v5871 = vpack.c.b16 %v5859, %v5857
      %v5872 = vpack.c.b16 %v5862, %v5860
      %v5873 = vpack.c.b16 %v5863, %v5861
      %v5880 = vsel %vm5680, %v5865, 0
      %v5883 = vsel %vm5680, %v5867, 0
      %v5886 = vsel %vm5680, %v5869, 0
      %v5889 = vsel %vm5680, %v5871, 0
      %v5892 = vsel %vm5680, %v5873, 0
      %5894 = vmatprep.subr.bf16.mxu0 0
      %5895 = vmatpush1.bf16.msra.mxu0 %v5824
      %5896 = vmatprep.subr.bf16.mxu0 0
      %5897 = vmatpush1.bf16.msra.mxu0 %v5825
      %5898 = vmatprep.subr.bf16.mxu0 0
      %5899 = vmatpush1.bf16.msra.mxu0 %v5826
      %5900 = vmatprep.subr.bf16.mxu0 0
      %5901 = vmatpush1.bf16.msra.mxu0 %v5827
      %5902 = vmatprep.subr.bf16.mxu0 0
      %5903 = vmatpush1.bf16.msra.mxu0 %v5828
      %5904 = vmatprep.subr.bf16.mxu0 0
      %5905 = vmatpush1.bf16.msra.mxu0 %v5829
      %5906 = vmatprep.subr.bf16.mxu0 0
      %5907 = vmatpush1.bf16.msra.mxu0 %v5830
      %5908 = vmatprep.subr.bf16.mxu0 0
      %5909 = vmatpush1.bf16.msra.mxu0 %v5831
      %5910 = vmatprep.subr.bf16.mxu0 0
      %5911 = vmatpush1.bf16.msra.mxu0 %v5832
      %5912 = vmatprep.subr.bf16.mxu0 0
      %5913 = vmatpush1.bf16.msra.mxu0 %v5833
      %5914 = vmatprep.subr.bf16.mxu0 0
      %5915 = vmatpush1.bf16.msra.mxu0 0
      %5916 = vmatprep.subr.bf16.mxu0 0
      %5917 = vmatpush1.bf16.msra.mxu0 0
      %5918 = vmatprep.subr.bf16.mxu0 0
      %5919 = vmatpush1.bf16.msra.mxu0 0
      %5920 = vmatprep.subr.bf16.mxu0 0
      %5921 = vmatpush1.bf16.msra.mxu0 0
      %5922 = vmatprep.subr.bf16.mxu0 0
      %5923 = vmatpush1.bf16.msra.mxu0 0
      %5924 = vmatprep.subr.bf16.mxu0 0
      %5925 = vmatpush1.bf16.msra.mxu0 0
      %5926 = vmatprep.mubr.bf16.mxu0 %v5880
      %5927 = vmatmul.mubr.bf16.gmra.mrb[0].mxu0 %v5864
      %v5928 = vpop.f32.mrb[0].mxu0
      %v5929 = vadd.f32 0.0, %v5928
      %v5930 = vpop.f32.mrb[0].mxu0
      %v5931 = vpop.f32.mrb[0].mxu0
      %v5932 = vadd.f32 0.0, %v5931
      %v5933 = vpop.f32.mrb[0].mxu0
      %5934 = vmatprep.mubr.bf16.mxu0 %v5883
      %5935 = vmatmul.mubr.bf16.gmra.mrb[0].mxu0 %v5866
      %v5936 = vpop.f32.mrb[0].mxu0
      %v5937 = vadd.f32 0.0, %v5936
      %v5938 = vpop.f32.mrb[0].mxu0
      %v5939 = vpop.f32.mrb[0].mxu0
      %v5940 = vadd.f32 0.0, %v5939
      %v5941 = vpop.f32.mrb[0].mxu0
      %5942 = vmatprep.mubr.bf16.mxu0 %v5886
      %5943 = vmatmul.mubr.bf16.gmra.mrb[0].mxu0 %v5868
      %v5944 = vpop.f32.mrb[0].mxu0
      %v5945 = vadd.f32 0.0, %v5944
      %v5946 = vpop.f32.mrb[0].mxu0
      %v5947 = vpop.f32.mrb[0].mxu0
      %v5948 = vadd.f32 0.0, %v5947
      %v5949 = vpop.f32.mrb[0].mxu0
      %5950 = vmatprep.mubr.bf16.mxu0 %v5889
      %5951 = vmatmul.mubr.bf16.gmra.mrb[0].mxu0 %v5870
      %v5952 = vpop.f32.mrb[0].mxu0
      %v5953 = vadd.f32 0.0, %v5952
      %v5954 = vpop.f32.mrb[0].mxu0
      %v5955 = vpop.f32.mrb[0].mxu0
      %v5956 = vadd.f32 0.0, %v5955
      %v5957 = vpop.f32.mrb[0].mxu0
      %5958 = vmatprep.mubr.bf16.mxu0 %v5892
      %5959 = vmatmul.mubr.bf16.gmra.mrb[0].mxu0 %v5872
      %v5960 = vpop.f32.mrb[0].mxu0
      %v5961 = vadd.f32 0.0, %v5960
      %v5962 = vpop.f32.mrb[0].mxu0
      %v5963 = vpop.f32.mrb[0].mxu0
      %v5964 = vadd.f32 0.0, %v5963
      %v5965 = vpop.f32.mrb[0].mxu0
      %5966 = vdwg.mxu0
      %v5967 = vpack.c.bf16 %v5932, %v5929
      %v5968 = vpack.c.bf16 %v5940, %v5937
      %v5969 = vpack.c.bf16 %v5948, %v5945
      %v5970 = vpack.c.bf16 %v5956, %v5953
      %v5971 = vpack.c.bf16 %v5964, %v5961
      %v5972 = vld [vmem:[%s9] sm:$0xf]
      %v5973 = vld [vmem:[%s9 + $0x4] sm:$0xf]
      %v5974 = vld [vmem:[%s9 + $0x8] sm:$0xf]
      %v5975 = vld [vmem:[%s9 + $0xc] sm:$0xf]
      %v5976 = vld [vmem:[%s9 + $0x10] sm:$0xf]
      %v5977 = vld [vmem:[%s9 + $0x14] sm:$0xf]
      %v5978 = vld [vmem:[%s9 + $0x18] sm:$0xf]
      %v5979 = vld [vmem:[%s9 + $0x1c] sm:$0xf]
      %v5980 = vld [vmem:[%s9 + $0x20] sm:$0xf]
      %v5981 = vld [vmem:[%s9 + $0x24] sm:$0xf]
      %s5982 = scalar_lea.vmem %s9, 40
      %v5983 = vld [vmem:[%s5982] sm:$0xf]
      %v5984 = vld [vmem:[%s5982 + $0x4] sm:$0xf]
      %v5985 = vld [vmem:[%s5982 + $0x8] sm:$0xf]
      %v5986 = vld [vmem:[%s5982 + $0xc] sm:$0xf]
      %v5987 = vld [vmem:[%s5982 + $0x10] sm:$0xf]
      %v5988 = vld [vmem:[%s5982 + $0x14] sm:$0xf]
      %v5989 = vld [vmem:[%s5982 + $0x18] sm:$0xf]
      %v5990 = vld [vmem:[%s5982 + $0x1c] sm:$0xf]
      %v5991 = vld [vmem:[%s5982 + $0x20] sm:$0xf]
      %v5992 = vld [vmem:[%s5982 + $0x24] sm:$0xf]
      %v6003 = vunpack.c.l.b16 %v5983
      %v6004 = vunpack.c.l.b16 %v5984
      %v6005 = vunpack.c.l.b16 %v5985
      %v6006 = vunpack.c.l.b16 %v5986
      %v6007 = vunpack.c.l.b16 %v5987
      %v6008 = vunpack.c.l.b16 %v5988
      %v6009 = vunpack.c.l.b16 %v5989
      %v6010 = vunpack.c.l.b16 %v5990
      %v6011 = vunpack.c.l.b16 %v5991
      %v6012 = vunpack.c.l.b16 %v5992
      %v6013 = vpack.c.b16 %v6004, %v6003
      %v6014 = vpack.c.b16 %v6006, %v6005
      %v6015 = vpack.c.b16 %v6008, %v6007
      %v6016 = vpack.c.b16 %v6010, %v6009
      %v6017 = vpack.c.b16 %v6012, %v6011
      %vm6023 = vcmask 654336
      %v6025 = vsel %vm6023, %v5968, 0
      %6027 = vmatprep.subr.bf16.mxu0 0
      %6028 = vmatpush1.bf16.msra.mxu0 %v6013
      %6029 = vmatprep.subr.bf16.mxu0 0
      %6030 = vmatpush1.bf16.msra.mxu0 %v6014
      %6031 = vmatprep.subr.bf16.mxu0 0
      %6032 = vmatpush1.bf16.msra.mxu0 %v6015
      %6033 = vmatprep.subr.bf16.mxu0 0
      %6034 = vmatpush1.bf16.msra.mxu0 %v6016
      %6035 = vmatprep.subr.bf16.mxu0 0
      %6036 = vmatpush1.bf16.msra.mxu0 %v6017
      %6037 = vmatprep.subr.bf16.mxu0 0
      %6038 = vmatpush1.bf16.msra.mxu0 0
      %6039 = vmatprep.subr.bf16.mxu0 0
      %6040 = vmatpush1.bf16.msra.mxu0 0
      %6041 = vmatprep.subr.bf16.mxu0 0
      %6042 = vmatpush1.bf16.msra.mxu0 0
      %6043 = vmatprep.subr.bf16.mxu0 0
      %6044 = vmatpush1.bf16.msra.mxu0 0
      %6045 = vmatprep.subr.bf16.mxu0 0
      %6046 = vmatpush1.bf16.msra.mxu0 0
      %6047 = vmatprep.subr.bf16.mxu0 0
      %6048 = vmatpush1.bf16.msra.mxu0 0
      %6049 = vmatprep.subr.bf16.mxu0 0
      %6050 = vmatpush1.bf16.msra.mxu0 0
      %6051 = vmatprep.subr.bf16.mxu0 0
      %6052 = vmatpush1.bf16.msra.mxu0 0
      %6053 = vmatprep.subr.bf16.mxu0 0
      %6054 = vmatpush1.bf16.msra.mxu0 0
      %6055 = vmatprep.subr.bf16.mxu0 0
      %6056 = vmatpush1.bf16.msra.mxu0 0
      %6057 = vmatprep.subr.bf16.mxu0 0
      %6058 = vmatpush1.bf16.msra.mxu0 0
      %6059 = vmatprep.mubr.bf16.mxu0 0
      %6060 = vmatmul.mubr.bf16.gmra.mrb[0].mxu0 %v6025
      %v6061 = vpop.f32.mrb[0].mxu0
      %v6062 = vadd.f32 0.0, %v6061
      %v6063 = vpop.f32.mrb[0].mxu0
      %v6064 = vpop.f32.mrb[0].mxu0
      %v6065 = vadd.f32 0.0, %v6064
      %v6066 = vpop.f32.mrb[0].mxu0
      %6067 = vdwg.mxu0
      %v6078 = vunpack.c.l.b16 %v5972
      %v6079 = vunpack.c.l.b16 %v5973
      %v6080 = vunpack.c.l.b16 %v5974
      %v6081 = vunpack.c.l.b16 %v5975
      %v6082 = vunpack.c.l.b16 %v5976
      %v6083 = vunpack.c.l.b16 %v5977
      %v6084 = vunpack.c.l.b16 %v5978
      %v6085 = vunpack.c.l.b16 %v5979
      %v6086 = vunpack.c.l.b16 %v5980
      %v6087 = vunpack.c.l.b16 %v5981
      %v6088 = vpack.c.b16 %v6079, %v6078
      %v6089 = vpack.c.b16 %v6081, %v6080
      %v6090 = vpack.c.b16 %v6083, %v6082
      %v6091 = vpack.c.b16 %v6085, %v6084
      %v6092 = vpack.c.b16 %v6087, %v6086
      %v6099 = vsel %vm6023, %v5967, 0
      %6101 = vmatprep.subr.bf16.mxu0 0
      %6102 = vmatpush1.bf16.msra.mxu0 %v6088
      %6103 = vmatprep.subr.bf16.mxu0 0
      %6104 = vmatpush1.bf16.msra.mxu0 %v6089
      %6105 = vmatprep.subr.bf16.mxu0 0
      %6106 = vmatpush1.bf16.msra.mxu0 %v6090
      %6107 = vmatprep.subr.bf16.mxu0 0
      %6108 = vmatpush1.bf16.msra.mxu0 %v6091
      %6109 = vmatprep.subr.bf16.mxu0 0
      %6110 = vmatpush1.bf16.msra.mxu0 %v6092
      %6111 = vmatprep.subr.bf16.mxu0 0
      %6112 = vmatpush1.bf16.msra.mxu0 0
      %6113 = vmatprep.subr.bf16.mxu0 0
      %6114 = vmatpush1.bf16.msra.mxu0 0
      %6115 = vmatprep.subr.bf16.mxu0 0
      %6116 = vmatpush1.bf16.msra.mxu0 0
      %6117 = vmatprep.subr.bf16.mxu0 0
      %6118 = vmatpush1.bf16.msra.mxu0 0
      %6119 = vmatprep.subr.bf16.mxu0 0
      %6120 = vmatpush1.bf16.msra.mxu0 0
      %6121 = vmatprep.subr.bf16.mxu0 0
      %6122 = vmatpush1.bf16.msra.mxu0 0
      %6123 = vmatprep.subr.bf16.mxu0 0
      %6124 = vmatpush1.bf16.msra.mxu0 0
      %6125 = vmatprep.subr.bf16.mxu0 0
      %6126 = vmatpush1.bf16.msra.mxu0 0
      %6127 = vmatprep.subr.bf16.mxu0 0
      %6128 = vmatpush1.bf16.msra.mxu0 0
      %6129 = vmatprep.subr.bf16.mxu0 0
      %6130 = vmatpush1.bf16.msra.mxu0 0
      %6131 = vmatprep.subr.bf16.mxu0 0
      %6132 = vmatpush1.bf16.msra.mxu0 0
      %6133 = vmatprep.mubr.bf16.mxu0 0
      %6134 = vmatmul.mubr.bf16.gmra.mrb[0].mxu0 %v6099
      %v6135 = vpop.f32.mrb[0].mxu0
      %v6136 = vadd.f32 %v6062, %v6135
      %v6137 = vpop.f32.mrb[0].mxu0
      %v6138 = vpop.f32.mrb[0].mxu0
      %v6139 = vadd.f32 %v6065, %v6138
      %v6140 = vpop.f32.mrb[0].mxu0
      %6141 = vdwg.mxu0
      %s6142 = scalar_lea.vmem %s9, 80
      %v6143 = vld [vmem:[%s6142] sm:$0xf]
      %v6144 = vld [vmem:[%s6142 + $0x4] sm:$0xf]
      %v6145 = vld [vmem:[%s6142 + $0x8] sm:$0xf]
      %v6146 = vld [vmem:[%s6142 + $0xc] sm:$0xf]
      %v6147 = vld [vmem:[%s6142 + $0x10] sm:$0xf]
      %v6148 = vld [vmem:[%s6142 + $0x14] sm:$0xf]
      %v6149 = vld [vmem:[%s6142 + $0x18] sm:$0xf]
      %v6150 = vld [vmem:[%s6142 + $0x1c] sm:$0xf]
      %v6151 = vld [vmem:[%s6142 + $0x20] sm:$0xf]
      %v6152 = vld [vmem:[%s6142 + $0x24] sm:$0xf]
      %v6163 = vunpack.c.l.b16 %v6143
      %v6164 = vunpack.c.l.b16 %v6144
      %v6165 = vunpack.c.l.b16 %v6145
      %v6166 = vunpack.c.l.b16 %v6146
      %v6167 = vunpack.c.l.b16 %v6147
      %v6168 = vunpack.c.l.b16 %v6148
      %v6169 = vunpack.c.l.b16 %v6149
      %v6170 = vunpack.c.l.b16 %v6150
      %v6171 = vunpack.c.l.b16 %v6151
      %v6172 = vunpack.c.l.b16 %v6152
      %v6173 = vpack.c.b16 %v6164, %v6163
      %v6174 = vpack.c.b16 %v6166, %v6165
      %v6175 = vpack.c.b16 %v6168, %v6167
      %v6176 = vpack.c.b16 %v6170, %v6169
      %v6177 = vpack.c.b16 %v6172, %v6171
      %v6184 = vsel %vm6023, %v5969, 0
      %6186 = vmatprep.subr.bf16.mxu0 0
      %6187 = vmatpush1.bf16.msra.mxu0 %v6173
      %6188 = vmatprep.subr.bf16.mxu0 0
      %6189 = vmatpush1.bf16.msra.mxu0 %v6174
      %6190 = vmatprep.subr.bf16.mxu0 0
      %6191 = vmatpush1.bf16.msra.mxu0 %v6175
      %6192 = vmatprep.subr.bf16.mxu0 0
      %6193 = vmatpush1.bf16.msra.mxu0 %v6176
      %6194 = vmatprep.subr.bf16.mxu0 0
      %6195 = vmatpush1.bf16.msra.mxu0 %v6177
      %6196 = vmatprep.subr.bf16.mxu0 0
      %6197 = vmatpush1.bf16.msra.mxu0 0
      %6198 = vmatprep.subr.bf16.mxu0 0
      %6199 = vmatpush1.bf16.msra.mxu0 0
      %6200 = vmatprep.subr.bf16.mxu0 0
      %6201 = vmatpush1.bf16.msra.mxu0 0
      %6202 = vmatprep.subr.bf16.mxu0 0
      %6203 = vmatpush1.bf16.msra.mxu0 0
      %6204 = vmatprep.subr.bf16.mxu0 0
      %6205 = vmatpush1.bf16.msra.mxu0 0
      %6206 = vmatprep.subr.bf16.mxu0 0
      %6207 = vmatpush1.bf16.msra.mxu0 0
      %6208 = vmatprep.subr.bf16.mxu0 0
      %6209 = vmatpush1.bf16.msra.mxu0 0
      %6210 = vmatprep.subr.bf16.mxu0 0
      %6211 = vmatpush1.bf16.msra.mxu0 0
      %6212 = vmatprep.subr.bf16.mxu0 0
      %6213 = vmatpush1.bf16.msra.mxu0 0
      %6214 = vmatprep.subr.bf16.mxu0 0
      %6215 = vmatpush1.bf16.msra.mxu0 0
      %6216 = vmatprep.subr.bf16.mxu0 0
      %6217 = vmatpush1.bf16.msra.mxu0 0
      %6218 = vmatprep.mubr.bf16.mxu0 0
      %6219 = vmatmul.mubr.bf16.gmra.mrb[0].mxu0 %v6184
      %v6220 = vpop.f32.mrb[0].mxu0
      %v6221 = vadd.f32 0.0, %v6220
      %v6222 = vpop.f32.mrb[0].mxu0
      %v6223 = vpop.f32.mrb[0].mxu0
      %v6224 = vadd.f32 0.0, %v6223
      %v6225 = vpop.f32.mrb[0].mxu0
      %6226 = vdwg.mxu0
      %v6227 = vadd.f32 %v6136, %v6221
      %v6228 = vadd.f32 %v6139, %v6224
      %s6229 = scalar_lea.vmem %s9, 120
      %v6230 = vld [vmem:[%s6229] sm:$0xf]
      %v6231 = vld [vmem:[%s6229 + $0x4] sm:$0xf]
      %v6232 = vld [vmem:[%s6229 + $0x8] sm:$0xf]
      %v6233 = vld [vmem:[%s6229 + $0xc] sm:$0xf]
      %v6234 = vld [vmem:[%s6229 + $0x10] sm:$0xf]
      %v6235 = vld [vmem:[%s6229 + $0x14] sm:$0xf]
      %v6236 = vld [vmem:[%s6229 + $0x18] sm:$0xf]
      %v6237 = vld [vmem:[%s6229 + $0x1c] sm:$0xf]
      %v6238 = vld [vmem:[%s6229 + $0x20] sm:$0xf]
      %v6239 = vld [vmem:[%s6229 + $0x24] sm:$0xf]
      %v6250 = vunpack.c.l.b16 %v6230
      %v6251 = vunpack.c.l.b16 %v6231
      %v6252 = vunpack.c.l.b16 %v6232
      %v6253 = vunpack.c.l.b16 %v6233
      %v6254 = vunpack.c.l.b16 %v6234
      %v6255 = vunpack.c.l.b16 %v6235
      %v6256 = vunpack.c.l.b16 %v6236
      %v6257 = vunpack.c.l.b16 %v6237
      %v6258 = vunpack.c.l.b16 %v6238
      %v6259 = vunpack.c.l.b16 %v6239
      %v6260 = vpack.c.b16 %v6251, %v6250
      %v6261 = vpack.c.b16 %v6253, %v6252
      %v6262 = vpack.c.b16 %v6255, %v6254
      %v6263 = vpack.c.b16 %v6257, %v6256
      %v6264 = vpack.c.b16 %v6259, %v6258
      %v6271 = vsel %vm6023, %v5970, 0
      %6273 = vmatprep.subr.bf16.mxu0 0
      %6274 = vmatpush1.bf16.msra.mxu0 %v6260
      %6275 = vmatprep.subr.bf16.mxu0 0
      %6276 = vmatpush1.bf16.msra.mxu0 %v6261
      %6277 = vmatprep.subr.bf16.mxu0 0
      %6278 = vmatpush1.bf16.msra.mxu0 %v6262
      %6279 = vmatprep.subr.bf16.mxu0 0
      %6280 = vmatpush1.bf16.msra.mxu0 %v6263
      %6281 = vmatprep.subr.bf16.mxu0 0
      %6282 = vmatpush1.bf16.msra.mxu0 %v6264
      %6283 = vmatprep.subr.bf16.mxu0 0
      %6284 = vmatpush1.bf16.msra.mxu0 0
      %6285 = vmatprep.subr.bf16.mxu0 0
      %6286 = vmatpush1.bf16.msra.mxu0 0
      %6287 = vmatprep.subr.bf16.mxu0 0
      %6288 = vmatpush1.bf16.msra.mxu0 0
      %6289 = vmatprep.subr.bf16.mxu0 0
      %6290 = vmatpush1.bf16.msra.mxu0 0
      %6291 = vmatprep.subr.bf16.mxu0 0
      %6292 = vmatpush1.bf16.msra.mxu0 0
      %6293 = vmatprep.subr.bf16.mxu0 0
      %6294 = vmatpush1.bf16.msra.mxu0 0
      %6295 = vmatprep.subr.bf16.mxu0 0
      %6296 = vmatpush1.bf16.msra.mxu0 0
      %6297 = vmatprep.subr.bf16.mxu0 0
      %6298 = vmatpush1.bf16.msra.mxu0 0
      %6299 = vmatprep.subr.bf16.mxu0 0
      %6300 = vmatpush1.bf16.msra.mxu0 0
      %6301 = vmatprep.subr.bf16.mxu0 0
      %6302 = vmatpush1.bf16.msra.mxu0 0
      %6303 = vmatprep.subr.bf16.mxu0 0
      %6304 = vmatpush1.bf16.msra.mxu0 0
      %6305 = vmatprep.mubr.bf16.mxu0 0
      %6306 = vmatmul.mubr.bf16.gmra.mrb[0].mxu0 %v6271
      %v6307 = vpop.f32.mrb[0].mxu0
      %v6308 = vadd.f32 0.0, %v6307
      %v6309 = vpop.f32.mrb[0].mxu0
      %v6310 = vpop.f32.mrb[0].mxu0
      %v6311 = vadd.f32 0.0, %v6310
      %v6312 = vpop.f32.mrb[0].mxu0
      %6313 = vdwg.mxu0
      %v6314 = vadd.f32 %v6227, %v6308
      %v6315 = vadd.f32 %v6228, %v6311
      %s6316 = scalar_lea.vmem %s9, 160
      %v6317 = vld [vmem:[%s6316] sm:$0xf]
      %v6318 = vld [vmem:[%s6316 + $0x4] sm:$0xf]
      %v6319 = vld [vmem:[%s6316 + $0x8] sm:$0xf]
      %v6320 = vld [vmem:[%s6316 + $0xc] sm:$0xf]
      %v6321 = vld [vmem:[%s6316 + $0x10] sm:$0xf]
      %v6322 = vld [vmem:[%s6316 + $0x14] sm:$0xf]
      %v6323 = vld [vmem:[%s6316 + $0x18] sm:$0xf]
      %v6324 = vld [vmem:[%s6316 + $0x1c] sm:$0xf]
      %v6325 = vld [vmem:[%s6316 + $0x20] sm:$0xf]
      %v6326 = vld [vmem:[%s6316 + $0x24] sm:$0xf]
      %v6337 = vunpack.c.l.b16 %v6317
      %v6338 = vunpack.c.l.b16 %v6318
      %v6339 = vunpack.c.l.b16 %v6319
      %v6340 = vunpack.c.l.b16 %v6320
      %v6341 = vunpack.c.l.b16 %v6321
      %v6342 = vunpack.c.l.b16 %v6322
      %v6343 = vunpack.c.l.b16 %v6323
      %v6344 = vunpack.c.l.b16 %v6324
      %v6345 = vunpack.c.l.b16 %v6325
      %v6346 = vunpack.c.l.b16 %v6326
      %v6347 = vpack.c.b16 %v6338, %v6337
      %v6348 = vpack.c.b16 %v6340, %v6339
      %v6349 = vpack.c.b16 %v6342, %v6341
      %v6350 = vpack.c.b16 %v6344, %v6343
      %v6351 = vpack.c.b16 %v6346, %v6345
      %v6358 = vsel %vm6023, %v5971, 0
      %6360 = vmatprep.subr.bf16.mxu0 0
      %6361 = vmatpush1.bf16.msra.mxu0 %v6347
      %6362 = vmatprep.subr.bf16.mxu0 0
      %6363 = vmatpush1.bf16.msra.mxu0 %v6348
      %6364 = vmatprep.subr.bf16.mxu0 0
      %6365 = vmatpush1.bf16.msra.mxu0 %v6349
      %6366 = vmatprep.subr.bf16.mxu0 0
      %6367 = vmatpush1.bf16.msra.mxu0 %v6350
      %6368 = vmatprep.subr.bf16.mxu0 0
      %6369 = vmatpush1.bf16.msra.mxu0 %v6351
      %6370 = vmatprep.subr.bf16.mxu0 0
      %6371 = vmatpush1.bf16.msra.mxu0 0
      %6372 = vmatprep.subr.bf16.mxu0 0
      %6373 = vmatpush1.bf16.msra.mxu0 0
      %6374 = vmatprep.subr.bf16.mxu0 0
      %6375 = vmatpush1.bf16.msra.mxu0 0
      %6376 = vmatprep.subr.bf16.mxu0 0
      %6377 = vmatpush1.bf16.msra.mxu0 0
      %6378 = vmatprep.subr.bf16.mxu0 0
      %6379 = vmatpush1.bf16.msra.mxu0 0
      %6380 = vmatprep.subr.bf16.mxu0 0
      %6381 = vmatpush1.bf16.msra.mxu0 0
      %6382 = vmatprep.subr.bf16.mxu0 0
      %6383 = vmatpush1.bf16.msra.mxu0 0
      %6384 = vmatprep.subr.bf16.mxu0 0
      %6385 = vmatpush1.bf16.msra.mxu0 0
      %6386 = vmatprep.subr.bf16.mxu0 0
      %6387 = vmatpush1.bf16.msra.mxu0 0
      %6388 = vmatprep.subr.bf16.mxu0 0
      %6389 = vmatpush1.bf16.msra.mxu0 0
      %6390 = vmatprep.subr.bf16.mxu0 0
      %6391 = vmatpush1.bf16.msra.mxu0 0
      %6392 = vmatprep.mubr.bf16.mxu0 0
      %6393 = vmatmul.mubr.bf16.gmra.mrb[0].mxu0 %v6358
      %v6394 = vpop.f32.mrb[0].mxu0
      %v6395 = vadd.f32 0.0, %v6394
      %v6396 = vpop.f32.mrb[0].mxu0
      %v6397 = vpop.f32.mrb[0].mxu0
      %v6398 = vadd.f32 0.0, %v6397
      %v6399 = vpop.f32.mrb[0].mxu0
      %6400 = vdwg.mxu0
      %v6401 = vadd.f32 %v6314, %v6395
      %v6402 = vadd.f32 %v6315, %v6398
      %v6403 = vld [vmem:[%s10] sm:$0x1]
      %v6405 = vlaneseq
      %v6406 = vshrl.u32 %v6405, 7
      %v6407 = vsub.s32 0, %v6406
      %v6408 = vrot.slane %v6403, %v6407
      %v6410 = vadd.f32 %v6401, %v6408
      %v6411 = vadd.f32 %v6402, %v6408
      %v6412 = vmax.f32 %v6410, 0.0
      %v6413 = vmax.f32 %v6411, 0.0
      %v6414 = vpack.c.bf16 %v6413, %v6412
      %v6415 = vld [vmem:[%s11] sm:$0xf]
      %v6416 = vld [vmem:[%s11 + $0x4] sm:$0xf]
      %v6417 = vld [vmem:[%s11 + $0x8] sm:$0xf]
      %v6418 = vld [vmem:[%s11 + $0xc] sm:$0xf]
      %v6419 = vld [vmem:[%s11 + $0x10] sm:$0xf]
      %v6420 = vld [vmem:[%s11 + $0x14] sm:$0xf]
      %v6421 = vld [vmem:[%s11 + $0x18] sm:$0xf]
      %v6422 = vld [vmem:[%s11 + $0x1c] sm:$0xf]
      %v6423 = vld [vmem:[%s11 + $0x20] sm:$0xf]
      %v6424 = vld [vmem:[%s11 + $0x24] sm:$0xf]
      %v6425 = vld [vmem:[%s11 + $0x28] sm:$0xf]
      %v6426 = vld [vmem:[%s11 + $0x2c] sm:$0xf]
      %v6427 = vld [vmem:[%s11 + $0x30] sm:$0xf]
      %v6428 = vld [vmem:[%s11 + $0x34] sm:$0xf]
      %v6429 = vld [vmem:[%s11 + $0x38] sm:$0xf]
      %v6430 = vld [vmem:[%s12] sm:$0x1]
      %v6432 = vlaneseq
      %v6433 = vshrl.u32 %v6432, 7
      %v6434 = vsub.s32 0, %v6433
      %v6435 = vrot.slane %v6430, %v6434
      %v6452 = vunpack.c.l.b16 %v6415
      %v6453 = vunpack.c.l.b16 %v6416
      %v6454 = vunpack.c.l.b16 %v6417
      %v6455 = vunpack.c.l.b16 %v6418
      %v6456 = vunpack.c.l.b16 %v6419
      %v6457 = vunpack.c.l.b16 %v6420
      %v6458 = vunpack.c.l.b16 %v6421
      %v6459 = vunpack.c.l.b16 %v6422
      %v6460 = vunpack.c.l.b16 %v6423
      %v6461 = vunpack.c.l.b16 %v6424
      %v6462 = vunpack.c.l.b16 %v6425
      %v6463 = vunpack.c.l.b16 %v6426
      %v6464 = vunpack.c.l.b16 %v6427
      %v6465 = vunpack.c.l.b16 %v6428
      %v6466 = vunpack.c.l.b16 %v6429
      %v6467 = vpack.c.b16 %v6453, %v6452
      %v6468 = vpack.c.b16 %v6455, %v6454
      %v6469 = vpack.c.b16 %v6457, %v6456
      %v6470 = vpack.c.b16 %v6459, %v6458
      %v6471 = vpack.c.b16 %v6461, %v6460
      %v6472 = vpack.c.b16 %v6463, %v6462
      %v6473 = vpack.c.b16 %v6465, %v6464
      %v6474 = vpack.c.b16 %v6466, %v6466
      %vm6482 = vcmask 982016
      %v6484 = vsel %vm6482, %v6414, 0
      %v6487 = vsel %vm3383, %v6474, 0
      %6489 = vmatprep.subr.bf16.mxu0 0
      %6490 = vmatpush1.bf16.msra.mxu0 %v6467
      %6491 = vmatprep.subr.bf16.mxu0 0
      %6492 = vmatpush1.bf16.msra.mxu0 %v6468
      %6493 = vmatprep.subr.bf16.mxu0 0
      %6494 = vmatpush1.bf16.msra.mxu0 %v6469
      %6495 = vmatprep.subr.bf16.mxu0 0
      %6496 = vmatpush1.bf16.msra.mxu0 %v6470
      %6497 = vmatprep.subr.bf16.mxu0 0
      %6498 = vmatpush1.bf16.msra.mxu0 %v6471
      %6499 = vmatprep.subr.bf16.mxu0 0
      %6500 = vmatpush1.bf16.msra.mxu0 %v6472
      %6501 = vmatprep.subr.bf16.mxu0 0
      %6502 = vmatpush1.bf16.msra.mxu0 %v6473
      %6503 = vmatprep.subr.bf16.mxu0 0
      %6504 = vmatpush1.bf16.msra.mxu0 %v6487
      %6505 = vmatprep.subr.bf16.mxu0 0
      %6506 = vmatpush1.bf16.msra.mxu0 0
      %6507 = vmatprep.subr.bf16.mxu0 0
      %6508 = vmatpush1.bf16.msra.mxu0 0
      %6509 = vmatprep.subr.bf16.mxu0 0
      %6510 = vmatpush1.bf16.msra.mxu0 0
      %6511 = vmatprep.subr.bf16.mxu0 0
      %6512 = vmatpush1.bf16.msra.mxu0 0
      %6513 = vmatprep.subr.bf16.mxu0 0
      %6514 = vmatpush1.bf16.msra.mxu0 0
      %6515 = vmatprep.subr.bf16.mxu0 0
      %6516 = vmatpush1.bf16.msra.mxu0 0
      %6517 = vmatprep.subr.bf16.mxu0 0
      %6518 = vmatpush1.bf16.msra.mxu0 0
      %6519 = vmatprep.subr.bf16.mxu0 0
      %6520 = vmatpush1.bf16.msra.mxu0 0
      %6521 = vmatprep.mubr.bf16.mxu0 0
      %6522 = vmatmul.mubr.bf16.gmra.mrb[0].mxu0 %v6484
      %v6523 = vpop.f32.mrb[0].mxu0
      %v6524 = vadd.f32 %v6435, %v6523
      %v6525 = vpop.f32.mrb[0].mxu0
      %v6526 = vpop.f32.mrb[0].mxu0
      %v6527 = vadd.f32 %v6435, %v6526
      %v6528 = vpop.f32.mrb[0].mxu0
      %6529 = vdwg.mxu0
      %v6530 = vmax.f32 %v6524, 0.0
      %v6531 = vmax.f32 %v6527, 0.0
      %v6532 = vpack.c.bf16 %v6531, %v6530
      %v6533 = vld [vmem:[%s13] sm:$0xf]
      %v6534 = vld [vmem:[%s13 + $0x4] sm:$0xf]
      %v6535 = vld [vmem:[%s13 + $0x8] sm:$0xf]
      %v6536 = vld [vmem:[%s13 + $0xc] sm:$0xf]
      %v6537 = vld [vmem:[%s13 + $0x10] sm:$0xf]
      %v6538 = vld [vmem:[%s13 + $0x14] sm:$0xf]
      %v6539 = vld [vmem:[%s13 + $0x18] sm:$0xf]
      %v6540 = vld [vmem:[%s13 + $0x1c] sm:$0xf]
      %v6541 = vld [vmem:[%s13 + $0x20] sm:$0xf]
      %v6542 = vld [vmem:[%s13 + $0x24] sm:$0xf]
      %v6543 = vld [vmem:[%s13 + $0x28] sm:$0x3]
      %v6544 = vld [vmem:[%s14] sm:$0x1]
      %v6546 = vlaneseq
      %v6547 = vshrl.u32 %v6546, 7
      %v6548 = vsub.s32 0, %v6547
      %v6549 = vrot.slane %v6544, %v6548
      %v6562 = vunpack.c.l.b16 %v6533
      %v6563 = vunpack.c.l.b16 %v6534
      %v6564 = vunpack.c.l.b16 %v6535
      %v6565 = vunpack.c.l.b16 %v6536
      %v6566 = vunpack.c.l.b16 %v6537
      %v6567 = vunpack.c.l.b16 %v6538
      %v6568 = vunpack.c.l.b16 %v6539
      %v6569 = vunpack.c.l.b16 %v6540
      %v6570 = vunpack.c.l.b16 %v6541
      %v6571 = vunpack.c.l.b16 %v6542
      %v6572 = vunpack.c.l.b16 %v6543
      %v6573 = vpack.c.b16 %v6563, %v6562
      %v6574 = vpack.c.b16 %v6565, %v6564
      %v6575 = vpack.c.b16 %v6567, %v6566
      %v6576 = vpack.c.b16 %v6569, %v6568
      %v6577 = vpack.c.b16 %v6571, %v6570
      %v6578 = vpack.c.b16 %v6572, %v6572
      %v6585 = vsel %vm4363, %v6532, 0
      %v6588 = vsel %vm4394, %v6578, 0
      %6590 = vmatprep.subr.bf16.mxu0 0
      %6591 = vmatpush1.bf16.msra.mxu0 %v6573
      %6592 = vmatprep.subr.bf16.mxu0 0
      %6593 = vmatpush1.bf16.msra.mxu0 %v6574
      %6594 = vmatprep.subr.bf16.mxu0 0
      %6595 = vmatpush1.bf16.msra.mxu0 %v6575
      %6596 = vmatprep.subr.bf16.mxu0 0
      %6597 = vmatpush1.bf16.msra.mxu0 %v6576
      %6598 = vmatprep.subr.bf16.mxu0 0
      %6599 = vmatpush1.bf16.msra.mxu0 %v6577
      %6600 = vmatprep.subr.bf16.mxu0 0
      %6601 = vmatpush1.bf16.msra.mxu0 %v6588
      %6602 = vmatprep.subr.bf16.mxu0 0
      %6603 = vmatpush1.bf16.msra.mxu0 0
      %6604 = vmatprep.subr.bf16.mxu0 0
      %6605 = vmatpush1.bf16.msra.mxu0 0
      %6606 = vmatprep.subr.bf16.mxu0 0
      %6607 = vmatpush1.bf16.msra.mxu0 0
      %6608 = vmatprep.subr.bf16.mxu0 0
      %6609 = vmatpush1.bf16.msra.mxu0 0
      %6610 = vmatprep.subr.bf16.mxu0 0
      %6611 = vmatpush1.bf16.msra.mxu0 0
      %6612 = vmatprep.subr.bf16.mxu0 0
      %6613 = vmatpush1.bf16.msra.mxu0 0
      %6614 = vmatprep.subr.bf16.mxu0 0
      %6615 = vmatpush1.bf16.msra.mxu0 0
      %6616 = vmatprep.subr.bf16.mxu0 0
      %6617 = vmatpush1.bf16.msra.mxu0 0
      %6618 = vmatprep.subr.bf16.mxu0 0
      %6619 = vmatpush1.bf16.msra.mxu0 0
      %6620 = vmatprep.subr.bf16.mxu0 0
      %6621 = vmatpush1.bf16.msra.mxu0 0
      %6622 = vmatprep.mubr.bf16.mxu0 0
      %6623 = vmatmul.mubr.bf16.gmra.mrb[0].mxu0 %v6585
      %v6624 = vpop.f32.mrb[0].mxu0
      %v6625 = vadd.f32 %v6549, %v6624
      %v6626 = vpop.f32.mrb[0].mxu0
      %v6627 = vpop.f32.mrb[0].mxu0
      %v6628 = vadd.f32 %v6549, %v6627
      %v6629 = vpop.f32.mrb[0].mxu0
      %6630 = vdwg.mxu0
      %vm6631 = vcmask 15360
      %6632 = vst.msk [vmem:[%s496] sm:$0xff] %vm6631, %v6625
      %6633 = vst.msk [vmem:[%s496 + $0x8] sm:$0xff] %vm6631, %v6628
      %s6634 = smul.u32 2, %s26
      %p6635 = scmp.lt.s32.totalorder %s6634, 3
      %s6636 = scalar_select %p6635, %s6634, 3
      %s6637 = smul.addr %s6636, 8
      %s6638 = scalar_lea.vmem %s15, %s6637
      // Predicated region
      $region81: #{lenet_forward.1} parent=79 // pred_check
        %p6639 = pneg %p364
      $region82: #{lenet_forward.1} parent=79 // pred_check_branch
        %6641 = sbr.rel (%p6639) target = $region84
      $region83: #{lenet_forward.1} parent=79 // pred_region
        %s6642 = smul.u32 2, %s26
      $region84: #{lenet_forward.1} parent=79 // pred_fallthru
        _
    $region80: #{lenet_forward.1} parent=5 // pred_fallthru
      _
    %p6643 = scmp.le.s32.totalorder 2, %s21
    // Predicated region
    $region85: #{lenet_forward.1} parent=5 // pred_check
      %p6644 = pneg %p6643
    $region86: #{lenet_forward.1} parent=5 // pred_check_branch
      %6646 = sbr.rel (%p6644) target = $region88
    $region87: #{lenet_forward.1} parent=5 // pred_region
      %s6647 = ssub.s32 %s21, 2
      // Predicated region
      $region89: #{lenet_forward.1} parent=87 // pred_check
        %p6648 = pneg %p370
      $region90: #{lenet_forward.1} parent=87 // pred_check_branch
        %6650 = sbr.rel (%p6648) target = $region92
      $region91: #{lenet_forward.1} parent=87 // pred_region
        %s6651 = smul.u32 2, %s27
        %p6652 = scmp.lt.s32.totalorder %s6651, 3
        %s6653 = scalar_select %p6652, %s6651, 3
        %s6654 = smul.addr %s6653, 8
        %s6655 = scalar_lea.vmem %s15, %s6654
      $region92: #{lenet_forward.1} parent=87 // pred_fallthru
        _
    $region88: #{lenet_forward.1} parent=5 // pred_fallthru
      _
  $region6: #{lenet_forward.1} parent=0 // loop_footer
    %s25 = sadd.s32 1, %s21
  $region7: #{lenet_forward.1} parent=0 // loop_footer_branch
    %20 = sbr.rel target = $region3
  $region8: #{lenet_forward.1} parent=0 // loop_exit
    _

</llo_original>
